<compile_context>
chip_gen: v7x
topology: tpu7x:2x2x1
jax: 0.10.0
libtpu: 0.0.40
codegen_flags: <defaults>
</compile_context>

<pallas_src>
import jax
import jax.numpy as jnp
from jax.experimental import pallas as pl
from jax.experimental.pallas import tpu as pltpu

# ----------------------------- model dims (small) -----------------------------
VOCAB = 20000
B = 2          # batch (per sentence)
T = 8          # sequence length
E = 32         # embedding_dim
H = 32         # hidden_dim
F = 2 * H      # bidirectional feature size
LN_EPS = 1e-5
COS_EPS = 1e-6


# ------------------------- in-kernel helpers (traced once) ---------------------
def _gru_cell(gi, h, w_hh, b_hh):
    """One PyTorch-convention GRU step with pre-computed input gates.

    gi: (N, 3H) = x_t @ W_ih + b_ih (hoisted out of the recurrence),
    h : (N, H) previous hidden state.  Gate order [r, z, n].
    """
    hd = h.shape[-1]
    gh = jnp.dot(h, w_hh, preferred_element_type=jnp.float32) + b_hh    # (N, 3H)
    r = jax.nn.sigmoid(gi[:, :hd] + gh[:, :hd])
    z = jax.nn.sigmoid(gi[:, hd:2 * hd] + gh[:, hd:2 * hd])
    n = jnp.tanh(gi[:, 2 * hd:] + r * gh[:, 2 * hd:])
    return (1.0 - z) * n + z * h


def _bigru_layer(x_all, n, t_len,
                 wf_ih, wf_hh, bf_ih, bf_hh,
                 wb_ih, wb_hh, bb_ih, bb_hh):
    """Bidirectional GRU layer over a t-major (T*N, din) stack.

    Input projections for every timestep are computed with a single matmul per
    direction (gi is independent of the recurrent state); only h @ W_hh stays
    inside the fully unrolled time loop.  Returns (T*N, 2H), [fwd | bwd].
    """
    hd = wf_hh.shape[0]
    gi_f = jnp.dot(x_all, wf_ih, preferred_element_type=jnp.float32) + bf_ih  # (T*N, 3H)
    gi_b = jnp.dot(x_all, wb_ih, preferred_element_type=jnp.float32) + bb_ih  # (T*N, 3H)

    h_f = jnp.zeros((n, hd), jnp.float32)
    h_b = jnp.zeros((n, hd), jnp.float32)
    outs_f = [None] * t_len
    outs_b = [None] * t_len
    for k in range(t_len):                       # fully unrolled recurrence
        tf, tb = k, t_len - 1 - k                # bwd reversal = index order only
        h_f = _gru_cell(gi_f[tf * n:(tf + 1) * n], h_f, wf_hh, bf_hh)
        h_b = _gru_cell(gi_b[tb * n:(tb + 1) * n], h_b, wb_hh, bb_hh)
        outs_f[tf] = h_f
        outs_b[tb] = h_b
    out_f = jnp.concatenate(outs_f, axis=0)      # (T*N, H), t-major
    out_b = jnp.concatenate(outs_b, axis=0)      # (T*N, H), t-major
    return jnp.concatenate([out_f, out_b], axis=-1)   # (T*N, 2H)


# ------------------------- single fused encoder+cosine kernel ------------------
def fused_encoder_cosine_kernel(
        xemb_ref,                                              # (T*2B, E) t-major
        w0f_ih_ref, w0f_hh_ref, b0f_ih_ref, b0f_hh_ref,        # GRU layer 0, fwd
        w0b_ih_ref, w0b_hh_ref, b0b_ih_ref, b0b_hh_ref,        # GRU layer 0, bwd
        w1f_ih_ref, w1f_hh_ref, b1f_ih_ref, b1f_hh_ref,        # GRU layer 1, fwd
        w1b_ih_ref, w1b_hh_ref, b1b_ih_ref, b1b_hh_ref,        # GRU layer 1, bwd
        ln_g_ref, ln_b_ref,                                    # LayerNorm(2H)
        wl1_ref, bl1_ref, wl2_ref, bl2_ref, wl3_ref, bl3_ref,  # MLP head
        o_ref):                                                # (B, 1) cosine out
    n_tot = 2 * B
    x_all = xemb_ref[...]                                      # (T*2B, E)

    # -------- GRU layer 0 (input = embeddings) --------
    s0 = _bigru_layer(
        x_all, n_tot, T,
        w0f_ih_ref[...], w0f_hh_ref[...], b0f_ih_ref[...], b0f_hh_ref[...],
        w0b_ih_ref[...], w0b_hh_ref[...], b0b_ih_ref[...], b0b_hh_ref[...])
    # TODO(synk): nn.GRU inter-layer dropout(0.5) is training-only; omitted (inference).

    # -------- GRU layer 1 (input = layer-0 bidirectional output) --------
    s1 = _bigru_layer(
        s0, n_tot, T,
        w1f_ih_ref[...], w1f_hh_ref[...], b1f_ih_ref[...], b1f_hh_ref[...],
        w1b_ih_ref[...], w1b_hh_ref[...], b1b_ih_ref[...], b1b_hh_ref[...])

    # -------- LayerNorm over the whole (T*2B, 2H) stack, then mean-pool over t --------
    mu = jnp.mean(s1, axis=-1, keepdims=True)
    var = jnp.mean(jnp.square(s1 - mu), axis=-1, keepdims=True)
    s_ln = (s1 - mu) * jax.lax.rsqrt(var + LN_EPS) * ln_g_ref[...] + ln_b_ref[...]

    acc = s_ln[:n_tot]
    for t in range(1, T):                                      # rows are t-major
        acc = acc + s_ln[t * n_tot:(t + 1) * n_tot]
    pooled = acc * (1.0 / T)                                   # (2B, 2H)

    # -------- MLP head --------
    a = jnp.maximum(
        jnp.dot(pooled, wl1_ref[...], preferred_element_type=jnp.float32) + bl1_ref[...], 0.0)
    a = jnp.maximum(
        jnp.dot(a, wl2_ref[...], preferred_element_type=jnp.float32) + bl2_ref[...], 0.0)
    emb_out = jnp.dot(a, wl3_ref[...], preferred_element_type=jnp.float32) + bl3_ref[...]  # (2B, 256)

    # -------- cosine similarity between x-rows (0:B) and y-rows (B:2B) --------
    s1e = emb_out[:B]
    s2e = emb_out[B:]
    dot = jnp.sum(s1e * s2e, axis=-1, keepdims=True)
    n1 = jnp.sqrt(jnp.sum(s1e * s1e, axis=-1, keepdims=True))
    n2 = jnp.sqrt(jnp.sum(s2e * s2e, axis=-1, keepdims=True))
    o_ref[...] = (dot / jnp.maximum(n1 * n2, COS_EPS)).astype(o_ref.dtype)


# ------------------------------------ wrapper -----------------------------------
@jax.jit
def forward(x_tokens, y_tokens, p):
    bsz, t_len = x_tokens.shape
    tokens = jnp.concatenate([x_tokens, y_tokens], axis=0)          # (2B, T)
    xemb = p["emb"][tokens]                                         # (2B, T, E) XLA gather (glue)
    xemb = jnp.swapaxes(xemb, 0, 1).reshape(t_len * 2 * bsz, -1)    # (T*2B, E), t-major

    args = (xemb,
            *p["l0f"], *p["l0b"], *p["l1f"], *p["l1b"],
            p["ln_g"], p["ln_b"],
            p["w1"], p["b1"], p["w2"], p["b2"], p["w3"], p["b3"])
    cos = pl.pallas_call(
        fused_encoder_cosine_kernel,
        out_shape=jax.ShapeDtypeStruct((bsz, 1), jnp.float32),
        # No grid: single invocation; every operand is a whole-array VMEM block
        # (~3 MB of weights -> well inside the scoped-VMEM default on all chips).
        in_specs=[pl.BlockSpec(memory_space=pltpu.MemorySpace.VMEM) for _ in args],
        out_specs=pl.BlockSpec(memory_space=pltpu.MemorySpace.VMEM),
    )(*args)
    return cos[:, 0]                                                # (B,)


# ------------------------------- parameter init ---------------------------------
def init_params(key):
    ks = iter(jax.random.split(key, 32))
    u = lambda k, shape, scale: jax.random.uniform(k, shape, jnp.float32, -scale, scale)
    sc = 1.0 / (H ** 0.5)

    def gru_dir(din):
        # kernel layout: w_ih (din, 3H), w_hh (H, 3H); gate order [r, z, n]
        # (equals the transpose of PyTorch's weight_ih_l* / weight_hh_l*).
        return (u(next(ks), (din, 3 * H), sc),
                u(next(ks), (H, 3 * H), sc),
                u(next(ks), (1, 3 * H), sc),
                u(next(ks), (1, 3 * H), sc))

    return {
        "emb": jax.random.normal(next(ks), (VOCAB, E), jnp.float32),
        "l0f": gru_dir(E), "l0b": gru_dir(E),
        "l1f": gru_dir(F), "l1b": gru_dir(F),
        "ln_g": jnp.ones((1, F), jnp.float32),
        "ln_b": jnp.zeros((1, F), jnp.float32),
        "w1": u(next(ks), (F, 1024), 1.0 / (F ** 0.5)),
        "b1": u(next(ks), (1, 1024), 1.0 / (F ** 0.5)),
        "w2": u(next(ks), (1024, 512), 1.0 / (1024.0 ** 0.5)),
        "b2": u(next(ks), (1, 512), 1.0 / (1024.0 ** 0.5)),
        "w3": u(next(ks), (512, 256), 1.0 / (512.0 ** 0.5)),
        "b3": u(next(ks), (1, 256), 1.0 / (512.0 ** 0.5)),
    }


if __name__ == "__main__":
    key = jax.random.PRNGKey(0)
    kp, kx, ky = jax.random.split(key, 3)
    params = init_params(kp)
    x = jax.random.randint(kx, (B, T), 0, VOCAB, dtype=jnp.int32)
    y = jax.random.randint(ky, (B, T), 0, VOCAB, dtype=jnp.int32)

    out = forward(x, y, params)
    jax.block_until_ready(out)
    assert out.shape == (B,)
    assert bool(jnp.all(jnp.isfinite(out)))
    assert bool(jnp.all(jnp.abs(out) <= 1.0 + 1e-4))   # cosine range sanity
    print("KERNEL_OK")
</pallas_src>

<mosaic_0001>
module attributes {stable_mosaic.version = 11 : i64} {
  func.func @fused_encoder_cosine_kernel(%arg0: memref<32x32xf32, #tpu.memory_space<vmem>>, %arg1: memref<32x96xf32, #tpu.memory_space<vmem>>, %arg2: memref<32x96xf32, #tpu.memory_space<vmem>>, %arg3: memref<1x96xf32, #tpu.memory_space<vmem>>, %arg4: memref<1x96xf32, #tpu.memory_space<vmem>>, %arg5: memref<32x96xf32, #tpu.memory_space<vmem>>, %arg6: memref<32x96xf32, #tpu.memory_space<vmem>>, %arg7: memref<1x96xf32, #tpu.memory_space<vmem>>, %arg8: memref<1x96xf32, #tpu.memory_space<vmem>>, %arg9: memref<64x96xf32, #tpu.memory_space<vmem>>, %arg10: memref<32x96xf32, #tpu.memory_space<vmem>>, %arg11: memref<1x96xf32, #tpu.memory_space<vmem>>, %arg12: memref<1x96xf32, #tpu.memory_space<vmem>>, %arg13: memref<64x96xf32, #tpu.memory_space<vmem>>, %arg14: memref<32x96xf32, #tpu.memory_space<vmem>>, %arg15: memref<1x96xf32, #tpu.memory_space<vmem>>, %arg16: memref<1x96xf32, #tpu.memory_space<vmem>>, %arg17: memref<1x64xf32, #tpu.memory_space<vmem>>, %arg18: memref<1x64xf32, #tpu.memory_space<vmem>>, %arg19: memref<64x1024xf32, #tpu.memory_space<vmem>>, %arg20: memref<1x1024xf32, #tpu.memory_space<vmem>>, %arg21: memref<1024x512xf32, #tpu.memory_space<vmem>>, %arg22: memref<1x512xf32, #tpu.memory_space<vmem>>, %arg23: memref<512x256xf32, #tpu.memory_space<vmem>>, %arg24: memref<1x256xf32, #tpu.memory_space<vmem>>, %arg25: memref<2x1xf32, #tpu.memory_space<vmem>>) attributes {dimension_semantics = [], scalar_prefetch = 0 : i64, scratch_operands = 0 : i64, tpu.core_type = #tpu.core_type<tc>} {
    %c0 = arith.constant 0 : index
    %c0_0 = arith.constant 0 : index
    %0 = vector.load %arg0[%c0, %c0_0] : memref<32x32xf32, #tpu.memory_space<vmem>>, vector<32x32xf32>
    %c0_1 = arith.constant 0 : index
    %c0_2 = arith.constant 0 : index
    %1 = vector.load %arg1[%c0_1, %c0_2] : memref<32x96xf32, #tpu.memory_space<vmem>>, vector<32x96xf32>
    %c0_3 = arith.constant 0 : index
    %c0_4 = arith.constant 0 : index
    %2 = vector.load %arg2[%c0_3, %c0_4] : memref<32x96xf32, #tpu.memory_space<vmem>>, vector<32x96xf32>
    %c0_5 = arith.constant 0 : index
    %c0_6 = arith.constant 0 : index
    %3 = vector.load %arg3[%c0_5, %c0_6] : memref<1x96xf32, #tpu.memory_space<vmem>>, vector<1x96xf32>
    %c0_7 = arith.constant 0 : index
    %c0_8 = arith.constant 0 : index
    %4 = vector.load %arg4[%c0_7, %c0_8] : memref<1x96xf32, #tpu.memory_space<vmem>>, vector<1x96xf32>
    %c0_9 = arith.constant 0 : index
    %c0_10 = arith.constant 0 : index
    %5 = vector.load %arg5[%c0_9, %c0_10] : memref<32x96xf32, #tpu.memory_space<vmem>>, vector<32x96xf32>
    %c0_11 = arith.constant 0 : index
    %c0_12 = arith.constant 0 : index
    %6 = vector.load %arg6[%c0_11, %c0_12] : memref<32x96xf32, #tpu.memory_space<vmem>>, vector<32x96xf32>
    %c0_13 = arith.constant 0 : index
    %c0_14 = arith.constant 0 : index
    %7 = vector.load %arg7[%c0_13, %c0_14] : memref<1x96xf32, #tpu.memory_space<vmem>>, vector<1x96xf32>
    %c0_15 = arith.constant 0 : index
    %c0_16 = arith.constant 0 : index
    %8 = vector.load %arg8[%c0_15, %c0_16] : memref<1x96xf32, #tpu.memory_space<vmem>>, vector<1x96xf32>
    %cst = arith.constant dense<0.000000e+00> : vector<32x96xf32>
    %9 = tpu.matmul %0, %1, %cst {dimension_numbers = #tpu.dot_dimension_numbers<[1], [0], [0], [1], [0, 0, 1, 1], [], []>} : vector<32x32xf32>, vector<32x96xf32>, vector<32x96xf32> -> vector<32x96xf32>
    %10 = vector.broadcast %3 : vector<1x96xf32> to vector<32x96xf32>
    %11 = arith.addf %9, %10 : vector<32x96xf32>
    %cst_17 = arith.constant dense<0.000000e+00> : vector<32x96xf32>
    %12 = tpu.matmul %0, %5, %cst_17 {dimension_numbers = #tpu.dot_dimension_numbers<[1], [0], [0], [1], [0, 0, 1, 1], [], []>} : vector<32x32xf32>, vector<32x96xf32>, vector<32x96xf32> -> vector<32x96xf32>
    %13 = vector.broadcast %7 : vector<1x96xf32> to vector<32x96xf32>
    %14 = arith.addf %12, %13 : vector<32x96xf32>
    %cst_18 = arith.constant 0.000000e+00 : f32
    %15 = vector.broadcast %cst_18 : f32 to vector<4x32xf32>
    %cst_19 = arith.constant 0.000000e+00 : f32
    %16 = vector.broadcast %cst_19 : f32 to vector<4x32xf32>
    %17 = vector.extract_strided_slice %11 {offsets = [0, 0], sizes = [4, 96], strides = [1, 1]} : vector<32x96xf32> to vector<4x96xf32>
    %cst_20 = arith.constant dense<0.000000e+00> : vector<4x96xf32>
    %18 = tpu.matmul %15, %2, %cst_20 {dimension_numbers = #tpu.dot_dimension_numbers<[1], [0], [0], [1], [0, 0, 1, 1], [], []>} : vector<4x32xf32>, vector<32x96xf32>, vector<4x96xf32> -> vector<4x96xf32>
    %19 = vector.broadcast %4 : vector<1x96xf32> to vector<4x96xf32>
    %20 = arith.addf %18, %19 : vector<4x96xf32>
    %21 = vector.extract_strided_slice %17 {offsets = [0, 0], sizes = [4, 32], strides = [1, 1]} : vector<4x96xf32> to vector<4x32xf32>
    %22 = vector.extract_strided_slice %20 {offsets = [0, 0], sizes = [4, 32], strides = [1, 1]} : vector<4x96xf32> to vector<4x32xf32>
    %23 = arith.addf %21, %22 : vector<4x32xf32>
    %24 = arith.negf %23 : vector<4x32xf32>
    %25 = math.exp %24 : vector<4x32xf32>
    %cst_21 = arith.constant 1.000000e+00 : f32
    %26 = vector.broadcast %cst_21 : f32 to vector<4x32xf32>
    %27 = arith.addf %26, %25 : vector<4x32xf32>
    %28 = arith.divf %26, %27 : vector<4x32xf32>
    %29 = vector.extract_strided_slice %17 {offsets = [0, 32], sizes = [4, 32], strides = [1, 1]} : vector<4x96xf32> to vector<4x32xf32>
    %30 = vector.extract_strided_slice %20 {offsets = [0, 32], sizes = [4, 32], strides = [1, 1]} : vector<4x96xf32> to vector<4x32xf32>
    %31 = arith.addf %29, %30 : vector<4x32xf32>
    %32 = arith.negf %31 : vector<4x32xf32>
    %33 = math.exp %32 : vector<4x32xf32>
    %cst_22 = arith.constant 1.000000e+00 : f32
    %34 = vector.broadcast %cst_22 : f32 to vector<4x32xf32>
    %35 = arith.addf %34, %33 : vector<4x32xf32>
    %36 = arith.divf %34, %35 : vector<4x32xf32>
    %37 = vector.extract_strided_slice %17 {offsets = [0, 64], sizes = [4, 32], strides = [1, 1]} : vector<4x96xf32> to vector<4x32xf32>
    %38 = vector.extract_strided_slice %20 {offsets = [0, 64], sizes = [4, 32], strides = [1, 1]} : vector<4x96xf32> to vector<4x32xf32>
    %39 = arith.mulf %28, %38 : vector<4x32xf32>
    %40 = arith.addf %37, %39 : vector<4x32xf32>
    %41 = math.tanh %40 : vector<4x32xf32>
    %cst_23 = arith.constant 1.000000e+00 : f32
    %42 = vector.broadcast %cst_23 : f32 to vector<4x32xf32>
    %43 = arith.subf %42, %36 : vector<4x32xf32>
    %44 = arith.mulf %43, %41 : vector<4x32xf32>
    %45 = arith.mulf %36, %15 : vector<4x32xf32>
    %46 = arith.addf %44, %45 : vector<4x32xf32>
    %47 = vector.extract_strided_slice %14 {offsets = [28, 0], sizes = [4, 96], strides = [1, 1]} : vector<32x96xf32> to vector<4x96xf32>
    %cst_24 = arith.constant dense<0.000000e+00> : vector<4x96xf32>
    %48 = tpu.matmul %16, %6, %cst_24 {dimension_numbers = #tpu.dot_dimension_numbers<[1], [0], [0], [1], [0, 0, 1, 1], [], []>} : vector<4x32xf32>, vector<32x96xf32>, vector<4x96xf32> -> vector<4x96xf32>
    %49 = vector.broadcast %8 : vector<1x96xf32> to vector<4x96xf32>
    %50 = arith.addf %48, %49 : vector<4x96xf32>
    %51 = vector.extract_strided_slice %47 {offsets = [0, 0], sizes = [4, 32], strides = [1, 1]} : vector<4x96xf32> to vector<4x32xf32>
    %52 = vector.extract_strided_slice %50 {offsets = [0, 0], sizes = [4, 32], strides = [1, 1]} : vector<4x96xf32> to vector<4x32xf32>
    %53 = arith.addf %51, %52 : vector<4x32xf32>
    %54 = arith.negf %53 : vector<4x32xf32>
    %55 = math.exp %54 : vector<4x32xf32>
    %cst_25 = arith.constant 1.000000e+00 : f32
    %56 = vector.broadcast %cst_25 : f32 to vector<4x32xf32>
    %57 = arith.addf %56, %55 : vector<4x32xf32>
    %58 = arith.divf %56, %57 : vector<4x32xf32>
    %59 = vector.extract_strided_slice %47 {offsets = [0, 32], sizes = [4, 32], strides = [1, 1]} : vector<4x96xf32> to vector<4x32xf32>
    %60 = vector.extract_strided_slice %50 {offsets = [0, 32], sizes = [4, 32], strides = [1, 1]} : vector<4x96xf32> to vector<4x32xf32>
    %61 = arith.addf %59, %60 : vector<4x32xf32>
    %62 = arith.negf %61 : vector<4x32xf32>
    %63 = math.exp %62 : vector<4x32xf32>
    %cst_26 = arith.constant 1.000000e+00 : f32
    %64 = vector.broadcast %cst_26 : f32 to vector<4x32xf32>
    %65 = arith.addf %64, %63 : vector<4x32xf32>
    %66 = arith.divf %64, %65 : vector<4x32xf32>
    %67 = vector.extract_strided_slice %47 {offsets = [0, 64], sizes = [4, 32], strides = [1, 1]} : vector<4x96xf32> to vector<4x32xf32>
    %68 = vector.extract_strided_slice %50 {offsets = [0, 64], sizes = [4, 32], strides = [1, 1]} : vector<4x96xf32> to vector<4x32xf32>
    %69 = arith.mulf %58, %68 : vector<4x32xf32>
    %70 = arith.addf %67, %69 : vector<4x32xf32>
    %71 = math.tanh %70 : vector<4x32xf32>
    %cst_27 = arith.constant 1.000000e+00 : f32
    %72 = vector.broadcast %cst_27 : f32 to vector<4x32xf32>
    %73 = arith.subf %72, %66 : vector<4x32xf32>
    %74 = arith.mulf %73, %71 : vector<4x32xf32>
    %75 = arith.mulf %66, %16 : vector<4x32xf32>
    %76 = arith.addf %74, %75 : vector<4x32xf32>
    %77 = vector.extract_strided_slice %11 {offsets = [4, 0], sizes = [4, 96], strides = [1, 1]} : vector<32x96xf32> to vector<4x96xf32>
    %cst_28 = arith.constant dense<0.000000e+00> : vector<4x96xf32>
    %78 = tpu.matmul %46, %2, %cst_28 {dimension_numbers = #tpu.dot_dimension_numbers<[1], [0], [0], [1], [0, 0, 1, 1], [], []>} : vector<4x32xf32>, vector<32x96xf32>, vector<4x96xf32> -> vector<4x96xf32>
    %79 = vector.broadcast %4 : vector<1x96xf32> to vector<4x96xf32>
    %80 = arith.addf %78, %79 : vector<4x96xf32>
    %81 = vector.extract_strided_slice %77 {offsets = [0, 0], sizes = [4, 32], strides = [1, 1]} : vector<4x96xf32> to vector<4x32xf32>
    %82 = vector.extract_strided_slice %80 {offsets = [0, 0], sizes = [4, 32], strides = [1, 1]} : vector<4x96xf32> to vector<4x32xf32>
    %83 = arith.addf %81, %82 : vector<4x32xf32>
    %84 = arith.negf %83 : vector<4x32xf32>
    %85 = math.exp %84 : vector<4x32xf32>
    %cst_29 = arith.constant 1.000000e+00 : f32
    %86 = vector.broadcast %cst_29 : f32 to vector<4x32xf32>
    %87 = arith.addf %86, %85 : vector<4x32xf32>
    %88 = arith.divf %86, %87 : vector<4x32xf32>
    %89 = vector.extract_strided_slice %77 {offsets = [0, 32], sizes = [4, 32], strides = [1, 1]} : vector<4x96xf32> to vector<4x32xf32>
    %90 = vector.extract_strided_slice %80 {offsets = [0, 32], sizes = [4, 32], strides = [1, 1]} : vector<4x96xf32> to vector<4x32xf32>
    %91 = arith.addf %89, %90 : vector<4x32xf32>
    %92 = arith.negf %91 : vector<4x32xf32>
    %93 = math.exp %92 : vector<4x32xf32>
    %cst_30 = arith.constant 1.000000e+00 : f32
    %94 = vector.broadcast %cst_30 : f32 to vector<4x32xf32>
    %95 = arith.addf %94, %93 : vector<4x32xf32>
    %96 = arith.divf %94, %95 : vector<4x32xf32>
    %97 = vector.extract_strided_slice %77 {offsets = [0, 64], sizes = [4, 32], strides = [1, 1]} : vector<4x96xf32> to vector<4x32xf32>
    %98 = vector.extract_strided_slice %80 {offsets = [0, 64], sizes = [4, 32], strides = [1, 1]} : vector<4x96xf32> to vector<4x32xf32>
    %99 = arith.mulf %88, %98 : vector<4x32xf32>
    %100 = arith.addf %97, %99 : vector<4x32xf32>
    %101 = math.tanh %100 : vector<4x32xf32>
    %cst_31 = arith.constant 1.000000e+00 : f32
    %102 = vector.broadcast %cst_31 : f32 to vector<4x32xf32>
    %103 = arith.subf %102, %96 : vector<4x32xf32>
    %104 = arith.mulf %103, %101 : vector<4x32xf32>
    %105 = arith.mulf %96, %46 : vector<4x32xf32>
    %106 = arith.addf %104, %105 : vector<4x32xf32>
    %107 = vector.extract_strided_slice %14 {offsets = [24, 0], sizes = [4, 96], strides = [1, 1]} : vector<32x96xf32> to vector<4x96xf32>
    %cst_32 = arith.constant dense<0.000000e+00> : vector<4x96xf32>
    %108 = tpu.matmul %76, %6, %cst_32 {dimension_numbers = #tpu.dot_dimension_numbers<[1], [0], [0], [1], [0, 0, 1, 1], [], []>} : vector<4x32xf32>, vector<32x96xf32>, vector<4x96xf32> -> vector<4x96xf32>
    %109 = vector.broadcast %8 : vector<1x96xf32> to vector<4x96xf32>
    %110 = arith.addf %108, %109 : vector<4x96xf32>
    %111 = vector.extract_strided_slice %107 {offsets = [0, 0], sizes = [4, 32], strides = [1, 1]} : vector<4x96xf32> to vector<4x32xf32>
    %112 = vector.extract_strided_slice %110 {offsets = [0, 0], sizes = [4, 32], strides = [1, 1]} : vector<4x96xf32> to vector<4x32xf32>
    %113 = arith.addf %111, %112 : vector<4x32xf32>
    %114 = arith.negf %113 : vector<4x32xf32>
    %115 = math.exp %114 : vector<4x32xf32>
    %cst_33 = arith.constant 1.000000e+00 : f32
    %116 = vector.broadcast %cst_33 : f32 to vector<4x32xf32>
    %117 = arith.addf %116, %115 : vector<4x32xf32>
    %118 = arith.divf %116, %117 : vector<4x32xf32>
    %119 = vector.extract_strided_slice %107 {offsets = [0, 32], sizes = [4, 32], strides = [1, 1]} : vector<4x96xf32> to vector<4x32xf32>
    %120 = vector.extract_strided_slice %110 {offsets = [0, 32], sizes = [4, 32], strides = [1, 1]} : vector<4x96xf32> to vector<4x32xf32>
    %121 = arith.addf %119, %120 : vector<4x32xf32>
    %122 = arith.negf %121 : vector<4x32xf32>
    %123 = math.exp %122 : vector<4x32xf32>
    %cst_34 = arith.constant 1.000000e+00 : f32
    %124 = vector.broadcast %cst_34 : f32 to vector<4x32xf32>
    %125 = arith.addf %124, %123 : vector<4x32xf32>
    %126 = arith.divf %124, %125 : vector<4x32xf32>
    %127 = vector.extract_strided_slice %107 {offsets = [0, 64], sizes = [4, 32], strides = [1, 1]} : vector<4x96xf32> to vector<4x32xf32>
    %128 = vector.extract_strided_slice %110 {offsets = [0, 64], sizes = [4, 32], strides = [1, 1]} : vector<4x96xf32> to vector<4x32xf32>
    %129 = arith.mulf %118, %128 : vector<4x32xf32>
    %130 = arith.addf %127, %129 : vector<4x32xf32>
    %131 = math.tanh %130 : vector<4x32xf32>
    %cst_35 = arith.constant 1.000000e+00 : f32
    %132 = vector.broadcast %cst_35 : f32 to vector<4x32xf32>
    %133 = arith.subf %132, %126 : vector<4x32xf32>
    %134 = arith.mulf %133, %131 : vector<4x32xf32>
    %135 = arith.mulf %126, %76 : vector<4x32xf32>
    %136 = arith.addf %134, %135 : vector<4x32xf32>
    %137 = vector.extract_strided_slice %11 {offsets = [8, 0], sizes = [4, 96], strides = [1, 1]} : vector<32x96xf32> to vector<4x96xf32>
    %cst_36 = arith.constant dense<0.000000e+00> : vector<4x96xf32>
    %138 = tpu.matmul %106, %2, %cst_36 {dimension_numbers = #tpu.dot_dimension_numbers<[1], [0], [0], [1], [0, 0, 1, 1], [], []>} : vector<4x32xf32>, vector<32x96xf32>, vector<4x96xf32> -> vector<4x96xf32>
    %139 = vector.broadcast %4 : vector<1x96xf32> to vector<4x96xf32>
    %140 = arith.addf %138, %139 : vector<4x96xf32>
    %141 = vector.extract_strided_slice %137 {offsets = [0, 0], sizes = [4, 32], strides = [1, 1]} : vector<4x96xf32> to vector<4x32xf32>
    %142 = vector.extract_strided_slice %140 {offsets = [0, 0], sizes = [4, 32], strides = [1, 1]} : vector<4x96xf32> to vector<4x32xf32>
    %143 = arith.addf %141, %142 : vector<4x32xf32>
    %144 = arith.negf %143 : vector<4x32xf32>
    %145 = math.exp %144 : vector<4x32xf32>
    %cst_37 = arith.constant 1.000000e+00 : f32
    %146 = vector.broadcast %cst_37 : f32 to vector<4x32xf32>
    %147 = arith.addf %146, %145 : vector<4x32xf32>
    %148 = arith.divf %146, %147 : vector<4x32xf32>
    %149 = vector.extract_strided_slice %137 {offsets = [0, 32], sizes = [4, 32], strides = [1, 1]} : vector<4x96xf32> to vector<4x32xf32>
    %150 = vector.extract_strided_slice %140 {offsets = [0, 32], sizes = [4, 32], strides = [1, 1]} : vector<4x96xf32> to vector<4x32xf32>
    %151 = arith.addf %149, %150 : vector<4x32xf32>
    %152 = arith.negf %151 : vector<4x32xf32>
    %153 = math.exp %152 : vector<4x32xf32>
    %cst_38 = arith.constant 1.000000e+00 : f32
    %154 = vector.broadcast %cst_38 : f32 to vector<4x32xf32>
    %155 = arith.addf %154, %153 : vector<4x32xf32>
    %156 = arith.divf %154, %155 : vector<4x32xf32>
    %157 = vector.extract_strided_slice %137 {offsets = [0, 64], sizes = [4, 32], strides = [1, 1]} : vector<4x96xf32> to vector<4x32xf32>
    %158 = vector.extract_strided_slice %140 {offsets = [0, 64], sizes = [4, 32], strides = [1, 1]} : vector<4x96xf32> to vector<4x32xf32>
    %159 = arith.mulf %148, %158 : vector<4x32xf32>
    %160 = arith.addf %157, %159 : vector<4x32xf32>
    %161 = math.tanh %160 : vector<4x32xf32>
    %cst_39 = arith.constant 1.000000e+00 : f32
    %162 = vector.broadcast %cst_39 : f32 to vector<4x32xf32>
    %163 = arith.subf %162, %156 : vector<4x32xf32>
    %164 = arith.mulf %163, %161 : vector<4x32xf32>
    %165 = arith.mulf %156, %106 : vector<4x32xf32>
    %166 = arith.addf %164, %165 : vector<4x32xf32>
    %167 = vector.extract_strided_slice %14 {offsets = [20, 0], sizes = [4, 96], strides = [1, 1]} : vector<32x96xf32> to vector<4x96xf32>
    %cst_40 = arith.constant dense<0.000000e+00> : vector<4x96xf32>
    %168 = tpu.matmul %136, %6, %cst_40 {dimension_numbers = #tpu.dot_dimension_numbers<[1], [0], [0], [1], [0, 0, 1, 1], [], []>} : vector<4x32xf32>, vector<32x96xf32>, vector<4x96xf32> -> vector<4x96xf32>
    %169 = vector.broadcast %8 : vector<1x96xf32> to vector<4x96xf32>
    %170 = arith.addf %168, %169 : vector<4x96xf32>
    %171 = vector.extract_strided_slice %167 {offsets = [0, 0], sizes = [4, 32], strides = [1, 1]} : vector<4x96xf32> to vector<4x32xf32>
    %172 = vector.extract_strided_slice %170 {offsets = [0, 0], sizes = [4, 32], strides = [1, 1]} : vector<4x96xf32> to vector<4x32xf32>
    %173 = arith.addf %171, %172 : vector<4x32xf32>
    %174 = arith.negf %173 : vector<4x32xf32>
    %175 = math.exp %174 : vector<4x32xf32>
    %cst_41 = arith.constant 1.000000e+00 : f32
    %176 = vector.broadcast %cst_41 : f32 to vector<4x32xf32>
    %177 = arith.addf %176, %175 : vector<4x32xf32>
    %178 = arith.divf %176, %177 : vector<4x32xf32>
    %179 = vector.extract_strided_slice %167 {offsets = [0, 32], sizes = [4, 32], strides = [1, 1]} : vector<4x96xf32> to vector<4x32xf32>
    %180 = vector.extract_strided_slice %170 {offsets = [0, 32], sizes = [4, 32], strides = [1, 1]} : vector<4x96xf32> to vector<4x32xf32>
    %181 = arith.addf %179, %180 : vector<4x32xf32>
    %182 = arith.negf %181 : vector<4x32xf32>
    %183 = math.exp %182 : vector<4x32xf32>
    %cst_42 = arith.constant 1.000000e+00 : f32
    %184 = vector.broadcast %cst_42 : f32 to vector<4x32xf32>
    %185 = arith.addf %184, %183 : vector<4x32xf32>
    %186 = arith.divf %184, %185 : vector<4x32xf32>
    %187 = vector.extract_strided_slice %167 {offsets = [0, 64], sizes = [4, 32], strides = [1, 1]} : vector<4x96xf32> to vector<4x32xf32>
    %188 = vector.extract_strided_slice %170 {offsets = [0, 64], sizes = [4, 32], strides = [1, 1]} : vector<4x96xf32> to vector<4x32xf32>
    %189 = arith.mulf %178, %188 : vector<4x32xf32>
    %190 = arith.addf %187, %189 : vector<4x32xf32>
    %191 = math.tanh %190 : vector<4x32xf32>
    %cst_43 = arith.constant 1.000000e+00 : f32
    %192 = vector.broadcast %cst_43 : f32 to vector<4x32xf32>
    %193 = arith.subf %192, %186 : vector<4x32xf32>
    %194 = arith.mulf %193, %191 : vector<4x32xf32>
    %195 = arith.mulf %186, %136 : vector<4x32xf32>
    %196 = arith.addf %194, %195 : vector<4x32xf32>
    %197 = vector.extract_strided_slice %11 {offsets = [12, 0], sizes = [4, 96], strides = [1, 1]} : vector<32x96xf32> to vector<4x96xf32>
    %cst_44 = arith.constant dense<0.000000e+00> : vector<4x96xf32>
    %198 = tpu.matmul %166, %2, %cst_44 {dimension_numbers = #tpu.dot_dimension_numbers<[1], [0], [0], [1], [0, 0, 1, 1], [], []>} : vector<4x32xf32>, vector<32x96xf32>, vector<4x96xf32> -> vector<4x96xf32>
    %199 = vector.broadcast %4 : vector<1x96xf32> to vector<4x96xf32>
    %200 = arith.addf %198, %199 : vector<4x96xf32>
    %201 = vector.extract_strided_slice %197 {offsets = [0, 0], sizes = [4, 32], strides = [1, 1]} : vector<4x96xf32> to vector<4x32xf32>
    %202 = vector.extract_strided_slice %200 {offsets = [0, 0], sizes = [4, 32], strides = [1, 1]} : vector<4x96xf32> to vector<4x32xf32>
    %203 = arith.addf %201, %202 : vector<4x32xf32>
    %204 = arith.negf %203 : vector<4x32xf32>
    %205 = math.exp %204 : vector<4x32xf32>
    %cst_45 = arith.constant 1.000000e+00 : f32
    %206 = vector.broadcast %cst_45 : f32 to vector<4x32xf32>
    %207 = arith.addf %206, %205 : vector<4x32xf32>
    %208 = arith.divf %206, %207 : vector<4x32xf32>
    %209 = vector.extract_strided_slice %197 {offsets = [0, 32], sizes = [4, 32], strides = [1, 1]} : vector<4x96xf32> to vector<4x32xf32>
    %210 = vector.extract_strided_slice %200 {offsets = [0, 32], sizes = [4, 32], strides = [1, 1]} : vector<4x96xf32> to vector<4x32xf32>
    %211 = arith.addf %209, %210 : vector<4x32xf32>
    %212 = arith.negf %211 : vector<4x32xf32>
    %213 = math.exp %212 : vector<4x32xf32>
    %cst_46 = arith.constant 1.000000e+00 : f32
    %214 = vector.broadcast %cst_46 : f32 to vector<4x32xf32>
    %215 = arith.addf %214, %213 : vector<4x32xf32>
    %216 = arith.divf %214, %215 : vector<4x32xf32>
    %217 = vector.extract_strided_slice %197 {offsets = [0, 64], sizes = [4, 32], strides = [1, 1]} : vector<4x96xf32> to vector<4x32xf32>
    %218 = vector.extract_strided_slice %200 {offsets = [0, 64], sizes = [4, 32], strides = [1, 1]} : vector<4x96xf32> to vector<4x32xf32>
    %219 = arith.mulf %208, %218 : vector<4x32xf32>
    %220 = arith.addf %217, %219 : vector<4x32xf32>
    %221 = math.tanh %220 : vector<4x32xf32>
    %cst_47 = arith.constant 1.000000e+00 : f32
    %222 = vector.broadcast %cst_47 : f32 to vector<4x32xf32>
    %223 = arith.subf %222, %216 : vector<4x32xf32>
    %224 = arith.mulf %223, %221 : vector<4x32xf32>
    %225 = arith.mulf %216, %166 : vector<4x32xf32>
    %226 = arith.addf %224, %225 : vector<4x32xf32>
    %227 = vector.extract_strided_slice %14 {offsets = [16, 0], sizes = [4, 96], strides = [1, 1]} : vector<32x96xf32> to vector<4x96xf32>
    %cst_48 = arith.constant dense<0.000000e+00> : vector<4x96xf32>
    %228 = tpu.matmul %196, %6, %cst_48 {dimension_numbers = #tpu.dot_dimension_numbers<[1], [0], [0], [1], [0, 0, 1, 1], [], []>} : vector<4x32xf32>, vector<32x96xf32>, vector<4x96xf32> -> vector<4x96xf32>
    %229 = vector.broadcast %8 : vector<1x96xf32> to vector<4x96xf32>
    %230 = arith.addf %228, %229 : vector<4x96xf32>
    %231 = vector.extract_strided_slice %227 {offsets = [0, 0], sizes = [4, 32], strides = [1, 1]} : vector<4x96xf32> to vector<4x32xf32>
    %232 = vector.extract_strided_slice %230 {offsets = [0, 0], sizes = [4, 32], strides = [1, 1]} : vector<4x96xf32> to vector<4x32xf32>
    %233 = arith.addf %231, %232 : vector<4x32xf32>
    %234 = arith.negf %233 : vector<4x32xf32>
    %235 = math.exp %234 : vector<4x32xf32>
    %cst_49 = arith.constant 1.000000e+00 : f32
    %236 = vector.broadcast %cst_49 : f32 to vector<4x32xf32>
    %237 = arith.addf %236, %235 : vector<4x32xf32>
    %238 = arith.divf %236, %237 : vector<4x32xf32>
    %239 = vector.extract_strided_slice %227 {offsets = [0, 32], sizes = [4, 32], strides = [1, 1]} : vector<4x96xf32> to vector<4x32xf32>
    %240 = vector.extract_strided_slice %230 {offsets = [0, 32], sizes = [4, 32], strides = [1, 1]} : vector<4x96xf32> to vector<4x32xf32>
    %241 = arith.addf %239, %240 : vector<4x32xf32>
    %242 = arith.negf %241 : vector<4x32xf32>
    %243 = math.exp %242 : vector<4x32xf32>
    %cst_50 = arith.constant 1.000000e+00 : f32
    %244 = vector.broadcast %cst_50 : f32 to vector<4x32xf32>
    %245 = arith.addf %244, %243 : vector<4x32xf32>
    %246 = arith.divf %244, %245 : vector<4x32xf32>
    %247 = vector.extract_strided_slice %227 {offsets = [0, 64], sizes = [4, 32], strides = [1, 1]} : vector<4x96xf32> to vector<4x32xf32>
    %248 = vector.extract_strided_slice %230 {offsets = [0, 64], sizes = [4, 32], strides = [1, 1]} : vector<4x96xf32> to vector<4x32xf32>
    %249 = arith.mulf %238, %248 : vector<4x32xf32>
    %250 = arith.addf %247, %249 : vector<4x32xf32>
    %251 = math.tanh %250 : vector<4x32xf32>
    %cst_51 = arith.constant 1.000000e+00 : f32
    %252 = vector.broadcast %cst_51 : f32 to vector<4x32xf32>
    %253 = arith.subf %252, %246 : vector<4x32xf32>
    %254 = arith.mulf %253, %251 : vector<4x32xf32>
    %255 = arith.mulf %246, %196 : vector<4x32xf32>
    %256 = arith.addf %254, %255 : vector<4x32xf32>
    %257 = vector.extract_strided_slice %11 {offsets = [16, 0], sizes = [4, 96], strides = [1, 1]} : vector<32x96xf32> to vector<4x96xf32>
    %cst_52 = arith.constant dense<0.000000e+00> : vector<4x96xf32>
    %258 = tpu.matmul %226, %2, %cst_52 {dimension_numbers = #tpu.dot_dimension_numbers<[1], [0], [0], [1], [0, 0, 1, 1], [], []>} : vector<4x32xf32>, vector<32x96xf32>, vector<4x96xf32> -> vector<4x96xf32>
    %259 = vector.broadcast %4 : vector<1x96xf32> to vector<4x96xf32>
    %260 = arith.addf %258, %259 : vector<4x96xf32>
    %261 = vector.extract_strided_slice %257 {offsets = [0, 0], sizes = [4, 32], strides = [1, 1]} : vector<4x96xf32> to vector<4x32xf32>
    %262 = vector.extract_strided_slice %260 {offsets = [0, 0], sizes = [4, 32], strides = [1, 1]} : vector<4x96xf32> to vector<4x32xf32>
    %263 = arith.addf %261, %262 : vector<4x32xf32>
    %264 = arith.negf %263 : vector<4x32xf32>
    %265 = math.exp %264 : vector<4x32xf32>
    %cst_53 = arith.constant 1.000000e+00 : f32
    %266 = vector.broadcast %cst_53 : f32 to vector<4x32xf32>
    %267 = arith.addf %266, %265 : vector<4x32xf32>
    %268 = arith.divf %266, %267 : vector<4x32xf32>
    %269 = vector.extract_strided_slice %257 {offsets = [0, 32], sizes = [4, 32], strides = [1, 1]} : vector<4x96xf32> to vector<4x32xf32>
    %270 = vector.extract_strided_slice %260 {offsets = [0, 32], sizes = [4, 32], strides = [1, 1]} : vector<4x96xf32> to vector<4x32xf32>
    %271 = arith.addf %269, %270 : vector<4x32xf32>
    %272 = arith.negf %271 : vector<4x32xf32>
    %273 = math.exp %272 : vector<4x32xf32>
    %cst_54 = arith.constant 1.000000e+00 : f32
    %274 = vector.broadcast %cst_54 : f32 to vector<4x32xf32>
    %275 = arith.addf %274, %273 : vector<4x32xf32>
    %276 = arith.divf %274, %275 : vector<4x32xf32>
    %277 = vector.extract_strided_slice %257 {offsets = [0, 64], sizes = [4, 32], strides = [1, 1]} : vector<4x96xf32> to vector<4x32xf32>
    %278 = vector.extract_strided_slice %260 {offsets = [0, 64], sizes = [4, 32], strides = [1, 1]} : vector<4x96xf32> to vector<4x32xf32>
    %279 = arith.mulf %268, %278 : vector<4x32xf32>
    %280 = arith.addf %277, %279 : vector<4x32xf32>
    %281 = math.tanh %280 : vector<4x32xf32>
    %cst_55 = arith.constant 1.000000e+00 : f32
    %282 = vector.broadcast %cst_55 : f32 to vector<4x32xf32>
    %283 = arith.subf %282, %276 : vector<4x32xf32>
    %284 = arith.mulf %283, %281 : vector<4x32xf32>
    %285 = arith.mulf %276, %226 : vector<4x32xf32>
    %286 = arith.addf %284, %285 : vector<4x32xf32>
    %287 = vector.extract_strided_slice %14 {offsets = [12, 0], sizes = [4, 96], strides = [1, 1]} : vector<32x96xf32> to vector<4x96xf32>
    %cst_56 = arith.constant dense<0.000000e+00> : vector<4x96xf32>
    %288 = tpu.matmul %256, %6, %cst_56 {dimension_numbers = #tpu.dot_dimension_numbers<[1], [0], [0], [1], [0, 0, 1, 1], [], []>} : vector<4x32xf32>, vector<32x96xf32>, vector<4x96xf32> -> vector<4x96xf32>
    %289 = vector.broadcast %8 : vector<1x96xf32> to vector<4x96xf32>
    %290 = arith.addf %288, %289 : vector<4x96xf32>
    %291 = vector.extract_strided_slice %287 {offsets = [0, 0], sizes = [4, 32], strides = [1, 1]} : vector<4x96xf32> to vector<4x32xf32>
    %292 = vector.extract_strided_slice %290 {offsets = [0, 0], sizes = [4, 32], strides = [1, 1]} : vector<4x96xf32> to vector<4x32xf32>
    %293 = arith.addf %291, %292 : vector<4x32xf32>
    %294 = arith.negf %293 : vector<4x32xf32>
    %295 = math.exp %294 : vector<4x32xf32>
    %cst_57 = arith.constant 1.000000e+00 : f32
    %296 = vector.broadcast %cst_57 : f32 to vector<4x32xf32>
    %297 = arith.addf %296, %295 : vector<4x32xf32>
    %298 = arith.divf %296, %297 : vector<4x32xf32>
    %299 = vector.extract_strided_slice %287 {offsets = [0, 32], sizes = [4, 32], strides = [1, 1]} : vector<4x96xf32> to vector<4x32xf32>
    %300 = vector.extract_strided_slice %290 {offsets = [0, 32], sizes = [4, 32], strides = [1, 1]} : vector<4x96xf32> to vector<4x32xf32>
    %301 = arith.addf %299, %300 : vector<4x32xf32>
    %302 = arith.negf %301 : vector<4x32xf32>
    %303 = math.exp %302 : vector<4x32xf32>
    %cst_58 = arith.constant 1.000000e+00 : f32
    %304 = vector.broadcast %cst_58 : f32 to vector<4x32xf32>
    %305 = arith.addf %304, %303 : vector<4x32xf32>
    %306 = arith.divf %304, %305 : vector<4x32xf32>
    %307 = vector.extract_strided_slice %287 {offsets = [0, 64], sizes = [4, 32], strides = [1, 1]} : vector<4x96xf32> to vector<4x32xf32>
    %308 = vector.extract_strided_slice %290 {offsets = [0, 64], sizes = [4, 32], strides = [1, 1]} : vector<4x96xf32> to vector<4x32xf32>
    %309 = arith.mulf %298, %308 : vector<4x32xf32>
    %310 = arith.addf %307, %309 : vector<4x32xf32>
    %311 = math.tanh %310 : vector<4x32xf32>
    %cst_59 = arith.constant 1.000000e+00 : f32
    %312 = vector.broadcast %cst_59 : f32 to vector<4x32xf32>
    %313 = arith.subf %312, %306 : vector<4x32xf32>
    %314 = arith.mulf %313, %311 : vector<4x32xf32>
    %315 = arith.mulf %306, %256 : vector<4x32xf32>
    %316 = arith.addf %314, %315 : vector<4x32xf32>
    %317 = vector.extract_strided_slice %11 {offsets = [20, 0], sizes = [4, 96], strides = [1, 1]} : vector<32x96xf32> to vector<4x96xf32>
    %cst_60 = arith.constant dense<0.000000e+00> : vector<4x96xf32>
    %318 = tpu.matmul %286, %2, %cst_60 {dimension_numbers = #tpu.dot_dimension_numbers<[1], [0], [0], [1], [0, 0, 1, 1], [], []>} : vector<4x32xf32>, vector<32x96xf32>, vector<4x96xf32> -> vector<4x96xf32>
    %319 = vector.broadcast %4 : vector<1x96xf32> to vector<4x96xf32>
    %320 = arith.addf %318, %319 : vector<4x96xf32>
    %321 = vector.extract_strided_slice %317 {offsets = [0, 0], sizes = [4, 32], strides = [1, 1]} : vector<4x96xf32> to vector<4x32xf32>
    %322 = vector.extract_strided_slice %320 {offsets = [0, 0], sizes = [4, 32], strides = [1, 1]} : vector<4x96xf32> to vector<4x32xf32>
    %323 = arith.addf %321, %322 : vector<4x32xf32>
    %324 = arith.negf %323 : vector<4x32xf32>
    %325 = math.exp %324 : vector<4x32xf32>
    %cst_61 = arith.constant 1.000000e+00 : f32
    %326 = vector.broadcast %cst_61 : f32 to vector<4x32xf32>
    %327 = arith.addf %326, %325 : vector<4x32xf32>
    %328 = arith.divf %326, %327 : vector<4x32xf32>
    %329 = vector.extract_strided_slice %317 {offsets = [0, 32], sizes = [4, 32], strides = [1, 1]} : vector<4x96xf32> to vector<4x32xf32>
    %330 = vector.extract_strided_slice %320 {offsets = [0, 32], sizes = [4, 32], strides = [1, 1]} : vector<4x96xf32> to vector<4x32xf32>
    %331 = arith.addf %329, %330 : vector<4x32xf32>
    %332 = arith.negf %331 : vector<4x32xf32>
    %333 = math.exp %332 : vector<4x32xf32>
    %cst_62 = arith.constant 1.000000e+00 : f32
    %334 = vector.broadcast %cst_62 : f32 to vector<4x32xf32>
    %335 = arith.addf %334, %333 : vector<4x32xf32>
    %336 = arith.divf %334, %335 : vector<4x32xf32>
    %337 = vector.extract_strided_slice %317 {offsets = [0, 64], sizes = [4, 32], strides = [1, 1]} : vector<4x96xf32> to vector<4x32xf32>
    %338 = vector.extract_strided_slice %320 {offsets = [0, 64], sizes = [4, 32], strides = [1, 1]} : vector<4x96xf32> to vector<4x32xf32>
    %339 = arith.mulf %328, %338 : vector<4x32xf32>
    %340 = arith.addf %337, %339 : vector<4x32xf32>
    %341 = math.tanh %340 : vector<4x32xf32>
    %cst_63 = arith.constant 1.000000e+00 : f32
    %342 = vector.broadcast %cst_63 : f32 to vector<4x32xf32>
    %343 = arith.subf %342, %336 : vector<4x32xf32>
    %344 = arith.mulf %343, %341 : vector<4x32xf32>
    %345 = arith.mulf %336, %286 : vector<4x32xf32>
    %346 = arith.addf %344, %345 : vector<4x32xf32>
    %347 = vector.extract_strided_slice %14 {offsets = [8, 0], sizes = [4, 96], strides = [1, 1]} : vector<32x96xf32> to vector<4x96xf32>
    %cst_64 = arith.constant dense<0.000000e+00> : vector<4x96xf32>
    %348 = tpu.matmul %316, %6, %cst_64 {dimension_numbers = #tpu.dot_dimension_numbers<[1], [0], [0], [1], [0, 0, 1, 1], [], []>} : vector<4x32xf32>, vector<32x96xf32>, vector<4x96xf32> -> vector<4x96xf32>
    %349 = vector.broadcast %8 : vector<1x96xf32> to vector<4x96xf32>
    %350 = arith.addf %348, %349 : vector<4x96xf32>
    %351 = vector.extract_strided_slice %347 {offsets = [0, 0], sizes = [4, 32], strides = [1, 1]} : vector<4x96xf32> to vector<4x32xf32>
    %352 = vector.extract_strided_slice %350 {offsets = [0, 0], sizes = [4, 32], strides = [1, 1]} : vector<4x96xf32> to vector<4x32xf32>
    %353 = arith.addf %351, %352 : vector<4x32xf32>
    %354 = arith.negf %353 : vector<4x32xf32>
    %355 = math.exp %354 : vector<4x32xf32>
    %cst_65 = arith.constant 1.000000e+00 : f32
    %356 = vector.broadcast %cst_65 : f32 to vector<4x32xf32>
    %357 = arith.addf %356, %355 : vector<4x32xf32>
    %358 = arith.divf %356, %357 : vector<4x32xf32>
    %359 = vector.extract_strided_slice %347 {offsets = [0, 32], sizes = [4, 32], strides = [1, 1]} : vector<4x96xf32> to vector<4x32xf32>
    %360 = vector.extract_strided_slice %350 {offsets = [0, 32], sizes = [4, 32], strides = [1, 1]} : vector<4x96xf32> to vector<4x32xf32>
    %361 = arith.addf %359, %360 : vector<4x32xf32>
    %362 = arith.negf %361 : vector<4x32xf32>
    %363 = math.exp %362 : vector<4x32xf32>
    %cst_66 = arith.constant 1.000000e+00 : f32
    %364 = vector.broadcast %cst_66 : f32 to vector<4x32xf32>
    %365 = arith.addf %364, %363 : vector<4x32xf32>
    %366 = arith.divf %364, %365 : vector<4x32xf32>
    %367 = vector.extract_strided_slice %347 {offsets = [0, 64], sizes = [4, 32], strides = [1, 1]} : vector<4x96xf32> to vector<4x32xf32>
    %368 = vector.extract_strided_slice %350 {offsets = [0, 64], sizes = [4, 32], strides = [1, 1]} : vector<4x96xf32> to vector<4x32xf32>
    %369 = arith.mulf %358, %368 : vector<4x32xf32>
    %370 = arith.addf %367, %369 : vector<4x32xf32>
    %371 = math.tanh %370 : vector<4x32xf32>
    %cst_67 = arith.constant 1.000000e+00 : f32
    %372 = vector.broadcast %cst_67 : f32 to vector<4x32xf32>
    %373 = arith.subf %372, %366 : vector<4x32xf32>
    %374 = arith.mulf %373, %371 : vector<4x32xf32>
    %375 = arith.mulf %366, %316 : vector<4x32xf32>
    %376 = arith.addf %374, %375 : vector<4x32xf32>
    %377 = vector.extract_strided_slice %11 {offsets = [24, 0], sizes = [4, 96], strides = [1, 1]} : vector<32x96xf32> to vector<4x96xf32>
    %cst_68 = arith.constant dense<0.000000e+00> : vector<4x96xf32>
    %378 = tpu.matmul %346, %2, %cst_68 {dimension_numbers = #tpu.dot_dimension_numbers<[1], [0], [0], [1], [0, 0, 1, 1], [], []>} : vector<4x32xf32>, vector<32x96xf32>, vector<4x96xf32> -> vector<4x96xf32>
    %379 = vector.broadcast %4 : vector<1x96xf32> to vector<4x96xf32>
    %380 = arith.addf %378, %379 : vector<4x96xf32>
    %381 = vector.extract_strided_slice %377 {offsets = [0, 0], sizes = [4, 32], strides = [1, 1]} : vector<4x96xf32> to vector<4x32xf32>
    %382 = vector.extract_strided_slice %380 {offsets = [0, 0], sizes = [4, 32], strides = [1, 1]} : vector<4x96xf32> to vector<4x32xf32>
    %383 = arith.addf %381, %382 : vector<4x32xf32>
    %384 = arith.negf %383 : vector<4x32xf32>
    %385 = math.exp %384 : vector<4x32xf32>
    %cst_69 = arith.constant 1.000000e+00 : f32
    %386 = vector.broadcast %cst_69 : f32 to vector<4x32xf32>
    %387 = arith.addf %386, %385 : vector<4x32xf32>
    %388 = arith.divf %386, %387 : vector<4x32xf32>
    %389 = vector.extract_strided_slice %377 {offsets = [0, 32], sizes = [4, 32], strides = [1, 1]} : vector<4x96xf32> to vector<4x32xf32>
    %390 = vector.extract_strided_slice %380 {offsets = [0, 32], sizes = [4, 32], strides = [1, 1]} : vector<4x96xf32> to vector<4x32xf32>
    %391 = arith.addf %389, %390 : vector<4x32xf32>
    %392 = arith.negf %391 : vector<4x32xf32>
    %393 = math.exp %392 : vector<4x32xf32>
    %cst_70 = arith.constant 1.000000e+00 : f32
    %394 = vector.broadcast %cst_70 : f32 to vector<4x32xf32>
    %395 = arith.addf %394, %393 : vector<4x32xf32>
    %396 = arith.divf %394, %395 : vector<4x32xf32>
    %397 = vector.extract_strided_slice %377 {offsets = [0, 64], sizes = [4, 32], strides = [1, 1]} : vector<4x96xf32> to vector<4x32xf32>
    %398 = vector.extract_strided_slice %380 {offsets = [0, 64], sizes = [4, 32], strides = [1, 1]} : vector<4x96xf32> to vector<4x32xf32>
    %399 = arith.mulf %388, %398 : vector<4x32xf32>
    %400 = arith.addf %397, %399 : vector<4x32xf32>
    %401 = math.tanh %400 : vector<4x32xf32>
    %cst_71 = arith.constant 1.000000e+00 : f32
    %402 = vector.broadcast %cst_71 : f32 to vector<4x32xf32>
    %403 = arith.subf %402, %396 : vector<4x32xf32>
    %404 = arith.mulf %403, %401 : vector<4x32xf32>
    %405 = arith.mulf %396, %346 : vector<4x32xf32>
    %406 = arith.addf %404, %405 : vector<4x32xf32>
    %407 = vector.extract_strided_slice %14 {offsets = [4, 0], sizes = [4, 96], strides = [1, 1]} : vector<32x96xf32> to vector<4x96xf32>
    %cst_72 = arith.constant dense<0.000000e+00> : vector<4x96xf32>
    %408 = tpu.matmul %376, %6, %cst_72 {dimension_numbers = #tpu.dot_dimension_numbers<[1], [0], [0], [1], [0, 0, 1, 1], [], []>} : vector<4x32xf32>, vector<32x96xf32>, vector<4x96xf32> -> vector<4x96xf32>
    %409 = vector.broadcast %8 : vector<1x96xf32> to vector<4x96xf32>
    %410 = arith.addf %408, %409 : vector<4x96xf32>
    %411 = vector.extract_strided_slice %407 {offsets = [0, 0], sizes = [4, 32], strides = [1, 1]} : vector<4x96xf32> to vector<4x32xf32>
    %412 = vector.extract_strided_slice %410 {offsets = [0, 0], sizes = [4, 32], strides = [1, 1]} : vector<4x96xf32> to vector<4x32xf32>
    %413 = arith.addf %411, %412 : vector<4x32xf32>
    %414 = arith.negf %413 : vector<4x32xf32>
    %415 = math.exp %414 : vector<4x32xf32>
    %cst_73 = arith.constant 1.000000e+00 : f32
    %416 = vector.broadcast %cst_73 : f32 to vector<4x32xf32>
    %417 = arith.addf %416, %415 : vector<4x32xf32>
    %418 = arith.divf %416, %417 : vector<4x32xf32>
    %419 = vector.extract_strided_slice %407 {offsets = [0, 32], sizes = [4, 32], strides = [1, 1]} : vector<4x96xf32> to vector<4x32xf32>
    %420 = vector.extract_strided_slice %410 {offsets = [0, 32], sizes = [4, 32], strides = [1, 1]} : vector<4x96xf32> to vector<4x32xf32>
    %421 = arith.addf %419, %420 : vector<4x32xf32>
    %422 = arith.negf %421 : vector<4x32xf32>
    %423 = math.exp %422 : vector<4x32xf32>
    %cst_74 = arith.constant 1.000000e+00 : f32
    %424 = vector.broadcast %cst_74 : f32 to vector<4x32xf32>
    %425 = arith.addf %424, %423 : vector<4x32xf32>
    %426 = arith.divf %424, %425 : vector<4x32xf32>
    %427 = vector.extract_strided_slice %407 {offsets = [0, 64], sizes = [4, 32], strides = [1, 1]} : vector<4x96xf32> to vector<4x32xf32>
    %428 = vector.extract_strided_slice %410 {offsets = [0, 64], sizes = [4, 32], strides = [1, 1]} : vector<4x96xf32> to vector<4x32xf32>
    %429 = arith.mulf %418, %428 : vector<4x32xf32>
    %430 = arith.addf %427, %429 : vector<4x32xf32>
    %431 = math.tanh %430 : vector<4x32xf32>
    %cst_75 = arith.constant 1.000000e+00 : f32
    %432 = vector.broadcast %cst_75 : f32 to vector<4x32xf32>
    %433 = arith.subf %432, %426 : vector<4x32xf32>
    %434 = arith.mulf %433, %431 : vector<4x32xf32>
    %435 = arith.mulf %426, %376 : vector<4x32xf32>
    %436 = arith.addf %434, %435 : vector<4x32xf32>
    %437 = vector.extract_strided_slice %11 {offsets = [28, 0], sizes = [4, 96], strides = [1, 1]} : vector<32x96xf32> to vector<4x96xf32>
    %cst_76 = arith.constant dense<0.000000e+00> : vector<4x96xf32>
    %438 = tpu.matmul %406, %2, %cst_76 {dimension_numbers = #tpu.dot_dimension_numbers<[1], [0], [0], [1], [0, 0, 1, 1], [], []>} : vector<4x32xf32>, vector<32x96xf32>, vector<4x96xf32> -> vector<4x96xf32>
    %439 = vector.broadcast %4 : vector<1x96xf32> to vector<4x96xf32>
    %440 = arith.addf %438, %439 : vector<4x96xf32>
    %441 = vector.extract_strided_slice %437 {offsets = [0, 0], sizes = [4, 32], strides = [1, 1]} : vector<4x96xf32> to vector<4x32xf32>
    %442 = vector.extract_strided_slice %440 {offsets = [0, 0], sizes = [4, 32], strides = [1, 1]} : vector<4x96xf32> to vector<4x32xf32>
    %443 = arith.addf %441, %442 : vector<4x32xf32>
    %444 = arith.negf %443 : vector<4x32xf32>
    %445 = math.exp %444 : vector<4x32xf32>
    %cst_77 = arith.constant 1.000000e+00 : f32
    %446 = vector.broadcast %cst_77 : f32 to vector<4x32xf32>
    %447 = arith.addf %446, %445 : vector<4x32xf32>
    %448 = arith.divf %446, %447 : vector<4x32xf32>
    %449 = vector.extract_strided_slice %437 {offsets = [0, 32], sizes = [4, 32], strides = [1, 1]} : vector<4x96xf32> to vector<4x32xf32>
    %450 = vector.extract_strided_slice %440 {offsets = [0, 32], sizes = [4, 32], strides = [1, 1]} : vector<4x96xf32> to vector<4x32xf32>
    %451 = arith.addf %449, %450 : vector<4x32xf32>
    %452 = arith.negf %451 : vector<4x32xf32>
    %453 = math.exp %452 : vector<4x32xf32>
    %cst_78 = arith.constant 1.000000e+00 : f32
    %454 = vector.broadcast %cst_78 : f32 to vector<4x32xf32>
    %455 = arith.addf %454, %453 : vector<4x32xf32>
    %456 = arith.divf %454, %455 : vector<4x32xf32>
    %457 = vector.extract_strided_slice %437 {offsets = [0, 64], sizes = [4, 32], strides = [1, 1]} : vector<4x96xf32> to vector<4x32xf32>
    %458 = vector.extract_strided_slice %440 {offsets = [0, 64], sizes = [4, 32], strides = [1, 1]} : vector<4x96xf32> to vector<4x32xf32>
    %459 = arith.mulf %448, %458 : vector<4x32xf32>
    %460 = arith.addf %457, %459 : vector<4x32xf32>
    %461 = math.tanh %460 : vector<4x32xf32>
    %cst_79 = arith.constant 1.000000e+00 : f32
    %462 = vector.broadcast %cst_79 : f32 to vector<4x32xf32>
    %463 = arith.subf %462, %456 : vector<4x32xf32>
    %464 = arith.mulf %463, %461 : vector<4x32xf32>
    %465 = arith.mulf %456, %406 : vector<4x32xf32>
    %466 = arith.addf %464, %465 : vector<4x32xf32>
    %467 = vector.extract_strided_slice %14 {offsets = [0, 0], sizes = [4, 96], strides = [1, 1]} : vector<32x96xf32> to vector<4x96xf32>
    %cst_80 = arith.constant dense<0.000000e+00> : vector<4x96xf32>
    %468 = tpu.matmul %436, %6, %cst_80 {dimension_numbers = #tpu.dot_dimension_numbers<[1], [0], [0], [1], [0, 0, 1, 1], [], []>} : vector<4x32xf32>, vector<32x96xf32>, vector<4x96xf32> -> vector<4x96xf32>
    %469 = vector.broadcast %8 : vector<1x96xf32> to vector<4x96xf32>
    %470 = arith.addf %468, %469 : vector<4x96xf32>
    %471 = vector.extract_strided_slice %467 {offsets = [0, 0], sizes = [4, 32], strides = [1, 1]} : vector<4x96xf32> to vector<4x32xf32>
    %472 = vector.extract_strided_slice %470 {offsets = [0, 0], sizes = [4, 32], strides = [1, 1]} : vector<4x96xf32> to vector<4x32xf32>
    %473 = arith.addf %471, %472 : vector<4x32xf32>
    %474 = arith.negf %473 : vector<4x32xf32>
    %475 = math.exp %474 : vector<4x32xf32>
    %cst_81 = arith.constant 1.000000e+00 : f32
    %476 = vector.broadcast %cst_81 : f32 to vector<4x32xf32>
    %477 = arith.addf %476, %475 : vector<4x32xf32>
    %478 = arith.divf %476, %477 : vector<4x32xf32>
    %479 = vector.extract_strided_slice %467 {offsets = [0, 32], sizes = [4, 32], strides = [1, 1]} : vector<4x96xf32> to vector<4x32xf32>
    %480 = vector.extract_strided_slice %470 {offsets = [0, 32], sizes = [4, 32], strides = [1, 1]} : vector<4x96xf32> to vector<4x32xf32>
    %481 = arith.addf %479, %480 : vector<4x32xf32>
    %482 = arith.negf %481 : vector<4x32xf32>
    %483 = math.exp %482 : vector<4x32xf32>
    %cst_82 = arith.constant 1.000000e+00 : f32
    %484 = vector.broadcast %cst_82 : f32 to vector<4x32xf32>
    %485 = arith.addf %484, %483 : vector<4x32xf32>
    %486 = arith.divf %484, %485 : vector<4x32xf32>
    %487 = vector.extract_strided_slice %467 {offsets = [0, 64], sizes = [4, 32], strides = [1, 1]} : vector<4x96xf32> to vector<4x32xf32>
    %488 = vector.extract_strided_slice %470 {offsets = [0, 64], sizes = [4, 32], strides = [1, 1]} : vector<4x96xf32> to vector<4x32xf32>
    %489 = arith.mulf %478, %488 : vector<4x32xf32>
    %490 = arith.addf %487, %489 : vector<4x32xf32>
    %491 = math.tanh %490 : vector<4x32xf32>
    %cst_83 = arith.constant 1.000000e+00 : f32
    %492 = vector.broadcast %cst_83 : f32 to vector<4x32xf32>
    %493 = arith.subf %492, %486 : vector<4x32xf32>
    %494 = arith.mulf %493, %491 : vector<4x32xf32>
    %495 = arith.mulf %486, %436 : vector<4x32xf32>
    %496 = arith.addf %494, %495 : vector<4x32xf32>
    %497 = tpu.concatenate %46, %106, %166, %226, %286, %346, %406, %466 in 0 : vector<4x32xf32>, vector<4x32xf32>, vector<4x32xf32>, vector<4x32xf32>, vector<4x32xf32>, vector<4x32xf32>, vector<4x32xf32>, vector<4x32xf32> -> vector<32x32xf32>
    %498 = tpu.concatenate %496, %436, %376, %316, %256, %196, %136, %76 in 0 : vector<4x32xf32>, vector<4x32xf32>, vector<4x32xf32>, vector<4x32xf32>, vector<4x32xf32>, vector<4x32xf32>, vector<4x32xf32>, vector<4x32xf32> -> vector<32x32xf32>
    %499 = tpu.concatenate %497, %498 in 1 : vector<32x32xf32>, vector<32x32xf32> -> vector<32x64xf32>
    %c0_84 = arith.constant 0 : index
    %c0_85 = arith.constant 0 : index
    %500 = vector.load %arg9[%c0_84, %c0_85] : memref<64x96xf32, #tpu.memory_space<vmem>>, vector<64x96xf32>
    %c0_86 = arith.constant 0 : index
    %c0_87 = arith.constant 0 : index
    %501 = vector.load %arg10[%c0_86, %c0_87] : memref<32x96xf32, #tpu.memory_space<vmem>>, vector<32x96xf32>
    %c0_88 = arith.constant 0 : index
    %c0_89 = arith.constant 0 : index
    %502 = vector.load %arg11[%c0_88, %c0_89] : memref<1x96xf32, #tpu.memory_space<vmem>>, vector<1x96xf32>
    %c0_90 = arith.constant 0 : index
    %c0_91 = arith.constant 0 : index
    %503 = vector.load %arg12[%c0_90, %c0_91] : memref<1x96xf32, #tpu.memory_space<vmem>>, vector<1x96xf32>
    %c0_92 = arith.constant 0 : index
    %c0_93 = arith.constant 0 : index
    %504 = vector.load %arg13[%c0_92, %c0_93] : memref<64x96xf32, #tpu.memory_space<vmem>>, vector<64x96xf32>
    %c0_94 = arith.constant 0 : index
    %c0_95 = arith.constant 0 : index
    %505 = vector.load %arg14[%c0_94, %c0_95] : memref<32x96xf32, #tpu.memory_space<vmem>>, vector<32x96xf32>
    %c0_96 = arith.constant 0 : index
    %c0_97 = arith.constant 0 : index
    %506 = vector.load %arg15[%c0_96, %c0_97] : memref<1x96xf32, #tpu.memory_space<vmem>>, vector<1x96xf32>
    %c0_98 = arith.constant 0 : index
    %c0_99 = arith.constant 0 : index
    %507 = vector.load %arg16[%c0_98, %c0_99] : memref<1x96xf32, #tpu.memory_space<vmem>>, vector<1x96xf32>
    %cst_100 = arith.constant dense<0.000000e+00> : vector<32x96xf32>
    %508 = tpu.matmul %499, %500, %cst_100 {dimension_numbers = #tpu.dot_dimension_numbers<[1], [0], [0], [1], [0, 0, 1, 1], [], []>} : vector<32x64xf32>, vector<64x96xf32>, vector<32x96xf32> -> vector<32x96xf32>
    %509 = vector.broadcast %502 : vector<1x96xf32> to vector<32x96xf32>
    %510 = arith.addf %508, %509 : vector<32x96xf32>
    %cst_101 = arith.constant dense<0.000000e+00> : vector<32x96xf32>
    %511 = tpu.matmul %499, %504, %cst_101 {dimension_numbers = #tpu.dot_dimension_numbers<[1], [0], [0], [1], [0, 0, 1, 1], [], []>} : vector<32x64xf32>, vector<64x96xf32>, vector<32x96xf32> -> vector<32x96xf32>
    %512 = vector.broadcast %506 : vector<1x96xf32> to vector<32x96xf32>
    %513 = arith.addf %511, %512 : vector<32x96xf32>
    %cst_102 = arith.constant 0.000000e+00 : f32
    %514 = vector.broadcast %cst_102 : f32 to vector<4x32xf32>
    %cst_103 = arith.constant 0.000000e+00 : f32
    %515 = vector.broadcast %cst_103 : f32 to vector<4x32xf32>
    %516 = vector.extract_strided_slice %510 {offsets = [0, 0], sizes = [4, 96], strides = [1, 1]} : vector<32x96xf32> to vector<4x96xf32>
    %cst_104 = arith.constant dense<0.000000e+00> : vector<4x96xf32>
    %517 = tpu.matmul %514, %501, %cst_104 {dimension_numbers = #tpu.dot_dimension_numbers<[1], [0], [0], [1], [0, 0, 1, 1], [], []>} : vector<4x32xf32>, vector<32x96xf32>, vector<4x96xf32> -> vector<4x96xf32>
    %518 = vector.broadcast %503 : vector<1x96xf32> to vector<4x96xf32>
    %519 = arith.addf %517, %518 : vector<4x96xf32>
    %520 = vector.extract_strided_slice %516 {offsets = [0, 0], sizes = [4, 32], strides = [1, 1]} : vector<4x96xf32> to vector<4x32xf32>
    %521 = vector.extract_strided_slice %519 {offsets = [0, 0], sizes = [4, 32], strides = [1, 1]} : vector<4x96xf32> to vector<4x32xf32>
    %522 = arith.addf %520, %521 : vector<4x32xf32>
    %523 = arith.negf %522 : vector<4x32xf32>
    %524 = math.exp %523 : vector<4x32xf32>
    %cst_105 = arith.constant 1.000000e+00 : f32
    %525 = vector.broadcast %cst_105 : f32 to vector<4x32xf32>
    %526 = arith.addf %525, %524 : vector<4x32xf32>
    %527 = arith.divf %525, %526 : vector<4x32xf32>
    %528 = vector.extract_strided_slice %516 {offsets = [0, 32], sizes = [4, 32], strides = [1, 1]} : vector<4x96xf32> to vector<4x32xf32>
    %529 = vector.extract_strided_slice %519 {offsets = [0, 32], sizes = [4, 32], strides = [1, 1]} : vector<4x96xf32> to vector<4x32xf32>
    %530 = arith.addf %528, %529 : vector<4x32xf32>
    %531 = arith.negf %530 : vector<4x32xf32>
    %532 = math.exp %531 : vector<4x32xf32>
    %cst_106 = arith.constant 1.000000e+00 : f32
    %533 = vector.broadcast %cst_106 : f32 to vector<4x32xf32>
    %534 = arith.addf %533, %532 : vector<4x32xf32>
    %535 = arith.divf %533, %534 : vector<4x32xf32>
    %536 = vector.extract_strided_slice %516 {offsets = [0, 64], sizes = [4, 32], strides = [1, 1]} : vector<4x96xf32> to vector<4x32xf32>
    %537 = vector.extract_strided_slice %519 {offsets = [0, 64], sizes = [4, 32], strides = [1, 1]} : vector<4x96xf32> to vector<4x32xf32>
    %538 = arith.mulf %527, %537 : vector<4x32xf32>
    %539 = arith.addf %536, %538 : vector<4x32xf32>
    %540 = math.tanh %539 : vector<4x32xf32>
    %cst_107 = arith.constant 1.000000e+00 : f32
    %541 = vector.broadcast %cst_107 : f32 to vector<4x32xf32>
    %542 = arith.subf %541, %535 : vector<4x32xf32>
    %543 = arith.mulf %542, %540 : vector<4x32xf32>
    %544 = arith.mulf %535, %514 : vector<4x32xf32>
    %545 = arith.addf %543, %544 : vector<4x32xf32>
    %546 = vector.extract_strided_slice %513 {offsets = [28, 0], sizes = [4, 96], strides = [1, 1]} : vector<32x96xf32> to vector<4x96xf32>
    %cst_108 = arith.constant dense<0.000000e+00> : vector<4x96xf32>
    %547 = tpu.matmul %515, %505, %cst_108 {dimension_numbers = #tpu.dot_dimension_numbers<[1], [0], [0], [1], [0, 0, 1, 1], [], []>} : vector<4x32xf32>, vector<32x96xf32>, vector<4x96xf32> -> vector<4x96xf32>
    %548 = vector.broadcast %507 : vector<1x96xf32> to vector<4x96xf32>
    %549 = arith.addf %547, %548 : vector<4x96xf32>
    %550 = vector.extract_strided_slice %546 {offsets = [0, 0], sizes = [4, 32], strides = [1, 1]} : vector<4x96xf32> to vector<4x32xf32>
    %551 = vector.extract_strided_slice %549 {offsets = [0, 0], sizes = [4, 32], strides = [1, 1]} : vector<4x96xf32> to vector<4x32xf32>
    %552 = arith.addf %550, %551 : vector<4x32xf32>
    %553 = arith.negf %552 : vector<4x32xf32>
    %554 = math.exp %553 : vector<4x32xf32>
    %cst_109 = arith.constant 1.000000e+00 : f32
    %555 = vector.broadcast %cst_109 : f32 to vector<4x32xf32>
    %556 = arith.addf %555, %554 : vector<4x32xf32>
    %557 = arith.divf %555, %556 : vector<4x32xf32>
    %558 = vector.extract_strided_slice %546 {offsets = [0, 32], sizes = [4, 32], strides = [1, 1]} : vector<4x96xf32> to vector<4x32xf32>
    %559 = vector.extract_strided_slice %549 {offsets = [0, 32], sizes = [4, 32], strides = [1, 1]} : vector<4x96xf32> to vector<4x32xf32>
    %560 = arith.addf %558, %559 : vector<4x32xf32>
    %561 = arith.negf %560 : vector<4x32xf32>
    %562 = math.exp %561 : vector<4x32xf32>
    %cst_110 = arith.constant 1.000000e+00 : f32
    %563 = vector.broadcast %cst_110 : f32 to vector<4x32xf32>
    %564 = arith.addf %563, %562 : vector<4x32xf32>
    %565 = arith.divf %563, %564 : vector<4x32xf32>
    %566 = vector.extract_strided_slice %546 {offsets = [0, 64], sizes = [4, 32], strides = [1, 1]} : vector<4x96xf32> to vector<4x32xf32>
    %567 = vector.extract_strided_slice %549 {offsets = [0, 64], sizes = [4, 32], strides = [1, 1]} : vector<4x96xf32> to vector<4x32xf32>
    %568 = arith.mulf %557, %567 : vector<4x32xf32>
    %569 = arith.addf %566, %568 : vector<4x32xf32>
    %570 = math.tanh %569 : vector<4x32xf32>
    %cst_111 = arith.constant 1.000000e+00 : f32
    %571 = vector.broadcast %cst_111 : f32 to vector<4x32xf32>
    %572 = arith.subf %571, %565 : vector<4x32xf32>
    %573 = arith.mulf %572, %570 : vector<4x32xf32>
    %574 = arith.mulf %565, %515 : vector<4x32xf32>
    %575 = arith.addf %573, %574 : vector<4x32xf32>
    %576 = vector.extract_strided_slice %510 {offsets = [4, 0], sizes = [4, 96], strides = [1, 1]} : vector<32x96xf32> to vector<4x96xf32>
    %cst_112 = arith.constant dense<0.000000e+00> : vector<4x96xf32>
    %577 = tpu.matmul %545, %501, %cst_112 {dimension_numbers = #tpu.dot_dimension_numbers<[1], [0], [0], [1], [0, 0, 1, 1], [], []>} : vector<4x32xf32>, vector<32x96xf32>, vector<4x96xf32> -> vector<4x96xf32>
    %578 = vector.broadcast %503 : vector<1x96xf32> to vector<4x96xf32>
    %579 = arith.addf %577, %578 : vector<4x96xf32>
    %580 = vector.extract_strided_slice %576 {offsets = [0, 0], sizes = [4, 32], strides = [1, 1]} : vector<4x96xf32> to vector<4x32xf32>
    %581 = vector.extract_strided_slice %579 {offsets = [0, 0], sizes = [4, 32], strides = [1, 1]} : vector<4x96xf32> to vector<4x32xf32>
    %582 = arith.addf %580, %581 : vector<4x32xf32>
    %583 = arith.negf %582 : vector<4x32xf32>
    %584 = math.exp %583 : vector<4x32xf32>
    %cst_113 = arith.constant 1.000000e+00 : f32
    %585 = vector.broadcast %cst_113 : f32 to vector<4x32xf32>
    %586 = arith.addf %585, %584 : vector<4x32xf32>
    %587 = arith.divf %585, %586 : vector<4x32xf32>
    %588 = vector.extract_strided_slice %576 {offsets = [0, 32], sizes = [4, 32], strides = [1, 1]} : vector<4x96xf32> to vector<4x32xf32>
    %589 = vector.extract_strided_slice %579 {offsets = [0, 32], sizes = [4, 32], strides = [1, 1]} : vector<4x96xf32> to vector<4x32xf32>
    %590 = arith.addf %588, %589 : vector<4x32xf32>
    %591 = arith.negf %590 : vector<4x32xf32>
    %592 = math.exp %591 : vector<4x32xf32>
    %cst_114 = arith.constant 1.000000e+00 : f32
    %593 = vector.broadcast %cst_114 : f32 to vector<4x32xf32>
    %594 = arith.addf %593, %592 : vector<4x32xf32>
    %595 = arith.divf %593, %594 : vector<4x32xf32>
    %596 = vector.extract_strided_slice %576 {offsets = [0, 64], sizes = [4, 32], strides = [1, 1]} : vector<4x96xf32> to vector<4x32xf32>
    %597 = vector.extract_strided_slice %579 {offsets = [0, 64], sizes = [4, 32], strides = [1, 1]} : vector<4x96xf32> to vector<4x32xf32>
    %598 = arith.mulf %587, %597 : vector<4x32xf32>
    %599 = arith.addf %596, %598 : vector<4x32xf32>
    %600 = math.tanh %599 : vector<4x32xf32>
    %cst_115 = arith.constant 1.000000e+00 : f32
    %601 = vector.broadcast %cst_115 : f32 to vector<4x32xf32>
    %602 = arith.subf %601, %595 : vector<4x32xf32>
    %603 = arith.mulf %602, %600 : vector<4x32xf32>
    %604 = arith.mulf %595, %545 : vector<4x32xf32>
    %605 = arith.addf %603, %604 : vector<4x32xf32>
    %606 = vector.extract_strided_slice %513 {offsets = [24, 0], sizes = [4, 96], strides = [1, 1]} : vector<32x96xf32> to vector<4x96xf32>
    %cst_116 = arith.constant dense<0.000000e+00> : vector<4x96xf32>
    %607 = tpu.matmul %575, %505, %cst_116 {dimension_numbers = #tpu.dot_dimension_numbers<[1], [0], [0], [1], [0, 0, 1, 1], [], []>} : vector<4x32xf32>, vector<32x96xf32>, vector<4x96xf32> -> vector<4x96xf32>
    %608 = vector.broadcast %507 : vector<1x96xf32> to vector<4x96xf32>
    %609 = arith.addf %607, %608 : vector<4x96xf32>
    %610 = vector.extract_strided_slice %606 {offsets = [0, 0], sizes = [4, 32], strides = [1, 1]} : vector<4x96xf32> to vector<4x32xf32>
    %611 = vector.extract_strided_slice %609 {offsets = [0, 0], sizes = [4, 32], strides = [1, 1]} : vector<4x96xf32> to vector<4x32xf32>
    %612 = arith.addf %610, %611 : vector<4x32xf32>
    %613 = arith.negf %612 : vector<4x32xf32>
    %614 = math.exp %613 : vector<4x32xf32>
    %cst_117 = arith.constant 1.000000e+00 : f32
    %615 = vector.broadcast %cst_117 : f32 to vector<4x32xf32>
    %616 = arith.addf %615, %614 : vector<4x32xf32>
    %617 = arith.divf %615, %616 : vector<4x32xf32>
    %618 = vector.extract_strided_slice %606 {offsets = [0, 32], sizes = [4, 32], strides = [1, 1]} : vector<4x96xf32> to vector<4x32xf32>
    %619 = vector.extract_strided_slice %609 {offsets = [0, 32], sizes = [4, 32], strides = [1, 1]} : vector<4x96xf32> to vector<4x32xf32>
    %620 = arith.addf %618, %619 : vector<4x32xf32>
    %621 = arith.negf %620 : vector<4x32xf32>
    %622 = math.exp %621 : vector<4x32xf32>
    %cst_118 = arith.constant 1.000000e+00 : f32
    %623 = vector.broadcast %cst_118 : f32 to vector<4x32xf32>
    %624 = arith.addf %623, %622 : vector<4x32xf32>
    %625 = arith.divf %623, %624 : vector<4x32xf32>
    %626 = vector.extract_strided_slice %606 {offsets = [0, 64], sizes = [4, 32], strides = [1, 1]} : vector<4x96xf32> to vector<4x32xf32>
    %627 = vector.extract_strided_slice %609 {offsets = [0, 64], sizes = [4, 32], strides = [1, 1]} : vector<4x96xf32> to vector<4x32xf32>
    %628 = arith.mulf %617, %627 : vector<4x32xf32>
    %629 = arith.addf %626, %628 : vector<4x32xf32>
    %630 = math.tanh %629 : vector<4x32xf32>
    %cst_119 = arith.constant 1.000000e+00 : f32
    %631 = vector.broadcast %cst_119 : f32 to vector<4x32xf32>
    %632 = arith.subf %631, %625 : vector<4x32xf32>
    %633 = arith.mulf %632, %630 : vector<4x32xf32>
    %634 = arith.mulf %625, %575 : vector<4x32xf32>
    %635 = arith.addf %633, %634 : vector<4x32xf32>
    %636 = vector.extract_strided_slice %510 {offsets = [8, 0], sizes = [4, 96], strides = [1, 1]} : vector<32x96xf32> to vector<4x96xf32>
    %cst_120 = arith.constant dense<0.000000e+00> : vector<4x96xf32>
    %637 = tpu.matmul %605, %501, %cst_120 {dimension_numbers = #tpu.dot_dimension_numbers<[1], [0], [0], [1], [0, 0, 1, 1], [], []>} : vector<4x32xf32>, vector<32x96xf32>, vector<4x96xf32> -> vector<4x96xf32>
    %638 = vector.broadcast %503 : vector<1x96xf32> to vector<4x96xf32>
    %639 = arith.addf %637, %638 : vector<4x96xf32>
    %640 = vector.extract_strided_slice %636 {offsets = [0, 0], sizes = [4, 32], strides = [1, 1]} : vector<4x96xf32> to vector<4x32xf32>
    %641 = vector.extract_strided_slice %639 {offsets = [0, 0], sizes = [4, 32], strides = [1, 1]} : vector<4x96xf32> to vector<4x32xf32>
    %642 = arith.addf %640, %641 : vector<4x32xf32>
    %643 = arith.negf %642 : vector<4x32xf32>
    %644 = math.exp %643 : vector<4x32xf32>
    %cst_121 = arith.constant 1.000000e+00 : f32
    %645 = vector.broadcast %cst_121 : f32 to vector<4x32xf32>
    %646 = arith.addf %645, %644 : vector<4x32xf32>
    %647 = arith.divf %645, %646 : vector<4x32xf32>
    %648 = vector.extract_strided_slice %636 {offsets = [0, 32], sizes = [4, 32], strides = [1, 1]} : vector<4x96xf32> to vector<4x32xf32>
    %649 = vector.extract_strided_slice %639 {offsets = [0, 32], sizes = [4, 32], strides = [1, 1]} : vector<4x96xf32> to vector<4x32xf32>
    %650 = arith.addf %648, %649 : vector<4x32xf32>
    %651 = arith.negf %650 : vector<4x32xf32>
    %652 = math.exp %651 : vector<4x32xf32>
    %cst_122 = arith.constant 1.000000e+00 : f32
    %653 = vector.broadcast %cst_122 : f32 to vector<4x32xf32>
    %654 = arith.addf %653, %652 : vector<4x32xf32>
    %655 = arith.divf %653, %654 : vector<4x32xf32>
    %656 = vector.extract_strided_slice %636 {offsets = [0, 64], sizes = [4, 32], strides = [1, 1]} : vector<4x96xf32> to vector<4x32xf32>
    %657 = vector.extract_strided_slice %639 {offsets = [0, 64], sizes = [4, 32], strides = [1, 1]} : vector<4x96xf32> to vector<4x32xf32>
    %658 = arith.mulf %647, %657 : vector<4x32xf32>
    %659 = arith.addf %656, %658 : vector<4x32xf32>
    %660 = math.tanh %659 : vector<4x32xf32>
    %cst_123 = arith.constant 1.000000e+00 : f32
    %661 = vector.broadcast %cst_123 : f32 to vector<4x32xf32>
    %662 = arith.subf %661, %655 : vector<4x32xf32>
    %663 = arith.mulf %662, %660 : vector<4x32xf32>
    %664 = arith.mulf %655, %605 : vector<4x32xf32>
    %665 = arith.addf %663, %664 : vector<4x32xf32>
    %666 = vector.extract_strided_slice %513 {offsets = [20, 0], sizes = [4, 96], strides = [1, 1]} : vector<32x96xf32> to vector<4x96xf32>
    %cst_124 = arith.constant dense<0.000000e+00> : vector<4x96xf32>
    %667 = tpu.matmul %635, %505, %cst_124 {dimension_numbers = #tpu.dot_dimension_numbers<[1], [0], [0], [1], [0, 0, 1, 1], [], []>} : vector<4x32xf32>, vector<32x96xf32>, vector<4x96xf32> -> vector<4x96xf32>
    %668 = vector.broadcast %507 : vector<1x96xf32> to vector<4x96xf32>
    %669 = arith.addf %667, %668 : vector<4x96xf32>
    %670 = vector.extract_strided_slice %666 {offsets = [0, 0], sizes = [4, 32], strides = [1, 1]} : vector<4x96xf32> to vector<4x32xf32>
    %671 = vector.extract_strided_slice %669 {offsets = [0, 0], sizes = [4, 32], strides = [1, 1]} : vector<4x96xf32> to vector<4x32xf32>
    %672 = arith.addf %670, %671 : vector<4x32xf32>
    %673 = arith.negf %672 : vector<4x32xf32>
    %674 = math.exp %673 : vector<4x32xf32>
    %cst_125 = arith.constant 1.000000e+00 : f32
    %675 = vector.broadcast %cst_125 : f32 to vector<4x32xf32>
    %676 = arith.addf %675, %674 : vector<4x32xf32>
    %677 = arith.divf %675, %676 : vector<4x32xf32>
    %678 = vector.extract_strided_slice %666 {offsets = [0, 32], sizes = [4, 32], strides = [1, 1]} : vector<4x96xf32> to vector<4x32xf32>
    %679 = vector.extract_strided_slice %669 {offsets = [0, 32], sizes = [4, 32], strides = [1, 1]} : vector<4x96xf32> to vector<4x32xf32>
    %680 = arith.addf %678, %679 : vector<4x32xf32>
    %681 = arith.negf %680 : vector<4x32xf32>
    %682 = math.exp %681 : vector<4x32xf32>
    %cst_126 = arith.constant 1.000000e+00 : f32
    %683 = vector.broadcast %cst_126 : f32 to vector<4x32xf32>
    %684 = arith.addf %683, %682 : vector<4x32xf32>
    %685 = arith.divf %683, %684 : vector<4x32xf32>
    %686 = vector.extract_strided_slice %666 {offsets = [0, 64], sizes = [4, 32], strides = [1, 1]} : vector<4x96xf32> to vector<4x32xf32>
    %687 = vector.extract_strided_slice %669 {offsets = [0, 64], sizes = [4, 32], strides = [1, 1]} : vector<4x96xf32> to vector<4x32xf32>
    %688 = arith.mulf %677, %687 : vector<4x32xf32>
    %689 = arith.addf %686, %688 : vector<4x32xf32>
    %690 = math.tanh %689 : vector<4x32xf32>
    %cst_127 = arith.constant 1.000000e+00 : f32
    %691 = vector.broadcast %cst_127 : f32 to vector<4x32xf32>
    %692 = arith.subf %691, %685 : vector<4x32xf32>
    %693 = arith.mulf %692, %690 : vector<4x32xf32>
    %694 = arith.mulf %685, %635 : vector<4x32xf32>
    %695 = arith.addf %693, %694 : vector<4x32xf32>
    %696 = vector.extract_strided_slice %510 {offsets = [12, 0], sizes = [4, 96], strides = [1, 1]} : vector<32x96xf32> to vector<4x96xf32>
    %cst_128 = arith.constant dense<0.000000e+00> : vector<4x96xf32>
    %697 = tpu.matmul %665, %501, %cst_128 {dimension_numbers = #tpu.dot_dimension_numbers<[1], [0], [0], [1], [0, 0, 1, 1], [], []>} : vector<4x32xf32>, vector<32x96xf32>, vector<4x96xf32> -> vector<4x96xf32>
    %698 = vector.broadcast %503 : vector<1x96xf32> to vector<4x96xf32>
    %699 = arith.addf %697, %698 : vector<4x96xf32>
    %700 = vector.extract_strided_slice %696 {offsets = [0, 0], sizes = [4, 32], strides = [1, 1]} : vector<4x96xf32> to vector<4x32xf32>
    %701 = vector.extract_strided_slice %699 {offsets = [0, 0], sizes = [4, 32], strides = [1, 1]} : vector<4x96xf32> to vector<4x32xf32>
    %702 = arith.addf %700, %701 : vector<4x32xf32>
    %703 = arith.negf %702 : vector<4x32xf32>
    %704 = math.exp %703 : vector<4x32xf32>
    %cst_129 = arith.constant 1.000000e+00 : f32
    %705 = vector.broadcast %cst_129 : f32 to vector<4x32xf32>
    %706 = arith.addf %705, %704 : vector<4x32xf32>
    %707 = arith.divf %705, %706 : vector<4x32xf32>
    %708 = vector.extract_strided_slice %696 {offsets = [0, 32], sizes = [4, 32], strides = [1, 1]} : vector<4x96xf32> to vector<4x32xf32>
    %709 = vector.extract_strided_slice %699 {offsets = [0, 32], sizes = [4, 32], strides = [1, 1]} : vector<4x96xf32> to vector<4x32xf32>
    %710 = arith.addf %708, %709 : vector<4x32xf32>
    %711 = arith.negf %710 : vector<4x32xf32>
    %712 = math.exp %711 : vector<4x32xf32>
    %cst_130 = arith.constant 1.000000e+00 : f32
    %713 = vector.broadcast %cst_130 : f32 to vector<4x32xf32>
    %714 = arith.addf %713, %712 : vector<4x32xf32>
    %715 = arith.divf %713, %714 : vector<4x32xf32>
    %716 = vector.extract_strided_slice %696 {offsets = [0, 64], sizes = [4, 32], strides = [1, 1]} : vector<4x96xf32> to vector<4x32xf32>
    %717 = vector.extract_strided_slice %699 {offsets = [0, 64], sizes = [4, 32], strides = [1, 1]} : vector<4x96xf32> to vector<4x32xf32>
    %718 = arith.mulf %707, %717 : vector<4x32xf32>
    %719 = arith.addf %716, %718 : vector<4x32xf32>
    %720 = math.tanh %719 : vector<4x32xf32>
    %cst_131 = arith.constant 1.000000e+00 : f32
    %721 = vector.broadcast %cst_131 : f32 to vector<4x32xf32>
    %722 = arith.subf %721, %715 : vector<4x32xf32>
    %723 = arith.mulf %722, %720 : vector<4x32xf32>
    %724 = arith.mulf %715, %665 : vector<4x32xf32>
    %725 = arith.addf %723, %724 : vector<4x32xf32>
    %726 = vector.extract_strided_slice %513 {offsets = [16, 0], sizes = [4, 96], strides = [1, 1]} : vector<32x96xf32> to vector<4x96xf32>
    %cst_132 = arith.constant dense<0.000000e+00> : vector<4x96xf32>
    %727 = tpu.matmul %695, %505, %cst_132 {dimension_numbers = #tpu.dot_dimension_numbers<[1], [0], [0], [1], [0, 0, 1, 1], [], []>} : vector<4x32xf32>, vector<32x96xf32>, vector<4x96xf32> -> vector<4x96xf32>
    %728 = vector.broadcast %507 : vector<1x96xf32> to vector<4x96xf32>
    %729 = arith.addf %727, %728 : vector<4x96xf32>
    %730 = vector.extract_strided_slice %726 {offsets = [0, 0], sizes = [4, 32], strides = [1, 1]} : vector<4x96xf32> to vector<4x32xf32>
    %731 = vector.extract_strided_slice %729 {offsets = [0, 0], sizes = [4, 32], strides = [1, 1]} : vector<4x96xf32> to vector<4x32xf32>
    %732 = arith.addf %730, %731 : vector<4x32xf32>
    %733 = arith.negf %732 : vector<4x32xf32>
    %734 = math.exp %733 : vector<4x32xf32>
    %cst_133 = arith.constant 1.000000e+00 : f32
    %735 = vector.broadcast %cst_133 : f32 to vector<4x32xf32>
    %736 = arith.addf %735, %734 : vector<4x32xf32>
    %737 = arith.divf %735, %736 : vector<4x32xf32>
    %738 = vector.extract_strided_slice %726 {offsets = [0, 32], sizes = [4, 32], strides = [1, 1]} : vector<4x96xf32> to vector<4x32xf32>
    %739 = vector.extract_strided_slice %729 {offsets = [0, 32], sizes = [4, 32], strides = [1, 1]} : vector<4x96xf32> to vector<4x32xf32>
    %740 = arith.addf %738, %739 : vector<4x32xf32>
    %741 = arith.negf %740 : vector<4x32xf32>
    %742 = math.exp %741 : vector<4x32xf32>
    %cst_134 = arith.constant 1.000000e+00 : f32
    %743 = vector.broadcast %cst_134 : f32 to vector<4x32xf32>
    %744 = arith.addf %743, %742 : vector<4x32xf32>
    %745 = arith.divf %743, %744 : vector<4x32xf32>
    %746 = vector.extract_strided_slice %726 {offsets = [0, 64], sizes = [4, 32], strides = [1, 1]} : vector<4x96xf32> to vector<4x32xf32>
    %747 = vector.extract_strided_slice %729 {offsets = [0, 64], sizes = [4, 32], strides = [1, 1]} : vector<4x96xf32> to vector<4x32xf32>
    %748 = arith.mulf %737, %747 : vector<4x32xf32>
    %749 = arith.addf %746, %748 : vector<4x32xf32>
    %750 = math.tanh %749 : vector<4x32xf32>
    %cst_135 = arith.constant 1.000000e+00 : f32
    %751 = vector.broadcast %cst_135 : f32 to vector<4x32xf32>
    %752 = arith.subf %751, %745 : vector<4x32xf32>
    %753 = arith.mulf %752, %750 : vector<4x32xf32>
    %754 = arith.mulf %745, %695 : vector<4x32xf32>
    %755 = arith.addf %753, %754 : vector<4x32xf32>
    %756 = vector.extract_strided_slice %510 {offsets = [16, 0], sizes = [4, 96], strides = [1, 1]} : vector<32x96xf32> to vector<4x96xf32>
    %cst_136 = arith.constant dense<0.000000e+00> : vector<4x96xf32>
    %757 = tpu.matmul %725, %501, %cst_136 {dimension_numbers = #tpu.dot_dimension_numbers<[1], [0], [0], [1], [0, 0, 1, 1], [], []>} : vector<4x32xf32>, vector<32x96xf32>, vector<4x96xf32> -> vector<4x96xf32>
    %758 = vector.broadcast %503 : vector<1x96xf32> to vector<4x96xf32>
    %759 = arith.addf %757, %758 : vector<4x96xf32>
    %760 = vector.extract_strided_slice %756 {offsets = [0, 0], sizes = [4, 32], strides = [1, 1]} : vector<4x96xf32> to vector<4x32xf32>
    %761 = vector.extract_strided_slice %759 {offsets = [0, 0], sizes = [4, 32], strides = [1, 1]} : vector<4x96xf32> to vector<4x32xf32>
    %762 = arith.addf %760, %761 : vector<4x32xf32>
    %763 = arith.negf %762 : vector<4x32xf32>
    %764 = math.exp %763 : vector<4x32xf32>
    %cst_137 = arith.constant 1.000000e+00 : f32
    %765 = vector.broadcast %cst_137 : f32 to vector<4x32xf32>
    %766 = arith.addf %765, %764 : vector<4x32xf32>
    %767 = arith.divf %765, %766 : vector<4x32xf32>
    %768 = vector.extract_strided_slice %756 {offsets = [0, 32], sizes = [4, 32], strides = [1, 1]} : vector<4x96xf32> to vector<4x32xf32>
    %769 = vector.extract_strided_slice %759 {offsets = [0, 32], sizes = [4, 32], strides = [1, 1]} : vector<4x96xf32> to vector<4x32xf32>
    %770 = arith.addf %768, %769 : vector<4x32xf32>
    %771 = arith.negf %770 : vector<4x32xf32>
    %772 = math.exp %771 : vector<4x32xf32>
    %cst_138 = arith.constant 1.000000e+00 : f32
    %773 = vector.broadcast %cst_138 : f32 to vector<4x32xf32>
    %774 = arith.addf %773, %772 : vector<4x32xf32>
    %775 = arith.divf %773, %774 : vector<4x32xf32>
    %776 = vector.extract_strided_slice %756 {offsets = [0, 64], sizes = [4, 32], strides = [1, 1]} : vector<4x96xf32> to vector<4x32xf32>
    %777 = vector.extract_strided_slice %759 {offsets = [0, 64], sizes = [4, 32], strides = [1, 1]} : vector<4x96xf32> to vector<4x32xf32>
    %778 = arith.mulf %767, %777 : vector<4x32xf32>
    %779 = arith.addf %776, %778 : vector<4x32xf32>
    %780 = math.tanh %779 : vector<4x32xf32>
    %cst_139 = arith.constant 1.000000e+00 : f32
    %781 = vector.broadcast %cst_139 : f32 to vector<4x32xf32>
    %782 = arith.subf %781, %775 : vector<4x32xf32>
    %783 = arith.mulf %782, %780 : vector<4x32xf32>
    %784 = arith.mulf %775, %725 : vector<4x32xf32>
    %785 = arith.addf %783, %784 : vector<4x32xf32>
    %786 = vector.extract_strided_slice %513 {offsets = [12, 0], sizes = [4, 96], strides = [1, 1]} : vector<32x96xf32> to vector<4x96xf32>
    %cst_140 = arith.constant dense<0.000000e+00> : vector<4x96xf32>
    %787 = tpu.matmul %755, %505, %cst_140 {dimension_numbers = #tpu.dot_dimension_numbers<[1], [0], [0], [1], [0, 0, 1, 1], [], []>} : vector<4x32xf32>, vector<32x96xf32>, vector<4x96xf32> -> vector<4x96xf32>
    %788 = vector.broadcast %507 : vector<1x96xf32> to vector<4x96xf32>
    %789 = arith.addf %787, %788 : vector<4x96xf32>
    %790 = vector.extract_strided_slice %786 {offsets = [0, 0], sizes = [4, 32], strides = [1, 1]} : vector<4x96xf32> to vector<4x32xf32>
    %791 = vector.extract_strided_slice %789 {offsets = [0, 0], sizes = [4, 32], strides = [1, 1]} : vector<4x96xf32> to vector<4x32xf32>
    %792 = arith.addf %790, %791 : vector<4x32xf32>
    %793 = arith.negf %792 : vector<4x32xf32>
    %794 = math.exp %793 : vector<4x32xf32>
    %cst_141 = arith.constant 1.000000e+00 : f32
    %795 = vector.broadcast %cst_141 : f32 to vector<4x32xf32>
    %796 = arith.addf %795, %794 : vector<4x32xf32>
    %797 = arith.divf %795, %796 : vector<4x32xf32>
    %798 = vector.extract_strided_slice %786 {offsets = [0, 32], sizes = [4, 32], strides = [1, 1]} : vector<4x96xf32> to vector<4x32xf32>
    %799 = vector.extract_strided_slice %789 {offsets = [0, 32], sizes = [4, 32], strides = [1, 1]} : vector<4x96xf32> to vector<4x32xf32>
    %800 = arith.addf %798, %799 : vector<4x32xf32>
    %801 = arith.negf %800 : vector<4x32xf32>
    %802 = math.exp %801 : vector<4x32xf32>
    %cst_142 = arith.constant 1.000000e+00 : f32
    %803 = vector.broadcast %cst_142 : f32 to vector<4x32xf32>
    %804 = arith.addf %803, %802 : vector<4x32xf32>
    %805 = arith.divf %803, %804 : vector<4x32xf32>
    %806 = vector.extract_strided_slice %786 {offsets = [0, 64], sizes = [4, 32], strides = [1, 1]} : vector<4x96xf32> to vector<4x32xf32>
    %807 = vector.extract_strided_slice %789 {offsets = [0, 64], sizes = [4, 32], strides = [1, 1]} : vector<4x96xf32> to vector<4x32xf32>
    %808 = arith.mulf %797, %807 : vector<4x32xf32>
    %809 = arith.addf %806, %808 : vector<4x32xf32>
    %810 = math.tanh %809 : vector<4x32xf32>
    %cst_143 = arith.constant 1.000000e+00 : f32
    %811 = vector.broadcast %cst_143 : f32 to vector<4x32xf32>
    %812 = arith.subf %811, %805 : vector<4x32xf32>
    %813 = arith.mulf %812, %810 : vector<4x32xf32>
    %814 = arith.mulf %805, %755 : vector<4x32xf32>
    %815 = arith.addf %813, %814 : vector<4x32xf32>
    %816 = vector.extract_strided_slice %510 {offsets = [20, 0], sizes = [4, 96], strides = [1, 1]} : vector<32x96xf32> to vector<4x96xf32>
    %cst_144 = arith.constant dense<0.000000e+00> : vector<4x96xf32>
    %817 = tpu.matmul %785, %501, %cst_144 {dimension_numbers = #tpu.dot_dimension_numbers<[1], [0], [0], [1], [0, 0, 1, 1], [], []>} : vector<4x32xf32>, vector<32x96xf32>, vector<4x96xf32> -> vector<4x96xf32>
    %818 = vector.broadcast %503 : vector<1x96xf32> to vector<4x96xf32>
    %819 = arith.addf %817, %818 : vector<4x96xf32>
    %820 = vector.extract_strided_slice %816 {offsets = [0, 0], sizes = [4, 32], strides = [1, 1]} : vector<4x96xf32> to vector<4x32xf32>
    %821 = vector.extract_strided_slice %819 {offsets = [0, 0], sizes = [4, 32], strides = [1, 1]} : vector<4x96xf32> to vector<4x32xf32>
    %822 = arith.addf %820, %821 : vector<4x32xf32>
    %823 = arith.negf %822 : vector<4x32xf32>
    %824 = math.exp %823 : vector<4x32xf32>
    %cst_145 = arith.constant 1.000000e+00 : f32
    %825 = vector.broadcast %cst_145 : f32 to vector<4x32xf32>
    %826 = arith.addf %825, %824 : vector<4x32xf32>
    %827 = arith.divf %825, %826 : vector<4x32xf32>
    %828 = vector.extract_strided_slice %816 {offsets = [0, 32], sizes = [4, 32], strides = [1, 1]} : vector<4x96xf32> to vector<4x32xf32>
    %829 = vector.extract_strided_slice %819 {offsets = [0, 32], sizes = [4, 32], strides = [1, 1]} : vector<4x96xf32> to vector<4x32xf32>
    %830 = arith.addf %828, %829 : vector<4x32xf32>
    %831 = arith.negf %830 : vector<4x32xf32>
    %832 = math.exp %831 : vector<4x32xf32>
    %cst_146 = arith.constant 1.000000e+00 : f32
    %833 = vector.broadcast %cst_146 : f32 to vector<4x32xf32>
    %834 = arith.addf %833, %832 : vector<4x32xf32>
    %835 = arith.divf %833, %834 : vector<4x32xf32>
    %836 = vector.extract_strided_slice %816 {offsets = [0, 64], sizes = [4, 32], strides = [1, 1]} : vector<4x96xf32> to vector<4x32xf32>
    %837 = vector.extract_strided_slice %819 {offsets = [0, 64], sizes = [4, 32], strides = [1, 1]} : vector<4x96xf32> to vector<4x32xf32>
    %838 = arith.mulf %827, %837 : vector<4x32xf32>
    %839 = arith.addf %836, %838 : vector<4x32xf32>
    %840 = math.tanh %839 : vector<4x32xf32>
    %cst_147 = arith.constant 1.000000e+00 : f32
    %841 = vector.broadcast %cst_147 : f32 to vector<4x32xf32>
    %842 = arith.subf %841, %835 : vector<4x32xf32>
    %843 = arith.mulf %842, %840 : vector<4x32xf32>
    %844 = arith.mulf %835, %785 : vector<4x32xf32>
    %845 = arith.addf %843, %844 : vector<4x32xf32>
    %846 = vector.extract_strided_slice %513 {offsets = [8, 0], sizes = [4, 96], strides = [1, 1]} : vector<32x96xf32> to vector<4x96xf32>
    %cst_148 = arith.constant dense<0.000000e+00> : vector<4x96xf32>
    %847 = tpu.matmul %815, %505, %cst_148 {dimension_numbers = #tpu.dot_dimension_numbers<[1], [0], [0], [1], [0, 0, 1, 1], [], []>} : vector<4x32xf32>, vector<32x96xf32>, vector<4x96xf32> -> vector<4x96xf32>
    %848 = vector.broadcast %507 : vector<1x96xf32> to vector<4x96xf32>
    %849 = arith.addf %847, %848 : vector<4x96xf32>
    %850 = vector.extract_strided_slice %846 {offsets = [0, 0], sizes = [4, 32], strides = [1, 1]} : vector<4x96xf32> to vector<4x32xf32>
    %851 = vector.extract_strided_slice %849 {offsets = [0, 0], sizes = [4, 32], strides = [1, 1]} : vector<4x96xf32> to vector<4x32xf32>
    %852 = arith.addf %850, %851 : vector<4x32xf32>
    %853 = arith.negf %852 : vector<4x32xf32>
    %854 = math.exp %853 : vector<4x32xf32>
    %cst_149 = arith.constant 1.000000e+00 : f32
    %855 = vector.broadcast %cst_149 : f32 to vector<4x32xf32>
    %856 = arith.addf %855, %854 : vector<4x32xf32>
    %857 = arith.divf %855, %856 : vector<4x32xf32>
    %858 = vector.extract_strided_slice %846 {offsets = [0, 32], sizes = [4, 32], strides = [1, 1]} : vector<4x96xf32> to vector<4x32xf32>
    %859 = vector.extract_strided_slice %849 {offsets = [0, 32], sizes = [4, 32], strides = [1, 1]} : vector<4x96xf32> to vector<4x32xf32>
    %860 = arith.addf %858, %859 : vector<4x32xf32>
    %861 = arith.negf %860 : vector<4x32xf32>
    %862 = math.exp %861 : vector<4x32xf32>
    %cst_150 = arith.constant 1.000000e+00 : f32
    %863 = vector.broadcast %cst_150 : f32 to vector<4x32xf32>
    %864 = arith.addf %863, %862 : vector<4x32xf32>
    %865 = arith.divf %863, %864 : vector<4x32xf32>
    %866 = vector.extract_strided_slice %846 {offsets = [0, 64], sizes = [4, 32], strides = [1, 1]} : vector<4x96xf32> to vector<4x32xf32>
    %867 = vector.extract_strided_slice %849 {offsets = [0, 64], sizes = [4, 32], strides = [1, 1]} : vector<4x96xf32> to vector<4x32xf32>
    %868 = arith.mulf %857, %867 : vector<4x32xf32>
    %869 = arith.addf %866, %868 : vector<4x32xf32>
    %870 = math.tanh %869 : vector<4x32xf32>
    %cst_151 = arith.constant 1.000000e+00 : f32
    %871 = vector.broadcast %cst_151 : f32 to vector<4x32xf32>
    %872 = arith.subf %871, %865 : vector<4x32xf32>
    %873 = arith.mulf %872, %870 : vector<4x32xf32>
    %874 = arith.mulf %865, %815 : vector<4x32xf32>
    %875 = arith.addf %873, %874 : vector<4x32xf32>
    %876 = vector.extract_strided_slice %510 {offsets = [24, 0], sizes = [4, 96], strides = [1, 1]} : vector<32x96xf32> to vector<4x96xf32>
    %cst_152 = arith.constant dense<0.000000e+00> : vector<4x96xf32>
    %877 = tpu.matmul %845, %501, %cst_152 {dimension_numbers = #tpu.dot_dimension_numbers<[1], [0], [0], [1], [0, 0, 1, 1], [], []>} : vector<4x32xf32>, vector<32x96xf32>, vector<4x96xf32> -> vector<4x96xf32>
    %878 = vector.broadcast %503 : vector<1x96xf32> to vector<4x96xf32>
    %879 = arith.addf %877, %878 : vector<4x96xf32>
    %880 = vector.extract_strided_slice %876 {offsets = [0, 0], sizes = [4, 32], strides = [1, 1]} : vector<4x96xf32> to vector<4x32xf32>
    %881 = vector.extract_strided_slice %879 {offsets = [0, 0], sizes = [4, 32], strides = [1, 1]} : vector<4x96xf32> to vector<4x32xf32>
    %882 = arith.addf %880, %881 : vector<4x32xf32>
    %883 = arith.negf %882 : vector<4x32xf32>
    %884 = math.exp %883 : vector<4x32xf32>
    %cst_153 = arith.constant 1.000000e+00 : f32
    %885 = vector.broadcast %cst_153 : f32 to vector<4x32xf32>
    %886 = arith.addf %885, %884 : vector<4x32xf32>
    %887 = arith.divf %885, %886 : vector<4x32xf32>
    %888 = vector.extract_strided_slice %876 {offsets = [0, 32], sizes = [4, 32], strides = [1, 1]} : vector<4x96xf32> to vector<4x32xf32>
    %889 = vector.extract_strided_slice %879 {offsets = [0, 32], sizes = [4, 32], strides = [1, 1]} : vector<4x96xf32> to vector<4x32xf32>
    %890 = arith.addf %888, %889 : vector<4x32xf32>
    %891 = arith.negf %890 : vector<4x32xf32>
    %892 = math.exp %891 : vector<4x32xf32>
    %cst_154 = arith.constant 1.000000e+00 : f32
    %893 = vector.broadcast %cst_154 : f32 to vector<4x32xf32>
    %894 = arith.addf %893, %892 : vector<4x32xf32>
    %895 = arith.divf %893, %894 : vector<4x32xf32>
    %896 = vector.extract_strided_slice %876 {offsets = [0, 64], sizes = [4, 32], strides = [1, 1]} : vector<4x96xf32> to vector<4x32xf32>
    %897 = vector.extract_strided_slice %879 {offsets = [0, 64], sizes = [4, 32], strides = [1, 1]} : vector<4x96xf32> to vector<4x32xf32>
    %898 = arith.mulf %887, %897 : vector<4x32xf32>
    %899 = arith.addf %896, %898 : vector<4x32xf32>
    %900 = math.tanh %899 : vector<4x32xf32>
    %cst_155 = arith.constant 1.000000e+00 : f32
    %901 = vector.broadcast %cst_155 : f32 to vector<4x32xf32>
    %902 = arith.subf %901, %895 : vector<4x32xf32>
    %903 = arith.mulf %902, %900 : vector<4x32xf32>
    %904 = arith.mulf %895, %845 : vector<4x32xf32>
    %905 = arith.addf %903, %904 : vector<4x32xf32>
    %906 = vector.extract_strided_slice %513 {offsets = [4, 0], sizes = [4, 96], strides = [1, 1]} : vector<32x96xf32> to vector<4x96xf32>
    %cst_156 = arith.constant dense<0.000000e+00> : vector<4x96xf32>
    %907 = tpu.matmul %875, %505, %cst_156 {dimension_numbers = #tpu.dot_dimension_numbers<[1], [0], [0], [1], [0, 0, 1, 1], [], []>} : vector<4x32xf32>, vector<32x96xf32>, vector<4x96xf32> -> vector<4x96xf32>
    %908 = vector.broadcast %507 : vector<1x96xf32> to vector<4x96xf32>
    %909 = arith.addf %907, %908 : vector<4x96xf32>
    %910 = vector.extract_strided_slice %906 {offsets = [0, 0], sizes = [4, 32], strides = [1, 1]} : vector<4x96xf32> to vector<4x32xf32>
    %911 = vector.extract_strided_slice %909 {offsets = [0, 0], sizes = [4, 32], strides = [1, 1]} : vector<4x96xf32> to vector<4x32xf32>
    %912 = arith.addf %910, %911 : vector<4x32xf32>
    %913 = arith.negf %912 : vector<4x32xf32>
    %914 = math.exp %913 : vector<4x32xf32>
    %cst_157 = arith.constant 1.000000e+00 : f32
    %915 = vector.broadcast %cst_157 : f32 to vector<4x32xf32>
    %916 = arith.addf %915, %914 : vector<4x32xf32>
    %917 = arith.divf %915, %916 : vector<4x32xf32>
    %918 = vector.extract_strided_slice %906 {offsets = [0, 32], sizes = [4, 32], strides = [1, 1]} : vector<4x96xf32> to vector<4x32xf32>
    %919 = vector.extract_strided_slice %909 {offsets = [0, 32], sizes = [4, 32], strides = [1, 1]} : vector<4x96xf32> to vector<4x32xf32>
    %920 = arith.addf %918, %919 : vector<4x32xf32>
    %921 = arith.negf %920 : vector<4x32xf32>
    %922 = math.exp %921 : vector<4x32xf32>
    %cst_158 = arith.constant 1.000000e+00 : f32
    %923 = vector.broadcast %cst_158 : f32 to vector<4x32xf32>
    %924 = arith.addf %923, %922 : vector<4x32xf32>
    %925 = arith.divf %923, %924 : vector<4x32xf32>
    %926 = vector.extract_strided_slice %906 {offsets = [0, 64], sizes = [4, 32], strides = [1, 1]} : vector<4x96xf32> to vector<4x32xf32>
    %927 = vector.extract_strided_slice %909 {offsets = [0, 64], sizes = [4, 32], strides = [1, 1]} : vector<4x96xf32> to vector<4x32xf32>
    %928 = arith.mulf %917, %927 : vector<4x32xf32>
    %929 = arith.addf %926, %928 : vector<4x32xf32>
    %930 = math.tanh %929 : vector<4x32xf32>
    %cst_159 = arith.constant 1.000000e+00 : f32
    %931 = vector.broadcast %cst_159 : f32 to vector<4x32xf32>
    %932 = arith.subf %931, %925 : vector<4x32xf32>
    %933 = arith.mulf %932, %930 : vector<4x32xf32>
    %934 = arith.mulf %925, %875 : vector<4x32xf32>
    %935 = arith.addf %933, %934 : vector<4x32xf32>
    %936 = vector.extract_strided_slice %510 {offsets = [28, 0], sizes = [4, 96], strides = [1, 1]} : vector<32x96xf32> to vector<4x96xf32>
    %cst_160 = arith.constant dense<0.000000e+00> : vector<4x96xf32>
    %937 = tpu.matmul %905, %501, %cst_160 {dimension_numbers = #tpu.dot_dimension_numbers<[1], [0], [0], [1], [0, 0, 1, 1], [], []>} : vector<4x32xf32>, vector<32x96xf32>, vector<4x96xf32> -> vector<4x96xf32>
    %938 = vector.broadcast %503 : vector<1x96xf32> to vector<4x96xf32>
    %939 = arith.addf %937, %938 : vector<4x96xf32>
    %940 = vector.extract_strided_slice %936 {offsets = [0, 0], sizes = [4, 32], strides = [1, 1]} : vector<4x96xf32> to vector<4x32xf32>
    %941 = vector.extract_strided_slice %939 {offsets = [0, 0], sizes = [4, 32], strides = [1, 1]} : vector<4x96xf32> to vector<4x32xf32>
    %942 = arith.addf %940, %941 : vector<4x32xf32>
    %943 = arith.negf %942 : vector<4x32xf32>
    %944 = math.exp %943 : vector<4x32xf32>
    %cst_161 = arith.constant 1.000000e+00 : f32
    %945 = vector.broadcast %cst_161 : f32 to vector<4x32xf32>
    %946 = arith.addf %945, %944 : vector<4x32xf32>
    %947 = arith.divf %945, %946 : vector<4x32xf32>
    %948 = vector.extract_strided_slice %936 {offsets = [0, 32], sizes = [4, 32], strides = [1, 1]} : vector<4x96xf32> to vector<4x32xf32>
    %949 = vector.extract_strided_slice %939 {offsets = [0, 32], sizes = [4, 32], strides = [1, 1]} : vector<4x96xf32> to vector<4x32xf32>
    %950 = arith.addf %948, %949 : vector<4x32xf32>
    %951 = arith.negf %950 : vector<4x32xf32>
    %952 = math.exp %951 : vector<4x32xf32>
    %cst_162 = arith.constant 1.000000e+00 : f32
    %953 = vector.broadcast %cst_162 : f32 to vector<4x32xf32>
    %954 = arith.addf %953, %952 : vector<4x32xf32>
    %955 = arith.divf %953, %954 : vector<4x32xf32>
    %956 = vector.extract_strided_slice %936 {offsets = [0, 64], sizes = [4, 32], strides = [1, 1]} : vector<4x96xf32> to vector<4x32xf32>
    %957 = vector.extract_strided_slice %939 {offsets = [0, 64], sizes = [4, 32], strides = [1, 1]} : vector<4x96xf32> to vector<4x32xf32>
    %958 = arith.mulf %947, %957 : vector<4x32xf32>
    %959 = arith.addf %956, %958 : vector<4x32xf32>
    %960 = math.tanh %959 : vector<4x32xf32>
    %cst_163 = arith.constant 1.000000e+00 : f32
    %961 = vector.broadcast %cst_163 : f32 to vector<4x32xf32>
    %962 = arith.subf %961, %955 : vector<4x32xf32>
    %963 = arith.mulf %962, %960 : vector<4x32xf32>
    %964 = arith.mulf %955, %905 : vector<4x32xf32>
    %965 = arith.addf %963, %964 : vector<4x32xf32>
    %966 = vector.extract_strided_slice %513 {offsets = [0, 0], sizes = [4, 96], strides = [1, 1]} : vector<32x96xf32> to vector<4x96xf32>
    %cst_164 = arith.constant dense<0.000000e+00> : vector<4x96xf32>
    %967 = tpu.matmul %935, %505, %cst_164 {dimension_numbers = #tpu.dot_dimension_numbers<[1], [0], [0], [1], [0, 0, 1, 1], [], []>} : vector<4x32xf32>, vector<32x96xf32>, vector<4x96xf32> -> vector<4x96xf32>
    %968 = vector.broadcast %507 : vector<1x96xf32> to vector<4x96xf32>
    %969 = arith.addf %967, %968 : vector<4x96xf32>
    %970 = vector.extract_strided_slice %966 {offsets = [0, 0], sizes = [4, 32], strides = [1, 1]} : vector<4x96xf32> to vector<4x32xf32>
    %971 = vector.extract_strided_slice %969 {offsets = [0, 0], sizes = [4, 32], strides = [1, 1]} : vector<4x96xf32> to vector<4x32xf32>
    %972 = arith.addf %970, %971 : vector<4x32xf32>
    %973 = arith.negf %972 : vector<4x32xf32>
    %974 = math.exp %973 : vector<4x32xf32>
    %cst_165 = arith.constant 1.000000e+00 : f32
    %975 = vector.broadcast %cst_165 : f32 to vector<4x32xf32>
    %976 = arith.addf %975, %974 : vector<4x32xf32>
    %977 = arith.divf %975, %976 : vector<4x32xf32>
    %978 = vector.extract_strided_slice %966 {offsets = [0, 32], sizes = [4, 32], strides = [1, 1]} : vector<4x96xf32> to vector<4x32xf32>
    %979 = vector.extract_strided_slice %969 {offsets = [0, 32], sizes = [4, 32], strides = [1, 1]} : vector<4x96xf32> to vector<4x32xf32>
    %980 = arith.addf %978, %979 : vector<4x32xf32>
    %981 = arith.negf %980 : vector<4x32xf32>
    %982 = math.exp %981 : vector<4x32xf32>
    %cst_166 = arith.constant 1.000000e+00 : f32
    %983 = vector.broadcast %cst_166 : f32 to vector<4x32xf32>
    %984 = arith.addf %983, %982 : vector<4x32xf32>
    %985 = arith.divf %983, %984 : vector<4x32xf32>
    %986 = vector.extract_strided_slice %966 {offsets = [0, 64], sizes = [4, 32], strides = [1, 1]} : vector<4x96xf32> to vector<4x32xf32>
    %987 = vector.extract_strided_slice %969 {offsets = [0, 64], sizes = [4, 32], strides = [1, 1]} : vector<4x96xf32> to vector<4x32xf32>
    %988 = arith.mulf %977, %987 : vector<4x32xf32>
    %989 = arith.addf %986, %988 : vector<4x32xf32>
    %990 = math.tanh %989 : vector<4x32xf32>
    %cst_167 = arith.constant 1.000000e+00 : f32
    %991 = vector.broadcast %cst_167 : f32 to vector<4x32xf32>
    %992 = arith.subf %991, %985 : vector<4x32xf32>
    %993 = arith.mulf %992, %990 : vector<4x32xf32>
    %994 = arith.mulf %985, %935 : vector<4x32xf32>
    %995 = arith.addf %993, %994 : vector<4x32xf32>
    %996 = tpu.concatenate %545, %605, %665, %725, %785, %845, %905, %965 in 0 : vector<4x32xf32>, vector<4x32xf32>, vector<4x32xf32>, vector<4x32xf32>, vector<4x32xf32>, vector<4x32xf32>, vector<4x32xf32>, vector<4x32xf32> -> vector<32x32xf32>
    %997 = tpu.concatenate %995, %935, %875, %815, %755, %695, %635, %575 in 0 : vector<4x32xf32>, vector<4x32xf32>, vector<4x32xf32>, vector<4x32xf32>, vector<4x32xf32>, vector<4x32xf32>, vector<4x32xf32>, vector<4x32xf32> -> vector<32x32xf32>
    %998 = tpu.concatenate %996, %997 in 1 : vector<32x32xf32>, vector<32x32xf32> -> vector<32x64xf32>
    %cst_168 = arith.constant dense<0.000000e+00> : vector<32xf32>
    %999 = vector.multi_reduction <add>, %998, %cst_168 [1] : vector<32x64xf32> to vector<32xf32>
    %1000 = vector.shape_cast %999 : vector<32xf32> to vector<32x1xf32>
    %cst_169 = arith.constant 6.400000e+01 : f32
    %1001 = vector.broadcast %cst_169 : f32 to vector<32x1xf32>
    %1002 = arith.divf %1000, %1001 : vector<32x1xf32>
    %1003 = vector.broadcast %1002 : vector<32x1xf32> to vector<32x64xf32>
    %1004 = arith.subf %998, %1003 : vector<32x64xf32>
    %1005 = arith.mulf %1004, %1004 : vector<32x64xf32>
    %cst_170 = arith.constant dense<0.000000e+00> : vector<32xf32>
    %1006 = vector.multi_reduction <add>, %1005, %cst_170 [1] : vector<32x64xf32> to vector<32xf32>
    %1007 = vector.shape_cast %1006 : vector<32xf32> to vector<32x1xf32>
    %cst_171 = arith.constant 6.400000e+01 : f32
    %1008 = vector.broadcast %cst_171 : f32 to vector<32x1xf32>
    %1009 = arith.divf %1007, %1008 : vector<32x1xf32>
    %1010 = vector.broadcast %1002 : vector<32x1xf32> to vector<32x64xf32>
    %1011 = arith.subf %998, %1010 : vector<32x64xf32>
    %cst_172 = arith.constant 9.99999974E-6 : f32
    %1012 = vector.broadcast %cst_172 : f32 to vector<32x1xf32>
    %1013 = arith.addf %1009, %1012 : vector<32x1xf32>
    %1014 = math.rsqrt %1013 : vector<32x1xf32>
    %1015 = vector.broadcast %1014 : vector<32x1xf32> to vector<32x64xf32>
    %1016 = arith.mulf %1011, %1015 : vector<32x64xf32>
    %c0_173 = arith.constant 0 : index
    %c0_174 = arith.constant 0 : index
    %1017 = vector.load %arg17[%c0_173, %c0_174] : memref<1x64xf32, #tpu.memory_space<vmem>>, vector<1x64xf32>
    %1018 = vector.broadcast %1017 : vector<1x64xf32> to vector<32x64xf32>
    %1019 = arith.mulf %1016, %1018 : vector<32x64xf32>
    %c0_175 = arith.constant 0 : index
    %c0_176 = arith.constant 0 : index
    %1020 = vector.load %arg18[%c0_175, %c0_176] : memref<1x64xf32, #tpu.memory_space<vmem>>, vector<1x64xf32>
    %1021 = vector.broadcast %1020 : vector<1x64xf32> to vector<32x64xf32>
    %1022 = arith.addf %1019, %1021 : vector<32x64xf32>
    %1023 = vector.extract_strided_slice %1022 {offsets = [0, 0], sizes = [4, 64], strides = [1, 1]} : vector<32x64xf32> to vector<4x64xf32>
    %1024 = vector.extract_strided_slice %1022 {offsets = [4, 0], sizes = [4, 64], strides = [1, 1]} : vector<32x64xf32> to vector<4x64xf32>
    %1025 = arith.addf %1023, %1024 : vector<4x64xf32>
    %1026 = vector.extract_strided_slice %1022 {offsets = [8, 0], sizes = [4, 64], strides = [1, 1]} : vector<32x64xf32> to vector<4x64xf32>
    %1027 = arith.addf %1025, %1026 : vector<4x64xf32>
    %1028 = vector.extract_strided_slice %1022 {offsets = [12, 0], sizes = [4, 64], strides = [1, 1]} : vector<32x64xf32> to vector<4x64xf32>
    %1029 = arith.addf %1027, %1028 : vector<4x64xf32>
    %1030 = vector.extract_strided_slice %1022 {offsets = [16, 0], sizes = [4, 64], strides = [1, 1]} : vector<32x64xf32> to vector<4x64xf32>
    %1031 = arith.addf %1029, %1030 : vector<4x64xf32>
    %1032 = vector.extract_strided_slice %1022 {offsets = [20, 0], sizes = [4, 64], strides = [1, 1]} : vector<32x64xf32> to vector<4x64xf32>
    %1033 = arith.addf %1031, %1032 : vector<4x64xf32>
    %1034 = vector.extract_strided_slice %1022 {offsets = [24, 0], sizes = [4, 64], strides = [1, 1]} : vector<32x64xf32> to vector<4x64xf32>
    %1035 = arith.addf %1033, %1034 : vector<4x64xf32>
    %1036 = vector.extract_strided_slice %1022 {offsets = [28, 0], sizes = [4, 64], strides = [1, 1]} : vector<32x64xf32> to vector<4x64xf32>
    %1037 = arith.addf %1035, %1036 : vector<4x64xf32>
    %cst_177 = arith.constant 1.250000e-01 : f32
    %1038 = vector.broadcast %cst_177 : f32 to vector<4x64xf32>
    %1039 = arith.mulf %1037, %1038 : vector<4x64xf32>
    %c0_178 = arith.constant 0 : index
    %c0_179 = arith.constant 0 : index
    %1040 = vector.load %arg19[%c0_178, %c0_179] : memref<64x1024xf32, #tpu.memory_space<vmem>>, vector<64x1024xf32>
    %cst_180 = arith.constant dense<0.000000e+00> : vector<4x1024xf32>
    %1041 = tpu.matmul %1039, %1040, %cst_180 {dimension_numbers = #tpu.dot_dimension_numbers<[1], [0], [0], [1], [0, 0, 1, 1], [], []>} : vector<4x64xf32>, vector<64x1024xf32>, vector<4x1024xf32> -> vector<4x1024xf32>
    %c0_181 = arith.constant 0 : index
    %c0_182 = arith.constant 0 : index
    %1042 = vector.load %arg20[%c0_181, %c0_182] : memref<1x1024xf32, #tpu.memory_space<vmem>>, vector<1x1024xf32>
    %1043 = vector.broadcast %1042 : vector<1x1024xf32> to vector<4x1024xf32>
    %1044 = arith.addf %1041, %1043 : vector<4x1024xf32>
    %cst_183 = arith.constant 0.000000e+00 : f32
    %1045 = vector.broadcast %cst_183 : f32 to vector<4x1024xf32>
    %1046 = arith.maximumf %1044, %1045 : vector<4x1024xf32>
    %c0_184 = arith.constant 0 : index
    %c0_185 = arith.constant 0 : index
    %1047 = vector.load %arg21[%c0_184, %c0_185] : memref<1024x512xf32, #tpu.memory_space<vmem>>, vector<1024x512xf32>
    %cst_186 = arith.constant dense<0.000000e+00> : vector<4x512xf32>
    %1048 = tpu.matmul %1046, %1047, %cst_186 {dimension_numbers = #tpu.dot_dimension_numbers<[1], [0], [0], [1], [0, 0, 1, 1], [], []>} : vector<4x1024xf32>, vector<1024x512xf32>, vector<4x512xf32> -> vector<4x512xf32>
    %c0_187 = arith.constant 0 : index
    %c0_188 = arith.constant 0 : index
    %1049 = vector.load %arg22[%c0_187, %c0_188] : memref<1x512xf32, #tpu.memory_space<vmem>>, vector<1x512xf32>
    %1050 = vector.broadcast %1049 : vector<1x512xf32> to vector<4x512xf32>
    %1051 = arith.addf %1048, %1050 : vector<4x512xf32>
    %cst_189 = arith.constant 0.000000e+00 : f32
    %1052 = vector.broadcast %cst_189 : f32 to vector<4x512xf32>
    %1053 = arith.maximumf %1051, %1052 : vector<4x512xf32>
    %c0_190 = arith.constant 0 : index
    %c0_191 = arith.constant 0 : index
    %1054 = vector.load %arg23[%c0_190, %c0_191] : memref<512x256xf32, #tpu.memory_space<vmem>>, vector<512x256xf32>
    %cst_192 = arith.constant dense<0.000000e+00> : vector<4x256xf32>
    %1055 = tpu.matmul %1053, %1054, %cst_192 {dimension_numbers = #tpu.dot_dimension_numbers<[1], [0], [0], [1], [0, 0, 1, 1], [], []>} : vector<4x512xf32>, vector<512x256xf32>, vector<4x256xf32> -> vector<4x256xf32>
    %c0_193 = arith.constant 0 : index
    %c0_194 = arith.constant 0 : index
    %1056 = vector.load %arg24[%c0_193, %c0_194] : memref<1x256xf32, #tpu.memory_space<vmem>>, vector<1x256xf32>
    %1057 = vector.broadcast %1056 : vector<1x256xf32> to vector<4x256xf32>
    %1058 = arith.addf %1055, %1057 : vector<4x256xf32>
    %1059 = vector.extract_strided_slice %1058 {offsets = [0, 0], sizes = [2, 256], strides = [1, 1]} : vector<4x256xf32> to vector<2x256xf32>
    %1060 = vector.extract_strided_slice %1058 {offsets = [2, 0], sizes = [2, 256], strides = [1, 1]} : vector<4x256xf32> to vector<2x256xf32>
    %1061 = arith.mulf %1059, %1060 : vector<2x256xf32>
    %cst_195 = arith.constant dense<0.000000e+00> : vector<2xf32>
    %1062 = vector.multi_reduction <add>, %1061, %cst_195 [1] : vector<2x256xf32> to vector<2xf32>
    %1063 = vector.shape_cast %1062 : vector<2xf32> to vector<2x1xf32>
    %1064 = arith.mulf %1059, %1059 : vector<2x256xf32>
    %cst_196 = arith.constant dense<0.000000e+00> : vector<2xf32>
    %1065 = vector.multi_reduction <add>, %1064, %cst_196 [1] : vector<2x256xf32> to vector<2xf32>
    %1066 = vector.shape_cast %1065 : vector<2xf32> to vector<2x1xf32>
    %1067 = math.sqrt %1066 : vector<2x1xf32>
    %1068 = arith.mulf %1060, %1060 : vector<2x256xf32>
    %cst_197 = arith.constant dense<0.000000e+00> : vector<2xf32>
    %1069 = vector.multi_reduction <add>, %1068, %cst_197 [1] : vector<2x256xf32> to vector<2xf32>
    %1070 = vector.shape_cast %1069 : vector<2xf32> to vector<2x1xf32>
    %1071 = math.sqrt %1070 : vector<2x1xf32>
    %1072 = arith.mulf %1067, %1071 : vector<2x1xf32>
    %cst_198 = arith.constant 9.99999997E-7 : f32
    %1073 = vector.broadcast %cst_198 : f32 to vector<2x1xf32>
    %1074 = arith.maximumf %1072, %1073 : vector<2x1xf32>
    %1075 = arith.divf %1063, %1074 : vector<2x1xf32>
    %c0_199 = arith.constant 0 : index
    %c0_200 = arith.constant 0 : index
    %1076 = vector.load %arg25[%c0_199, %c0_200] : memref<2x1xf32, #tpu.memory_space<vmem>>, vector<2x1xf32>
    tpu.vector_store %arg25[%c0_199, %c0_200], %1075 {strides = array<i32>} : memref<2x1xf32, #tpu.memory_space<vmem>>, vector<2x1xf32>,
    return
  }
}

</mosaic_0001>

<llo_original>
// kernel: forward.1
$region0: #{forward.1}
  #allocation0 [shape = 'u32[]', space=smem, size = 0x4, offset = 0x4, fixed_abs, tag = 'smem constant byte address 0x4 - core index']
  #allocation1 [shape = 'u32[144,128]{1,0:T(1,128)}', space=vmem, size = 0x12000, scoped, tag = 'internal scratch']
  %s0 = inlined_call_operand.vmem [shape: f32[32,32], index: 0, kind: input, shape index: {}]
  %s1 = inlined_call_operand.vmem [shape: f32[32,96], index: 1, kind: input, shape index: {}]
  %s2 = inlined_call_operand.vmem [shape: f32[32,96], index: 2, kind: input, shape index: {}]
  %s3 = inlined_call_operand.vmem [shape: f32[1,96], index: 3, kind: input, shape index: {}]
  %s4 = inlined_call_operand.vmem [shape: f32[1,96], index: 4, kind: input, shape index: {}]
  %s5 = inlined_call_operand.vmem [shape: f32[32,96], index: 5, kind: input, shape index: {}]
  %s6 = inlined_call_operand.vmem [shape: f32[32,96], index: 6, kind: input, shape index: {}]
  %s7 = inlined_call_operand.vmem [shape: f32[1,96], index: 7, kind: input, shape index: {}]
  %s8 = inlined_call_operand.vmem [shape: f32[1,96], index: 8, kind: input, shape index: {}]
  %s9 = inlined_call_operand.vmem [shape: f32[64,96], index: 9, kind: input, shape index: {}]
  %s10 = inlined_call_operand.vmem [shape: f32[32,96], index: 10, kind: input, shape index: {}]
  %s11 = inlined_call_operand.vmem [shape: f32[1,96], index: 11, kind: input, shape index: {}]
  %s12 = inlined_call_operand.vmem [shape: f32[1,96], index: 12, kind: input, shape index: {}]
  %s13 = inlined_call_operand.vmem [shape: f32[64,96], index: 13, kind: input, shape index: {}]
  %s14 = inlined_call_operand.vmem [shape: f32[32,96], index: 14, kind: input, shape index: {}]
  %s15 = inlined_call_operand.vmem [shape: f32[1,96], index: 15, kind: input, shape index: {}]
  %s16 = inlined_call_operand.vmem [shape: f32[1,96], index: 16, kind: input, shape index: {}]
  %s17 = inlined_call_operand.vmem [shape: f32[1,64], index: 17, kind: input, shape index: {}]
  %s18 = inlined_call_operand.vmem [shape: f32[1,64], index: 18, kind: input, shape index: {}]
  %s19 = inlined_call_operand.vmem [shape: f32[64,1024], index: 19, kind: input, shape index: {}]
  %s20 = inlined_call_operand.vmem [shape: f32[1,1024], index: 20, kind: input, shape index: {}]
  %s21 = inlined_call_operand.vmem [shape: f32[1024,512], index: 21, kind: input, shape index: {}]
  %s22 = inlined_call_operand.vmem [shape: f32[1,512], index: 22, kind: input, shape index: {}]
  %s23 = inlined_call_operand.vmem [shape: f32[512,256], index: 23, kind: input, shape index: {}]
  %s24 = inlined_call_operand.vmem [shape: f32[1,256], index: 24, kind: input, shape index: {}]
  %s25 = inlined_call_operand.vmem [shape: f32[2,1], index: 25, kind: output, shape index: {}]
  %s26 = sld [smem:[#allocation0]]
  $region110: #{forward.1} parent=0
    _
  %s28 = ssub.s32 1, %s26
  %s29 = scalar_select 0, %s28, %s26
  // Predicated region
  $region2: #{forward.1} parent=0 // pred_check
    _
  $region3: #{forward.1} parent=0 // pred_check_branch
    %31 = sbr.rel (0) target = $region5
  $region4: #{forward.1} parent=0 // pred_region
    _
  $region5: #{forward.1} parent=0 // pred_fallthru
    _
  // Predicated region
  $region6: #{forward.1} parent=0 // pred_check
    _
  $region7: #{forward.1} parent=0 // pred_check_branch
    %33 = sbr.rel (0) target = $region9
  $region8: #{forward.1} parent=0 // pred_region
    _
  $region9: #{forward.1} parent=0 // pred_fallthru
    _
  // Predicated region
  $region10: #{forward.1} parent=0 // pred_check
    _
  $region11: #{forward.1} parent=0 // pred_check_branch
    %35 = sbr.rel (0) target = $region13
  $region12: #{forward.1} parent=0 // pred_region
    _
  $region13: #{forward.1} parent=0 // pred_fallthru
    _
  // Predicated region
  $region14: #{forward.1} parent=0 // pred_check
    _
  $region15: #{forward.1} parent=0 // pred_check_branch
    %37 = sbr.rel (0) target = $region17
  $region16: #{forward.1} parent=0 // pred_region
    _
  $region17: #{forward.1} parent=0 // pred_fallthru
    _
  // Predicated region
  $region18: #{forward.1} parent=0 // pred_check
    _
  $region19: #{forward.1} parent=0 // pred_check_branch
    %39 = sbr.rel (0) target = $region21
  $region20: #{forward.1} parent=0 // pred_region
    _
  $region21: #{forward.1} parent=0 // pred_fallthru
    _
  // Predicated region
  $region22: #{forward.1} parent=0 // pred_check
    _
  $region23: #{forward.1} parent=0 // pred_check_branch
    %41 = sbr.rel (0) target = $region25
  $region24: #{forward.1} parent=0 // pred_region
    _
  $region25: #{forward.1} parent=0 // pred_fallthru
    _
  // Predicated region
  $region26: #{forward.1} parent=0 // pred_check
    _
  $region27: #{forward.1} parent=0 // pred_check_branch
    %43 = sbr.rel (0) target = $region29
  $region28: #{forward.1} parent=0 // pred_region
    _
  $region29: #{forward.1} parent=0 // pred_fallthru
    _
  // Predicated region
  $region30: #{forward.1} parent=0 // pred_check
    _
  $region31: #{forward.1} parent=0 // pred_check_branch
    %45 = sbr.rel (0) target = $region33
  $region32: #{forward.1} parent=0 // pred_region
    _
  $region33: #{forward.1} parent=0 // pred_fallthru
    _
  // Predicated region
  $region34: #{forward.1} parent=0 // pred_check
    _
  $region35: #{forward.1} parent=0 // pred_check_branch
    %47 = sbr.rel (0) target = $region37
  $region36: #{forward.1} parent=0 // pred_region
    _
  $region37: #{forward.1} parent=0 // pred_fallthru
    _
  // Predicated region
  $region38: #{forward.1} parent=0 // pred_check
    _
  $region39: #{forward.1} parent=0 // pred_check_branch
    %49 = sbr.rel (0) target = $region41
  $region40: #{forward.1} parent=0 // pred_region
    _
  $region41: #{forward.1} parent=0 // pred_fallthru
    _
  // Predicated region
  $region42: #{forward.1} parent=0 // pred_check
    _
  $region43: #{forward.1} parent=0 // pred_check_branch
    %51 = sbr.rel (0) target = $region45
  $region44: #{forward.1} parent=0 // pred_region
    _
  $region45: #{forward.1} parent=0 // pred_fallthru
    _
  // Predicated region
  $region46: #{forward.1} parent=0 // pred_check
    _
  $region47: #{forward.1} parent=0 // pred_check_branch
    %53 = sbr.rel (0) target = $region49
  $region48: #{forward.1} parent=0 // pred_region
    _
  $region49: #{forward.1} parent=0 // pred_fallthru
    _
  // Predicated region
  $region50: #{forward.1} parent=0 // pred_check
    _
  $region51: #{forward.1} parent=0 // pred_check_branch
    %55 = sbr.rel (0) target = $region53
  $region52: #{forward.1} parent=0 // pred_region
    _
  $region53: #{forward.1} parent=0 // pred_fallthru
    _
  // Predicated region
  $region54: #{forward.1} parent=0 // pred_check
    _
  $region55: #{forward.1} parent=0 // pred_check_branch
    %57 = sbr.rel (0) target = $region57
  $region56: #{forward.1} parent=0 // pred_region
    _
  $region57: #{forward.1} parent=0 // pred_fallthru
    _
  // Predicated region
  $region58: #{forward.1} parent=0 // pred_check
    _
  $region59: #{forward.1} parent=0 // pred_check_branch
    %59 = sbr.rel (0) target = $region61
  $region60: #{forward.1} parent=0 // pred_region
    _
  $region61: #{forward.1} parent=0 // pred_fallthru
    _
  // Predicated region
  $region62: #{forward.1} parent=0 // pred_check
    _
  $region63: #{forward.1} parent=0 // pred_check_branch
    %61 = sbr.rel (0) target = $region65
  $region64: #{forward.1} parent=0 // pred_region
    _
  $region65: #{forward.1} parent=0 // pred_fallthru
    _
  // Predicated region
  $region66: #{forward.1} parent=0 // pred_check
    _
  $region67: #{forward.1} parent=0 // pred_check_branch
    %63 = sbr.rel (0) target = $region69
  $region68: #{forward.1} parent=0 // pred_region
    _
  $region69: #{forward.1} parent=0 // pred_fallthru
    _
  // Predicated region
  $region70: #{forward.1} parent=0 // pred_check
    _
  $region71: #{forward.1} parent=0 // pred_check_branch
    %65 = sbr.rel (0) target = $region73
  $region72: #{forward.1} parent=0 // pred_region
    _
  $region73: #{forward.1} parent=0 // pred_fallthru
    _
  // Predicated region
  $region74: #{forward.1} parent=0 // pred_check
    _
  $region75: #{forward.1} parent=0 // pred_check_branch
    %67 = sbr.rel (0) target = $region77
  $region76: #{forward.1} parent=0 // pred_region
    _
  $region77: #{forward.1} parent=0 // pred_fallthru
    _
  // Predicated region
  $region78: #{forward.1} parent=0 // pred_check
    _
  $region79: #{forward.1} parent=0 // pred_check_branch
    %69 = sbr.rel (0) target = $region81
  $region80: #{forward.1} parent=0 // pred_region
    _
  $region81: #{forward.1} parent=0 // pred_fallthru
    _
  // Predicated region
  $region82: #{forward.1} parent=0 // pred_check
    _
  $region83: #{forward.1} parent=0 // pred_check_branch
    %71 = sbr.rel (0) target = $region85
  $region84: #{forward.1} parent=0 // pred_region
    _
  $region85: #{forward.1} parent=0 // pred_fallthru
    _
  // Predicated region
  $region86: #{forward.1} parent=0 // pred_check
    _
  $region87: #{forward.1} parent=0 // pred_check_branch
    %73 = sbr.rel (0) target = $region89
  $region88: #{forward.1} parent=0 // pred_region
    _
  $region89: #{forward.1} parent=0 // pred_fallthru
    _
  // Predicated region
  $region90: #{forward.1} parent=0 // pred_check
    _
  $region91: #{forward.1} parent=0 // pred_check_branch
    %75 = sbr.rel (0) target = $region93
  $region92: #{forward.1} parent=0 // pred_region
    _
  $region93: #{forward.1} parent=0 // pred_fallthru
    _
  // Predicated region
  $region94: #{forward.1} parent=0 // pred_check
    _
  $region95: #{forward.1} parent=0 // pred_check_branch
    %77 = sbr.rel (0) target = $region97
  $region96: #{forward.1} parent=0 // pred_region
    _
  $region97: #{forward.1} parent=0 // pred_fallthru
    _
  // Predicated region
  $region98: #{forward.1} parent=0 // pred_check
    _
  $region99: #{forward.1} parent=0 // pred_check_branch
    %79 = sbr.rel (0) target = $region101
  $region100: #{forward.1} parent=0 // pred_region
    _
  $region101: #{forward.1} parent=0 // pred_fallthru
    _
  %v80 = vld [vmem:[%s0] sm:$0xff]
  %v81 = vld [vmem:[%s0 + $0x8] sm:$0xff]
  %v82 = vld [vmem:[%s0 + $0x10] sm:$0xff]
  %v83 = vld [vmem:[%s0 + $0x18] sm:$0xff]
  %v84 = vld [vmem:[%s1] sm:$0xff]
  %v85 = vld [vmem:[%s1 + $0x8] sm:$0xff]
  %v86 = vld [vmem:[%s1 + $0x10] sm:$0xff]
  %v87 = vld [vmem:[%s1 + $0x18] sm:$0xff]
  %v88 = vld [vmem:[%s2] sm:$0xff]
  %v89 = vld [vmem:[%s2 + $0x8] sm:$0xff]
  %v90 = vld [vmem:[%s2 + $0x10] sm:$0xff]
  %v91 = vld [vmem:[%s2 + $0x18] sm:$0xff]
  %v92 = vld [vmem:[%s3] sm:$0x1]
  %v93 = vld [vmem:[%s4] sm:$0x1]
  %v94 = vld [vmem:[%s5] sm:$0xff]
  %v95 = vld [vmem:[%s5 + $0x8] sm:$0xff]
  %v96 = vld [vmem:[%s5 + $0x10] sm:$0xff]
  %v97 = vld [vmem:[%s5 + $0x18] sm:$0xff]
  %v98 = vld [vmem:[%s6] sm:$0xff]
  %v99 = vld [vmem:[%s6 + $0x8] sm:$0xff]
  %v100 = vld [vmem:[%s6 + $0x10] sm:$0xff]
  %v101 = vld [vmem:[%s6 + $0x18] sm:$0xff]
  %v102 = vld [vmem:[%s7] sm:$0x1]
  %v103 = vld [vmem:[%s8] sm:$0x1]
  %v105 = vlaneseq
  %v106 = vshrl.u32 %v105, 7
  %v107 = vsub.s32 0, %v106
  %v108 = vrot.slane %v92, %v107
  %vm110 = vcmask 261120
  %v112 = vsel %vm110, %v80, 0
  %v115 = vsel %vm110, %v81, 0
  %v118 = vsel %vm110, %v82, 0
  %v121 = vsel %vm110, %v83, 0
  %123 = vmatprep.subr.mxu0 0.0
  %124 = vmatpush1.msra.mxu0 %v84
  %125 = vmatprep.subr.mxu0 0.0
  %126 = vmatpush1.msra.mxu0 %v85
  %127 = vmatprep.subr.mxu0 0.0
  %128 = vmatpush1.msra.mxu0 %v86
  %129 = vmatprep.subr.mxu0 0.0
  %130 = vmatpush1.msra.mxu0 %v87
  %131 = vmatprep.subr.mxu0 0.0
  %132 = vmatpush1.msra.mxu0 0.0
  %133 = vmatprep.subr.mxu0 0.0
  %134 = vmatpush1.msra.mxu0 0.0
  %135 = vmatprep.subr.mxu0 0.0
  %136 = vmatpush1.msra.mxu0 0.0
  %137 = vmatprep.subr.mxu0 0.0
  %138 = vmatpush1.msra.mxu0 0.0
  %139 = vmatprep.subr.mxu0 0.0
  %140 = vmatpush1.msra.mxu0 0.0
  %141 = vmatprep.subr.mxu0 0.0
  %142 = vmatpush1.msra.mxu0 0.0
  %143 = vmatprep.subr.mxu0 0.0
  %144 = vmatpush1.msra.mxu0 0.0
  %145 = vmatprep.subr.mxu0 0.0
  %146 = vmatpush1.msra.mxu0 0.0
  %147 = vmatprep.subr.mxu0 0.0
  %148 = vmatpush1.msra.mxu0 0.0
  %149 = vmatprep.subr.mxu0 0.0
  %150 = vmatpush1.msra.mxu0 0.0
  %151 = vmatprep.subr.mxu0 0.0
  %152 = vmatpush1.msra.mxu0 0.0
  %153 = vmatprep.subr.mxu0 0.0
  %154 = vmatpush1.msra.mxu0 0.0
  %155 = vmatprep.subr.mxu0 0.0
  %156 = vmatpush1.msra.mxu0 0.0
  %157 = vmatprep.subr.mxu0 0.0
  %158 = vmatpush1.msra.mxu0 0.0
  %159 = vmatprep.subr.mxu0 0.0
  %160 = vmatpush1.msra.mxu0 0.0
  %161 = vmatprep.subr.mxu0 0.0
  %162 = vmatpush1.msra.mxu0 0.0
  %163 = vmatprep.subr.mxu0 0.0
  %164 = vmatpush1.msra.mxu0 0.0
  %165 = vmatprep.subr.mxu0 0.0
  %166 = vmatpush1.msra.mxu0 0.0
  %167 = vmatprep.subr.mxu0 0.0
  %168 = vmatpush1.msra.mxu0 0.0
  %169 = vmatprep.subr.mxu0 0.0
  %170 = vmatpush1.msra.mxu0 0.0
  %171 = vmatprep.subr.mxu0 0.0
  %172 = vmatpush1.msra.mxu0 0.0
  %173 = vmatprep.subr.mxu0 0.0
  %174 = vmatpush1.msra.mxu0 0.0
  %175 = vmatprep.subr.mxu0 0.0
  %176 = vmatpush1.msra.mxu0 0.0
  %177 = vmatprep.subr.mxu0 0.0
  %178 = vmatpush1.msra.mxu0 0.0
  %179 = vmatprep.subr.mxu0 0.0
  %180 = vmatpush1.msra.mxu0 0.0
  %181 = vmatprep.subr.mxu0 0.0
  %182 = vmatpush1.msra.mxu0 0.0
  %183 = vmatprep.subr.mxu0 0.0
  %184 = vmatpush1.msra.mxu0 0.0
  %185 = vmatprep.subr.mxu0 0.0
  %186 = vmatpush1.msra.mxu0 0.0
  %187 = vmatprep.mubr.f32.mxu0 0.0
  %188 = vmatmul.mubr.f32.gmra.mrb[0].mxu0 %v112
  %v189 = vpop.f32.mrb[0].mxu0
  %v190 = vadd.f32 %v108, %v189
  %v191 = vpop.f32.mrb[0].mxu0
  %192 = vmatprep.mubr.f32.mxu0 0.0
  %193 = vmatmul.mubr.f32.gmra.mrb[0].mxu0 %v115
  %v194 = vpop.f32.mrb[0].mxu0
  %v195 = vadd.f32 %v108, %v194
  %v196 = vpop.f32.mrb[0].mxu0
  %197 = vmatprep.mubr.f32.mxu0 0.0
  %198 = vmatmul.mubr.f32.gmra.mrb[0].mxu0 %v118
  %v199 = vpop.f32.mrb[0].mxu0
  %v200 = vadd.f32 %v108, %v199
  %v201 = vpop.f32.mrb[0].mxu0
  %202 = vmatprep.mubr.f32.mxu0 0.0
  %203 = vmatmul.mubr.f32.gmra.mrb[0].mxu0 %v121
  %v204 = vpop.f32.mrb[0].mxu0
  %v205 = vadd.f32 %v108, %v204
  %v206 = vpop.f32.mrb[0].mxu0
  %207 = vdwg.mxu0
  %v209 = vlaneseq
  %v210 = vshrl.u32 %v209, 7
  %v211 = vsub.s32 0, %v210
  %v212 = vrot.slane %v102, %v211
  %214 = vmatprep.subr.mxu0 0.0
  %215 = vmatpush1.msra.mxu0 %v94
  %216 = vmatprep.subr.mxu0 0.0
  %217 = vmatpush1.msra.mxu0 %v95
  %218 = vmatprep.subr.mxu0 0.0
  %219 = vmatpush1.msra.mxu0 %v96
  %220 = vmatprep.subr.mxu0 0.0
  %221 = vmatpush1.msra.mxu0 %v97
  %222 = vmatprep.subr.mxu0 0.0
  %223 = vmatpush1.msra.mxu0 0.0
  %224 = vmatprep.subr.mxu0 0.0
  %225 = vmatpush1.msra.mxu0 0.0
  %226 = vmatprep.subr.mxu0 0.0
  %227 = vmatpush1.msra.mxu0 0.0
  %228 = vmatprep.subr.mxu0 0.0
  %229 = vmatpush1.msra.mxu0 0.0
  %230 = vmatprep.subr.mxu0 0.0
  %231 = vmatpush1.msra.mxu0 0.0
  %232 = vmatprep.subr.mxu0 0.0
  %233 = vmatpush1.msra.mxu0 0.0
  %234 = vmatprep.subr.mxu0 0.0
  %235 = vmatpush1.msra.mxu0 0.0
  %236 = vmatprep.subr.mxu0 0.0
  %237 = vmatpush1.msra.mxu0 0.0
  %238 = vmatprep.subr.mxu0 0.0
  %239 = vmatpush1.msra.mxu0 0.0
  %240 = vmatprep.subr.mxu0 0.0
  %241 = vmatpush1.msra.mxu0 0.0
  %242 = vmatprep.subr.mxu0 0.0
  %243 = vmatpush1.msra.mxu0 0.0
  %244 = vmatprep.subr.mxu0 0.0
  %245 = vmatpush1.msra.mxu0 0.0
  %246 = vmatprep.subr.mxu0 0.0
  %247 = vmatpush1.msra.mxu0 0.0
  %248 = vmatprep.subr.mxu0 0.0
  %249 = vmatpush1.msra.mxu0 0.0
  %250 = vmatprep.subr.mxu0 0.0
  %251 = vmatpush1.msra.mxu0 0.0
  %252 = vmatprep.subr.mxu0 0.0
  %253 = vmatpush1.msra.mxu0 0.0
  %254 = vmatprep.subr.mxu0 0.0
  %255 = vmatpush1.msra.mxu0 0.0
  %256 = vmatprep.subr.mxu0 0.0
  %257 = vmatpush1.msra.mxu0 0.0
  %258 = vmatprep.subr.mxu0 0.0
  %259 = vmatpush1.msra.mxu0 0.0
  %260 = vmatprep.subr.mxu0 0.0
  %261 = vmatpush1.msra.mxu0 0.0
  %262 = vmatprep.subr.mxu0 0.0
  %263 = vmatpush1.msra.mxu0 0.0
  %264 = vmatprep.subr.mxu0 0.0
  %265 = vmatpush1.msra.mxu0 0.0
  %266 = vmatprep.subr.mxu0 0.0
  %267 = vmatpush1.msra.mxu0 0.0
  %268 = vmatprep.subr.mxu0 0.0
  %269 = vmatpush1.msra.mxu0 0.0
  %270 = vmatprep.subr.mxu0 0.0
  %271 = vmatpush1.msra.mxu0 0.0
  %272 = vmatprep.subr.mxu0 0.0
  %273 = vmatpush1.msra.mxu0 0.0
  %274 = vmatprep.subr.mxu0 0.0
  %275 = vmatpush1.msra.mxu0 0.0
  %276 = vmatprep.subr.mxu0 0.0
  %277 = vmatpush1.msra.mxu0 0.0
  %278 = vmatprep.mubr.f32.mxu0 0.0
  %279 = vmatmul.mubr.f32.gmra.mrb[0].mxu0 %v112
  %v280 = vpop.f32.mrb[0].mxu0
  %v281 = vadd.f32 %v212, %v280
  %v282 = vpop.f32.mrb[0].mxu0
  %283 = vmatprep.mubr.f32.mxu0 0.0
  %284 = vmatmul.mubr.f32.gmra.mrb[0].mxu0 %v115
  %v285 = vpop.f32.mrb[0].mxu0
  %v286 = vadd.f32 %v212, %v285
  %v287 = vpop.f32.mrb[0].mxu0
  %288 = vmatprep.mubr.f32.mxu0 0.0
  %289 = vmatmul.mubr.f32.gmra.mrb[0].mxu0 %v118
  %v290 = vpop.f32.mrb[0].mxu0
  %v291 = vadd.f32 %v212, %v290
  %v292 = vpop.f32.mrb[0].mxu0
  %293 = vmatprep.mubr.f32.mxu0 0.0
  %294 = vmatmul.mubr.f32.gmra.mrb[0].mxu0 %v121
  %v295 = vpop.f32.mrb[0].mxu0
  %v296 = vadd.f32 %v212, %v295
  %v297 = vpop.f32.mrb[0].mxu0
  %298 = vdwg.mxu0
  %v300 = vlaneseq
  %v301 = vshrl.u32 %v300, 7
  %v302 = vsub.s32 0, %v301
  %v303 = vrot.slane %v93, %v302
  %v306 = vsel %vm110, 0.0, 0
  %308 = vmatprep.subr.mxu0 0.0
  %309 = vmatpush1.msra.mxu0 %v88
  %310 = vmatprep.subr.mxu0 0.0
  %311 = vmatpush1.msra.mxu0 %v89
  %312 = vmatprep.subr.mxu0 0.0
  %313 = vmatpush1.msra.mxu0 %v90
  %314 = vmatprep.subr.mxu0 0.0
  %315 = vmatpush1.msra.mxu0 %v91
  %316 = vmatprep.subr.mxu0 0.0
  %317 = vmatpush1.msra.mxu0 0.0
  %318 = vmatprep.subr.mxu0 0.0
  %319 = vmatpush1.msra.mxu0 0.0
  %320 = vmatprep.subr.mxu0 0.0
  %321 = vmatpush1.msra.mxu0 0.0
  %322 = vmatprep.subr.mxu0 0.0
  %323 = vmatpush1.msra.mxu0 0.0
  %324 = vmatprep.subr.mxu0 0.0
  %325 = vmatpush1.msra.mxu0 0.0
  %326 = vmatprep.subr.mxu0 0.0
  %327 = vmatpush1.msra.mxu0 0.0
  %328 = vmatprep.subr.mxu0 0.0
  %329 = vmatpush1.msra.mxu0 0.0
  %330 = vmatprep.subr.mxu0 0.0
  %331 = vmatpush1.msra.mxu0 0.0
  %332 = vmatprep.subr.mxu0 0.0
  %333 = vmatpush1.msra.mxu0 0.0
  %334 = vmatprep.subr.mxu0 0.0
  %335 = vmatpush1.msra.mxu0 0.0
  %336 = vmatprep.subr.mxu0 0.0
  %337 = vmatpush1.msra.mxu0 0.0
  %338 = vmatprep.subr.mxu0 0.0
  %339 = vmatpush1.msra.mxu0 0.0
  %340 = vmatprep.subr.mxu0 0.0
  %341 = vmatpush1.msra.mxu0 0.0
  %342 = vmatprep.subr.mxu0 0.0
  %343 = vmatpush1.msra.mxu0 0.0
  %344 = vmatprep.subr.mxu0 0.0
  %345 = vmatpush1.msra.mxu0 0.0
  %346 = vmatprep.subr.mxu0 0.0
  %347 = vmatpush1.msra.mxu0 0.0
  %348 = vmatprep.subr.mxu0 0.0
  %349 = vmatpush1.msra.mxu0 0.0
  %350 = vmatprep.subr.mxu0 0.0
  %351 = vmatpush1.msra.mxu0 0.0
  %352 = vmatprep.subr.mxu0 0.0
  %353 = vmatpush1.msra.mxu0 0.0
  %354 = vmatprep.subr.mxu0 0.0
  %355 = vmatpush1.msra.mxu0 0.0
  %356 = vmatprep.subr.mxu0 0.0
  %357 = vmatpush1.msra.mxu0 0.0
  %358 = vmatprep.subr.mxu0 0.0
  %359 = vmatpush1.msra.mxu0 0.0
  %360 = vmatprep.subr.mxu0 0.0
  %361 = vmatpush1.msra.mxu0 0.0
  %362 = vmatprep.subr.mxu0 0.0
  %363 = vmatpush1.msra.mxu0 0.0
  %364 = vmatprep.subr.mxu0 0.0
  %365 = vmatpush1.msra.mxu0 0.0
  %366 = vmatprep.subr.mxu0 0.0
  %367 = vmatpush1.msra.mxu0 0.0
  %368 = vmatprep.subr.mxu0 0.0
  %369 = vmatpush1.msra.mxu0 0.0
  %370 = vmatprep.subr.mxu0 0.0
  %371 = vmatpush1.msra.mxu0 0.0
  %372 = vmatprep.mubr.f32.mxu0 0.0
  %373 = vmatmul.mubr.f32.gmra.mrb[0].mxu0 %v306
  %v374 = vpop.f32.mrb[0].mxu0
  %v375 = vadd.f32 %v303, %v374
  %v376 = vpop.f32.mrb[0].mxu0
  %377 = vdwg.mxu0
  %v378 = vadd.f32 %v190, %v375
  %v379 = vxor.u32 %v378, 2147483648
  %v380 = vmul.f32 %v379, 1.442695
  %v381 = vpow.pop %v380
  %v382 = vadd.f32 %v381, 1.0
  %v383 = vrcp.pop %v382
  %v384 = vmul.f32 1.0, %v383
  %386 = vrot.lane.b32.xlu0 %v375, 64
  %v387 = vpop.permute.xlu0 %386
  %v389 = vmul.f32 %v384, %v387
  %391 = vrot.lane.b32.xlu0 %v389, 64
  %v392 = vpop.permute.xlu0 %391
  %v394 = vadd.f32 %v190, %v392
  %v395 = vtanh.pop %v394
  %v396 = vsub.f32 1.0, %v384
  %398 = vrot.lane.b32.xlu0 %v395, 96
  %v399 = vpop.permute.xlu0 %398
  %v401 = vmul.f32 %v396, %v399
  %v402 = vmul.f32 %v384, 0.0
  %v403 = vadd.f32 %v401, %v402
  %v405 = vlaneseq
  %v406 = vshrl.u32 %v405, 7
  %v407 = vsub.s32 0, %v406
  %v408 = vrot.slane %v103, %v407
  %410 = vmatprep.subr.mxu0 0.0
  %411 = vmatpush1.msra.mxu0 %v98
  %412 = vmatprep.subr.mxu0 0.0
  %413 = vmatpush1.msra.mxu0 %v99
  %414 = vmatprep.subr.mxu0 0.0
  %415 = vmatpush1.msra.mxu0 %v100
  %416 = vmatprep.subr.mxu0 0.0
  %417 = vmatpush1.msra.mxu0 %v101
  %418 = vmatprep.subr.mxu0 0.0
  %419 = vmatpush1.msra.mxu0 0.0
  %420 = vmatprep.subr.mxu0 0.0
  %421 = vmatpush1.msra.mxu0 0.0
  %422 = vmatprep.subr.mxu0 0.0
  %423 = vmatpush1.msra.mxu0 0.0
  %424 = vmatprep.subr.mxu0 0.0
  %425 = vmatpush1.msra.mxu0 0.0
  %426 = vmatprep.subr.mxu0 0.0
  %427 = vmatpush1.msra.mxu0 0.0
  %428 = vmatprep.subr.mxu0 0.0
  %429 = vmatpush1.msra.mxu0 0.0
  %430 = vmatprep.subr.mxu0 0.0
  %431 = vmatpush1.msra.mxu0 0.0
  %432 = vmatprep.subr.mxu0 0.0
  %433 = vmatpush1.msra.mxu0 0.0
  %434 = vmatprep.subr.mxu0 0.0
  %435 = vmatpush1.msra.mxu0 0.0
  %436 = vmatprep.subr.mxu0 0.0
  %437 = vmatpush1.msra.mxu0 0.0
  %438 = vmatprep.subr.mxu0 0.0
  %439 = vmatpush1.msra.mxu0 0.0
  %440 = vmatprep.subr.mxu0 0.0
  %441 = vmatpush1.msra.mxu0 0.0
  %442 = vmatprep.subr.mxu0 0.0
  %443 = vmatpush1.msra.mxu0 0.0
  %444 = vmatprep.subr.mxu0 0.0
  %445 = vmatpush1.msra.mxu0 0.0
  %446 = vmatprep.subr.mxu0 0.0
  %447 = vmatpush1.msra.mxu0 0.0
  %448 = vmatprep.subr.mxu0 0.0
  %449 = vmatpush1.msra.mxu0 0.0
  %450 = vmatprep.subr.mxu0 0.0
  %451 = vmatpush1.msra.mxu0 0.0
  %452 = vmatprep.subr.mxu0 0.0
  %453 = vmatpush1.msra.mxu0 0.0
  %454 = vmatprep.subr.mxu0 0.0
  %455 = vmatpush1.msra.mxu0 0.0
  %456 = vmatprep.subr.mxu0 0.0
  %457 = vmatpush1.msra.mxu0 0.0
  %458 = vmatprep.subr.mxu0 0.0
  %459 = vmatpush1.msra.mxu0 0.0
  %460 = vmatprep.subr.mxu0 0.0
  %461 = vmatpush1.msra.mxu0 0.0
  %462 = vmatprep.subr.mxu0 0.0
  %463 = vmatpush1.msra.mxu0 0.0
  %464 = vmatprep.subr.mxu0 0.0
  %465 = vmatpush1.msra.mxu0 0.0
  %466 = vmatprep.subr.mxu0 0.0
  %467 = vmatpush1.msra.mxu0 0.0
  %468 = vmatprep.subr.mxu0 0.0
  %469 = vmatpush1.msra.mxu0 0.0
  %470 = vmatprep.subr.mxu0 0.0
  %471 = vmatpush1.msra.mxu0 0.0
  %472 = vmatprep.subr.mxu0 0.0
  %473 = vmatpush1.msra.mxu0 0.0
  %474 = vmatprep.mubr.f32.mxu0 0.0
  %475 = vmatmul.mubr.f32.gmra.mrb[0].mxu0 %v306
  %v476 = vpop.f32.mrb[0].mxu0
  %v477 = vadd.f32 %v408, %v476
  %v478 = vpop.f32.mrb[0].mxu0
  %479 = vdwg.mxu0
  %v481 = vrot.slane %v477, 4
  %v483 = vadd.f32 %v296, %v481
  %v484 = vxor.u32 %v483, 2147483648
  %v485 = vmul.f32 %v484, 1.442695
  %v486 = vpow.pop %v485
  %v487 = vadd.f32 %v486, 1.0
  %v488 = vrcp.pop %v487
  %v489 = vmul.f32 1.0, %v488
  %490 = vrot.lane.b32.xlu0 %v481, 64
  %v491 = vpop.permute.xlu0 %490
  %v493 = vmul.f32 %v489, %v491
  %495 = vrot.lane.b32.xlu0 %v493, 64
  %v496 = vpop.permute.xlu0 %495
  %v498 = vadd.f32 %v296, %v496
  %v499 = vtanh.pop %v498
  %v500 = vsub.f32 1.0, %v489
  %502 = vrot.lane.b32.xlu0 %v499, 96
  %v503 = vpop.permute.xlu0 %502
  %v505 = vmul.f32 %v500, %v503
  %v506 = vmul.f32 %v489, 0.0
  %v507 = vadd.f32 %v505, %v506
  %509 = vrot.lane.b32.xlu0 %v403, 96
  %v510 = vpop.permute.xlu0 %509
  %v511 = vsel %vm110, %v510, 0
  %513 = vmatprep.subr.mxu0 0.0
  %514 = vmatpush1.msra.mxu0 %v88
  %515 = vmatprep.subr.mxu0 0.0
  %516 = vmatpush1.msra.mxu0 %v89
  %517 = vmatprep.subr.mxu0 0.0
  %518 = vmatpush1.msra.mxu0 %v90
  %519 = vmatprep.subr.mxu0 0.0
  %520 = vmatpush1.msra.mxu0 %v91
  %521 = vmatprep.subr.mxu0 0.0
  %522 = vmatpush1.msra.mxu0 0.0
  %523 = vmatprep.subr.mxu0 0.0
  %524 = vmatpush1.msra.mxu0 0.0
  %525 = vmatprep.subr.mxu0 0.0
  %526 = vmatpush1.msra.mxu0 0.0
  %527 = vmatprep.subr.mxu0 0.0
  %528 = vmatpush1.msra.mxu0 0.0
  %529 = vmatprep.subr.mxu0 0.0
  %530 = vmatpush1.msra.mxu0 0.0
  %531 = vmatprep.subr.mxu0 0.0
  %532 = vmatpush1.msra.mxu0 0.0
  %533 = vmatprep.subr.mxu0 0.0
  %534 = vmatpush1.msra.mxu0 0.0
  %535 = vmatprep.subr.mxu0 0.0
  %536 = vmatpush1.msra.mxu0 0.0
  %537 = vmatprep.subr.mxu0 0.0
  %538 = vmatpush1.msra.mxu0 0.0
  %539 = vmatprep.subr.mxu0 0.0
  %540 = vmatpush1.msra.mxu0 0.0
  %541 = vmatprep.subr.mxu0 0.0
  %542 = vmatpush1.msra.mxu0 0.0
  %543 = vmatprep.subr.mxu0 0.0
  %544 = vmatpush1.msra.mxu0 0.0
  %545 = vmatprep.subr.mxu0 0.0
  %546 = vmatpush1.msra.mxu0 0.0
  %547 = vmatprep.subr.mxu0 0.0
  %548 = vmatpush1.msra.mxu0 0.0
  %549 = vmatprep.subr.mxu0 0.0
  %550 = vmatpush1.msra.mxu0 0.0
  %551 = vmatprep.subr.mxu0 0.0
  %552 = vmatpush1.msra.mxu0 0.0
  %553 = vmatprep.subr.mxu0 0.0
  %554 = vmatpush1.msra.mxu0 0.0
  %555 = vmatprep.subr.mxu0 0.0
  %556 = vmatpush1.msra.mxu0 0.0
  %557 = vmatprep.subr.mxu0 0.0
  %558 = vmatpush1.msra.mxu0 0.0
  %559 = vmatprep.subr.mxu0 0.0
  %560 = vmatpush1.msra.mxu0 0.0
  %561 = vmatprep.subr.mxu0 0.0
  %562 = vmatpush1.msra.mxu0 0.0
  %563 = vmatprep.subr.mxu0 0.0
  %564 = vmatpush1.msra.mxu0 0.0
  %565 = vmatprep.subr.mxu0 0.0
  %566 = vmatpush1.msra.mxu0 0.0
  %567 = vmatprep.subr.mxu0 0.0
  %568 = vmatpush1.msra.mxu0 0.0
  %569 = vmatprep.subr.mxu0 0.0
  %570 = vmatpush1.msra.mxu0 0.0
  %571 = vmatprep.subr.mxu0 0.0
  %572 = vmatpush1.msra.mxu0 0.0
  %573 = vmatprep.subr.mxu0 0.0
  %574 = vmatpush1.msra.mxu0 0.0
  %575 = vmatprep.subr.mxu0 0.0
  %576 = vmatpush1.msra.mxu0 0.0
  %577 = vmatprep.mubr.f32.mxu0 0.0
  %578 = vmatmul.mubr.f32.gmra.mrb[0].mxu0 %v511
  %v579 = vpop.f32.mrb[0].mxu0
  %v580 = vadd.f32 %v303, %v579
  %v581 = vpop.f32.mrb[0].mxu0
  %582 = vdwg.mxu0
  %v584 = vrot.slane %v580, 4
  %v586 = vadd.f32 %v190, %v584
  %v587 = vxor.u32 %v586, 2147483648
  %v588 = vmul.f32 %v587, 1.442695
  %v589 = vpow.pop %v588
  %v590 = vadd.f32 %v589, 1.0
  %v591 = vrcp.pop %v590
  %v592 = vmul.f32 1.0, %v591
  %593 = vrot.lane.b32.xlu0 %v584, 64
  %v594 = vpop.permute.xlu0 %593
  %v596 = vmul.f32 %v592, %v594
  %598 = vrot.lane.b32.xlu0 %v596, 64
  %v599 = vpop.permute.xlu0 %598
  %v601 = vadd.f32 %v190, %v599
  %v602 = vtanh.pop %v601
  %v603 = vsub.f32 1.0, %v592
  %605 = vrot.lane.b32.xlu0 %v602, 96
  %v606 = vpop.permute.xlu0 %605
  %v608 = vmul.f32 %v603, %v606
  %v609 = vrot.slane %v403, 4
  %v611 = vmul.f32 %v592, %v609
  %v612 = vadd.f32 %v608, %v611
  %v614 = vrot.slane %v507, 4
  %615 = vrot.lane.b32.xlu0 %v614, 96
  %v616 = vpop.permute.xlu0 %615
  %v617 = vsel %vm110, %v616, 0
  %619 = vmatprep.subr.mxu0 0.0
  %620 = vmatpush1.msra.mxu0 %v98
  %621 = vmatprep.subr.mxu0 0.0
  %622 = vmatpush1.msra.mxu0 %v99
  %623 = vmatprep.subr.mxu0 0.0
  %624 = vmatpush1.msra.mxu0 %v100
  %625 = vmatprep.subr.mxu0 0.0
  %626 = vmatpush1.msra.mxu0 %v101
  %627 = vmatprep.subr.mxu0 0.0
  %628 = vmatpush1.msra.mxu0 0.0
  %629 = vmatprep.subr.mxu0 0.0
  %630 = vmatpush1.msra.mxu0 0.0
  %631 = vmatprep.subr.mxu0 0.0
  %632 = vmatpush1.msra.mxu0 0.0
  %633 = vmatprep.subr.mxu0 0.0
  %634 = vmatpush1.msra.mxu0 0.0
  %635 = vmatprep.subr.mxu0 0.0
  %636 = vmatpush1.msra.mxu0 0.0
  %637 = vmatprep.subr.mxu0 0.0
  %638 = vmatpush1.msra.mxu0 0.0
  %639 = vmatprep.subr.mxu0 0.0
  %640 = vmatpush1.msra.mxu0 0.0
  %641 = vmatprep.subr.mxu0 0.0
  %642 = vmatpush1.msra.mxu0 0.0
  %643 = vmatprep.subr.mxu0 0.0
  %644 = vmatpush1.msra.mxu0 0.0
  %645 = vmatprep.subr.mxu0 0.0
  %646 = vmatpush1.msra.mxu0 0.0
  %647 = vmatprep.subr.mxu0 0.0
  %648 = vmatpush1.msra.mxu0 0.0
  %649 = vmatprep.subr.mxu0 0.0
  %650 = vmatpush1.msra.mxu0 0.0
  %651 = vmatprep.subr.mxu0 0.0
  %652 = vmatpush1.msra.mxu0 0.0
  %653 = vmatprep.subr.mxu0 0.0
  %654 = vmatpush1.msra.mxu0 0.0
  %655 = vmatprep.subr.mxu0 0.0
  %656 = vmatpush1.msra.mxu0 0.0
  %657 = vmatprep.subr.mxu0 0.0
  %658 = vmatpush1.msra.mxu0 0.0
  %659 = vmatprep.subr.mxu0 0.0
  %660 = vmatpush1.msra.mxu0 0.0
  %661 = vmatprep.subr.mxu0 0.0
  %662 = vmatpush1.msra.mxu0 0.0
  %663 = vmatprep.subr.mxu0 0.0
  %664 = vmatpush1.msra.mxu0 0.0
  %665 = vmatprep.subr.mxu0 0.0
  %666 = vmatpush1.msra.mxu0 0.0
  %667 = vmatprep.subr.mxu0 0.0
  %668 = vmatpush1.msra.mxu0 0.0
  %669 = vmatprep.subr.mxu0 0.0
  %670 = vmatpush1.msra.mxu0 0.0
  %671 = vmatprep.subr.mxu0 0.0
  %672 = vmatpush1.msra.mxu0 0.0
  %673 = vmatprep.subr.mxu0 0.0
  %674 = vmatpush1.msra.mxu0 0.0
  %675 = vmatprep.subr.mxu0 0.0
  %676 = vmatpush1.msra.mxu0 0.0
  %677 = vmatprep.subr.mxu0 0.0
  %678 = vmatpush1.msra.mxu0 0.0
  %679 = vmatprep.subr.mxu0 0.0
  %680 = vmatpush1.msra.mxu0 0.0
  %681 = vmatprep.subr.mxu0 0.0
  %682 = vmatpush1.msra.mxu0 0.0
  %683 = vmatprep.mubr.f32.mxu0 0.0
  %684 = vmatmul.mubr.f32.gmra.mrb[0].mxu0 %v617
  %v685 = vpop.f32.mrb[0].mxu0
  %v686 = vadd.f32 %v408, %v685
  %v687 = vpop.f32.mrb[0].mxu0
  %688 = vdwg.mxu0
  %v689 = vadd.f32 %v296, %v686
  %v690 = vxor.u32 %v689, 2147483648
  %v691 = vmul.f32 %v690, 1.442695
  %v692 = vpow.pop %v691
  %v693 = vadd.f32 %v692, 1.0
  %v694 = vrcp.pop %v693
  %v695 = vmul.f32 1.0, %v694
  %697 = vrot.lane.b32.xlu0 %v686, 64
  %v698 = vpop.permute.xlu0 %697
  %v700 = vmul.f32 %v695, %v698
  %702 = vrot.lane.b32.xlu0 %v700, 64
  %v703 = vpop.permute.xlu0 %702
  %v705 = vadd.f32 %v296, %v703
  %v706 = vtanh.pop %v705
  %v707 = vsub.f32 1.0, %v695
  %709 = vrot.lane.b32.xlu0 %v706, 96
  %v710 = vpop.permute.xlu0 %709
  %v712 = vmul.f32 %v707, %v710
  %v714 = vmul.f32 %v695, %v614
  %v715 = vadd.f32 %v712, %v714
  %v717 = vrot.slane %v612, 4
  %718 = vrot.lane.b32.xlu0 %v717, 96
  %v719 = vpop.permute.xlu0 %718
  %v720 = vsel %vm110, %v719, 0
  %722 = vmatprep.subr.mxu0 0.0
  %723 = vmatpush1.msra.mxu0 %v88
  %724 = vmatprep.subr.mxu0 0.0
  %725 = vmatpush1.msra.mxu0 %v89
  %726 = vmatprep.subr.mxu0 0.0
  %727 = vmatpush1.msra.mxu0 %v90
  %728 = vmatprep.subr.mxu0 0.0
  %729 = vmatpush1.msra.mxu0 %v91
  %730 = vmatprep.subr.mxu0 0.0
  %731 = vmatpush1.msra.mxu0 0.0
  %732 = vmatprep.subr.mxu0 0.0
  %733 = vmatpush1.msra.mxu0 0.0
  %734 = vmatprep.subr.mxu0 0.0
  %735 = vmatpush1.msra.mxu0 0.0
  %736 = vmatprep.subr.mxu0 0.0
  %737 = vmatpush1.msra.mxu0 0.0
  %738 = vmatprep.subr.mxu0 0.0
  %739 = vmatpush1.msra.mxu0 0.0
  %740 = vmatprep.subr.mxu0 0.0
  %741 = vmatpush1.msra.mxu0 0.0
  %742 = vmatprep.subr.mxu0 0.0
  %743 = vmatpush1.msra.mxu0 0.0
  %744 = vmatprep.subr.mxu0 0.0
  %745 = vmatpush1.msra.mxu0 0.0
  %746 = vmatprep.subr.mxu0 0.0
  %747 = vmatpush1.msra.mxu0 0.0
  %748 = vmatprep.subr.mxu0 0.0
  %749 = vmatpush1.msra.mxu0 0.0
  %750 = vmatprep.subr.mxu0 0.0
  %751 = vmatpush1.msra.mxu0 0.0
  %752 = vmatprep.subr.mxu0 0.0
  %753 = vmatpush1.msra.mxu0 0.0
  %754 = vmatprep.subr.mxu0 0.0
  %755 = vmatpush1.msra.mxu0 0.0
  %756 = vmatprep.subr.mxu0 0.0
  %757 = vmatpush1.msra.mxu0 0.0
  %758 = vmatprep.subr.mxu0 0.0
  %759 = vmatpush1.msra.mxu0 0.0
  %760 = vmatprep.subr.mxu0 0.0
  %761 = vmatpush1.msra.mxu0 0.0
  %762 = vmatprep.subr.mxu0 0.0
  %763 = vmatpush1.msra.mxu0 0.0
  %764 = vmatprep.subr.mxu0 0.0
  %765 = vmatpush1.msra.mxu0 0.0
  %766 = vmatprep.subr.mxu0 0.0
  %767 = vmatpush1.msra.mxu0 0.0
  %768 = vmatprep.subr.mxu0 0.0
  %769 = vmatpush1.msra.mxu0 0.0
  %770 = vmatprep.subr.mxu0 0.0
  %771 = vmatpush1.msra.mxu0 0.0
  %772 = vmatprep.subr.mxu0 0.0
  %773 = vmatpush1.msra.mxu0 0.0
  %774 = vmatprep.subr.mxu0 0.0
  %775 = vmatpush1.msra.mxu0 0.0
  %776 = vmatprep.subr.mxu0 0.0
  %777 = vmatpush1.msra.mxu0 0.0
  %778 = vmatprep.subr.mxu0 0.0
  %779 = vmatpush1.msra.mxu0 0.0
  %780 = vmatprep.subr.mxu0 0.0
  %781 = vmatpush1.msra.mxu0 0.0
  %782 = vmatprep.subr.mxu0 0.0
  %783 = vmatpush1.msra.mxu0 0.0
  %784 = vmatprep.subr.mxu0 0.0
  %785 = vmatpush1.msra.mxu0 0.0
  %786 = vmatprep.mubr.f32.mxu0 0.0
  %787 = vmatmul.mubr.f32.gmra.mrb[0].mxu0 %v720
  %v788 = vpop.f32.mrb[0].mxu0
  %v789 = vadd.f32 %v303, %v788
  %v790 = vpop.f32.mrb[0].mxu0
  %791 = vdwg.mxu0
  %v792 = vadd.f32 %v195, %v789
  %v793 = vxor.u32 %v792, 2147483648
  %v794 = vmul.f32 %v793, 1.442695
  %v795 = vpow.pop %v794
  %v796 = vadd.f32 %v795, 1.0
  %v797 = vrcp.pop %v796
  %v798 = vmul.f32 1.0, %v797
  %800 = vrot.lane.b32.xlu0 %v789, 64
  %v801 = vpop.permute.xlu0 %800
  %v803 = vmul.f32 %v798, %v801
  %805 = vrot.lane.b32.xlu0 %v803, 64
  %v806 = vpop.permute.xlu0 %805
  %v808 = vadd.f32 %v195, %v806
  %v809 = vtanh.pop %v808
  %v810 = vsub.f32 1.0, %v798
  %812 = vrot.lane.b32.xlu0 %v809, 96
  %v813 = vpop.permute.xlu0 %812
  %v815 = vmul.f32 %v810, %v813
  %v817 = vmul.f32 %v798, %v717
  %v818 = vadd.f32 %v815, %v817
  %820 = vrot.lane.b32.xlu0 %v715, 96
  %v821 = vpop.permute.xlu0 %820
  %v822 = vsel %vm110, %v821, 0
  %824 = vmatprep.subr.mxu0 0.0
  %825 = vmatpush1.msra.mxu0 %v98
  %826 = vmatprep.subr.mxu0 0.0
  %827 = vmatpush1.msra.mxu0 %v99
  %828 = vmatprep.subr.mxu0 0.0
  %829 = vmatpush1.msra.mxu0 %v100
  %830 = vmatprep.subr.mxu0 0.0
  %831 = vmatpush1.msra.mxu0 %v101
  %832 = vmatprep.subr.mxu0 0.0
  %833 = vmatpush1.msra.mxu0 0.0
  %834 = vmatprep.subr.mxu0 0.0
  %835 = vmatpush1.msra.mxu0 0.0
  %836 = vmatprep.subr.mxu0 0.0
  %837 = vmatpush1.msra.mxu0 0.0
  %838 = vmatprep.subr.mxu0 0.0
  %839 = vmatpush1.msra.mxu0 0.0
  %840 = vmatprep.subr.mxu0 0.0
  %841 = vmatpush1.msra.mxu0 0.0
  %842 = vmatprep.subr.mxu0 0.0
  %843 = vmatpush1.msra.mxu0 0.0
  %844 = vmatprep.subr.mxu0 0.0
  %845 = vmatpush1.msra.mxu0 0.0
  %846 = vmatprep.subr.mxu0 0.0
  %847 = vmatpush1.msra.mxu0 0.0
  %848 = vmatprep.subr.mxu0 0.0
  %849 = vmatpush1.msra.mxu0 0.0
  %850 = vmatprep.subr.mxu0 0.0
  %851 = vmatpush1.msra.mxu0 0.0
  %852 = vmatprep.subr.mxu0 0.0
  %853 = vmatpush1.msra.mxu0 0.0
  %854 = vmatprep.subr.mxu0 0.0
  %855 = vmatpush1.msra.mxu0 0.0
  %856 = vmatprep.subr.mxu0 0.0
  %857 = vmatpush1.msra.mxu0 0.0
  %858 = vmatprep.subr.mxu0 0.0
  %859 = vmatpush1.msra.mxu0 0.0
  %860 = vmatprep.subr.mxu0 0.0
  %861 = vmatpush1.msra.mxu0 0.0
  %862 = vmatprep.subr.mxu0 0.0
  %863 = vmatpush1.msra.mxu0 0.0
  %864 = vmatprep.subr.mxu0 0.0
  %865 = vmatpush1.msra.mxu0 0.0
  %866 = vmatprep.subr.mxu0 0.0
  %867 = vmatpush1.msra.mxu0 0.0
  %868 = vmatprep.subr.mxu0 0.0
  %869 = vmatpush1.msra.mxu0 0.0
  %870 = vmatprep.subr.mxu0 0.0
  %871 = vmatpush1.msra.mxu0 0.0
  %872 = vmatprep.subr.mxu0 0.0
  %873 = vmatpush1.msra.mxu0 0.0
  %874 = vmatprep.subr.mxu0 0.0
  %875 = vmatpush1.msra.mxu0 0.0
  %876 = vmatprep.subr.mxu0 0.0
  %877 = vmatpush1.msra.mxu0 0.0
  %878 = vmatprep.subr.mxu0 0.0
  %879 = vmatpush1.msra.mxu0 0.0
  %880 = vmatprep.subr.mxu0 0.0
  %881 = vmatpush1.msra.mxu0 0.0
  %882 = vmatprep.subr.mxu0 0.0
  %883 = vmatpush1.msra.mxu0 0.0
  %884 = vmatprep.subr.mxu0 0.0
  %885 = vmatpush1.msra.mxu0 0.0
  %886 = vmatprep.subr.mxu0 0.0
  %887 = vmatpush1.msra.mxu0 0.0
  %888 = vmatprep.mubr.f32.mxu0 0.0
  %889 = vmatmul.mubr.f32.gmra.mrb[0].mxu0 %v822
  %v890 = vpop.f32.mrb[0].mxu0
  %v891 = vadd.f32 %v408, %v890
  %v892 = vpop.f32.mrb[0].mxu0
  %893 = vdwg.mxu0
  %v895 = vrot.slane %v891, 4
  %v897 = vadd.f32 %v291, %v895
  %v898 = vxor.u32 %v897, 2147483648
  %v899 = vmul.f32 %v898, 1.442695
  %v900 = vpow.pop %v899
  %v901 = vadd.f32 %v900, 1.0
  %v902 = vrcp.pop %v901
  %v903 = vmul.f32 1.0, %v902
  %904 = vrot.lane.b32.xlu0 %v895, 64
  %v905 = vpop.permute.xlu0 %904
  %v907 = vmul.f32 %v903, %v905
  %909 = vrot.lane.b32.xlu0 %v907, 64
  %v910 = vpop.permute.xlu0 %909
  %v912 = vadd.f32 %v291, %v910
  %v913 = vtanh.pop %v912
  %v914 = vsub.f32 1.0, %v903
  %916 = vrot.lane.b32.xlu0 %v913, 96
  %v917 = vpop.permute.xlu0 %916
  %v919 = vmul.f32 %v914, %v917
  %v920 = vrot.slane %v715, 4
  %v922 = vmul.f32 %v903, %v920
  %v923 = vadd.f32 %v919, %v922
  %925 = vrot.lane.b32.xlu0 %v818, 96
  %v926 = vpop.permute.xlu0 %925
  %v927 = vsel %vm110, %v926, 0
  %929 = vmatprep.subr.mxu0 0.0
  %930 = vmatpush1.msra.mxu0 %v88
  %931 = vmatprep.subr.mxu0 0.0
  %932 = vmatpush1.msra.mxu0 %v89
  %933 = vmatprep.subr.mxu0 0.0
  %934 = vmatpush1.msra.mxu0 %v90
  %935 = vmatprep.subr.mxu0 0.0
  %936 = vmatpush1.msra.mxu0 %v91
  %937 = vmatprep.subr.mxu0 0.0
  %938 = vmatpush1.msra.mxu0 0.0
  %939 = vmatprep.subr.mxu0 0.0
  %940 = vmatpush1.msra.mxu0 0.0
  %941 = vmatprep.subr.mxu0 0.0
  %942 = vmatpush1.msra.mxu0 0.0
  %943 = vmatprep.subr.mxu0 0.0
  %944 = vmatpush1.msra.mxu0 0.0
  %945 = vmatprep.subr.mxu0 0.0
  %946 = vmatpush1.msra.mxu0 0.0
  %947 = vmatprep.subr.mxu0 0.0
  %948 = vmatpush1.msra.mxu0 0.0
  %949 = vmatprep.subr.mxu0 0.0
  %950 = vmatpush1.msra.mxu0 0.0
  %951 = vmatprep.subr.mxu0 0.0
  %952 = vmatpush1.msra.mxu0 0.0
  %953 = vmatprep.subr.mxu0 0.0
  %954 = vmatpush1.msra.mxu0 0.0
  %955 = vmatprep.subr.mxu0 0.0
  %956 = vmatpush1.msra.mxu0 0.0
  %957 = vmatprep.subr.mxu0 0.0
  %958 = vmatpush1.msra.mxu0 0.0
  %959 = vmatprep.subr.mxu0 0.0
  %960 = vmatpush1.msra.mxu0 0.0
  %961 = vmatprep.subr.mxu0 0.0
  %962 = vmatpush1.msra.mxu0 0.0
  %963 = vmatprep.subr.mxu0 0.0
  %964 = vmatpush1.msra.mxu0 0.0
  %965 = vmatprep.subr.mxu0 0.0
  %966 = vmatpush1.msra.mxu0 0.0
  %967 = vmatprep.subr.mxu0 0.0
  %968 = vmatpush1.msra.mxu0 0.0
  %969 = vmatprep.subr.mxu0 0.0
  %970 = vmatpush1.msra.mxu0 0.0
  %971 = vmatprep.subr.mxu0 0.0
  %972 = vmatpush1.msra.mxu0 0.0
  %973 = vmatprep.subr.mxu0 0.0
  %974 = vmatpush1.msra.mxu0 0.0
  %975 = vmatprep.subr.mxu0 0.0
  %976 = vmatpush1.msra.mxu0 0.0
  %977 = vmatprep.subr.mxu0 0.0
  %978 = vmatpush1.msra.mxu0 0.0
  %979 = vmatprep.subr.mxu0 0.0
  %980 = vmatpush1.msra.mxu0 0.0
  %981 = vmatprep.subr.mxu0 0.0
  %982 = vmatpush1.msra.mxu0 0.0
  %983 = vmatprep.subr.mxu0 0.0
  %984 = vmatpush1.msra.mxu0 0.0
  %985 = vmatprep.subr.mxu0 0.0
  %986 = vmatpush1.msra.mxu0 0.0
  %987 = vmatprep.subr.mxu0 0.0
  %988 = vmatpush1.msra.mxu0 0.0
  %989 = vmatprep.subr.mxu0 0.0
  %990 = vmatpush1.msra.mxu0 0.0
  %991 = vmatprep.subr.mxu0 0.0
  %992 = vmatpush1.msra.mxu0 0.0
  %993 = vmatprep.mubr.f32.mxu0 0.0
  %994 = vmatmul.mubr.f32.gmra.mrb[0].mxu0 %v927
  %v995 = vpop.f32.mrb[0].mxu0
  %v996 = vadd.f32 %v303, %v995
  %v997 = vpop.f32.mrb[0].mxu0
  %998 = vdwg.mxu0
  %v1000 = vrot.slane %v996, 4
  %v1002 = vadd.f32 %v195, %v1000
  %v1003 = vxor.u32 %v1002, 2147483648
  %v1004 = vmul.f32 %v1003, 1.442695
  %v1005 = vpow.pop %v1004
  %v1006 = vadd.f32 %v1005, 1.0
  %v1007 = vrcp.pop %v1006
  %v1008 = vmul.f32 1.0, %v1007
  %1009 = vrot.lane.b32.xlu0 %v1000, 64
  %v1010 = vpop.permute.xlu0 %1009
  %v1012 = vmul.f32 %v1008, %v1010
  %1014 = vrot.lane.b32.xlu0 %v1012, 64
  %v1015 = vpop.permute.xlu0 %1014
  %v1017 = vadd.f32 %v195, %v1015
  %v1018 = vtanh.pop %v1017
  %v1019 = vsub.f32 1.0, %v1008
  %1021 = vrot.lane.b32.xlu0 %v1018, 96
  %v1022 = vpop.permute.xlu0 %1021
  %v1024 = vmul.f32 %v1019, %v1022
  %v1025 = vrot.slane %v818, 4
  %v1027 = vmul.f32 %v1008, %v1025
  %v1028 = vadd.f32 %v1024, %v1027
  %v1030 = vrot.slane %v923, 4
  %1031 = vrot.lane.b32.xlu0 %v1030, 96
  %v1032 = vpop.permute.xlu0 %1031
  %v1033 = vsel %vm110, %v1032, 0
  %1035 = vmatprep.subr.mxu0 0.0
  %1036 = vmatpush1.msra.mxu0 %v98
  %1037 = vmatprep.subr.mxu0 0.0
  %1038 = vmatpush1.msra.mxu0 %v99
  %1039 = vmatprep.subr.mxu0 0.0
  %1040 = vmatpush1.msra.mxu0 %v100
  %1041 = vmatprep.subr.mxu0 0.0
  %1042 = vmatpush1.msra.mxu0 %v101
  %1043 = vmatprep.subr.mxu0 0.0
  %1044 = vmatpush1.msra.mxu0 0.0
  %1045 = vmatprep.subr.mxu0 0.0
  %1046 = vmatpush1.msra.mxu0 0.0
  %1047 = vmatprep.subr.mxu0 0.0
  %1048 = vmatpush1.msra.mxu0 0.0
  %1049 = vmatprep.subr.mxu0 0.0
  %1050 = vmatpush1.msra.mxu0 0.0
  %1051 = vmatprep.subr.mxu0 0.0
  %1052 = vmatpush1.msra.mxu0 0.0
  %1053 = vmatprep.subr.mxu0 0.0
  %1054 = vmatpush1.msra.mxu0 0.0
  %1055 = vmatprep.subr.mxu0 0.0
  %1056 = vmatpush1.msra.mxu0 0.0
  %1057 = vmatprep.subr.mxu0 0.0
  %1058 = vmatpush1.msra.mxu0 0.0
  %1059 = vmatprep.subr.mxu0 0.0
  %1060 = vmatpush1.msra.mxu0 0.0
  %1061 = vmatprep.subr.mxu0 0.0
  %1062 = vmatpush1.msra.mxu0 0.0
  %1063 = vmatprep.subr.mxu0 0.0
  %1064 = vmatpush1.msra.mxu0 0.0
  %1065 = vmatprep.subr.mxu0 0.0
  %1066 = vmatpush1.msra.mxu0 0.0
  %1067 = vmatprep.subr.mxu0 0.0
  %1068 = vmatpush1.msra.mxu0 0.0
  %1069 = vmatprep.subr.mxu0 0.0
  %1070 = vmatpush1.msra.mxu0 0.0
  %1071 = vmatprep.subr.mxu0 0.0
  %1072 = vmatpush1.msra.mxu0 0.0
  %1073 = vmatprep.subr.mxu0 0.0
  %1074 = vmatpush1.msra.mxu0 0.0
  %1075 = vmatprep.subr.mxu0 0.0
  %1076 = vmatpush1.msra.mxu0 0.0
  %1077 = vmatprep.subr.mxu0 0.0
  %1078 = vmatpush1.msra.mxu0 0.0
  %1079 = vmatprep.subr.mxu0 0.0
  %1080 = vmatpush1.msra.mxu0 0.0
  %1081 = vmatprep.subr.mxu0 0.0
  %1082 = vmatpush1.msra.mxu0 0.0
  %1083 = vmatprep.subr.mxu0 0.0
  %1084 = vmatpush1.msra.mxu0 0.0
  %1085 = vmatprep.subr.mxu0 0.0
  %1086 = vmatpush1.msra.mxu0 0.0
  %1087 = vmatprep.subr.mxu0 0.0
  %1088 = vmatpush1.msra.mxu0 0.0
  %1089 = vmatprep.subr.mxu0 0.0
  %1090 = vmatpush1.msra.mxu0 0.0
  %1091 = vmatprep.subr.mxu0 0.0
  %1092 = vmatpush1.msra.mxu0 0.0
  %1093 = vmatprep.subr.mxu0 0.0
  %1094 = vmatpush1.msra.mxu0 0.0
  %1095 = vmatprep.subr.mxu0 0.0
  %1096 = vmatpush1.msra.mxu0 0.0
  %1097 = vmatprep.subr.mxu0 0.0
  %1098 = vmatpush1.msra.mxu0 0.0
  %1099 = vmatprep.mubr.f32.mxu0 0.0
  %1100 = vmatmul.mubr.f32.gmra.mrb[0].mxu0 %v1033
  %v1101 = vpop.f32.mrb[0].mxu0
  %v1102 = vadd.f32 %v408, %v1101
  %v1103 = vpop.f32.mrb[0].mxu0
  %1104 = vdwg.mxu0
  %v1105 = vadd.f32 %v291, %v1102
  %v1106 = vxor.u32 %v1105, 2147483648
  %v1107 = vmul.f32 %v1106, 1.442695
  %v1108 = vpow.pop %v1107
  %v1109 = vadd.f32 %v1108, 1.0
  %v1110 = vrcp.pop %v1109
  %v1111 = vmul.f32 1.0, %v1110
  %1113 = vrot.lane.b32.xlu0 %v1102, 64
  %v1114 = vpop.permute.xlu0 %1113
  %v1116 = vmul.f32 %v1111, %v1114
  %1118 = vrot.lane.b32.xlu0 %v1116, 64
  %v1119 = vpop.permute.xlu0 %1118
  %v1121 = vadd.f32 %v291, %v1119
  %v1122 = vtanh.pop %v1121
  %v1123 = vsub.f32 1.0, %v1111
  %1125 = vrot.lane.b32.xlu0 %v1122, 96
  %v1126 = vpop.permute.xlu0 %1125
  %v1128 = vmul.f32 %v1123, %v1126
  %v1130 = vmul.f32 %v1111, %v1030
  %v1131 = vadd.f32 %v1128, %v1130
  %v1133 = vrot.slane %v1028, 4
  %1134 = vrot.lane.b32.xlu0 %v1133, 96
  %v1135 = vpop.permute.xlu0 %1134
  %v1136 = vsel %vm110, %v1135, 0
  %1138 = vmatprep.subr.mxu0 0.0
  %1139 = vmatpush1.msra.mxu0 %v88
  %1140 = vmatprep.subr.mxu0 0.0
  %1141 = vmatpush1.msra.mxu0 %v89
  %1142 = vmatprep.subr.mxu0 0.0
  %1143 = vmatpush1.msra.mxu0 %v90
  %1144 = vmatprep.subr.mxu0 0.0
  %1145 = vmatpush1.msra.mxu0 %v91
  %1146 = vmatprep.subr.mxu0 0.0
  %1147 = vmatpush1.msra.mxu0 0.0
  %1148 = vmatprep.subr.mxu0 0.0
  %1149 = vmatpush1.msra.mxu0 0.0
  %1150 = vmatprep.subr.mxu0 0.0
  %1151 = vmatpush1.msra.mxu0 0.0
  %1152 = vmatprep.subr.mxu0 0.0
  %1153 = vmatpush1.msra.mxu0 0.0
  %1154 = vmatprep.subr.mxu0 0.0
  %1155 = vmatpush1.msra.mxu0 0.0
  %1156 = vmatprep.subr.mxu0 0.0
  %1157 = vmatpush1.msra.mxu0 0.0
  %1158 = vmatprep.subr.mxu0 0.0
  %1159 = vmatpush1.msra.mxu0 0.0
  %1160 = vmatprep.subr.mxu0 0.0
  %1161 = vmatpush1.msra.mxu0 0.0
  %1162 = vmatprep.subr.mxu0 0.0
  %1163 = vmatpush1.msra.mxu0 0.0
  %1164 = vmatprep.subr.mxu0 0.0
  %1165 = vmatpush1.msra.mxu0 0.0
  %1166 = vmatprep.subr.mxu0 0.0
  %1167 = vmatpush1.msra.mxu0 0.0
  %1168 = vmatprep.subr.mxu0 0.0
  %1169 = vmatpush1.msra.mxu0 0.0
  %1170 = vmatprep.subr.mxu0 0.0
  %1171 = vmatpush1.msra.mxu0 0.0
  %1172 = vmatprep.subr.mxu0 0.0
  %1173 = vmatpush1.msra.mxu0 0.0
  %1174 = vmatprep.subr.mxu0 0.0
  %1175 = vmatpush1.msra.mxu0 0.0
  %1176 = vmatprep.subr.mxu0 0.0
  %1177 = vmatpush1.msra.mxu0 0.0
  %1178 = vmatprep.subr.mxu0 0.0
  %1179 = vmatpush1.msra.mxu0 0.0
  %1180 = vmatprep.subr.mxu0 0.0
  %1181 = vmatpush1.msra.mxu0 0.0
  %1182 = vmatprep.subr.mxu0 0.0
  %1183 = vmatpush1.msra.mxu0 0.0
  %1184 = vmatprep.subr.mxu0 0.0
  %1185 = vmatpush1.msra.mxu0 0.0
  %1186 = vmatprep.subr.mxu0 0.0
  %1187 = vmatpush1.msra.mxu0 0.0
  %1188 = vmatprep.subr.mxu0 0.0
  %1189 = vmatpush1.msra.mxu0 0.0
  %1190 = vmatprep.subr.mxu0 0.0
  %1191 = vmatpush1.msra.mxu0 0.0
  %1192 = vmatprep.subr.mxu0 0.0
  %1193 = vmatpush1.msra.mxu0 0.0
  %1194 = vmatprep.subr.mxu0 0.0
  %1195 = vmatpush1.msra.mxu0 0.0
  %1196 = vmatprep.subr.mxu0 0.0
  %1197 = vmatpush1.msra.mxu0 0.0
  %1198 = vmatprep.subr.mxu0 0.0
  %1199 = vmatpush1.msra.mxu0 0.0
  %1200 = vmatprep.subr.mxu0 0.0
  %1201 = vmatpush1.msra.mxu0 0.0
  %1202 = vmatprep.mubr.f32.mxu0 0.0
  %1203 = vmatmul.mubr.f32.gmra.mrb[0].mxu0 %v1136
  %v1204 = vpop.f32.mrb[0].mxu0
  %v1205 = vadd.f32 %v303, %v1204
  %v1206 = vpop.f32.mrb[0].mxu0
  %1207 = vdwg.mxu0
  %v1208 = vadd.f32 %v200, %v1205
  %v1209 = vxor.u32 %v1208, 2147483648
  %v1210 = vmul.f32 %v1209, 1.442695
  %v1211 = vpow.pop %v1210
  %v1212 = vadd.f32 %v1211, 1.0
  %v1213 = vrcp.pop %v1212
  %v1214 = vmul.f32 1.0, %v1213
  %1216 = vrot.lane.b32.xlu0 %v1205, 64
  %v1217 = vpop.permute.xlu0 %1216
  %v1219 = vmul.f32 %v1214, %v1217
  %1221 = vrot.lane.b32.xlu0 %v1219, 64
  %v1222 = vpop.permute.xlu0 %1221
  %v1224 = vadd.f32 %v200, %v1222
  %v1225 = vtanh.pop %v1224
  %v1226 = vsub.f32 1.0, %v1214
  %1228 = vrot.lane.b32.xlu0 %v1225, 96
  %v1229 = vpop.permute.xlu0 %1228
  %v1231 = vmul.f32 %v1226, %v1229
  %v1233 = vmul.f32 %v1214, %v1133
  %v1234 = vadd.f32 %v1231, %v1233
  %1236 = vrot.lane.b32.xlu0 %v1131, 96
  %v1237 = vpop.permute.xlu0 %1236
  %v1238 = vsel %vm110, %v1237, 0
  %1240 = vmatprep.subr.mxu0 0.0
  %1241 = vmatpush1.msra.mxu0 %v98
  %1242 = vmatprep.subr.mxu0 0.0
  %1243 = vmatpush1.msra.mxu0 %v99
  %1244 = vmatprep.subr.mxu0 0.0
  %1245 = vmatpush1.msra.mxu0 %v100
  %1246 = vmatprep.subr.mxu0 0.0
  %1247 = vmatpush1.msra.mxu0 %v101
  %1248 = vmatprep.subr.mxu0 0.0
  %1249 = vmatpush1.msra.mxu0 0.0
  %1250 = vmatprep.subr.mxu0 0.0
  %1251 = vmatpush1.msra.mxu0 0.0
  %1252 = vmatprep.subr.mxu0 0.0
  %1253 = vmatpush1.msra.mxu0 0.0
  %1254 = vmatprep.subr.mxu0 0.0
  %1255 = vmatpush1.msra.mxu0 0.0
  %1256 = vmatprep.subr.mxu0 0.0
  %1257 = vmatpush1.msra.mxu0 0.0
  %1258 = vmatprep.subr.mxu0 0.0
  %1259 = vmatpush1.msra.mxu0 0.0
  %1260 = vmatprep.subr.mxu0 0.0
  %1261 = vmatpush1.msra.mxu0 0.0
  %1262 = vmatprep.subr.mxu0 0.0
  %1263 = vmatpush1.msra.mxu0 0.0
  %1264 = vmatprep.subr.mxu0 0.0
  %1265 = vmatpush1.msra.mxu0 0.0
  %1266 = vmatprep.subr.mxu0 0.0
  %1267 = vmatpush1.msra.mxu0 0.0
  %1268 = vmatprep.subr.mxu0 0.0
  %1269 = vmatpush1.msra.mxu0 0.0
  %1270 = vmatprep.subr.mxu0 0.0
  %1271 = vmatpush1.msra.mxu0 0.0
  %1272 = vmatprep.subr.mxu0 0.0
  %1273 = vmatpush1.msra.mxu0 0.0
  %1274 = vmatprep.subr.mxu0 0.0
  %1275 = vmatpush1.msra.mxu0 0.0
  %1276 = vmatprep.subr.mxu0 0.0
  %1277 = vmatpush1.msra.mxu0 0.0
  %1278 = vmatprep.subr.mxu0 0.0
  %1279 = vmatpush1.msra.mxu0 0.0
  %1280 = vmatprep.subr.mxu0 0.0
  %1281 = vmatpush1.msra.mxu0 0.0
  %1282 = vmatprep.subr.mxu0 0.0
  %1283 = vmatpush1.msra.mxu0 0.0
  %1284 = vmatprep.subr.mxu0 0.0
  %1285 = vmatpush1.msra.mxu0 0.0
  %1286 = vmatprep.subr.mxu0 0.0
  %1287 = vmatpush1.msra.mxu0 0.0
  %1288 = vmatprep.subr.mxu0 0.0
  %1289 = vmatpush1.msra.mxu0 0.0
  %1290 = vmatprep.subr.mxu0 0.0
  %1291 = vmatpush1.msra.mxu0 0.0
  %1292 = vmatprep.subr.mxu0 0.0
  %1293 = vmatpush1.msra.mxu0 0.0
  %1294 = vmatprep.subr.mxu0 0.0
  %1295 = vmatpush1.msra.mxu0 0.0
  %1296 = vmatprep.subr.mxu0 0.0
  %1297 = vmatpush1.msra.mxu0 0.0
  %1298 = vmatprep.subr.mxu0 0.0
  %1299 = vmatpush1.msra.mxu0 0.0
  %1300 = vmatprep.subr.mxu0 0.0
  %1301 = vmatpush1.msra.mxu0 0.0
  %1302 = vmatprep.subr.mxu0 0.0
  %1303 = vmatpush1.msra.mxu0 0.0
  %1304 = vmatprep.mubr.f32.mxu0 0.0
  %1305 = vmatmul.mubr.f32.gmra.mrb[0].mxu0 %v1238
  %v1306 = vpop.f32.mrb[0].mxu0
  %v1307 = vadd.f32 %v408, %v1306
  %v1308 = vpop.f32.mrb[0].mxu0
  %1309 = vdwg.mxu0
  %v1311 = vrot.slane %v1307, 4
  %v1313 = vadd.f32 %v286, %v1311
  %v1314 = vxor.u32 %v1313, 2147483648
  %v1315 = vmul.f32 %v1314, 1.442695
  %v1316 = vpow.pop %v1315
  %v1317 = vadd.f32 %v1316, 1.0
  %v1318 = vrcp.pop %v1317
  %v1319 = vmul.f32 1.0, %v1318
  %1320 = vrot.lane.b32.xlu0 %v1311, 64
  %v1321 = vpop.permute.xlu0 %1320
  %v1323 = vmul.f32 %v1319, %v1321
  %1325 = vrot.lane.b32.xlu0 %v1323, 64
  %v1326 = vpop.permute.xlu0 %1325
  %v1328 = vadd.f32 %v286, %v1326
  %v1329 = vtanh.pop %v1328
  %v1330 = vsub.f32 1.0, %v1319
  %1332 = vrot.lane.b32.xlu0 %v1329, 96
  %v1333 = vpop.permute.xlu0 %1332
  %v1335 = vmul.f32 %v1330, %v1333
  %v1336 = vrot.slane %v1131, 4
  %v1338 = vmul.f32 %v1319, %v1336
  %v1339 = vadd.f32 %v1335, %v1338
  %1341 = vrot.lane.b32.xlu0 %v1234, 96
  %v1342 = vpop.permute.xlu0 %1341
  %v1343 = vsel %vm110, %v1342, 0
  %1345 = vmatprep.subr.mxu0 0.0
  %1346 = vmatpush1.msra.mxu0 %v88
  %1347 = vmatprep.subr.mxu0 0.0
  %1348 = vmatpush1.msra.mxu0 %v89
  %1349 = vmatprep.subr.mxu0 0.0
  %1350 = vmatpush1.msra.mxu0 %v90
  %1351 = vmatprep.subr.mxu0 0.0
  %1352 = vmatpush1.msra.mxu0 %v91
  %1353 = vmatprep.subr.mxu0 0.0
  %1354 = vmatpush1.msra.mxu0 0.0
  %1355 = vmatprep.subr.mxu0 0.0
  %1356 = vmatpush1.msra.mxu0 0.0
  %1357 = vmatprep.subr.mxu0 0.0
  %1358 = vmatpush1.msra.mxu0 0.0
  %1359 = vmatprep.subr.mxu0 0.0
  %1360 = vmatpush1.msra.mxu0 0.0
  %1361 = vmatprep.subr.mxu0 0.0
  %1362 = vmatpush1.msra.mxu0 0.0
  %1363 = vmatprep.subr.mxu0 0.0
  %1364 = vmatpush1.msra.mxu0 0.0
  %1365 = vmatprep.subr.mxu0 0.0
  %1366 = vmatpush1.msra.mxu0 0.0
  %1367 = vmatprep.subr.mxu0 0.0
  %1368 = vmatpush1.msra.mxu0 0.0
  %1369 = vmatprep.subr.mxu0 0.0
  %1370 = vmatpush1.msra.mxu0 0.0
  %1371 = vmatprep.subr.mxu0 0.0
  %1372 = vmatpush1.msra.mxu0 0.0
  %1373 = vmatprep.subr.mxu0 0.0
  %1374 = vmatpush1.msra.mxu0 0.0
  %1375 = vmatprep.subr.mxu0 0.0
  %1376 = vmatpush1.msra.mxu0 0.0
  %1377 = vmatprep.subr.mxu0 0.0
  %1378 = vmatpush1.msra.mxu0 0.0
  %1379 = vmatprep.subr.mxu0 0.0
  %1380 = vmatpush1.msra.mxu0 0.0
  %1381 = vmatprep.subr.mxu0 0.0
  %1382 = vmatpush1.msra.mxu0 0.0
  %1383 = vmatprep.subr.mxu0 0.0
  %1384 = vmatpush1.msra.mxu0 0.0
  %1385 = vmatprep.subr.mxu0 0.0
  %1386 = vmatpush1.msra.mxu0 0.0
  %1387 = vmatprep.subr.mxu0 0.0
  %1388 = vmatpush1.msra.mxu0 0.0
  %1389 = vmatprep.subr.mxu0 0.0
  %1390 = vmatpush1.msra.mxu0 0.0
  %1391 = vmatprep.subr.mxu0 0.0
  %1392 = vmatpush1.msra.mxu0 0.0
  %1393 = vmatprep.subr.mxu0 0.0
  %1394 = vmatpush1.msra.mxu0 0.0
  %1395 = vmatprep.subr.mxu0 0.0
  %1396 = vmatpush1.msra.mxu0 0.0
  %1397 = vmatprep.subr.mxu0 0.0
  %1398 = vmatpush1.msra.mxu0 0.0
  %1399 = vmatprep.subr.mxu0 0.0
  %1400 = vmatpush1.msra.mxu0 0.0
  %1401 = vmatprep.subr.mxu0 0.0
  %1402 = vmatpush1.msra.mxu0 0.0
  %1403 = vmatprep.subr.mxu0 0.0
  %1404 = vmatpush1.msra.mxu0 0.0
  %1405 = vmatprep.subr.mxu0 0.0
  %1406 = vmatpush1.msra.mxu0 0.0
  %1407 = vmatprep.subr.mxu0 0.0
  %1408 = vmatpush1.msra.mxu0 0.0
  %1409 = vmatprep.mubr.f32.mxu0 0.0
  %1410 = vmatmul.mubr.f32.gmra.mrb[0].mxu0 %v1343
  %v1411 = vpop.f32.mrb[0].mxu0
  %v1412 = vadd.f32 %v303, %v1411
  %v1413 = vpop.f32.mrb[0].mxu0
  %1414 = vdwg.mxu0
  %v1416 = vrot.slane %v1412, 4
  %v1418 = vadd.f32 %v200, %v1416
  %v1419 = vxor.u32 %v1418, 2147483648
  %v1420 = vmul.f32 %v1419, 1.442695
  %v1421 = vpow.pop %v1420
  %v1422 = vadd.f32 %v1421, 1.0
  %v1423 = vrcp.pop %v1422
  %v1424 = vmul.f32 1.0, %v1423
  %1425 = vrot.lane.b32.xlu0 %v1416, 64
  %v1426 = vpop.permute.xlu0 %1425
  %v1428 = vmul.f32 %v1424, %v1426
  %1430 = vrot.lane.b32.xlu0 %v1428, 64
  %v1431 = vpop.permute.xlu0 %1430
  %v1433 = vadd.f32 %v200, %v1431
  %v1434 = vtanh.pop %v1433
  %v1435 = vsub.f32 1.0, %v1424
  %1437 = vrot.lane.b32.xlu0 %v1434, 96
  %v1438 = vpop.permute.xlu0 %1437
  %v1440 = vmul.f32 %v1435, %v1438
  %v1441 = vrot.slane %v1234, 4
  %v1443 = vmul.f32 %v1424, %v1441
  %v1444 = vadd.f32 %v1440, %v1443
  %v1446 = vrot.slane %v1339, 4
  %1447 = vrot.lane.b32.xlu0 %v1446, 96
  %v1448 = vpop.permute.xlu0 %1447
  %v1449 = vsel %vm110, %v1448, 0
  %1451 = vmatprep.subr.mxu0 0.0
  %1452 = vmatpush1.msra.mxu0 %v98
  %1453 = vmatprep.subr.mxu0 0.0
  %1454 = vmatpush1.msra.mxu0 %v99
  %1455 = vmatprep.subr.mxu0 0.0
  %1456 = vmatpush1.msra.mxu0 %v100
  %1457 = vmatprep.subr.mxu0 0.0
  %1458 = vmatpush1.msra.mxu0 %v101
  %1459 = vmatprep.subr.mxu0 0.0
  %1460 = vmatpush1.msra.mxu0 0.0
  %1461 = vmatprep.subr.mxu0 0.0
  %1462 = vmatpush1.msra.mxu0 0.0
  %1463 = vmatprep.subr.mxu0 0.0
  %1464 = vmatpush1.msra.mxu0 0.0
  %1465 = vmatprep.subr.mxu0 0.0
  %1466 = vmatpush1.msra.mxu0 0.0
  %1467 = vmatprep.subr.mxu0 0.0
  %1468 = vmatpush1.msra.mxu0 0.0
  %1469 = vmatprep.subr.mxu0 0.0
  %1470 = vmatpush1.msra.mxu0 0.0
  %1471 = vmatprep.subr.mxu0 0.0
  %1472 = vmatpush1.msra.mxu0 0.0
  %1473 = vmatprep.subr.mxu0 0.0
  %1474 = vmatpush1.msra.mxu0 0.0
  %1475 = vmatprep.subr.mxu0 0.0
  %1476 = vmatpush1.msra.mxu0 0.0
  %1477 = vmatprep.subr.mxu0 0.0
  %1478 = vmatpush1.msra.mxu0 0.0
  %1479 = vmatprep.subr.mxu0 0.0
  %1480 = vmatpush1.msra.mxu0 0.0
  %1481 = vmatprep.subr.mxu0 0.0
  %1482 = vmatpush1.msra.mxu0 0.0
  %1483 = vmatprep.subr.mxu0 0.0
  %1484 = vmatpush1.msra.mxu0 0.0
  %1485 = vmatprep.subr.mxu0 0.0
  %1486 = vmatpush1.msra.mxu0 0.0
  %1487 = vmatprep.subr.mxu0 0.0
  %1488 = vmatpush1.msra.mxu0 0.0
  %1489 = vmatprep.subr.mxu0 0.0
  %1490 = vmatpush1.msra.mxu0 0.0
  %1491 = vmatprep.subr.mxu0 0.0
  %1492 = vmatpush1.msra.mxu0 0.0
  %1493 = vmatprep.subr.mxu0 0.0
  %1494 = vmatpush1.msra.mxu0 0.0
  %1495 = vmatprep.subr.mxu0 0.0
  %1496 = vmatpush1.msra.mxu0 0.0
  %1497 = vmatprep.subr.mxu0 0.0
  %1498 = vmatpush1.msra.mxu0 0.0
  %1499 = vmatprep.subr.mxu0 0.0
  %1500 = vmatpush1.msra.mxu0 0.0
  %1501 = vmatprep.subr.mxu0 0.0
  %1502 = vmatpush1.msra.mxu0 0.0
  %1503 = vmatprep.subr.mxu0 0.0
  %1504 = vmatpush1.msra.mxu0 0.0
  %1505 = vmatprep.subr.mxu0 0.0
  %1506 = vmatpush1.msra.mxu0 0.0
  %1507 = vmatprep.subr.mxu0 0.0
  %1508 = vmatpush1.msra.mxu0 0.0
  %1509 = vmatprep.subr.mxu0 0.0
  %1510 = vmatpush1.msra.mxu0 0.0
  %1511 = vmatprep.subr.mxu0 0.0
  %1512 = vmatpush1.msra.mxu0 0.0
  %1513 = vmatprep.subr.mxu0 0.0
  %1514 = vmatpush1.msra.mxu0 0.0
  %1515 = vmatprep.mubr.f32.mxu0 0.0
  %1516 = vmatmul.mubr.f32.gmra.mrb[0].mxu0 %v1449
  %v1517 = vpop.f32.mrb[0].mxu0
  %v1518 = vadd.f32 %v408, %v1517
  %v1519 = vpop.f32.mrb[0].mxu0
  %1520 = vdwg.mxu0
  %v1521 = vadd.f32 %v286, %v1518
  %v1522 = vxor.u32 %v1521, 2147483648
  %v1523 = vmul.f32 %v1522, 1.442695
  %v1524 = vpow.pop %v1523
  %v1525 = vadd.f32 %v1524, 1.0
  %v1526 = vrcp.pop %v1525
  %v1527 = vmul.f32 1.0, %v1526
  %1529 = vrot.lane.b32.xlu0 %v1518, 64
  %v1530 = vpop.permute.xlu0 %1529
  %v1532 = vmul.f32 %v1527, %v1530
  %1534 = vrot.lane.b32.xlu0 %v1532, 64
  %v1535 = vpop.permute.xlu0 %1534
  %v1537 = vadd.f32 %v286, %v1535
  %v1538 = vtanh.pop %v1537
  %v1539 = vsub.f32 1.0, %v1527
  %1541 = vrot.lane.b32.xlu0 %v1538, 96
  %v1542 = vpop.permute.xlu0 %1541
  %v1544 = vmul.f32 %v1539, %v1542
  %v1546 = vmul.f32 %v1527, %v1446
  %v1547 = vadd.f32 %v1544, %v1546
  %v1549 = vrot.slane %v1444, 4
  %1550 = vrot.lane.b32.xlu0 %v1549, 96
  %v1551 = vpop.permute.xlu0 %1550
  %v1552 = vsel %vm110, %v1551, 0
  %1554 = vmatprep.subr.mxu0 0.0
  %1555 = vmatpush1.msra.mxu0 %v88
  %1556 = vmatprep.subr.mxu0 0.0
  %1557 = vmatpush1.msra.mxu0 %v89
  %1558 = vmatprep.subr.mxu0 0.0
  %1559 = vmatpush1.msra.mxu0 %v90
  %1560 = vmatprep.subr.mxu0 0.0
  %1561 = vmatpush1.msra.mxu0 %v91
  %1562 = vmatprep.subr.mxu0 0.0
  %1563 = vmatpush1.msra.mxu0 0.0
  %1564 = vmatprep.subr.mxu0 0.0
  %1565 = vmatpush1.msra.mxu0 0.0
  %1566 = vmatprep.subr.mxu0 0.0
  %1567 = vmatpush1.msra.mxu0 0.0
  %1568 = vmatprep.subr.mxu0 0.0
  %1569 = vmatpush1.msra.mxu0 0.0
  %1570 = vmatprep.subr.mxu0 0.0
  %1571 = vmatpush1.msra.mxu0 0.0
  %1572 = vmatprep.subr.mxu0 0.0
  %1573 = vmatpush1.msra.mxu0 0.0
  %1574 = vmatprep.subr.mxu0 0.0
  %1575 = vmatpush1.msra.mxu0 0.0
  %1576 = vmatprep.subr.mxu0 0.0
  %1577 = vmatpush1.msra.mxu0 0.0
  %1578 = vmatprep.subr.mxu0 0.0
  %1579 = vmatpush1.msra.mxu0 0.0
  %1580 = vmatprep.subr.mxu0 0.0
  %1581 = vmatpush1.msra.mxu0 0.0
  %1582 = vmatprep.subr.mxu0 0.0
  %1583 = vmatpush1.msra.mxu0 0.0
  %1584 = vmatprep.subr.mxu0 0.0
  %1585 = vmatpush1.msra.mxu0 0.0
  %1586 = vmatprep.subr.mxu0 0.0
  %1587 = vmatpush1.msra.mxu0 0.0
  %1588 = vmatprep.subr.mxu0 0.0
  %1589 = vmatpush1.msra.mxu0 0.0
  %1590 = vmatprep.subr.mxu0 0.0
  %1591 = vmatpush1.msra.mxu0 0.0
  %1592 = vmatprep.subr.mxu0 0.0
  %1593 = vmatpush1.msra.mxu0 0.0
  %1594 = vmatprep.subr.mxu0 0.0
  %1595 = vmatpush1.msra.mxu0 0.0
  %1596 = vmatprep.subr.mxu0 0.0
  %1597 = vmatpush1.msra.mxu0 0.0
  %1598 = vmatprep.subr.mxu0 0.0
  %1599 = vmatpush1.msra.mxu0 0.0
  %1600 = vmatprep.subr.mxu0 0.0
  %1601 = vmatpush1.msra.mxu0 0.0
  %1602 = vmatprep.subr.mxu0 0.0
  %1603 = vmatpush1.msra.mxu0 0.0
  %1604 = vmatprep.subr.mxu0 0.0
  %1605 = vmatpush1.msra.mxu0 0.0
  %1606 = vmatprep.subr.mxu0 0.0
  %1607 = vmatpush1.msra.mxu0 0.0
  %1608 = vmatprep.subr.mxu0 0.0
  %1609 = vmatpush1.msra.mxu0 0.0
  %1610 = vmatprep.subr.mxu0 0.0
  %1611 = vmatpush1.msra.mxu0 0.0
  %1612 = vmatprep.subr.mxu0 0.0
  %1613 = vmatpush1.msra.mxu0 0.0
  %1614 = vmatprep.subr.mxu0 0.0
  %1615 = vmatpush1.msra.mxu0 0.0
  %1616 = vmatprep.subr.mxu0 0.0
  %1617 = vmatpush1.msra.mxu0 0.0
  %1618 = vmatprep.mubr.f32.mxu0 0.0
  %1619 = vmatmul.mubr.f32.gmra.mrb[0].mxu0 %v1552
  %v1620 = vpop.f32.mrb[0].mxu0
  %v1621 = vadd.f32 %v303, %v1620
  %v1622 = vpop.f32.mrb[0].mxu0
  %1623 = vdwg.mxu0
  %v1624 = vadd.f32 %v205, %v1621
  %v1625 = vxor.u32 %v1624, 2147483648
  %v1626 = vmul.f32 %v1625, 1.442695
  %v1627 = vpow.pop %v1626
  %v1628 = vadd.f32 %v1627, 1.0
  %v1629 = vrcp.pop %v1628
  %v1630 = vmul.f32 1.0, %v1629
  %1632 = vrot.lane.b32.xlu0 %v1621, 64
  %v1633 = vpop.permute.xlu0 %1632
  %v1635 = vmul.f32 %v1630, %v1633
  %1637 = vrot.lane.b32.xlu0 %v1635, 64
  %v1638 = vpop.permute.xlu0 %1637
  %v1640 = vadd.f32 %v205, %v1638
  %v1641 = vtanh.pop %v1640
  %v1642 = vsub.f32 1.0, %v1630
  %1644 = vrot.lane.b32.xlu0 %v1641, 96
  %v1645 = vpop.permute.xlu0 %1644
  %v1647 = vmul.f32 %v1642, %v1645
  %v1649 = vmul.f32 %v1630, %v1549
  %v1650 = vadd.f32 %v1647, %v1649
  %1652 = vrot.lane.b32.xlu0 %v1547, 96
  %v1653 = vpop.permute.xlu0 %1652
  %v1654 = vsel %vm110, %v1653, 0
  %1656 = vmatprep.subr.mxu0 0.0
  %1657 = vmatpush1.msra.mxu0 %v98
  %1658 = vmatprep.subr.mxu0 0.0
  %1659 = vmatpush1.msra.mxu0 %v99
  %1660 = vmatprep.subr.mxu0 0.0
  %1661 = vmatpush1.msra.mxu0 %v100
  %1662 = vmatprep.subr.mxu0 0.0
  %1663 = vmatpush1.msra.mxu0 %v101
  %1664 = vmatprep.subr.mxu0 0.0
  %1665 = vmatpush1.msra.mxu0 0.0
  %1666 = vmatprep.subr.mxu0 0.0
  %1667 = vmatpush1.msra.mxu0 0.0
  %1668 = vmatprep.subr.mxu0 0.0
  %1669 = vmatpush1.msra.mxu0 0.0
  %1670 = vmatprep.subr.mxu0 0.0
  %1671 = vmatpush1.msra.mxu0 0.0
  %1672 = vmatprep.subr.mxu0 0.0
  %1673 = vmatpush1.msra.mxu0 0.0
  %1674 = vmatprep.subr.mxu0 0.0
  %1675 = vmatpush1.msra.mxu0 0.0
  %1676 = vmatprep.subr.mxu0 0.0
  %1677 = vmatpush1.msra.mxu0 0.0
  %1678 = vmatprep.subr.mxu0 0.0
  %1679 = vmatpush1.msra.mxu0 0.0
  %1680 = vmatprep.subr.mxu0 0.0
  %1681 = vmatpush1.msra.mxu0 0.0
  %1682 = vmatprep.subr.mxu0 0.0
  %1683 = vmatpush1.msra.mxu0 0.0
  %1684 = vmatprep.subr.mxu0 0.0
  %1685 = vmatpush1.msra.mxu0 0.0
  %1686 = vmatprep.subr.mxu0 0.0
  %1687 = vmatpush1.msra.mxu0 0.0
  %1688 = vmatprep.subr.mxu0 0.0
  %1689 = vmatpush1.msra.mxu0 0.0
  %1690 = vmatprep.subr.mxu0 0.0
  %1691 = vmatpush1.msra.mxu0 0.0
  %1692 = vmatprep.subr.mxu0 0.0
  %1693 = vmatpush1.msra.mxu0 0.0
  %1694 = vmatprep.subr.mxu0 0.0
  %1695 = vmatpush1.msra.mxu0 0.0
  %1696 = vmatprep.subr.mxu0 0.0
  %1697 = vmatpush1.msra.mxu0 0.0
  %1698 = vmatprep.subr.mxu0 0.0
  %1699 = vmatpush1.msra.mxu0 0.0
  %1700 = vmatprep.subr.mxu0 0.0
  %1701 = vmatpush1.msra.mxu0 0.0
  %1702 = vmatprep.subr.mxu0 0.0
  %1703 = vmatpush1.msra.mxu0 0.0
  %1704 = vmatprep.subr.mxu0 0.0
  %1705 = vmatpush1.msra.mxu0 0.0
  %1706 = vmatprep.subr.mxu0 0.0
  %1707 = vmatpush1.msra.mxu0 0.0
  %1708 = vmatprep.subr.mxu0 0.0
  %1709 = vmatpush1.msra.mxu0 0.0
  %1710 = vmatprep.subr.mxu0 0.0
  %1711 = vmatpush1.msra.mxu0 0.0
  %1712 = vmatprep.subr.mxu0 0.0
  %1713 = vmatpush1.msra.mxu0 0.0
  %1714 = vmatprep.subr.mxu0 0.0
  %1715 = vmatpush1.msra.mxu0 0.0
  %1716 = vmatprep.subr.mxu0 0.0
  %1717 = vmatpush1.msra.mxu0 0.0
  %1718 = vmatprep.subr.mxu0 0.0
  %1719 = vmatpush1.msra.mxu0 0.0
  %1720 = vmatprep.mubr.f32.mxu0 0.0
  %1721 = vmatmul.mubr.f32.gmra.mrb[0].mxu0 %v1654
  %v1722 = vpop.f32.mrb[0].mxu0
  %v1723 = vadd.f32 %v408, %v1722
  %v1724 = vpop.f32.mrb[0].mxu0
  %1725 = vdwg.mxu0
  %v1727 = vrot.slane %v1723, 4
  %v1729 = vadd.f32 %v281, %v1727
  %v1730 = vxor.u32 %v1729, 2147483648
  %v1731 = vmul.f32 %v1730, 1.442695
  %v1732 = vpow.pop %v1731
  %v1733 = vadd.f32 %v1732, 1.0
  %v1734 = vrcp.pop %v1733
  %v1735 = vmul.f32 1.0, %v1734
  %1736 = vrot.lane.b32.xlu0 %v1727, 64
  %v1737 = vpop.permute.xlu0 %1736
  %v1739 = vmul.f32 %v1735, %v1737
  %1741 = vrot.lane.b32.xlu0 %v1739, 64
  %v1742 = vpop.permute.xlu0 %1741
  %v1744 = vadd.f32 %v281, %v1742
  %v1745 = vtanh.pop %v1744
  %v1746 = vsub.f32 1.0, %v1735
  %1748 = vrot.lane.b32.xlu0 %v1745, 96
  %v1749 = vpop.permute.xlu0 %1748
  %v1751 = vmul.f32 %v1746, %v1749
  %v1752 = vrot.slane %v1547, 4
  %v1754 = vmul.f32 %v1735, %v1752
  %v1755 = vadd.f32 %v1751, %v1754
  %1757 = vrot.lane.b32.xlu0 %v1650, 96
  %v1758 = vpop.permute.xlu0 %1757
  %v1759 = vsel %vm110, %v1758, 0
  %1761 = vmatprep.subr.mxu0 0.0
  %1762 = vmatpush1.msra.mxu0 %v88
  %1763 = vmatprep.subr.mxu0 0.0
  %1764 = vmatpush1.msra.mxu0 %v89
  %1765 = vmatprep.subr.mxu0 0.0
  %1766 = vmatpush1.msra.mxu0 %v90
  %1767 = vmatprep.subr.mxu0 0.0
  %1768 = vmatpush1.msra.mxu0 %v91
  %1769 = vmatprep.subr.mxu0 0.0
  %1770 = vmatpush1.msra.mxu0 0.0
  %1771 = vmatprep.subr.mxu0 0.0
  %1772 = vmatpush1.msra.mxu0 0.0
  %1773 = vmatprep.subr.mxu0 0.0
  %1774 = vmatpush1.msra.mxu0 0.0
  %1775 = vmatprep.subr.mxu0 0.0
  %1776 = vmatpush1.msra.mxu0 0.0
  %1777 = vmatprep.subr.mxu0 0.0
  %1778 = vmatpush1.msra.mxu0 0.0
  %1779 = vmatprep.subr.mxu0 0.0
  %1780 = vmatpush1.msra.mxu0 0.0
  %1781 = vmatprep.subr.mxu0 0.0
  %1782 = vmatpush1.msra.mxu0 0.0
  %1783 = vmatprep.subr.mxu0 0.0
  %1784 = vmatpush1.msra.mxu0 0.0
  %1785 = vmatprep.subr.mxu0 0.0
  %1786 = vmatpush1.msra.mxu0 0.0
  %1787 = vmatprep.subr.mxu0 0.0
  %1788 = vmatpush1.msra.mxu0 0.0
  %1789 = vmatprep.subr.mxu0 0.0
  %1790 = vmatpush1.msra.mxu0 0.0
  %1791 = vmatprep.subr.mxu0 0.0
  %1792 = vmatpush1.msra.mxu0 0.0
  %1793 = vmatprep.subr.mxu0 0.0
  %1794 = vmatpush1.msra.mxu0 0.0
  %1795 = vmatprep.subr.mxu0 0.0
  %1796 = vmatpush1.msra.mxu0 0.0
  %1797 = vmatprep.subr.mxu0 0.0
  %1798 = vmatpush1.msra.mxu0 0.0
  %1799 = vmatprep.subr.mxu0 0.0
  %1800 = vmatpush1.msra.mxu0 0.0
  %1801 = vmatprep.subr.mxu0 0.0
  %1802 = vmatpush1.msra.mxu0 0.0
  %1803 = vmatprep.subr.mxu0 0.0
  %1804 = vmatpush1.msra.mxu0 0.0
  %1805 = vmatprep.subr.mxu0 0.0
  %1806 = vmatpush1.msra.mxu0 0.0
  %1807 = vmatprep.subr.mxu0 0.0
  %1808 = vmatpush1.msra.mxu0 0.0
  %1809 = vmatprep.subr.mxu0 0.0
  %1810 = vmatpush1.msra.mxu0 0.0
  %1811 = vmatprep.subr.mxu0 0.0
  %1812 = vmatpush1.msra.mxu0 0.0
  %1813 = vmatprep.subr.mxu0 0.0
  %1814 = vmatpush1.msra.mxu0 0.0
  %1815 = vmatprep.subr.mxu0 0.0
  %1816 = vmatpush1.msra.mxu0 0.0
  %1817 = vmatprep.subr.mxu0 0.0
  %1818 = vmatpush1.msra.mxu0 0.0
  %1819 = vmatprep.subr.mxu0 0.0
  %1820 = vmatpush1.msra.mxu0 0.0
  %1821 = vmatprep.subr.mxu0 0.0
  %1822 = vmatpush1.msra.mxu0 0.0
  %1823 = vmatprep.subr.mxu0 0.0
  %1824 = vmatpush1.msra.mxu0 0.0
  %1825 = vmatprep.mubr.f32.mxu0 0.0
  %1826 = vmatmul.mubr.f32.gmra.mrb[0].mxu0 %v1759
  %v1827 = vpop.f32.mrb[0].mxu0
  %v1828 = vadd.f32 %v303, %v1827
  %v1829 = vpop.f32.mrb[0].mxu0
  %1830 = vdwg.mxu0
  %v1832 = vrot.slane %v1828, 4
  %v1834 = vadd.f32 %v205, %v1832
  %v1835 = vxor.u32 %v1834, 2147483648
  %v1836 = vmul.f32 %v1835, 1.442695
  %v1837 = vpow.pop %v1836
  %v1838 = vadd.f32 %v1837, 1.0
  %v1839 = vrcp.pop %v1838
  %v1840 = vmul.f32 1.0, %v1839
  %1841 = vrot.lane.b32.xlu0 %v1832, 64
  %v1842 = vpop.permute.xlu0 %1841
  %v1844 = vmul.f32 %v1840, %v1842
  %1846 = vrot.lane.b32.xlu0 %v1844, 64
  %v1847 = vpop.permute.xlu0 %1846
  %v1849 = vadd.f32 %v205, %v1847
  %v1850 = vtanh.pop %v1849
  %v1851 = vsub.f32 1.0, %v1840
  %1853 = vrot.lane.b32.xlu0 %v1850, 96
  %v1854 = vpop.permute.xlu0 %1853
  %v1856 = vmul.f32 %v1851, %v1854
  %v1857 = vrot.slane %v1650, 4
  %v1859 = vmul.f32 %v1840, %v1857
  %v1860 = vadd.f32 %v1856, %v1859
  %v1862 = vrot.slane %v1755, 4
  %1863 = vrot.lane.b32.xlu0 %v1862, 96
  %v1864 = vpop.permute.xlu0 %1863
  %v1865 = vsel %vm110, %v1864, 0
  %1867 = vmatprep.subr.mxu0 0.0
  %1868 = vmatpush1.msra.mxu0 %v98
  %1869 = vmatprep.subr.mxu0 0.0
  %1870 = vmatpush1.msra.mxu0 %v99
  %1871 = vmatprep.subr.mxu0 0.0
  %1872 = vmatpush1.msra.mxu0 %v100
  %1873 = vmatprep.subr.mxu0 0.0
  %1874 = vmatpush1.msra.mxu0 %v101
  %1875 = vmatprep.subr.mxu0 0.0
  %1876 = vmatpush1.msra.mxu0 0.0
  %1877 = vmatprep.subr.mxu0 0.0
  %1878 = vmatpush1.msra.mxu0 0.0
  %1879 = vmatprep.subr.mxu0 0.0
  %1880 = vmatpush1.msra.mxu0 0.0
  %1881 = vmatprep.subr.mxu0 0.0
  %1882 = vmatpush1.msra.mxu0 0.0
  %1883 = vmatprep.subr.mxu0 0.0
  %1884 = vmatpush1.msra.mxu0 0.0
  %1885 = vmatprep.subr.mxu0 0.0
  %1886 = vmatpush1.msra.mxu0 0.0
  %1887 = vmatprep.subr.mxu0 0.0
  %1888 = vmatpush1.msra.mxu0 0.0
  %1889 = vmatprep.subr.mxu0 0.0
  %1890 = vmatpush1.msra.mxu0 0.0
  %1891 = vmatprep.subr.mxu0 0.0
  %1892 = vmatpush1.msra.mxu0 0.0
  %1893 = vmatprep.subr.mxu0 0.0
  %1894 = vmatpush1.msra.mxu0 0.0
  %1895 = vmatprep.subr.mxu0 0.0
  %1896 = vmatpush1.msra.mxu0 0.0
  %1897 = vmatprep.subr.mxu0 0.0
  %1898 = vmatpush1.msra.mxu0 0.0
  %1899 = vmatprep.subr.mxu0 0.0
  %1900 = vmatpush1.msra.mxu0 0.0
  %1901 = vmatprep.subr.mxu0 0.0
  %1902 = vmatpush1.msra.mxu0 0.0
  %1903 = vmatprep.subr.mxu0 0.0
  %1904 = vmatpush1.msra.mxu0 0.0
  %1905 = vmatprep.subr.mxu0 0.0
  %1906 = vmatpush1.msra.mxu0 0.0
  %1907 = vmatprep.subr.mxu0 0.0
  %1908 = vmatpush1.msra.mxu0 0.0
  %1909 = vmatprep.subr.mxu0 0.0
  %1910 = vmatpush1.msra.mxu0 0.0
  %1911 = vmatprep.subr.mxu0 0.0
  %1912 = vmatpush1.msra.mxu0 0.0
  %1913 = vmatprep.subr.mxu0 0.0
  %1914 = vmatpush1.msra.mxu0 0.0
  %1915 = vmatprep.subr.mxu0 0.0
  %1916 = vmatpush1.msra.mxu0 0.0
  %1917 = vmatprep.subr.mxu0 0.0
  %1918 = vmatpush1.msra.mxu0 0.0
  %1919 = vmatprep.subr.mxu0 0.0
  %1920 = vmatpush1.msra.mxu0 0.0
  %1921 = vmatprep.subr.mxu0 0.0
  %1922 = vmatpush1.msra.mxu0 0.0
  %1923 = vmatprep.subr.mxu0 0.0
  %1924 = vmatpush1.msra.mxu0 0.0
  %1925 = vmatprep.subr.mxu0 0.0
  %1926 = vmatpush1.msra.mxu0 0.0
  %1927 = vmatprep.subr.mxu0 0.0
  %1928 = vmatpush1.msra.mxu0 0.0
  %1929 = vmatprep.subr.mxu0 0.0
  %1930 = vmatpush1.msra.mxu0 0.0
  %1931 = vmatprep.mubr.f32.mxu0 0.0
  %1932 = vmatmul.mubr.f32.gmra.mrb[0].mxu0 %v1865
  %v1933 = vpop.f32.mrb[0].mxu0
  %v1934 = vadd.f32 %v408, %v1933
  %v1935 = vpop.f32.mrb[0].mxu0
  %1936 = vdwg.mxu0
  %v1937 = vadd.f32 %v281, %v1934
  %v1938 = vxor.u32 %v1937, 2147483648
  %v1939 = vmul.f32 %v1938, 1.442695
  %v1940 = vpow.pop %v1939
  %v1941 = vadd.f32 %v1940, 1.0
  %v1942 = vrcp.pop %v1941
  %v1943 = vmul.f32 1.0, %v1942
  %1945 = vrot.lane.b32.xlu0 %v1934, 64
  %v1946 = vpop.permute.xlu0 %1945
  %v1948 = vmul.f32 %v1943, %v1946
  %1950 = vrot.lane.b32.xlu0 %v1948, 64
  %v1951 = vpop.permute.xlu0 %1950
  %v1953 = vadd.f32 %v281, %v1951
  %v1954 = vtanh.pop %v1953
  %v1955 = vsub.f32 1.0, %v1943
  %1957 = vrot.lane.b32.xlu0 %v1954, 96
  %v1958 = vpop.permute.xlu0 %1957
  %v1960 = vmul.f32 %v1955, %v1958
  %v1962 = vmul.f32 %v1943, %v1862
  %v1963 = vadd.f32 %v1960, %v1962
  %vm1964 = vcmask 1043456
  %v1965 = vsel %vm1964, %v403, %v612
  %v1966 = vsel %vm1964, %v818, %v1028
  %v1967 = vsel %vm1964, %v1234, %v1444
  %v1968 = vsel %vm1964, %v1650, %v1860
  %v1969 = vsel %vm1964, %v1963, %v1755
  %v1970 = vsel %vm1964, %v1547, %v1339
  %v1971 = vsel %vm1964, %v1131, %v923
  %v1972 = vsel %vm1964, %v715, %v507
  %1977 = vrot.lane.b32.xlu0 %v1965, 96
  %v1978 = vpop.permute.xlu0 %1977
  %1979 = vrot.lane.b32.xlu0 %v1966, 96
  %v1980 = vpop.permute.xlu0 %1979
  %1981 = vrot.lane.b32.xlu0 %v1967, 96
  %v1982 = vpop.permute.xlu0 %1981
  %1983 = vrot.lane.b32.xlu0 %v1968, 96
  %v1984 = vpop.permute.xlu0 %1983
  %v1989 = vsel %vm110, %v1978, %v1969
  %v1990 = vsel %vm110, %v1980, %v1970
  %v1991 = vsel %vm110, %v1982, %v1971
  %v1992 = vsel %vm110, %v1984, %v1972
  %v1993 = vld [vmem:[%s9] sm:$0xff]
  %v1994 = vld [vmem:[%s9 + $0x8] sm:$0xff]
  %v1995 = vld [vmem:[%s9 + $0x10] sm:$0xff]
  %v1996 = vld [vmem:[%s9 + $0x18] sm:$0xff]
  %v1997 = vld [vmem:[%s9 + $0x20] sm:$0xff]
  %v1998 = vld [vmem:[%s9 + $0x28] sm:$0xff]
  %v1999 = vld [vmem:[%s9 + $0x30] sm:$0xff]
  %v2000 = vld [vmem:[%s9 + $0x38] sm:$0xff]
  %v2001 = vld [vmem:[%s10] sm:$0xff]
  %v2002 = vld [vmem:[%s10 + $0x8] sm:$0xff]
  %v2003 = vld [vmem:[%s10 + $0x10] sm:$0xff]
  %v2004 = vld [vmem:[%s10 + $0x18] sm:$0xff]
  %v2005 = vld [vmem:[%s11] sm:$0x1]
  %v2006 = vld [vmem:[%s12] sm:$0x1]
  %v2007 = vld [vmem:[%s13] sm:$0xff]
  %v2008 = vld [vmem:[%s13 + $0x8] sm:$0xff]
  %v2009 = vld [vmem:[%s13 + $0x10] sm:$0xff]
  %v2010 = vld [vmem:[%s13 + $0x18] sm:$0xff]
  %v2011 = vld [vmem:[%s13 + $0x20] sm:$0xff]
  %v2012 = vld [vmem:[%s13 + $0x28] sm:$0xff]
  %v2013 = vld [vmem:[%s13 + $0x30] sm:$0xff]
  %v2014 = vld [vmem:[%s13 + $0x38] sm:$0xff]
  %v2015 = vld [vmem:[%s14] sm:$0xff]
  %v2016 = vld [vmem:[%s14 + $0x8] sm:$0xff]
  %v2017 = vld [vmem:[%s14 + $0x10] sm:$0xff]
  %v2018 = vld [vmem:[%s14 + $0x18] sm:$0xff]
  %v2019 = vld [vmem:[%s15] sm:$0x1]
  %v2020 = vld [vmem:[%s16] sm:$0x1]
  %v2022 = vlaneseq
  %v2023 = vshrl.u32 %v2022, 7
  %v2024 = vsub.s32 0, %v2023
  %v2025 = vrot.slane %v2005, %v2024
  %vm2027 = vcmask 523264
  %v2029 = vsel %vm2027, %v1989, 0
  %v2032 = vsel %vm2027, %v1990, 0
  %v2035 = vsel %vm2027, %v1991, 0
  %v2038 = vsel %vm2027, %v1992, 0
  %2040 = vmatprep.subr.mxu0 0.0
  %2041 = vmatpush1.msra.mxu0 %v1993
  %2042 = vmatprep.subr.mxu0 0.0
  %2043 = vmatpush1.msra.mxu0 %v1994
  %2044 = vmatprep.subr.mxu0 0.0
  %2045 = vmatpush1.msra.mxu0 %v1995
  %2046 = vmatprep.subr.mxu0 0.0
  %2047 = vmatpush1.msra.mxu0 %v1996
  %2048 = vmatprep.subr.mxu0 0.0
  %2049 = vmatpush1.msra.mxu0 %v1997
  %2050 = vmatprep.subr.mxu0 0.0
  %2051 = vmatpush1.msra.mxu0 %v1998
  %2052 = vmatprep.subr.mxu0 0.0
  %2053 = vmatpush1.msra.mxu0 %v1999
  %2054 = vmatprep.subr.mxu0 0.0
  %2055 = vmatpush1.msra.mxu0 %v2000
  %2056 = vmatprep.subr.mxu0 0.0
  %2057 = vmatpush1.msra.mxu0 0.0
  %2058 = vmatprep.subr.mxu0 0.0
  %2059 = vmatpush1.msra.mxu0 0.0
  %2060 = vmatprep.subr.mxu0 0.0
  %2061 = vmatpush1.msra.mxu0 0.0
  %2062 = vmatprep.subr.mxu0 0.0
  %2063 = vmatpush1.msra.mxu0 0.0
  %2064 = vmatprep.subr.mxu0 0.0
  %2065 = vmatpush1.msra.mxu0 0.0
  %2066 = vmatprep.subr.mxu0 0.0
  %2067 = vmatpush1.msra.mxu0 0.0
  %2068 = vmatprep.subr.mxu0 0.0
  %2069 = vmatpush1.msra.mxu0 0.0
  %2070 = vmatprep.subr.mxu0 0.0
  %2071 = vmatpush1.msra.mxu0 0.0
  %2072 = vmatprep.subr.mxu0 0.0
  %2073 = vmatpush1.msra.mxu0 0.0
  %2074 = vmatprep.subr.mxu0 0.0
  %2075 = vmatpush1.msra.mxu0 0.0
  %2076 = vmatprep.subr.mxu0 0.0
  %2077 = vmatpush1.msra.mxu0 0.0
  %2078 = vmatprep.subr.mxu0 0.0
  %2079 = vmatpush1.msra.mxu0 0.0
  %2080 = vmatprep.subr.mxu0 0.0
  %2081 = vmatpush1.msra.mxu0 0.0
  %2082 = vmatprep.subr.mxu0 0.0
  %2083 = vmatpush1.msra.mxu0 0.0
  %2084 = vmatprep.subr.mxu0 0.0
  %2085 = vmatpush1.msra.mxu0 0.0
  %2086 = vmatprep.subr.mxu0 0.0
  %2087 = vmatpush1.msra.mxu0 0.0
  %2088 = vmatprep.subr.mxu0 0.0
  %2089 = vmatpush1.msra.mxu0 0.0
  %2090 = vmatprep.subr.mxu0 0.0
  %2091 = vmatpush1.msra.mxu0 0.0
  %2092 = vmatprep.subr.mxu0 0.0
  %2093 = vmatpush1.msra.mxu0 0.0
  %2094 = vmatprep.subr.mxu0 0.0
  %2095 = vmatpush1.msra.mxu0 0.0
  %2096 = vmatprep.subr.mxu0 0.0
  %2097 = vmatpush1.msra.mxu0 0.0
  %2098 = vmatprep.subr.mxu0 0.0
  %2099 = vmatpush1.msra.mxu0 0.0
  %2100 = vmatprep.subr.mxu0 0.0
  %2101 = vmatpush1.msra.mxu0 0.0
  %2102 = vmatprep.subr.mxu0 0.0
  %2103 = vmatpush1.msra.mxu0 0.0
  %2104 = vmatprep.mubr.f32.mxu0 0.0
  %2105 = vmatmul.mubr.f32.gmra.mrb[0].mxu0 %v2029
  %v2106 = vpop.f32.mrb[0].mxu0
  %v2107 = vadd.f32 %v2025, %v2106
  %v2108 = vpop.f32.mrb[0].mxu0
  %2109 = vmatprep.mubr.f32.mxu0 0.0
  %2110 = vmatmul.mubr.f32.gmra.mrb[0].mxu0 %v2032
  %v2111 = vpop.f32.mrb[0].mxu0
  %v2112 = vadd.f32 %v2025, %v2111
  %v2113 = vpop.f32.mrb[0].mxu0
  %2114 = vmatprep.mubr.f32.mxu0 0.0
  %2115 = vmatmul.mubr.f32.gmra.mrb[0].mxu0 %v2035
  %v2116 = vpop.f32.mrb[0].mxu0
  %v2117 = vadd.f32 %v2025, %v2116
  %v2118 = vpop.f32.mrb[0].mxu0
  %2119 = vmatprep.mubr.f32.mxu0 0.0
  %2120 = vmatmul.mubr.f32.gmra.mrb[0].mxu0 %v2038
  %v2121 = vpop.f32.mrb[0].mxu0
  %v2122 = vadd.f32 %v2025, %v2121
  %v2123 = vpop.f32.mrb[0].mxu0
  %2124 = vdwg.mxu0
  %v2126 = vlaneseq
  %v2127 = vshrl.u32 %v2126, 7
  %v2128 = vsub.s32 0, %v2127
  %v2129 = vrot.slane %v2019, %v2128
  %2131 = vmatprep.subr.mxu0 0.0
  %2132 = vmatpush1.msra.mxu0 %v2007
  %2133 = vmatprep.subr.mxu0 0.0
  %2134 = vmatpush1.msra.mxu0 %v2008
  %2135 = vmatprep.subr.mxu0 0.0
  %2136 = vmatpush1.msra.mxu0 %v2009
  %2137 = vmatprep.subr.mxu0 0.0
  %2138 = vmatpush1.msra.mxu0 %v2010
  %2139 = vmatprep.subr.mxu0 0.0
  %2140 = vmatpush1.msra.mxu0 %v2011
  %2141 = vmatprep.subr.mxu0 0.0
  %2142 = vmatpush1.msra.mxu0 %v2012
  %2143 = vmatprep.subr.mxu0 0.0
  %2144 = vmatpush1.msra.mxu0 %v2013
  %2145 = vmatprep.subr.mxu0 0.0
  %2146 = vmatpush1.msra.mxu0 %v2014
  %2147 = vmatprep.subr.mxu0 0.0
  %2148 = vmatpush1.msra.mxu0 0.0
  %2149 = vmatprep.subr.mxu0 0.0
  %2150 = vmatpush1.msra.mxu0 0.0
  %2151 = vmatprep.subr.mxu0 0.0
  %2152 = vmatpush1.msra.mxu0 0.0
  %2153 = vmatprep.subr.mxu0 0.0
  %2154 = vmatpush1.msra.mxu0 0.0
  %2155 = vmatprep.subr.mxu0 0.0
  %2156 = vmatpush1.msra.mxu0 0.0
  %2157 = vmatprep.subr.mxu0 0.0
  %2158 = vmatpush1.msra.mxu0 0.0
  %2159 = vmatprep.subr.mxu0 0.0
  %2160 = vmatpush1.msra.mxu0 0.0
  %2161 = vmatprep.subr.mxu0 0.0
  %2162 = vmatpush1.msra.mxu0 0.0
  %2163 = vmatprep.subr.mxu0 0.0
  %2164 = vmatpush1.msra.mxu0 0.0
  %2165 = vmatprep.subr.mxu0 0.0
  %2166 = vmatpush1.msra.mxu0 0.0
  %2167 = vmatprep.subr.mxu0 0.0
  %2168 = vmatpush1.msra.mxu0 0.0
  %2169 = vmatprep.subr.mxu0 0.0
  %2170 = vmatpush1.msra.mxu0 0.0
  %2171 = vmatprep.subr.mxu0 0.0
  %2172 = vmatpush1.msra.mxu0 0.0
  %2173 = vmatprep.subr.mxu0 0.0
  %2174 = vmatpush1.msra.mxu0 0.0
  %2175 = vmatprep.subr.mxu0 0.0
  %2176 = vmatpush1.msra.mxu0 0.0
  %2177 = vmatprep.subr.mxu0 0.0
  %2178 = vmatpush1.msra.mxu0 0.0
  %2179 = vmatprep.subr.mxu0 0.0
  %2180 = vmatpush1.msra.mxu0 0.0
  %2181 = vmatprep.subr.mxu0 0.0
  %2182 = vmatpush1.msra.mxu0 0.0
  %2183 = vmatprep.subr.mxu0 0.0
  %2184 = vmatpush1.msra.mxu0 0.0
  %2185 = vmatprep.subr.mxu0 0.0
  %2186 = vmatpush1.msra.mxu0 0.0
  %2187 = vmatprep.subr.mxu0 0.0
  %2188 = vmatpush1.msra.mxu0 0.0
  %2189 = vmatprep.subr.mxu0 0.0
  %2190 = vmatpush1.msra.mxu0 0.0
  %2191 = vmatprep.subr.mxu0 0.0
  %2192 = vmatpush1.msra.mxu0 0.0
  %2193 = vmatprep.subr.mxu0 0.0
  %2194 = vmatpush1.msra.mxu0 0.0
  %2195 = vmatprep.mubr.f32.mxu0 0.0
  %2196 = vmatmul.mubr.f32.gmra.mrb[0].mxu0 %v2029
  %v2197 = vpop.f32.mrb[0].mxu0
  %v2198 = vadd.f32 %v2129, %v2197
  %v2199 = vpop.f32.mrb[0].mxu0
  %2200 = vmatprep.mubr.f32.mxu0 0.0
  %2201 = vmatmul.mubr.f32.gmra.mrb[0].mxu0 %v2032
  %v2202 = vpop.f32.mrb[0].mxu0
  %v2203 = vadd.f32 %v2129, %v2202
  %v2204 = vpop.f32.mrb[0].mxu0
  %2205 = vmatprep.mubr.f32.mxu0 0.0
  %2206 = vmatmul.mubr.f32.gmra.mrb[0].mxu0 %v2035
  %v2207 = vpop.f32.mrb[0].mxu0
  %v2208 = vadd.f32 %v2129, %v2207
  %v2209 = vpop.f32.mrb[0].mxu0
  %2210 = vmatprep.mubr.f32.mxu0 0.0
  %2211 = vmatmul.mubr.f32.gmra.mrb[0].mxu0 %v2038
  %v2212 = vpop.f32.mrb[0].mxu0
  %v2213 = vadd.f32 %v2129, %v2212
  %v2214 = vpop.f32.mrb[0].mxu0
  %2215 = vdwg.mxu0
  %v2217 = vlaneseq
  %v2218 = vshrl.u32 %v2217, 7
  %v2219 = vsub.s32 0, %v2218
  %v2220 = vrot.slane %v2006, %v2219
  %2222 = vmatprep.subr.mxu0 0.0
  %2223 = vmatpush1.msra.mxu0 %v2001
  %2224 = vmatprep.subr.mxu0 0.0
  %2225 = vmatpush1.msra.mxu0 %v2002
  %2226 = vmatprep.subr.mxu0 0.0
  %2227 = vmatpush1.msra.mxu0 %v2003
  %2228 = vmatprep.subr.mxu0 0.0
  %2229 = vmatpush1.msra.mxu0 %v2004
  %2230 = vmatprep.subr.mxu0 0.0
  %2231 = vmatpush1.msra.mxu0 0.0
  %2232 = vmatprep.subr.mxu0 0.0
  %2233 = vmatpush1.msra.mxu0 0.0
  %2234 = vmatprep.subr.mxu0 0.0
  %2235 = vmatpush1.msra.mxu0 0.0
  %2236 = vmatprep.subr.mxu0 0.0
  %2237 = vmatpush1.msra.mxu0 0.0
  %2238 = vmatprep.subr.mxu0 0.0
  %2239 = vmatpush1.msra.mxu0 0.0
  %2240 = vmatprep.subr.mxu0 0.0
  %2241 = vmatpush1.msra.mxu0 0.0
  %2242 = vmatprep.subr.mxu0 0.0
  %2243 = vmatpush1.msra.mxu0 0.0
  %2244 = vmatprep.subr.mxu0 0.0
  %2245 = vmatpush1.msra.mxu0 0.0
  %2246 = vmatprep.subr.mxu0 0.0
  %2247 = vmatpush1.msra.mxu0 0.0
  %2248 = vmatprep.subr.mxu0 0.0
  %2249 = vmatpush1.msra.mxu0 0.0
  %2250 = vmatprep.subr.mxu0 0.0
  %2251 = vmatpush1.msra.mxu0 0.0
  %2252 = vmatprep.subr.mxu0 0.0
  %2253 = vmatpush1.msra.mxu0 0.0
  %2254 = vmatprep.subr.mxu0 0.0
  %2255 = vmatpush1.msra.mxu0 0.0
  %2256 = vmatprep.subr.mxu0 0.0
  %2257 = vmatpush1.msra.mxu0 0.0
  %2258 = vmatprep.subr.mxu0 0.0
  %2259 = vmatpush1.msra.mxu0 0.0
  %2260 = vmatprep.subr.mxu0 0.0
  %2261 = vmatpush1.msra.mxu0 0.0
  %2262 = vmatprep.subr.mxu0 0.0
  %2263 = vmatpush1.msra.mxu0 0.0
  %2264 = vmatprep.subr.mxu0 0.0
  %2265 = vmatpush1.msra.mxu0 0.0
  %2266 = vmatprep.subr.mxu0 0.0
  %2267 = vmatpush1.msra.mxu0 0.0
  %2268 = vmatprep.subr.mxu0 0.0
  %2269 = vmatpush1.msra.mxu0 0.0
  %2270 = vmatprep.subr.mxu0 0.0
  %2271 = vmatpush1.msra.mxu0 0.0
  %2272 = vmatprep.subr.mxu0 0.0
  %2273 = vmatpush1.msra.mxu0 0.0
  %2274 = vmatprep.subr.mxu0 0.0
  %2275 = vmatpush1.msra.mxu0 0.0
  %2276 = vmatprep.subr.mxu0 0.0
  %2277 = vmatpush1.msra.mxu0 0.0
  %2278 = vmatprep.subr.mxu0 0.0
  %2279 = vmatpush1.msra.mxu0 0.0
  %2280 = vmatprep.subr.mxu0 0.0
  %2281 = vmatpush1.msra.mxu0 0.0
  %2282 = vmatprep.subr.mxu0 0.0
  %2283 = vmatpush1.msra.mxu0 0.0
  %2284 = vmatprep.subr.mxu0 0.0
  %2285 = vmatpush1.msra.mxu0 0.0
  %2286 = vmatprep.mubr.f32.mxu0 0.0
  %2287 = vmatmul.mubr.f32.gmra.mrb[0].mxu0 %v306
  %v2288 = vpop.f32.mrb[0].mxu0
  %v2289 = vadd.f32 %v2220, %v2288
  %v2290 = vpop.f32.mrb[0].mxu0
  %2291 = vdwg.mxu0
  %v2292 = vadd.f32 %v2107, %v2289
  %v2293 = vxor.u32 %v2292, 2147483648
  %v2294 = vmul.f32 %v2293, 1.442695
  %v2295 = vpow.pop %v2294
  %v2296 = vadd.f32 %v2295, 1.0
  %v2297 = vrcp.pop %v2296
  %v2298 = vmul.f32 1.0, %v2297
  %2300 = vrot.lane.b32.xlu0 %v2289, 64
  %v2301 = vpop.permute.xlu0 %2300
  %v2303 = vmul.f32 %v2298, %v2301
  %2305 = vrot.lane.b32.xlu0 %v2303, 64
  %v2306 = vpop.permute.xlu0 %2305
  %v2308 = vadd.f32 %v2107, %v2306
  %v2309 = vtanh.pop %v2308
  %v2310 = vsub.f32 1.0, %v2298
  %2312 = vrot.lane.b32.xlu0 %v2309, 96
  %v2313 = vpop.permute.xlu0 %2312
  %v2315 = vmul.f32 %v2310, %v2313
  %v2316 = vmul.f32 %v2298, 0.0
  %v2317 = vadd.f32 %v2315, %v2316
  %v2319 = vlaneseq
  %v2320 = vshrl.u32 %v2319, 7
  %v2321 = vsub.s32 0, %v2320
  %v2322 = vrot.slane %v2020, %v2321
  %2324 = vmatprep.subr.mxu0 0.0
  %2325 = vmatpush1.msra.mxu0 %v2015
  %2326 = vmatprep.subr.mxu0 0.0
  %2327 = vmatpush1.msra.mxu0 %v2016
  %2328 = vmatprep.subr.mxu0 0.0
  %2329 = vmatpush1.msra.mxu0 %v2017
  %2330 = vmatprep.subr.mxu0 0.0
  %2331 = vmatpush1.msra.mxu0 %v2018
  %2332 = vmatprep.subr.mxu0 0.0
  %2333 = vmatpush1.msra.mxu0 0.0
  %2334 = vmatprep.subr.mxu0 0.0
  %2335 = vmatpush1.msra.mxu0 0.0
  %2336 = vmatprep.subr.mxu0 0.0
  %2337 = vmatpush1.msra.mxu0 0.0
  %2338 = vmatprep.subr.mxu0 0.0
  %2339 = vmatpush1.msra.mxu0 0.0
  %2340 = vmatprep.subr.mxu0 0.0
  %2341 = vmatpush1.msra.mxu0 0.0
  %2342 = vmatprep.subr.mxu0 0.0
  %2343 = vmatpush1.msra.mxu0 0.0
  %2344 = vmatprep.subr.mxu0 0.0
  %2345 = vmatpush1.msra.mxu0 0.0
  %2346 = vmatprep.subr.mxu0 0.0
  %2347 = vmatpush1.msra.mxu0 0.0
  %2348 = vmatprep.subr.mxu0 0.0
  %2349 = vmatpush1.msra.mxu0 0.0
  %2350 = vmatprep.subr.mxu0 0.0
  %2351 = vmatpush1.msra.mxu0 0.0
  %2352 = vmatprep.subr.mxu0 0.0
  %2353 = vmatpush1.msra.mxu0 0.0
  %2354 = vmatprep.subr.mxu0 0.0
  %2355 = vmatpush1.msra.mxu0 0.0
  %2356 = vmatprep.subr.mxu0 0.0
  %2357 = vmatpush1.msra.mxu0 0.0
  %2358 = vmatprep.subr.mxu0 0.0
  %2359 = vmatpush1.msra.mxu0 0.0
  %2360 = vmatprep.subr.mxu0 0.0
  %2361 = vmatpush1.msra.mxu0 0.0
  %2362 = vmatprep.subr.mxu0 0.0
  %2363 = vmatpush1.msra.mxu0 0.0
  %2364 = vmatprep.subr.mxu0 0.0
  %2365 = vmatpush1.msra.mxu0 0.0
  %2366 = vmatprep.subr.mxu0 0.0
  %2367 = vmatpush1.msra.mxu0 0.0
  %2368 = vmatprep.subr.mxu0 0.0
  %2369 = vmatpush1.msra.mxu0 0.0
  %2370 = vmatprep.subr.mxu0 0.0
  %2371 = vmatpush1.msra.mxu0 0.0
  %2372 = vmatprep.subr.mxu0 0.0
  %2373 = vmatpush1.msra.mxu0 0.0
  %2374 = vmatprep.subr.mxu0 0.0
  %2375 = vmatpush1.msra.mxu0 0.0
  %2376 = vmatprep.subr.mxu0 0.0
  %2377 = vmatpush1.msra.mxu0 0.0
  %2378 = vmatprep.subr.mxu0 0.0
  %2379 = vmatpush1.msra.mxu0 0.0
  %2380 = vmatprep.subr.mxu0 0.0
  %2381 = vmatpush1.msra.mxu0 0.0
  %2382 = vmatprep.subr.mxu0 0.0
  %2383 = vmatpush1.msra.mxu0 0.0
  %2384 = vmatprep.subr.mxu0 0.0
  %2385 = vmatpush1.msra.mxu0 0.0
  %2386 = vmatprep.subr.mxu0 0.0
  %2387 = vmatpush1.msra.mxu0 0.0
  %2388 = vmatprep.mubr.f32.mxu0 0.0
  %2389 = vmatmul.mubr.f32.gmra.mrb[0].mxu0 %v306
  %v2390 = vpop.f32.mrb[0].mxu0
  %v2391 = vadd.f32 %v2322, %v2390
  %v2392 = vpop.f32.mrb[0].mxu0
  %2393 = vdwg.mxu0
  %v2395 = vrot.slane %v2391, 4
  %v2397 = vadd.f32 %v2213, %v2395
  %v2398 = vxor.u32 %v2397, 2147483648
  %v2399 = vmul.f32 %v2398, 1.442695
  %v2400 = vpow.pop %v2399
  %v2401 = vadd.f32 %v2400, 1.0
  %v2402 = vrcp.pop %v2401
  %v2403 = vmul.f32 1.0, %v2402
  %2404 = vrot.lane.b32.xlu0 %v2395, 64
  %v2405 = vpop.permute.xlu0 %2404
  %v2407 = vmul.f32 %v2403, %v2405
  %2409 = vrot.lane.b32.xlu0 %v2407, 64
  %v2410 = vpop.permute.xlu0 %2409
  %v2412 = vadd.f32 %v2213, %v2410
  %v2413 = vtanh.pop %v2412
  %v2414 = vsub.f32 1.0, %v2403
  %2416 = vrot.lane.b32.xlu0 %v2413, 96
  %v2417 = vpop.permute.xlu0 %2416
  %v2419 = vmul.f32 %v2414, %v2417
  %v2420 = vmul.f32 %v2403, 0.0
  %v2421 = vadd.f32 %v2419, %v2420
  %2423 = vrot.lane.b32.xlu0 %v2317, 96
  %v2424 = vpop.permute.xlu0 %2423
  %v2425 = vsel %vm110, %v2424, 0
  %2427 = vmatprep.subr.mxu0 0.0
  %2428 = vmatpush1.msra.mxu0 %v2001
  %2429 = vmatprep.subr.mxu0 0.0
  %2430 = vmatpush1.msra.mxu0 %v2002
  %2431 = vmatprep.subr.mxu0 0.0
  %2432 = vmatpush1.msra.mxu0 %v2003
  %2433 = vmatprep.subr.mxu0 0.0
  %2434 = vmatpush1.msra.mxu0 %v2004
  %2435 = vmatprep.subr.mxu0 0.0
  %2436 = vmatpush1.msra.mxu0 0.0
  %2437 = vmatprep.subr.mxu0 0.0
  %2438 = vmatpush1.msra.mxu0 0.0
  %2439 = vmatprep.subr.mxu0 0.0
  %2440 = vmatpush1.msra.mxu0 0.0
  %2441 = vmatprep.subr.mxu0 0.0
  %2442 = vmatpush1.msra.mxu0 0.0
  %2443 = vmatprep.subr.mxu0 0.0
  %2444 = vmatpush1.msra.mxu0 0.0
  %2445 = vmatprep.subr.mxu0 0.0
  %2446 = vmatpush1.msra.mxu0 0.0
  %2447 = vmatprep.subr.mxu0 0.0
  %2448 = vmatpush1.msra.mxu0 0.0
  %2449 = vmatprep.subr.mxu0 0.0
  %2450 = vmatpush1.msra.mxu0 0.0
  %2451 = vmatprep.subr.mxu0 0.0
  %2452 = vmatpush1.msra.mxu0 0.0
  %2453 = vmatprep.subr.mxu0 0.0
  %2454 = vmatpush1.msra.mxu0 0.0
  %2455 = vmatprep.subr.mxu0 0.0
  %2456 = vmatpush1.msra.mxu0 0.0
  %2457 = vmatprep.subr.mxu0 0.0
  %2458 = vmatpush1.msra.mxu0 0.0
  %2459 = vmatprep.subr.mxu0 0.0
  %2460 = vmatpush1.msra.mxu0 0.0
  %2461 = vmatprep.subr.mxu0 0.0
  %2462 = vmatpush1.msra.mxu0 0.0
  %2463 = vmatprep.subr.mxu0 0.0
  %2464 = vmatpush1.msra.mxu0 0.0
  %2465 = vmatprep.subr.mxu0 0.0
  %2466 = vmatpush1.msra.mxu0 0.0
  %2467 = vmatprep.subr.mxu0 0.0
  %2468 = vmatpush1.msra.mxu0 0.0
  %2469 = vmatprep.subr.mxu0 0.0
  %2470 = vmatpush1.msra.mxu0 0.0
  %2471 = vmatprep.subr.mxu0 0.0
  %2472 = vmatpush1.msra.mxu0 0.0
  %2473 = vmatprep.subr.mxu0 0.0
  %2474 = vmatpush1.msra.mxu0 0.0
  %2475 = vmatprep.subr.mxu0 0.0
  %2476 = vmatpush1.msra.mxu0 0.0
  %2477 = vmatprep.subr.mxu0 0.0
  %2478 = vmatpush1.msra.mxu0 0.0
  %2479 = vmatprep.subr.mxu0 0.0
  %2480 = vmatpush1.msra.mxu0 0.0
  %2481 = vmatprep.subr.mxu0 0.0
  %2482 = vmatpush1.msra.mxu0 0.0
  %2483 = vmatprep.subr.mxu0 0.0
  %2484 = vmatpush1.msra.mxu0 0.0
  %2485 = vmatprep.subr.mxu0 0.0
  %2486 = vmatpush1.msra.mxu0 0.0
  %2487 = vmatprep.subr.mxu0 0.0
  %2488 = vmatpush1.msra.mxu0 0.0
  %2489 = vmatprep.subr.mxu0 0.0
  %2490 = vmatpush1.msra.mxu0 0.0
  %2491 = vmatprep.mubr.f32.mxu0 0.0
  %2492 = vmatmul.mubr.f32.gmra.mrb[0].mxu0 %v2425
  %v2493 = vpop.f32.mrb[0].mxu0
  %v2494 = vadd.f32 %v2220, %v2493
  %v2495 = vpop.f32.mrb[0].mxu0
  %2496 = vdwg.mxu0
  %v2498 = vrot.slane %v2494, 4
  %v2500 = vadd.f32 %v2107, %v2498
  %v2501 = vxor.u32 %v2500, 2147483648
  %v2502 = vmul.f32 %v2501, 1.442695
  %v2503 = vpow.pop %v2502
  %v2504 = vadd.f32 %v2503, 1.0
  %v2505 = vrcp.pop %v2504
  %v2506 = vmul.f32 1.0, %v2505
  %2507 = vrot.lane.b32.xlu0 %v2498, 64
  %v2508 = vpop.permute.xlu0 %2507
  %v2510 = vmul.f32 %v2506, %v2508
  %2512 = vrot.lane.b32.xlu0 %v2510, 64
  %v2513 = vpop.permute.xlu0 %2512
  %v2515 = vadd.f32 %v2107, %v2513
  %v2516 = vtanh.pop %v2515
  %v2517 = vsub.f32 1.0, %v2506
  %2519 = vrot.lane.b32.xlu0 %v2516, 96
  %v2520 = vpop.permute.xlu0 %2519
  %v2522 = vmul.f32 %v2517, %v2520
  %v2523 = vrot.slane %v2317, 4
  %v2525 = vmul.f32 %v2506, %v2523
  %v2526 = vadd.f32 %v2522, %v2525
  %v2528 = vrot.slane %v2421, 4
  %2529 = vrot.lane.b32.xlu0 %v2528, 96
  %v2530 = vpop.permute.xlu0 %2529
  %v2531 = vsel %vm110, %v2530, 0
  %2533 = vmatprep.subr.mxu0 0.0
  %2534 = vmatpush1.msra.mxu0 %v2015
  %2535 = vmatprep.subr.mxu0 0.0
  %2536 = vmatpush1.msra.mxu0 %v2016
  %2537 = vmatprep.subr.mxu0 0.0
  %2538 = vmatpush1.msra.mxu0 %v2017
  %2539 = vmatprep.subr.mxu0 0.0
  %2540 = vmatpush1.msra.mxu0 %v2018
  %2541 = vmatprep.subr.mxu0 0.0
  %2542 = vmatpush1.msra.mxu0 0.0
  %2543 = vmatprep.subr.mxu0 0.0
  %2544 = vmatpush1.msra.mxu0 0.0
  %2545 = vmatprep.subr.mxu0 0.0
  %2546 = vmatpush1.msra.mxu0 0.0
  %2547 = vmatprep.subr.mxu0 0.0
  %2548 = vmatpush1.msra.mxu0 0.0
  %2549 = vmatprep.subr.mxu0 0.0
  %2550 = vmatpush1.msra.mxu0 0.0
  %2551 = vmatprep.subr.mxu0 0.0
  %2552 = vmatpush1.msra.mxu0 0.0
  %2553 = vmatprep.subr.mxu0 0.0
  %2554 = vmatpush1.msra.mxu0 0.0
  %2555 = vmatprep.subr.mxu0 0.0
  %2556 = vmatpush1.msra.mxu0 0.0
  %2557 = vmatprep.subr.mxu0 0.0
  %2558 = vmatpush1.msra.mxu0 0.0
  %2559 = vmatprep.subr.mxu0 0.0
  %2560 = vmatpush1.msra.mxu0 0.0
  %2561 = vmatprep.subr.mxu0 0.0
  %2562 = vmatpush1.msra.mxu0 0.0
  %2563 = vmatprep.subr.mxu0 0.0
  %2564 = vmatpush1.msra.mxu0 0.0
  %2565 = vmatprep.subr.mxu0 0.0
  %2566 = vmatpush1.msra.mxu0 0.0
  %2567 = vmatprep.subr.mxu0 0.0
  %2568 = vmatpush1.msra.mxu0 0.0
  %2569 = vmatprep.subr.mxu0 0.0
  %2570 = vmatpush1.msra.mxu0 0.0
  %2571 = vmatprep.subr.mxu0 0.0
  %2572 = vmatpush1.msra.mxu0 0.0
  %2573 = vmatprep.subr.mxu0 0.0
  %2574 = vmatpush1.msra.mxu0 0.0
  %2575 = vmatprep.subr.mxu0 0.0
  %2576 = vmatpush1.msra.mxu0 0.0
  %2577 = vmatprep.subr.mxu0 0.0
  %2578 = vmatpush1.msra.mxu0 0.0
  %2579 = vmatprep.subr.mxu0 0.0
  %2580 = vmatpush1.msra.mxu0 0.0
  %2581 = vmatprep.subr.mxu0 0.0
  %2582 = vmatpush1.msra.mxu0 0.0
  %2583 = vmatprep.subr.mxu0 0.0
  %2584 = vmatpush1.msra.mxu0 0.0
  %2585 = vmatprep.subr.mxu0 0.0
  %2586 = vmatpush1.msra.mxu0 0.0
  %2587 = vmatprep.subr.mxu0 0.0
  %2588 = vmatpush1.msra.mxu0 0.0
  %2589 = vmatprep.subr.mxu0 0.0
  %2590 = vmatpush1.msra.mxu0 0.0
  %2591 = vmatprep.subr.mxu0 0.0
  %2592 = vmatpush1.msra.mxu0 0.0
  %2593 = vmatprep.subr.mxu0 0.0
  %2594 = vmatpush1.msra.mxu0 0.0
  %2595 = vmatprep.subr.mxu0 0.0
  %2596 = vmatpush1.msra.mxu0 0.0
  %2597 = vmatprep.mubr.f32.mxu0 0.0
  %2598 = vmatmul.mubr.f32.gmra.mrb[0].mxu0 %v2531
  %v2599 = vpop.f32.mrb[0].mxu0
  %v2600 = vadd.f32 %v2322, %v2599
  %v2601 = vpop.f32.mrb[0].mxu0
  %2602 = vdwg.mxu0
  %v2603 = vadd.f32 %v2213, %v2600
  %v2604 = vxor.u32 %v2603, 2147483648
  %v2605 = vmul.f32 %v2604, 1.442695
  %v2606 = vpow.pop %v2605
  %v2607 = vadd.f32 %v2606, 1.0
  %v2608 = vrcp.pop %v2607
  %v2609 = vmul.f32 1.0, %v2608
  %2611 = vrot.lane.b32.xlu0 %v2600, 64
  %v2612 = vpop.permute.xlu0 %2611
  %v2614 = vmul.f32 %v2609, %v2612
  %2616 = vrot.lane.b32.xlu0 %v2614, 64
  %v2617 = vpop.permute.xlu0 %2616
  %v2619 = vadd.f32 %v2213, %v2617
  %v2620 = vtanh.pop %v2619
  %v2621 = vsub.f32 1.0, %v2609
  %2623 = vrot.lane.b32.xlu0 %v2620, 96
  %v2624 = vpop.permute.xlu0 %2623
  %v2626 = vmul.f32 %v2621, %v2624
  %v2628 = vmul.f32 %v2609, %v2528
  %v2629 = vadd.f32 %v2626, %v2628
  %v2631 = vrot.slane %v2526, 4
  %2632 = vrot.lane.b32.xlu0 %v2631, 96
  %v2633 = vpop.permute.xlu0 %2632
  %v2634 = vsel %vm110, %v2633, 0
  %2636 = vmatprep.subr.mxu0 0.0
  %2637 = vmatpush1.msra.mxu0 %v2001
  %2638 = vmatprep.subr.mxu0 0.0
  %2639 = vmatpush1.msra.mxu0 %v2002
  %2640 = vmatprep.subr.mxu0 0.0
  %2641 = vmatpush1.msra.mxu0 %v2003
  %2642 = vmatprep.subr.mxu0 0.0
  %2643 = vmatpush1.msra.mxu0 %v2004
  %2644 = vmatprep.subr.mxu0 0.0
  %2645 = vmatpush1.msra.mxu0 0.0
  %2646 = vmatprep.subr.mxu0 0.0
  %2647 = vmatpush1.msra.mxu0 0.0
  %2648 = vmatprep.subr.mxu0 0.0
  %2649 = vmatpush1.msra.mxu0 0.0
  %2650 = vmatprep.subr.mxu0 0.0
  %2651 = vmatpush1.msra.mxu0 0.0
  %2652 = vmatprep.subr.mxu0 0.0
  %2653 = vmatpush1.msra.mxu0 0.0
  %2654 = vmatprep.subr.mxu0 0.0
  %2655 = vmatpush1.msra.mxu0 0.0
  %2656 = vmatprep.subr.mxu0 0.0
  %2657 = vmatpush1.msra.mxu0 0.0
  %2658 = vmatprep.subr.mxu0 0.0
  %2659 = vmatpush1.msra.mxu0 0.0
  %2660 = vmatprep.subr.mxu0 0.0
  %2661 = vmatpush1.msra.mxu0 0.0
  %2662 = vmatprep.subr.mxu0 0.0
  %2663 = vmatpush1.msra.mxu0 0.0
  %2664 = vmatprep.subr.mxu0 0.0
  %2665 = vmatpush1.msra.mxu0 0.0
  %2666 = vmatprep.subr.mxu0 0.0
  %2667 = vmatpush1.msra.mxu0 0.0
  %2668 = vmatprep.subr.mxu0 0.0
  %2669 = vmatpush1.msra.mxu0 0.0
  %2670 = vmatprep.subr.mxu0 0.0
  %2671 = vmatpush1.msra.mxu0 0.0
  %2672 = vmatprep.subr.mxu0 0.0
  %2673 = vmatpush1.msra.mxu0 0.0
  %2674 = vmatprep.subr.mxu0 0.0
  %2675 = vmatpush1.msra.mxu0 0.0
  %2676 = vmatprep.subr.mxu0 0.0
  %2677 = vmatpush1.msra.mxu0 0.0
  %2678 = vmatprep.subr.mxu0 0.0
  %2679 = vmatpush1.msra.mxu0 0.0
  %2680 = vmatprep.subr.mxu0 0.0
  %2681 = vmatpush1.msra.mxu0 0.0
  %2682 = vmatprep.subr.mxu0 0.0
  %2683 = vmatpush1.msra.mxu0 0.0
  %2684 = vmatprep.subr.mxu0 0.0
  %2685 = vmatpush1.msra.mxu0 0.0
  %2686 = vmatprep.subr.mxu0 0.0
  %2687 = vmatpush1.msra.mxu0 0.0
  %2688 = vmatprep.subr.mxu0 0.0
  %2689 = vmatpush1.msra.mxu0 0.0
  %2690 = vmatprep.subr.mxu0 0.0
  %2691 = vmatpush1.msra.mxu0 0.0
  %2692 = vmatprep.subr.mxu0 0.0
  %2693 = vmatpush1.msra.mxu0 0.0
  %2694 = vmatprep.subr.mxu0 0.0
  %2695 = vmatpush1.msra.mxu0 0.0
  %2696 = vmatprep.subr.mxu0 0.0
  %2697 = vmatpush1.msra.mxu0 0.0
  %2698 = vmatprep.subr.mxu0 0.0
  %2699 = vmatpush1.msra.mxu0 0.0
  %2700 = vmatprep.mubr.f32.mxu0 0.0
  %2701 = vmatmul.mubr.f32.gmra.mrb[0].mxu0 %v2634
  %v2702 = vpop.f32.mrb[0].mxu0
  %v2703 = vadd.f32 %v2220, %v2702
  %v2704 = vpop.f32.mrb[0].mxu0
  %2705 = vdwg.mxu0
  %v2706 = vadd.f32 %v2112, %v2703
  %v2707 = vxor.u32 %v2706, 2147483648
  %v2708 = vmul.f32 %v2707, 1.442695
  %v2709 = vpow.pop %v2708
  %v2710 = vadd.f32 %v2709, 1.0
  %v2711 = vrcp.pop %v2710
  %v2712 = vmul.f32 1.0, %v2711
  %2714 = vrot.lane.b32.xlu0 %v2703, 64
  %v2715 = vpop.permute.xlu0 %2714
  %v2717 = vmul.f32 %v2712, %v2715
  %2719 = vrot.lane.b32.xlu0 %v2717, 64
  %v2720 = vpop.permute.xlu0 %2719
  %v2722 = vadd.f32 %v2112, %v2720
  %v2723 = vtanh.pop %v2722
  %v2724 = vsub.f32 1.0, %v2712
  %2726 = vrot.lane.b32.xlu0 %v2723, 96
  %v2727 = vpop.permute.xlu0 %2726
  %v2729 = vmul.f32 %v2724, %v2727
  %v2731 = vmul.f32 %v2712, %v2631
  %v2732 = vadd.f32 %v2729, %v2731
  %2734 = vrot.lane.b32.xlu0 %v2629, 96
  %v2735 = vpop.permute.xlu0 %2734
  %v2736 = vsel %vm110, %v2735, 0
  %2738 = vmatprep.subr.mxu0 0.0
  %2739 = vmatpush1.msra.mxu0 %v2015
  %2740 = vmatprep.subr.mxu0 0.0
  %2741 = vmatpush1.msra.mxu0 %v2016
  %2742 = vmatprep.subr.mxu0 0.0
  %2743 = vmatpush1.msra.mxu0 %v2017
  %2744 = vmatprep.subr.mxu0 0.0
  %2745 = vmatpush1.msra.mxu0 %v2018
  %2746 = vmatprep.subr.mxu0 0.0
  %2747 = vmatpush1.msra.mxu0 0.0
  %2748 = vmatprep.subr.mxu0 0.0
  %2749 = vmatpush1.msra.mxu0 0.0
  %2750 = vmatprep.subr.mxu0 0.0
  %2751 = vmatpush1.msra.mxu0 0.0
  %2752 = vmatprep.subr.mxu0 0.0
  %2753 = vmatpush1.msra.mxu0 0.0
  %2754 = vmatprep.subr.mxu0 0.0
  %2755 = vmatpush1.msra.mxu0 0.0
  %2756 = vmatprep.subr.mxu0 0.0
  %2757 = vmatpush1.msra.mxu0 0.0
  %2758 = vmatprep.subr.mxu0 0.0
  %2759 = vmatpush1.msra.mxu0 0.0
  %2760 = vmatprep.subr.mxu0 0.0
  %2761 = vmatpush1.msra.mxu0 0.0
  %2762 = vmatprep.subr.mxu0 0.0
  %2763 = vmatpush1.msra.mxu0 0.0
  %2764 = vmatprep.subr.mxu0 0.0
  %2765 = vmatpush1.msra.mxu0 0.0
  %2766 = vmatprep.subr.mxu0 0.0
  %2767 = vmatpush1.msra.mxu0 0.0
  %2768 = vmatprep.subr.mxu0 0.0
  %2769 = vmatpush1.msra.mxu0 0.0
  %2770 = vmatprep.subr.mxu0 0.0
  %2771 = vmatpush1.msra.mxu0 0.0
  %2772 = vmatprep.subr.mxu0 0.0
  %2773 = vmatpush1.msra.mxu0 0.0
  %2774 = vmatprep.subr.mxu0 0.0
  %2775 = vmatpush1.msra.mxu0 0.0
  %2776 = vmatprep.subr.mxu0 0.0
  %2777 = vmatpush1.msra.mxu0 0.0
  %2778 = vmatprep.subr.mxu0 0.0
  %2779 = vmatpush1.msra.mxu0 0.0
  %2780 = vmatprep.subr.mxu0 0.0
  %2781 = vmatpush1.msra.mxu0 0.0
  %2782 = vmatprep.subr.mxu0 0.0
  %2783 = vmatpush1.msra.mxu0 0.0
  %2784 = vmatprep.subr.mxu0 0.0
  %2785 = vmatpush1.msra.mxu0 0.0
  %2786 = vmatprep.subr.mxu0 0.0
  %2787 = vmatpush1.msra.mxu0 0.0
  %2788 = vmatprep.subr.mxu0 0.0
  %2789 = vmatpush1.msra.mxu0 0.0
  %2790 = vmatprep.subr.mxu0 0.0
  %2791 = vmatpush1.msra.mxu0 0.0
  %2792 = vmatprep.subr.mxu0 0.0
  %2793 = vmatpush1.msra.mxu0 0.0
  %2794 = vmatprep.subr.mxu0 0.0
  %2795 = vmatpush1.msra.mxu0 0.0
  %2796 = vmatprep.subr.mxu0 0.0
  %2797 = vmatpush1.msra.mxu0 0.0
  %2798 = vmatprep.subr.mxu0 0.0
  %2799 = vmatpush1.msra.mxu0 0.0
  %2800 = vmatprep.subr.mxu0 0.0
  %2801 = vmatpush1.msra.mxu0 0.0
  %2802 = vmatprep.mubr.f32.mxu0 0.0
  %2803 = vmatmul.mubr.f32.gmra.mrb[0].mxu0 %v2736
  %v2804 = vpop.f32.mrb[0].mxu0
  %v2805 = vadd.f32 %v2322, %v2804
  %v2806 = vpop.f32.mrb[0].mxu0
  %2807 = vdwg.mxu0
  %v2809 = vrot.slane %v2805, 4
  %v2811 = vadd.f32 %v2208, %v2809
  %v2812 = vxor.u32 %v2811, 2147483648
  %v2813 = vmul.f32 %v2812, 1.442695
  %v2814 = vpow.pop %v2813
  %v2815 = vadd.f32 %v2814, 1.0
  %v2816 = vrcp.pop %v2815
  %v2817 = vmul.f32 1.0, %v2816
  %2818 = vrot.lane.b32.xlu0 %v2809, 64
  %v2819 = vpop.permute.xlu0 %2818
  %v2821 = vmul.f32 %v2817, %v2819
  %2823 = vrot.lane.b32.xlu0 %v2821, 64
  %v2824 = vpop.permute.xlu0 %2823
  %v2826 = vadd.f32 %v2208, %v2824
  %v2827 = vtanh.pop %v2826
  %v2828 = vsub.f32 1.0, %v2817
  %2830 = vrot.lane.b32.xlu0 %v2827, 96
  %v2831 = vpop.permute.xlu0 %2830
  %v2833 = vmul.f32 %v2828, %v2831
  %v2834 = vrot.slane %v2629, 4
  %v2836 = vmul.f32 %v2817, %v2834
  %v2837 = vadd.f32 %v2833, %v2836
  %2839 = vrot.lane.b32.xlu0 %v2732, 96
  %v2840 = vpop.permute.xlu0 %2839
  %v2841 = vsel %vm110, %v2840, 0
  %2843 = vmatprep.subr.mxu0 0.0
  %2844 = vmatpush1.msra.mxu0 %v2001
  %2845 = vmatprep.subr.mxu0 0.0
  %2846 = vmatpush1.msra.mxu0 %v2002
  %2847 = vmatprep.subr.mxu0 0.0
  %2848 = vmatpush1.msra.mxu0 %v2003
  %2849 = vmatprep.subr.mxu0 0.0
  %2850 = vmatpush1.msra.mxu0 %v2004
  %2851 = vmatprep.subr.mxu0 0.0
  %2852 = vmatpush1.msra.mxu0 0.0
  %2853 = vmatprep.subr.mxu0 0.0
  %2854 = vmatpush1.msra.mxu0 0.0
  %2855 = vmatprep.subr.mxu0 0.0
  %2856 = vmatpush1.msra.mxu0 0.0
  %2857 = vmatprep.subr.mxu0 0.0
  %2858 = vmatpush1.msra.mxu0 0.0
  %2859 = vmatprep.subr.mxu0 0.0
  %2860 = vmatpush1.msra.mxu0 0.0
  %2861 = vmatprep.subr.mxu0 0.0
  %2862 = vmatpush1.msra.mxu0 0.0
  %2863 = vmatprep.subr.mxu0 0.0
  %2864 = vmatpush1.msra.mxu0 0.0
  %2865 = vmatprep.subr.mxu0 0.0
  %2866 = vmatpush1.msra.mxu0 0.0
  %2867 = vmatprep.subr.mxu0 0.0
  %2868 = vmatpush1.msra.mxu0 0.0
  %2869 = vmatprep.subr.mxu0 0.0
  %2870 = vmatpush1.msra.mxu0 0.0
  %2871 = vmatprep.subr.mxu0 0.0
  %2872 = vmatpush1.msra.mxu0 0.0
  %2873 = vmatprep.subr.mxu0 0.0
  %2874 = vmatpush1.msra.mxu0 0.0
  %2875 = vmatprep.subr.mxu0 0.0
  %2876 = vmatpush1.msra.mxu0 0.0
  %2877 = vmatprep.subr.mxu0 0.0
  %2878 = vmatpush1.msra.mxu0 0.0
  %2879 = vmatprep.subr.mxu0 0.0
  %2880 = vmatpush1.msra.mxu0 0.0
  %2881 = vmatprep.subr.mxu0 0.0
  %2882 = vmatpush1.msra.mxu0 0.0
  %2883 = vmatprep.subr.mxu0 0.0
  %2884 = vmatpush1.msra.mxu0 0.0
  %2885 = vmatprep.subr.mxu0 0.0
  %2886 = vmatpush1.msra.mxu0 0.0
  %2887 = vmatprep.subr.mxu0 0.0
  %2888 = vmatpush1.msra.mxu0 0.0
  %2889 = vmatprep.subr.mxu0 0.0
  %2890 = vmatpush1.msra.mxu0 0.0
  %2891 = vmatprep.subr.mxu0 0.0
  %2892 = vmatpush1.msra.mxu0 0.0
  %2893 = vmatprep.subr.mxu0 0.0
  %2894 = vmatpush1.msra.mxu0 0.0
  %2895 = vmatprep.subr.mxu0 0.0
  %2896 = vmatpush1.msra.mxu0 0.0
  %2897 = vmatprep.subr.mxu0 0.0
  %2898 = vmatpush1.msra.mxu0 0.0
  %2899 = vmatprep.subr.mxu0 0.0
  %2900 = vmatpush1.msra.mxu0 0.0
  %2901 = vmatprep.subr.mxu0 0.0
  %2902 = vmatpush1.msra.mxu0 0.0
  %2903 = vmatprep.subr.mxu0 0.0
  %2904 = vmatpush1.msra.mxu0 0.0
  %2905 = vmatprep.subr.mxu0 0.0
  %2906 = vmatpush1.msra.mxu0 0.0
  %2907 = vmatprep.mubr.f32.mxu0 0.0
  %2908 = vmatmul.mubr.f32.gmra.mrb[0].mxu0 %v2841
  %v2909 = vpop.f32.mrb[0].mxu0
  %v2910 = vadd.f32 %v2220, %v2909
  %v2911 = vpop.f32.mrb[0].mxu0
  %2912 = vdwg.mxu0
  %v2914 = vrot.slane %v2910, 4
  %v2916 = vadd.f32 %v2112, %v2914
  %v2917 = vxor.u32 %v2916, 2147483648
  %v2918 = vmul.f32 %v2917, 1.442695
  %v2919 = vpow.pop %v2918
  %v2920 = vadd.f32 %v2919, 1.0
  %v2921 = vrcp.pop %v2920
  %v2922 = vmul.f32 1.0, %v2921
  %2923 = vrot.lane.b32.xlu0 %v2914, 64
  %v2924 = vpop.permute.xlu0 %2923
  %v2926 = vmul.f32 %v2922, %v2924
  %2928 = vrot.lane.b32.xlu0 %v2926, 64
  %v2929 = vpop.permute.xlu0 %2928
  %v2931 = vadd.f32 %v2112, %v2929
  %v2932 = vtanh.pop %v2931
  %v2933 = vsub.f32 1.0, %v2922
  %2935 = vrot.lane.b32.xlu0 %v2932, 96
  %v2936 = vpop.permute.xlu0 %2935
  %v2938 = vmul.f32 %v2933, %v2936
  %v2939 = vrot.slane %v2732, 4
  %v2941 = vmul.f32 %v2922, %v2939
  %v2942 = vadd.f32 %v2938, %v2941
  %v2944 = vrot.slane %v2837, 4
  %2945 = vrot.lane.b32.xlu0 %v2944, 96
  %v2946 = vpop.permute.xlu0 %2945
  %v2947 = vsel %vm110, %v2946, 0
  %2949 = vmatprep.subr.mxu0 0.0
  %2950 = vmatpush1.msra.mxu0 %v2015
  %2951 = vmatprep.subr.mxu0 0.0
  %2952 = vmatpush1.msra.mxu0 %v2016
  %2953 = vmatprep.subr.mxu0 0.0
  %2954 = vmatpush1.msra.mxu0 %v2017
  %2955 = vmatprep.subr.mxu0 0.0
  %2956 = vmatpush1.msra.mxu0 %v2018
  %2957 = vmatprep.subr.mxu0 0.0
  %2958 = vmatpush1.msra.mxu0 0.0
  %2959 = vmatprep.subr.mxu0 0.0
  %2960 = vmatpush1.msra.mxu0 0.0
  %2961 = vmatprep.subr.mxu0 0.0
  %2962 = vmatpush1.msra.mxu0 0.0
  %2963 = vmatprep.subr.mxu0 0.0
  %2964 = vmatpush1.msra.mxu0 0.0
  %2965 = vmatprep.subr.mxu0 0.0
  %2966 = vmatpush1.msra.mxu0 0.0
  %2967 = vmatprep.subr.mxu0 0.0
  %2968 = vmatpush1.msra.mxu0 0.0
  %2969 = vmatprep.subr.mxu0 0.0
  %2970 = vmatpush1.msra.mxu0 0.0
  %2971 = vmatprep.subr.mxu0 0.0
  %2972 = vmatpush1.msra.mxu0 0.0
  %2973 = vmatprep.subr.mxu0 0.0
  %2974 = vmatpush1.msra.mxu0 0.0
  %2975 = vmatprep.subr.mxu0 0.0
  %2976 = vmatpush1.msra.mxu0 0.0
  %2977 = vmatprep.subr.mxu0 0.0
  %2978 = vmatpush1.msra.mxu0 0.0
  %2979 = vmatprep.subr.mxu0 0.0
  %2980 = vmatpush1.msra.mxu0 0.0
  %2981 = vmatprep.subr.mxu0 0.0
  %2982 = vmatpush1.msra.mxu0 0.0
  %2983 = vmatprep.subr.mxu0 0.0
  %2984 = vmatpush1.msra.mxu0 0.0
  %2985 = vmatprep.subr.mxu0 0.0
  %2986 = vmatpush1.msra.mxu0 0.0
  %2987 = vmatprep.subr.mxu0 0.0
  %2988 = vmatpush1.msra.mxu0 0.0
  %2989 = vmatprep.subr.mxu0 0.0
  %2990 = vmatpush1.msra.mxu0 0.0
  %2991 = vmatprep.subr.mxu0 0.0
  %2992 = vmatpush1.msra.mxu0 0.0
  %2993 = vmatprep.subr.mxu0 0.0
  %2994 = vmatpush1.msra.mxu0 0.0
  %2995 = vmatprep.subr.mxu0 0.0
  %2996 = vmatpush1.msra.mxu0 0.0
  %2997 = vmatprep.subr.mxu0 0.0
  %2998 = vmatpush1.msra.mxu0 0.0
  %2999 = vmatprep.subr.mxu0 0.0
  %3000 = vmatpush1.msra.mxu0 0.0
  %3001 = vmatprep.subr.mxu0 0.0
  %3002 = vmatpush1.msra.mxu0 0.0
  %3003 = vmatprep.subr.mxu0 0.0
  %3004 = vmatpush1.msra.mxu0 0.0
  %3005 = vmatprep.subr.mxu0 0.0
  %3006 = vmatpush1.msra.mxu0 0.0
  %3007 = vmatprep.subr.mxu0 0.0
  %3008 = vmatpush1.msra.mxu0 0.0
  %3009 = vmatprep.subr.mxu0 0.0
  %3010 = vmatpush1.msra.mxu0 0.0
  %3011 = vmatprep.subr.mxu0 0.0
  %3012 = vmatpush1.msra.mxu0 0.0
  %3013 = vmatprep.mubr.f32.mxu0 0.0
  %3014 = vmatmul.mubr.f32.gmra.mrb[0].mxu0 %v2947
  %v3015 = vpop.f32.mrb[0].mxu0
  %v3016 = vadd.f32 %v2322, %v3015
  %v3017 = vpop.f32.mrb[0].mxu0
  %3018 = vdwg.mxu0
  %v3019 = vadd.f32 %v2208, %v3016
  %v3020 = vxor.u32 %v3019, 2147483648
  %v3021 = vmul.f32 %v3020, 1.442695
  %v3022 = vpow.pop %v3021
  %v3023 = vadd.f32 %v3022, 1.0
  %v3024 = vrcp.pop %v3023
  %v3025 = vmul.f32 1.0, %v3024
  %3027 = vrot.lane.b32.xlu0 %v3016, 64
  %v3028 = vpop.permute.xlu0 %3027
  %v3030 = vmul.f32 %v3025, %v3028
  %3032 = vrot.lane.b32.xlu0 %v3030, 64
  %v3033 = vpop.permute.xlu0 %3032
  %v3035 = vadd.f32 %v2208, %v3033
  %v3036 = vtanh.pop %v3035
  %v3037 = vsub.f32 1.0, %v3025
  %3039 = vrot.lane.b32.xlu0 %v3036, 96
  %v3040 = vpop.permute.xlu0 %3039
  %v3042 = vmul.f32 %v3037, %v3040
  %v3044 = vmul.f32 %v3025, %v2944
  %v3045 = vadd.f32 %v3042, %v3044
  %v3047 = vrot.slane %v2942, 4
  %3048 = vrot.lane.b32.xlu0 %v3047, 96
  %v3049 = vpop.permute.xlu0 %3048
  %v3050 = vsel %vm110, %v3049, 0
  %3052 = vmatprep.subr.mxu0 0.0
  %3053 = vmatpush1.msra.mxu0 %v2001
  %3054 = vmatprep.subr.mxu0 0.0
  %3055 = vmatpush1.msra.mxu0 %v2002
  %3056 = vmatprep.subr.mxu0 0.0
  %3057 = vmatpush1.msra.mxu0 %v2003
  %3058 = vmatprep.subr.mxu0 0.0
  %3059 = vmatpush1.msra.mxu0 %v2004
  %3060 = vmatprep.subr.mxu0 0.0
  %3061 = vmatpush1.msra.mxu0 0.0
  %3062 = vmatprep.subr.mxu0 0.0
  %3063 = vmatpush1.msra.mxu0 0.0
  %3064 = vmatprep.subr.mxu0 0.0
  %3065 = vmatpush1.msra.mxu0 0.0
  %3066 = vmatprep.subr.mxu0 0.0
  %3067 = vmatpush1.msra.mxu0 0.0
  %3068 = vmatprep.subr.mxu0 0.0
  %3069 = vmatpush1.msra.mxu0 0.0
  %3070 = vmatprep.subr.mxu0 0.0
  %3071 = vmatpush1.msra.mxu0 0.0
  %3072 = vmatprep.subr.mxu0 0.0
  %3073 = vmatpush1.msra.mxu0 0.0
  %3074 = vmatprep.subr.mxu0 0.0
  %3075 = vmatpush1.msra.mxu0 0.0
  %3076 = vmatprep.subr.mxu0 0.0
  %3077 = vmatpush1.msra.mxu0 0.0
  %3078 = vmatprep.subr.mxu0 0.0
  %3079 = vmatpush1.msra.mxu0 0.0
  %3080 = vmatprep.subr.mxu0 0.0
  %3081 = vmatpush1.msra.mxu0 0.0
  %3082 = vmatprep.subr.mxu0 0.0
  %3083 = vmatpush1.msra.mxu0 0.0
  %3084 = vmatprep.subr.mxu0 0.0
  %3085 = vmatpush1.msra.mxu0 0.0
  %3086 = vmatprep.subr.mxu0 0.0
  %3087 = vmatpush1.msra.mxu0 0.0
  %3088 = vmatprep.subr.mxu0 0.0
  %3089 = vmatpush1.msra.mxu0 0.0
  %3090 = vmatprep.subr.mxu0 0.0
  %3091 = vmatpush1.msra.mxu0 0.0
  %3092 = vmatprep.subr.mxu0 0.0
  %3093 = vmatpush1.msra.mxu0 0.0
  %3094 = vmatprep.subr.mxu0 0.0
  %3095 = vmatpush1.msra.mxu0 0.0
  %3096 = vmatprep.subr.mxu0 0.0
  %3097 = vmatpush1.msra.mxu0 0.0
  %3098 = vmatprep.subr.mxu0 0.0
  %3099 = vmatpush1.msra.mxu0 0.0
  %3100 = vmatprep.subr.mxu0 0.0
  %3101 = vmatpush1.msra.mxu0 0.0
  %3102 = vmatprep.subr.mxu0 0.0
  %3103 = vmatpush1.msra.mxu0 0.0
  %3104 = vmatprep.subr.mxu0 0.0
  %3105 = vmatpush1.msra.mxu0 0.0
  %3106 = vmatprep.subr.mxu0 0.0
  %3107 = vmatpush1.msra.mxu0 0.0
  %3108 = vmatprep.subr.mxu0 0.0
  %3109 = vmatpush1.msra.mxu0 0.0
  %3110 = vmatprep.subr.mxu0 0.0
  %3111 = vmatpush1.msra.mxu0 0.0
  %3112 = vmatprep.subr.mxu0 0.0
  %3113 = vmatpush1.msra.mxu0 0.0
  %3114 = vmatprep.subr.mxu0 0.0
  %3115 = vmatpush1.msra.mxu0 0.0
  %3116 = vmatprep.mubr.f32.mxu0 0.0
  %3117 = vmatmul.mubr.f32.gmra.mrb[0].mxu0 %v3050
  %v3118 = vpop.f32.mrb[0].mxu0
  %v3119 = vadd.f32 %v2220, %v3118
  %v3120 = vpop.f32.mrb[0].mxu0
  %3121 = vdwg.mxu0
  %v3122 = vadd.f32 %v2117, %v3119
  %v3123 = vxor.u32 %v3122, 2147483648
  %v3124 = vmul.f32 %v3123, 1.442695
  %v3125 = vpow.pop %v3124
  %v3126 = vadd.f32 %v3125, 1.0
  %v3127 = vrcp.pop %v3126
  %v3128 = vmul.f32 1.0, %v3127
  %3130 = vrot.lane.b32.xlu0 %v3119, 64
  %v3131 = vpop.permute.xlu0 %3130
  %v3133 = vmul.f32 %v3128, %v3131
  %3135 = vrot.lane.b32.xlu0 %v3133, 64
  %v3136 = vpop.permute.xlu0 %3135
  %v3138 = vadd.f32 %v2117, %v3136
  %v3139 = vtanh.pop %v3138
  %v3140 = vsub.f32 1.0, %v3128
  %3142 = vrot.lane.b32.xlu0 %v3139, 96
  %v3143 = vpop.permute.xlu0 %3142
  %v3145 = vmul.f32 %v3140, %v3143
  %v3147 = vmul.f32 %v3128, %v3047
  %v3148 = vadd.f32 %v3145, %v3147
  %3150 = vrot.lane.b32.xlu0 %v3045, 96
  %v3151 = vpop.permute.xlu0 %3150
  %v3152 = vsel %vm110, %v3151, 0
  %3154 = vmatprep.subr.mxu0 0.0
  %3155 = vmatpush1.msra.mxu0 %v2015
  %3156 = vmatprep.subr.mxu0 0.0
  %3157 = vmatpush1.msra.mxu0 %v2016
  %3158 = vmatprep.subr.mxu0 0.0
  %3159 = vmatpush1.msra.mxu0 %v2017
  %3160 = vmatprep.subr.mxu0 0.0
  %3161 = vmatpush1.msra.mxu0 %v2018
  %3162 = vmatprep.subr.mxu0 0.0
  %3163 = vmatpush1.msra.mxu0 0.0
  %3164 = vmatprep.subr.mxu0 0.0
  %3165 = vmatpush1.msra.mxu0 0.0
  %3166 = vmatprep.subr.mxu0 0.0
  %3167 = vmatpush1.msra.mxu0 0.0
  %3168 = vmatprep.subr.mxu0 0.0
  %3169 = vmatpush1.msra.mxu0 0.0
  %3170 = vmatprep.subr.mxu0 0.0
  %3171 = vmatpush1.msra.mxu0 0.0
  %3172 = vmatprep.subr.mxu0 0.0
  %3173 = vmatpush1.msra.mxu0 0.0
  %3174 = vmatprep.subr.mxu0 0.0
  %3175 = vmatpush1.msra.mxu0 0.0
  %3176 = vmatprep.subr.mxu0 0.0
  %3177 = vmatpush1.msra.mxu0 0.0
  %3178 = vmatprep.subr.mxu0 0.0
  %3179 = vmatpush1.msra.mxu0 0.0
  %3180 = vmatprep.subr.mxu0 0.0
  %3181 = vmatpush1.msra.mxu0 0.0
  %3182 = vmatprep.subr.mxu0 0.0
  %3183 = vmatpush1.msra.mxu0 0.0
  %3184 = vmatprep.subr.mxu0 0.0
  %3185 = vmatpush1.msra.mxu0 0.0
  %3186 = vmatprep.subr.mxu0 0.0
  %3187 = vmatpush1.msra.mxu0 0.0
  %3188 = vmatprep.subr.mxu0 0.0
  %3189 = vmatpush1.msra.mxu0 0.0
  %3190 = vmatprep.subr.mxu0 0.0
  %3191 = vmatpush1.msra.mxu0 0.0
  %3192 = vmatprep.subr.mxu0 0.0
  %3193 = vmatpush1.msra.mxu0 0.0
  %3194 = vmatprep.subr.mxu0 0.0
  %3195 = vmatpush1.msra.mxu0 0.0
  %3196 = vmatprep.subr.mxu0 0.0
  %3197 = vmatpush1.msra.mxu0 0.0
  %3198 = vmatprep.subr.mxu0 0.0
  %3199 = vmatpush1.msra.mxu0 0.0
  %3200 = vmatprep.subr.mxu0 0.0
  %3201 = vmatpush1.msra.mxu0 0.0
  %3202 = vmatprep.subr.mxu0 0.0
  %3203 = vmatpush1.msra.mxu0 0.0
  %3204 = vmatprep.subr.mxu0 0.0
  %3205 = vmatpush1.msra.mxu0 0.0
  %3206 = vmatprep.subr.mxu0 0.0
  %3207 = vmatpush1.msra.mxu0 0.0
  %3208 = vmatprep.subr.mxu0 0.0
  %3209 = vmatpush1.msra.mxu0 0.0
  %3210 = vmatprep.subr.mxu0 0.0
  %3211 = vmatpush1.msra.mxu0 0.0
  %3212 = vmatprep.subr.mxu0 0.0
  %3213 = vmatpush1.msra.mxu0 0.0
  %3214 = vmatprep.subr.mxu0 0.0
  %3215 = vmatpush1.msra.mxu0 0.0
  %3216 = vmatprep.subr.mxu0 0.0
  %3217 = vmatpush1.msra.mxu0 0.0
  %3218 = vmatprep.mubr.f32.mxu0 0.0
  %3219 = vmatmul.mubr.f32.gmra.mrb[0].mxu0 %v3152
  %v3220 = vpop.f32.mrb[0].mxu0
  %v3221 = vadd.f32 %v2322, %v3220
  %v3222 = vpop.f32.mrb[0].mxu0
  %3223 = vdwg.mxu0
  %v3225 = vrot.slane %v3221, 4
  %v3227 = vadd.f32 %v2203, %v3225
  %v3228 = vxor.u32 %v3227, 2147483648
  %v3229 = vmul.f32 %v3228, 1.442695
  %v3230 = vpow.pop %v3229
  %v3231 = vadd.f32 %v3230, 1.0
  %v3232 = vrcp.pop %v3231
  %v3233 = vmul.f32 1.0, %v3232
  %3234 = vrot.lane.b32.xlu0 %v3225, 64
  %v3235 = vpop.permute.xlu0 %3234
  %v3237 = vmul.f32 %v3233, %v3235
  %3239 = vrot.lane.b32.xlu0 %v3237, 64
  %v3240 = vpop.permute.xlu0 %3239
  %v3242 = vadd.f32 %v2203, %v3240
  %v3243 = vtanh.pop %v3242
  %v3244 = vsub.f32 1.0, %v3233
  %3246 = vrot.lane.b32.xlu0 %v3243, 96
  %v3247 = vpop.permute.xlu0 %3246
  %v3249 = vmul.f32 %v3244, %v3247
  %v3250 = vrot.slane %v3045, 4
  %v3252 = vmul.f32 %v3233, %v3250
  %v3253 = vadd.f32 %v3249, %v3252
  %3255 = vrot.lane.b32.xlu0 %v3148, 96
  %v3256 = vpop.permute.xlu0 %3255
  %v3257 = vsel %vm110, %v3256, 0
  %3259 = vmatprep.subr.mxu0 0.0
  %3260 = vmatpush1.msra.mxu0 %v2001
  %3261 = vmatprep.subr.mxu0 0.0
  %3262 = vmatpush1.msra.mxu0 %v2002
  %3263 = vmatprep.subr.mxu0 0.0
  %3264 = vmatpush1.msra.mxu0 %v2003
  %3265 = vmatprep.subr.mxu0 0.0
  %3266 = vmatpush1.msra.mxu0 %v2004
  %3267 = vmatprep.subr.mxu0 0.0
  %3268 = vmatpush1.msra.mxu0 0.0
  %3269 = vmatprep.subr.mxu0 0.0
  %3270 = vmatpush1.msra.mxu0 0.0
  %3271 = vmatprep.subr.mxu0 0.0
  %3272 = vmatpush1.msra.mxu0 0.0
  %3273 = vmatprep.subr.mxu0 0.0
  %3274 = vmatpush1.msra.mxu0 0.0
  %3275 = vmatprep.subr.mxu0 0.0
  %3276 = vmatpush1.msra.mxu0 0.0
  %3277 = vmatprep.subr.mxu0 0.0
  %3278 = vmatpush1.msra.mxu0 0.0
  %3279 = vmatprep.subr.mxu0 0.0
  %3280 = vmatpush1.msra.mxu0 0.0
  %3281 = vmatprep.subr.mxu0 0.0
  %3282 = vmatpush1.msra.mxu0 0.0
  %3283 = vmatprep.subr.mxu0 0.0
  %3284 = vmatpush1.msra.mxu0 0.0
  %3285 = vmatprep.subr.mxu0 0.0
  %3286 = vmatpush1.msra.mxu0 0.0
  %3287 = vmatprep.subr.mxu0 0.0
  %3288 = vmatpush1.msra.mxu0 0.0
  %3289 = vmatprep.subr.mxu0 0.0
  %3290 = vmatpush1.msra.mxu0 0.0
  %3291 = vmatprep.subr.mxu0 0.0
  %3292 = vmatpush1.msra.mxu0 0.0
  %3293 = vmatprep.subr.mxu0 0.0
  %3294 = vmatpush1.msra.mxu0 0.0
  %3295 = vmatprep.subr.mxu0 0.0
  %3296 = vmatpush1.msra.mxu0 0.0
  %3297 = vmatprep.subr.mxu0 0.0
  %3298 = vmatpush1.msra.mxu0 0.0
  %3299 = vmatprep.subr.mxu0 0.0
  %3300 = vmatpush1.msra.mxu0 0.0
  %3301 = vmatprep.subr.mxu0 0.0
  %3302 = vmatpush1.msra.mxu0 0.0
  %3303 = vmatprep.subr.mxu0 0.0
  %3304 = vmatpush1.msra.mxu0 0.0
  %3305 = vmatprep.subr.mxu0 0.0
  %3306 = vmatpush1.msra.mxu0 0.0
  %3307 = vmatprep.subr.mxu0 0.0
  %3308 = vmatpush1.msra.mxu0 0.0
  %3309 = vmatprep.subr.mxu0 0.0
  %3310 = vmatpush1.msra.mxu0 0.0
  %3311 = vmatprep.subr.mxu0 0.0
  %3312 = vmatpush1.msra.mxu0 0.0
  %3313 = vmatprep.subr.mxu0 0.0
  %3314 = vmatpush1.msra.mxu0 0.0
  %3315 = vmatprep.subr.mxu0 0.0
  %3316 = vmatpush1.msra.mxu0 0.0
  %3317 = vmatprep.subr.mxu0 0.0
  %3318 = vmatpush1.msra.mxu0 0.0
  %3319 = vmatprep.subr.mxu0 0.0
  %3320 = vmatpush1.msra.mxu0 0.0
  %3321 = vmatprep.subr.mxu0 0.0
  %3322 = vmatpush1.msra.mxu0 0.0
  %3323 = vmatprep.mubr.f32.mxu0 0.0
  %3324 = vmatmul.mubr.f32.gmra.mrb[0].mxu0 %v3257
  %v3325 = vpop.f32.mrb[0].mxu0
  %v3326 = vadd.f32 %v2220, %v3325
  %v3327 = vpop.f32.mrb[0].mxu0
  %3328 = vdwg.mxu0
  %v3330 = vrot.slane %v3326, 4
  %v3332 = vadd.f32 %v2117, %v3330
  %v3333 = vxor.u32 %v3332, 2147483648
  %v3334 = vmul.f32 %v3333, 1.442695
  %v3335 = vpow.pop %v3334
  %v3336 = vadd.f32 %v3335, 1.0
  %v3337 = vrcp.pop %v3336
  %v3338 = vmul.f32 1.0, %v3337
  %3339 = vrot.lane.b32.xlu0 %v3330, 64
  %v3340 = vpop.permute.xlu0 %3339
  %v3342 = vmul.f32 %v3338, %v3340
  %3344 = vrot.lane.b32.xlu0 %v3342, 64
  %v3345 = vpop.permute.xlu0 %3344
  %v3347 = vadd.f32 %v2117, %v3345
  %v3348 = vtanh.pop %v3347
  %v3349 = vsub.f32 1.0, %v3338
  %3351 = vrot.lane.b32.xlu0 %v3348, 96
  %v3352 = vpop.permute.xlu0 %3351
  %v3354 = vmul.f32 %v3349, %v3352
  %v3355 = vrot.slane %v3148, 4
  %v3357 = vmul.f32 %v3338, %v3355
  %v3358 = vadd.f32 %v3354, %v3357
  %v3360 = vrot.slane %v3253, 4
  %3361 = vrot.lane.b32.xlu0 %v3360, 96
  %v3362 = vpop.permute.xlu0 %3361
  %v3363 = vsel %vm110, %v3362, 0
  %3365 = vmatprep.subr.mxu0 0.0
  %3366 = vmatpush1.msra.mxu0 %v2015
  %3367 = vmatprep.subr.mxu0 0.0
  %3368 = vmatpush1.msra.mxu0 %v2016
  %3369 = vmatprep.subr.mxu0 0.0
  %3370 = vmatpush1.msra.mxu0 %v2017
  %3371 = vmatprep.subr.mxu0 0.0
  %3372 = vmatpush1.msra.mxu0 %v2018
  %3373 = vmatprep.subr.mxu0 0.0
  %3374 = vmatpush1.msra.mxu0 0.0
  %3375 = vmatprep.subr.mxu0 0.0
  %3376 = vmatpush1.msra.mxu0 0.0
  %3377 = vmatprep.subr.mxu0 0.0
  %3378 = vmatpush1.msra.mxu0 0.0
  %3379 = vmatprep.subr.mxu0 0.0
  %3380 = vmatpush1.msra.mxu0 0.0
  %3381 = vmatprep.subr.mxu0 0.0
  %3382 = vmatpush1.msra.mxu0 0.0
  %3383 = vmatprep.subr.mxu0 0.0
  %3384 = vmatpush1.msra.mxu0 0.0
  %3385 = vmatprep.subr.mxu0 0.0
  %3386 = vmatpush1.msra.mxu0 0.0
  %3387 = vmatprep.subr.mxu0 0.0
  %3388 = vmatpush1.msra.mxu0 0.0
  %3389 = vmatprep.subr.mxu0 0.0
  %3390 = vmatpush1.msra.mxu0 0.0
  %3391 = vmatprep.subr.mxu0 0.0
  %3392 = vmatpush1.msra.mxu0 0.0
  %3393 = vmatprep.subr.mxu0 0.0
  %3394 = vmatpush1.msra.mxu0 0.0
  %3395 = vmatprep.subr.mxu0 0.0
  %3396 = vmatpush1.msra.mxu0 0.0
  %3397 = vmatprep.subr.mxu0 0.0
  %3398 = vmatpush1.msra.mxu0 0.0
  %3399 = vmatprep.subr.mxu0 0.0
  %3400 = vmatpush1.msra.mxu0 0.0
  %3401 = vmatprep.subr.mxu0 0.0
  %3402 = vmatpush1.msra.mxu0 0.0
  %3403 = vmatprep.subr.mxu0 0.0
  %3404 = vmatpush1.msra.mxu0 0.0
  %3405 = vmatprep.subr.mxu0 0.0
  %3406 = vmatpush1.msra.mxu0 0.0
  %3407 = vmatprep.subr.mxu0 0.0
  %3408 = vmatpush1.msra.mxu0 0.0
  %3409 = vmatprep.subr.mxu0 0.0
  %3410 = vmatpush1.msra.mxu0 0.0
  %3411 = vmatprep.subr.mxu0 0.0
  %3412 = vmatpush1.msra.mxu0 0.0
  %3413 = vmatprep.subr.mxu0 0.0
  %3414 = vmatpush1.msra.mxu0 0.0
  %3415 = vmatprep.subr.mxu0 0.0
  %3416 = vmatpush1.msra.mxu0 0.0
  %3417 = vmatprep.subr.mxu0 0.0
  %3418 = vmatpush1.msra.mxu0 0.0
  %3419 = vmatprep.subr.mxu0 0.0
  %3420 = vmatpush1.msra.mxu0 0.0
  %3421 = vmatprep.subr.mxu0 0.0
  %3422 = vmatpush1.msra.mxu0 0.0
  %3423 = vmatprep.subr.mxu0 0.0
  %3424 = vmatpush1.msra.mxu0 0.0
  %3425 = vmatprep.subr.mxu0 0.0
  %3426 = vmatpush1.msra.mxu0 0.0
  %3427 = vmatprep.subr.mxu0 0.0
  %3428 = vmatpush1.msra.mxu0 0.0
  %3429 = vmatprep.mubr.f32.mxu0 0.0
  %3430 = vmatmul.mubr.f32.gmra.mrb[0].mxu0 %v3363
  %v3431 = vpop.f32.mrb[0].mxu0
  %v3432 = vadd.f32 %v2322, %v3431
  %v3433 = vpop.f32.mrb[0].mxu0
  %3434 = vdwg.mxu0
  %v3435 = vadd.f32 %v2203, %v3432
  %v3436 = vxor.u32 %v3435, 2147483648
  %v3437 = vmul.f32 %v3436, 1.442695
  %v3438 = vpow.pop %v3437
  %v3439 = vadd.f32 %v3438, 1.0
  %v3440 = vrcp.pop %v3439
  %v3441 = vmul.f32 1.0, %v3440
  %3443 = vrot.lane.b32.xlu0 %v3432, 64
  %v3444 = vpop.permute.xlu0 %3443
  %v3446 = vmul.f32 %v3441, %v3444
  %3448 = vrot.lane.b32.xlu0 %v3446, 64
  %v3449 = vpop.permute.xlu0 %3448
  %v3451 = vadd.f32 %v2203, %v3449
  %v3452 = vtanh.pop %v3451
  %v3453 = vsub.f32 1.0, %v3441
  %3455 = vrot.lane.b32.xlu0 %v3452, 96
  %v3456 = vpop.permute.xlu0 %3455
  %v3458 = vmul.f32 %v3453, %v3456
  %v3460 = vmul.f32 %v3441, %v3360
  %v3461 = vadd.f32 %v3458, %v3460
  %v3463 = vrot.slane %v3358, 4
  %3464 = vrot.lane.b32.xlu0 %v3463, 96
  %v3465 = vpop.permute.xlu0 %3464
  %v3466 = vsel %vm110, %v3465, 0
  %3468 = vmatprep.subr.mxu0 0.0
  %3469 = vmatpush1.msra.mxu0 %v2001
  %3470 = vmatprep.subr.mxu0 0.0
  %3471 = vmatpush1.msra.mxu0 %v2002
  %3472 = vmatprep.subr.mxu0 0.0
  %3473 = vmatpush1.msra.mxu0 %v2003
  %3474 = vmatprep.subr.mxu0 0.0
  %3475 = vmatpush1.msra.mxu0 %v2004
  %3476 = vmatprep.subr.mxu0 0.0
  %3477 = vmatpush1.msra.mxu0 0.0
  %3478 = vmatprep.subr.mxu0 0.0
  %3479 = vmatpush1.msra.mxu0 0.0
  %3480 = vmatprep.subr.mxu0 0.0
  %3481 = vmatpush1.msra.mxu0 0.0
  %3482 = vmatprep.subr.mxu0 0.0
  %3483 = vmatpush1.msra.mxu0 0.0
  %3484 = vmatprep.subr.mxu0 0.0
  %3485 = vmatpush1.msra.mxu0 0.0
  %3486 = vmatprep.subr.mxu0 0.0
  %3487 = vmatpush1.msra.mxu0 0.0
  %3488 = vmatprep.subr.mxu0 0.0
  %3489 = vmatpush1.msra.mxu0 0.0
  %3490 = vmatprep.subr.mxu0 0.0
  %3491 = vmatpush1.msra.mxu0 0.0
  %3492 = vmatprep.subr.mxu0 0.0
  %3493 = vmatpush1.msra.mxu0 0.0
  %3494 = vmatprep.subr.mxu0 0.0
  %3495 = vmatpush1.msra.mxu0 0.0
  %3496 = vmatprep.subr.mxu0 0.0
  %3497 = vmatpush1.msra.mxu0 0.0
  %3498 = vmatprep.subr.mxu0 0.0
  %3499 = vmatpush1.msra.mxu0 0.0
  %3500 = vmatprep.subr.mxu0 0.0
  %3501 = vmatpush1.msra.mxu0 0.0
  %3502 = vmatprep.subr.mxu0 0.0
  %3503 = vmatpush1.msra.mxu0 0.0
  %3504 = vmatprep.subr.mxu0 0.0
  %3505 = vmatpush1.msra.mxu0 0.0
  %3506 = vmatprep.subr.mxu0 0.0
  %3507 = vmatpush1.msra.mxu0 0.0
  %3508 = vmatprep.subr.mxu0 0.0
  %3509 = vmatpush1.msra.mxu0 0.0
  %3510 = vmatprep.subr.mxu0 0.0
  %3511 = vmatpush1.msra.mxu0 0.0
  %3512 = vmatprep.subr.mxu0 0.0
  %3513 = vmatpush1.msra.mxu0 0.0
  %3514 = vmatprep.subr.mxu0 0.0
  %3515 = vmatpush1.msra.mxu0 0.0
  %3516 = vmatprep.subr.mxu0 0.0
  %3517 = vmatpush1.msra.mxu0 0.0
  %3518 = vmatprep.subr.mxu0 0.0
  %3519 = vmatpush1.msra.mxu0 0.0
  %3520 = vmatprep.subr.mxu0 0.0
  %3521 = vmatpush1.msra.mxu0 0.0
  %3522 = vmatprep.subr.mxu0 0.0
  %3523 = vmatpush1.msra.mxu0 0.0
  %3524 = vmatprep.subr.mxu0 0.0
  %3525 = vmatpush1.msra.mxu0 0.0
  %3526 = vmatprep.subr.mxu0 0.0
  %3527 = vmatpush1.msra.mxu0 0.0
  %3528 = vmatprep.subr.mxu0 0.0
  %3529 = vmatpush1.msra.mxu0 0.0
  %3530 = vmatprep.subr.mxu0 0.0
  %3531 = vmatpush1.msra.mxu0 0.0
  %3532 = vmatprep.mubr.f32.mxu0 0.0
  %3533 = vmatmul.mubr.f32.gmra.mrb[0].mxu0 %v3466
  %v3534 = vpop.f32.mrb[0].mxu0
  %v3535 = vadd.f32 %v2220, %v3534
  %v3536 = vpop.f32.mrb[0].mxu0
  %3537 = vdwg.mxu0
  %v3538 = vadd.f32 %v2122, %v3535
  %v3539 = vxor.u32 %v3538, 2147483648
  %v3540 = vmul.f32 %v3539, 1.442695
  %v3541 = vpow.pop %v3540
  %v3542 = vadd.f32 %v3541, 1.0
  %v3543 = vrcp.pop %v3542
  %v3544 = vmul.f32 1.0, %v3543
  %3546 = vrot.lane.b32.xlu0 %v3535, 64
  %v3547 = vpop.permute.xlu0 %3546
  %v3549 = vmul.f32 %v3544, %v3547
  %3551 = vrot.lane.b32.xlu0 %v3549, 64
  %v3552 = vpop.permute.xlu0 %3551
  %v3554 = vadd.f32 %v2122, %v3552
  %v3555 = vtanh.pop %v3554
  %v3556 = vsub.f32 1.0, %v3544
  %3558 = vrot.lane.b32.xlu0 %v3555, 96
  %v3559 = vpop.permute.xlu0 %3558
  %v3561 = vmul.f32 %v3556, %v3559
  %v3563 = vmul.f32 %v3544, %v3463
  %v3564 = vadd.f32 %v3561, %v3563
  %3566 = vrot.lane.b32.xlu0 %v3461, 96
  %v3567 = vpop.permute.xlu0 %3566
  %v3568 = vsel %vm110, %v3567, 0
  %3570 = vmatprep.subr.mxu0 0.0
  %3571 = vmatpush1.msra.mxu0 %v2015
  %3572 = vmatprep.subr.mxu0 0.0
  %3573 = vmatpush1.msra.mxu0 %v2016
  %3574 = vmatprep.subr.mxu0 0.0
  %3575 = vmatpush1.msra.mxu0 %v2017
  %3576 = vmatprep.subr.mxu0 0.0
  %3577 = vmatpush1.msra.mxu0 %v2018
  %3578 = vmatprep.subr.mxu0 0.0
  %3579 = vmatpush1.msra.mxu0 0.0
  %3580 = vmatprep.subr.mxu0 0.0
  %3581 = vmatpush1.msra.mxu0 0.0
  %3582 = vmatprep.subr.mxu0 0.0
  %3583 = vmatpush1.msra.mxu0 0.0
  %3584 = vmatprep.subr.mxu0 0.0
  %3585 = vmatpush1.msra.mxu0 0.0
  %3586 = vmatprep.subr.mxu0 0.0
  %3587 = vmatpush1.msra.mxu0 0.0
  %3588 = vmatprep.subr.mxu0 0.0
  %3589 = vmatpush1.msra.mxu0 0.0
  %3590 = vmatprep.subr.mxu0 0.0
  %3591 = vmatpush1.msra.mxu0 0.0
  %3592 = vmatprep.subr.mxu0 0.0
  %3593 = vmatpush1.msra.mxu0 0.0
  %3594 = vmatprep.subr.mxu0 0.0
  %3595 = vmatpush1.msra.mxu0 0.0
  %3596 = vmatprep.subr.mxu0 0.0
  %3597 = vmatpush1.msra.mxu0 0.0
  %3598 = vmatprep.subr.mxu0 0.0
  %3599 = vmatpush1.msra.mxu0 0.0
  %3600 = vmatprep.subr.mxu0 0.0
  %3601 = vmatpush1.msra.mxu0 0.0
  %3602 = vmatprep.subr.mxu0 0.0
  %3603 = vmatpush1.msra.mxu0 0.0
  %3604 = vmatprep.subr.mxu0 0.0
  %3605 = vmatpush1.msra.mxu0 0.0
  %3606 = vmatprep.subr.mxu0 0.0
  %3607 = vmatpush1.msra.mxu0 0.0
  %3608 = vmatprep.subr.mxu0 0.0
  %3609 = vmatpush1.msra.mxu0 0.0
  %3610 = vmatprep.subr.mxu0 0.0
  %3611 = vmatpush1.msra.mxu0 0.0
  %3612 = vmatprep.subr.mxu0 0.0
  %3613 = vmatpush1.msra.mxu0 0.0
  %3614 = vmatprep.subr.mxu0 0.0
  %3615 = vmatpush1.msra.mxu0 0.0
  %3616 = vmatprep.subr.mxu0 0.0
  %3617 = vmatpush1.msra.mxu0 0.0
  %3618 = vmatprep.subr.mxu0 0.0
  %3619 = vmatpush1.msra.mxu0 0.0
  %3620 = vmatprep.subr.mxu0 0.0
  %3621 = vmatpush1.msra.mxu0 0.0
  %3622 = vmatprep.subr.mxu0 0.0
  %3623 = vmatpush1.msra.mxu0 0.0
  %3624 = vmatprep.subr.mxu0 0.0
  %3625 = vmatpush1.msra.mxu0 0.0
  %3626 = vmatprep.subr.mxu0 0.0
  %3627 = vmatpush1.msra.mxu0 0.0
  %3628 = vmatprep.subr.mxu0 0.0
  %3629 = vmatpush1.msra.mxu0 0.0
  %3630 = vmatprep.subr.mxu0 0.0
  %3631 = vmatpush1.msra.mxu0 0.0
  %3632 = vmatprep.subr.mxu0 0.0
  %3633 = vmatpush1.msra.mxu0 0.0
  %3634 = vmatprep.mubr.f32.mxu0 0.0
  %3635 = vmatmul.mubr.f32.gmra.mrb[0].mxu0 %v3568
  %v3636 = vpop.f32.mrb[0].mxu0
  %v3637 = vadd.f32 %v2322, %v3636
  %v3638 = vpop.f32.mrb[0].mxu0
  %3639 = vdwg.mxu0
  %v3641 = vrot.slane %v3637, 4
  %v3643 = vadd.f32 %v2198, %v3641
  %v3644 = vxor.u32 %v3643, 2147483648
  %v3645 = vmul.f32 %v3644, 1.442695
  %v3646 = vpow.pop %v3645
  %v3647 = vadd.f32 %v3646, 1.0
  %v3648 = vrcp.pop %v3647
  %v3649 = vmul.f32 1.0, %v3648
  %3650 = vrot.lane.b32.xlu0 %v3641, 64
  %v3651 = vpop.permute.xlu0 %3650
  %v3653 = vmul.f32 %v3649, %v3651
  %3655 = vrot.lane.b32.xlu0 %v3653, 64
  %v3656 = vpop.permute.xlu0 %3655
  %v3658 = vadd.f32 %v2198, %v3656
  %v3659 = vtanh.pop %v3658
  %v3660 = vsub.f32 1.0, %v3649
  %3662 = vrot.lane.b32.xlu0 %v3659, 96
  %v3663 = vpop.permute.xlu0 %3662
  %v3665 = vmul.f32 %v3660, %v3663
  %v3666 = vrot.slane %v3461, 4
  %v3668 = vmul.f32 %v3649, %v3666
  %v3669 = vadd.f32 %v3665, %v3668
  %3671 = vrot.lane.b32.xlu0 %v3564, 96
  %v3672 = vpop.permute.xlu0 %3671
  %v3673 = vsel %vm110, %v3672, 0
  %3675 = vmatprep.subr.mxu0 0.0
  %3676 = vmatpush1.msra.mxu0 %v2001
  %3677 = vmatprep.subr.mxu0 0.0
  %3678 = vmatpush1.msra.mxu0 %v2002
  %3679 = vmatprep.subr.mxu0 0.0
  %3680 = vmatpush1.msra.mxu0 %v2003
  %3681 = vmatprep.subr.mxu0 0.0
  %3682 = vmatpush1.msra.mxu0 %v2004
  %3683 = vmatprep.subr.mxu0 0.0
  %3684 = vmatpush1.msra.mxu0 0.0
  %3685 = vmatprep.subr.mxu0 0.0
  %3686 = vmatpush1.msra.mxu0 0.0
  %3687 = vmatprep.subr.mxu0 0.0
  %3688 = vmatpush1.msra.mxu0 0.0
  %3689 = vmatprep.subr.mxu0 0.0
  %3690 = vmatpush1.msra.mxu0 0.0
  %3691 = vmatprep.subr.mxu0 0.0
  %3692 = vmatpush1.msra.mxu0 0.0
  %3693 = vmatprep.subr.mxu0 0.0
  %3694 = vmatpush1.msra.mxu0 0.0
  %3695 = vmatprep.subr.mxu0 0.0
  %3696 = vmatpush1.msra.mxu0 0.0
  %3697 = vmatprep.subr.mxu0 0.0
  %3698 = vmatpush1.msra.mxu0 0.0
  %3699 = vmatprep.subr.mxu0 0.0
  %3700 = vmatpush1.msra.mxu0 0.0
  %3701 = vmatprep.subr.mxu0 0.0
  %3702 = vmatpush1.msra.mxu0 0.0
  %3703 = vmatprep.subr.mxu0 0.0
  %3704 = vmatpush1.msra.mxu0 0.0
  %3705 = vmatprep.subr.mxu0 0.0
  %3706 = vmatpush1.msra.mxu0 0.0
  %3707 = vmatprep.subr.mxu0 0.0
  %3708 = vmatpush1.msra.mxu0 0.0
  %3709 = vmatprep.subr.mxu0 0.0
  %3710 = vmatpush1.msra.mxu0 0.0
  %3711 = vmatprep.subr.mxu0 0.0
  %3712 = vmatpush1.msra.mxu0 0.0
  %3713 = vmatprep.subr.mxu0 0.0
  %3714 = vmatpush1.msra.mxu0 0.0
  %3715 = vmatprep.subr.mxu0 0.0
  %3716 = vmatpush1.msra.mxu0 0.0
  %3717 = vmatprep.subr.mxu0 0.0
  %3718 = vmatpush1.msra.mxu0 0.0
  %3719 = vmatprep.subr.mxu0 0.0
  %3720 = vmatpush1.msra.mxu0 0.0
  %3721 = vmatprep.subr.mxu0 0.0
  %3722 = vmatpush1.msra.mxu0 0.0
  %3723 = vmatprep.subr.mxu0 0.0
  %3724 = vmatpush1.msra.mxu0 0.0
  %3725 = vmatprep.subr.mxu0 0.0
  %3726 = vmatpush1.msra.mxu0 0.0
  %3727 = vmatprep.subr.mxu0 0.0
  %3728 = vmatpush1.msra.mxu0 0.0
  %3729 = vmatprep.subr.mxu0 0.0
  %3730 = vmatpush1.msra.mxu0 0.0
  %3731 = vmatprep.subr.mxu0 0.0
  %3732 = vmatpush1.msra.mxu0 0.0
  %3733 = vmatprep.subr.mxu0 0.0
  %3734 = vmatpush1.msra.mxu0 0.0
  %3735 = vmatprep.subr.mxu0 0.0
  %3736 = vmatpush1.msra.mxu0 0.0
  %3737 = vmatprep.subr.mxu0 0.0
  %3738 = vmatpush1.msra.mxu0 0.0
  %3739 = vmatprep.mubr.f32.mxu0 0.0
  %3740 = vmatmul.mubr.f32.gmra.mrb[0].mxu0 %v3673
  %v3741 = vpop.f32.mrb[0].mxu0
  %v3742 = vadd.f32 %v2220, %v3741
  %v3743 = vpop.f32.mrb[0].mxu0
  %3744 = vdwg.mxu0
  %v3746 = vrot.slane %v3742, 4
  %v3748 = vadd.f32 %v2122, %v3746
  %v3749 = vxor.u32 %v3748, 2147483648
  %v3750 = vmul.f32 %v3749, 1.442695
  %v3751 = vpow.pop %v3750
  %v3752 = vadd.f32 %v3751, 1.0
  %v3753 = vrcp.pop %v3752
  %v3754 = vmul.f32 1.0, %v3753
  %3755 = vrot.lane.b32.xlu0 %v3746, 64
  %v3756 = vpop.permute.xlu0 %3755
  %v3758 = vmul.f32 %v3754, %v3756
  %3760 = vrot.lane.b32.xlu0 %v3758, 64
  %v3761 = vpop.permute.xlu0 %3760
  %v3763 = vadd.f32 %v2122, %v3761
  %v3764 = vtanh.pop %v3763
  %v3765 = vsub.f32 1.0, %v3754
  %3767 = vrot.lane.b32.xlu0 %v3764, 96
  %v3768 = vpop.permute.xlu0 %3767
  %v3770 = vmul.f32 %v3765, %v3768
  %v3771 = vrot.slane %v3564, 4
  %v3773 = vmul.f32 %v3754, %v3771
  %v3774 = vadd.f32 %v3770, %v3773
  %v3776 = vrot.slane %v3669, 4
  %3777 = vrot.lane.b32.xlu0 %v3776, 96
  %v3778 = vpop.permute.xlu0 %3777
  %v3779 = vsel %vm110, %v3778, 0
  %3781 = vmatprep.subr.mxu0 0.0
  %3782 = vmatpush1.msra.mxu0 %v2015
  %3783 = vmatprep.subr.mxu0 0.0
  %3784 = vmatpush1.msra.mxu0 %v2016
  %3785 = vmatprep.subr.mxu0 0.0
  %3786 = vmatpush1.msra.mxu0 %v2017
  %3787 = vmatprep.subr.mxu0 0.0
  %3788 = vmatpush1.msra.mxu0 %v2018
  %3789 = vmatprep.subr.mxu0 0.0
  %3790 = vmatpush1.msra.mxu0 0.0
  %3791 = vmatprep.subr.mxu0 0.0
  %3792 = vmatpush1.msra.mxu0 0.0
  %3793 = vmatprep.subr.mxu0 0.0
  %3794 = vmatpush1.msra.mxu0 0.0
  %3795 = vmatprep.subr.mxu0 0.0
  %3796 = vmatpush1.msra.mxu0 0.0
  %3797 = vmatprep.subr.mxu0 0.0
  %3798 = vmatpush1.msra.mxu0 0.0
  %3799 = vmatprep.subr.mxu0 0.0
  %3800 = vmatpush1.msra.mxu0 0.0
  %3801 = vmatprep.subr.mxu0 0.0
  %3802 = vmatpush1.msra.mxu0 0.0
  %3803 = vmatprep.subr.mxu0 0.0
  %3804 = vmatpush1.msra.mxu0 0.0
  %3805 = vmatprep.subr.mxu0 0.0
  %3806 = vmatpush1.msra.mxu0 0.0
  %3807 = vmatprep.subr.mxu0 0.0
  %3808 = vmatpush1.msra.mxu0 0.0
  %3809 = vmatprep.subr.mxu0 0.0
  %3810 = vmatpush1.msra.mxu0 0.0
  %3811 = vmatprep.subr.mxu0 0.0
  %3812 = vmatpush1.msra.mxu0 0.0
  %3813 = vmatprep.subr.mxu0 0.0
  %3814 = vmatpush1.msra.mxu0 0.0
  %3815 = vmatprep.subr.mxu0 0.0
  %3816 = vmatpush1.msra.mxu0 0.0
  %3817 = vmatprep.subr.mxu0 0.0
  %3818 = vmatpush1.msra.mxu0 0.0
  %3819 = vmatprep.subr.mxu0 0.0
  %3820 = vmatpush1.msra.mxu0 0.0
  %3821 = vmatprep.subr.mxu0 0.0
  %3822 = vmatpush1.msra.mxu0 0.0
  %3823 = vmatprep.subr.mxu0 0.0
  %3824 = vmatpush1.msra.mxu0 0.0
  %3825 = vmatprep.subr.mxu0 0.0
  %3826 = vmatpush1.msra.mxu0 0.0
  %3827 = vmatprep.subr.mxu0 0.0
  %3828 = vmatpush1.msra.mxu0 0.0
  %3829 = vmatprep.subr.mxu0 0.0
  %3830 = vmatpush1.msra.mxu0 0.0
  %3831 = vmatprep.subr.mxu0 0.0
  %3832 = vmatpush1.msra.mxu0 0.0
  %3833 = vmatprep.subr.mxu0 0.0
  %3834 = vmatpush1.msra.mxu0 0.0
  %3835 = vmatprep.subr.mxu0 0.0
  %3836 = vmatpush1.msra.mxu0 0.0
  %3837 = vmatprep.subr.mxu0 0.0
  %3838 = vmatpush1.msra.mxu0 0.0
  %3839 = vmatprep.subr.mxu0 0.0
  %3840 = vmatpush1.msra.mxu0 0.0
  %3841 = vmatprep.subr.mxu0 0.0
  %3842 = vmatpush1.msra.mxu0 0.0
  %3843 = vmatprep.subr.mxu0 0.0
  %3844 = vmatpush1.msra.mxu0 0.0
  %3845 = vmatprep.mubr.f32.mxu0 0.0
  %3846 = vmatmul.mubr.f32.gmra.mrb[0].mxu0 %v3779
  %v3847 = vpop.f32.mrb[0].mxu0
  %v3848 = vadd.f32 %v2322, %v3847
  %v3849 = vpop.f32.mrb[0].mxu0
  %3850 = vdwg.mxu0
  %v3851 = vadd.f32 %v2198, %v3848
  %v3852 = vxor.u32 %v3851, 2147483648
  %v3853 = vmul.f32 %v3852, 1.442695
  %v3854 = vpow.pop %v3853
  %v3855 = vadd.f32 %v3854, 1.0
  %v3856 = vrcp.pop %v3855
  %v3857 = vmul.f32 1.0, %v3856
  %3859 = vrot.lane.b32.xlu0 %v3848, 64
  %v3860 = vpop.permute.xlu0 %3859
  %v3862 = vmul.f32 %v3857, %v3860
  %3864 = vrot.lane.b32.xlu0 %v3862, 64
  %v3865 = vpop.permute.xlu0 %3864
  %v3867 = vadd.f32 %v2198, %v3865
  %v3868 = vtanh.pop %v3867
  %v3869 = vsub.f32 1.0, %v3857
  %3871 = vrot.lane.b32.xlu0 %v3868, 96
  %v3872 = vpop.permute.xlu0 %3871
  %v3874 = vmul.f32 %v3869, %v3872
  %v3876 = vmul.f32 %v3857, %v3776
  %v3877 = vadd.f32 %v3874, %v3876
  %v3878 = vsel %vm1964, %v2317, %v2526
  %v3879 = vsel %vm1964, %v2732, %v2942
  %v3880 = vsel %vm1964, %v3148, %v3358
  %v3881 = vsel %vm1964, %v3564, %v3774
  %v3882 = vsel %vm1964, %v3877, %v3669
  %v3883 = vsel %vm1964, %v3461, %v3253
  %v3884 = vsel %vm1964, %v3045, %v2837
  %v3885 = vsel %vm1964, %v2629, %v2421
  %3890 = vrot.lane.b32.xlu0 %v3878, 96
  %v3891 = vpop.permute.xlu0 %3890
  %3892 = vrot.lane.b32.xlu0 %v3879, 96
  %v3893 = vpop.permute.xlu0 %3892
  %3894 = vrot.lane.b32.xlu0 %v3880, 96
  %v3895 = vpop.permute.xlu0 %3894
  %3896 = vrot.lane.b32.xlu0 %v3881, 96
  %v3897 = vpop.permute.xlu0 %3896
  %v3902 = vsel %vm110, %v3891, %v3882
  %v3903 = vsel %vm110, %v3893, %v3883
  %v3904 = vsel %vm110, %v3895, %v3884
  %v3905 = vsel %vm110, %v3897, %v3885
  %v3906 = vsel %vm2027, %v3902, 0.0
  %3907 = vadd.xlane.f32.xlu0 %v3906
  %v3908 = vpop.xlane.xlu0 %3907
  %v3909 = vsel %vm2027, %v3903, 0.0
  %3910 = vadd.xlane.f32.xlu0 %v3909
  %v3911 = vpop.xlane.xlu0 %3910
  %v3912 = vsel %vm2027, %v3904, 0.0
  %3913 = vadd.xlane.f32.xlu0 %v3912
  %v3914 = vpop.xlane.xlu0 %3913
  %v3915 = vsel %vm2027, %v3905, 0.0
  %3916 = vadd.xlane.f32.xlu0 %v3915
  %v3917 = vpop.xlane.xlu0 %3916
  %v3918 = vrcp.pop 64.0
  %v3919 = vmul.f32 %v3908, %v3918
  %v3920 = vmul.f32 %v3911, %v3918
  %v3921 = vmul.f32 %v3914, %v3918
  %v3922 = vmul.f32 %v3917, %v3918
  %v3923 = vsub.f32 %v3902, %v3919
  %v3924 = vsub.f32 %v3903, %v3920
  %v3925 = vsub.f32 %v3904, %v3921
  %v3926 = vsub.f32 %v3905, %v3922
  %v3927 = vmul.f32 %v3923, %v3923
  %v3928 = vmul.f32 %v3924, %v3924
  %v3929 = vmul.f32 %v3925, %v3925
  %v3930 = vmul.f32 %v3926, %v3926
  %v3931 = vsel %vm2027, %v3927, 0.0
  %3932 = vadd.xlane.f32.xlu0 %v3931
  %v3933 = vpop.xlane.xlu0 %3932
  %v3934 = vsel %vm2027, %v3928, 0.0
  %3935 = vadd.xlane.f32.xlu0 %v3934
  %v3936 = vpop.xlane.xlu0 %3935
  %v3937 = vsel %vm2027, %v3929, 0.0
  %3938 = vadd.xlane.f32.xlu0 %v3937
  %v3939 = vpop.xlane.xlu0 %3938
  %v3940 = vsel %vm2027, %v3930, 0.0
  %3941 = vadd.xlane.f32.xlu0 %v3940
  %v3942 = vpop.xlane.xlu0 %3941
  %v3943 = vmul.f32 %v3933, %v3918
  %v3944 = vmul.f32 %v3936, %v3918
  %v3945 = vmul.f32 %v3939, %v3918
  %v3946 = vmul.f32 %v3942, %v3918
  %v3947 = vadd.f32 %v3943, 1e-05
  %v3948 = vadd.f32 %v3944, 1e-05
  %v3949 = vadd.f32 %v3945, 1e-05
  %v3950 = vadd.f32 %v3946, 1e-05
  %v3951 = vrsqrt.pop %v3947
  %v3952 = vrsqrt.pop %v3948
  %v3953 = vrsqrt.pop %v3949
  %v3954 = vrsqrt.pop %v3950
  %v3955 = vmul.f32 %v3923, %v3951
  %v3956 = vmul.f32 %v3924, %v3952
  %v3957 = vmul.f32 %v3925, %v3953
  %v3958 = vmul.f32 %v3926, %v3954
  %v3959 = vld [vmem:[%s17] sm:$0x1]
  %v3961 = vlaneseq
  %v3962 = vshrl.u32 %v3961, 7
  %v3963 = vsub.s32 0, %v3962
  %v3964 = vrot.slane %v3959, %v3963
  %v3966 = vmul.f32 %v3955, %v3964
  %v3967 = vmul.f32 %v3956, %v3964
  %v3968 = vmul.f32 %v3957, %v3964
  %v3969 = vmul.f32 %v3958, %v3964
  %v3970 = vld [vmem:[%s18] sm:$0x1]
  %v3972 = vlaneseq
  %v3973 = vshrl.u32 %v3972, 7
  %v3974 = vsub.s32 0, %v3973
  %v3975 = vrot.slane %v3970, %v3974
  %v3977 = vadd.f32 %v3966, %v3975
  %v3978 = vadd.f32 %v3967, %v3975
  %v3979 = vadd.f32 %v3968, %v3975
  %v3980 = vadd.f32 %v3969, %v3975
  %v3982 = vrot.slane %v3977, 4
  %v3984 = vadd.f32 %v3977, %v3982
  %v3985 = vadd.f32 %v3984, %v3978
  %v3987 = vrot.slane %v3978, 4
  %v3989 = vadd.f32 %v3985, %v3987
  %v3990 = vadd.f32 %v3989, %v3979
  %v3992 = vrot.slane %v3979, 4
  %v3994 = vadd.f32 %v3990, %v3992
  %v3995 = vadd.f32 %v3994, %v3980
  %v3997 = vrot.slane %v3980, 4
  %v3999 = vadd.f32 %v3995, %v3997
  %v4000 = vmul.f32 %v3999, 0.125
  %v4001 = vld [vmem:[%s19] sm:$0xff]
  %v4002 = vld [vmem:[%s19 + $0x8] sm:$0xff]
  %v4003 = vld [vmem:[%s19 + $0x10] sm:$0xff]
  %v4004 = vld [vmem:[%s19 + $0x18] sm:$0xff]
  %v4005 = vld [vmem:[%s19 + $0x20] sm:$0xff]
  %v4006 = vld [vmem:[%s19 + $0x28] sm:$0xff]
  %v4007 = vld [vmem:[%s19 + $0x30] sm:$0xff]
  %v4008 = vld [vmem:[%s19 + $0x38] sm:$0xff]
  %v4009 = vld [vmem:[%s19 + $0x40] sm:$0xff]
  %v4010 = vld [vmem:[%s19 + $0x48] sm:$0xff]
  %v4011 = vld [vmem:[%s19 + $0x50] sm:$0xff]
  %v4012 = vld [vmem:[%s19 + $0x58] sm:$0xff]
  %v4013 = vld [vmem:[%s19 + $0x60] sm:$0xff]
  %v4014 = vld [vmem:[%s19 + $0x68] sm:$0xff]
  %v4015 = vld [vmem:[%s19 + $0x70] sm:$0xff]
  %v4016 = vld [vmem:[%s19 + $0x78] sm:$0xff]
  %v4017 = vld [vmem:[%s19 + $0x80] sm:$0xff]
  %v4018 = vld [vmem:[%s19 + $0x88] sm:$0xff]
  %v4019 = vld [vmem:[%s19 + $0x90] sm:$0xff]
  %v4020 = vld [vmem:[%s19 + $0x98] sm:$0xff]
  %v4021 = vld [vmem:[%s19 + $0xa0] sm:$0xff]
  %v4022 = vld [vmem:[%s19 + $0xa8] sm:$0xff]
  %v4023 = vld [vmem:[%s19 + $0xb0] sm:$0xff]
  %v4024 = vld [vmem:[%s19 + $0xb8] sm:$0xff]
  %v4025 = vld [vmem:[%s19 + $0xc0] sm:$0xff]
  %v4026 = vld [vmem:[%s19 + $0xc8] sm:$0xff]
  %v4027 = vld [vmem:[%s19 + $0xd0] sm:$0xff]
  %v4028 = vld [vmem:[%s19 + $0xd8] sm:$0xff]
  %v4029 = vld [vmem:[%s19 + $0xe0] sm:$0xff]
  %v4030 = vld [vmem:[%s19 + $0xe8] sm:$0xff]
  %v4031 = vld [vmem:[%s19 + $0xf0] sm:$0xff]
  %v4032 = vld [vmem:[%s19 + $0xf8] sm:$0xff]
  %v4033 = vld [vmem:[%s19 + $0x100] sm:$0xff]
  %v4034 = vld [vmem:[%s19 + $0x108] sm:$0xff]
  %v4035 = vld [vmem:[%s19 + $0x110] sm:$0xff]
  %v4036 = vld [vmem:[%s19 + $0x118] sm:$0xff]
  %v4037 = vld [vmem:[%s19 + $0x120] sm:$0xff]
  %v4038 = vld [vmem:[%s19 + $0x128] sm:$0xff]
  %v4039 = vld [vmem:[%s19 + $0x130] sm:$0xff]
  %v4040 = vld [vmem:[%s19 + $0x138] sm:$0xff]
  %v4041 = vld [vmem:[%s19 + $0x140] sm:$0xff]
  %v4042 = vld [vmem:[%s19 + $0x148] sm:$0xff]
  %v4043 = vld [vmem:[%s19 + $0x150] sm:$0xff]
  %v4044 = vld [vmem:[%s19 + $0x158] sm:$0xff]
  %v4045 = vld [vmem:[%s19 + $0x160] sm:$0xff]
  %v4046 = vld [vmem:[%s19 + $0x168] sm:$0xff]
  %v4047 = vld [vmem:[%s19 + $0x170] sm:$0xff]
  %v4048 = vld [vmem:[%s19 + $0x178] sm:$0xff]
  %v4049 = vld [vmem:[%s19 + $0x180] sm:$0xff]
  %v4050 = vld [vmem:[%s19 + $0x188] sm:$0xff]
  %v4051 = vld [vmem:[%s19 + $0x190] sm:$0xff]
  %v4052 = vld [vmem:[%s19 + $0x198] sm:$0xff]
  %v4053 = vld [vmem:[%s19 + $0x1a0] sm:$0xff]
  %v4054 = vld [vmem:[%s19 + $0x1a8] sm:$0xff]
  %v4055 = vld [vmem:[%s19 + $0x1b0] sm:$0xff]
  %v4056 = vld [vmem:[%s19 + $0x1b8] sm:$0xff]
  %v4057 = vld [vmem:[%s19 + $0x1c0] sm:$0xff]
  %v4058 = vld [vmem:[%s19 + $0x1c8] sm:$0xff]
  %v4059 = vld [vmem:[%s19 + $0x1d0] sm:$0xff]
  %v4060 = vld [vmem:[%s19 + $0x1d8] sm:$0xff]
  %v4061 = vld [vmem:[%s19 + $0x1e0] sm:$0xff]
  %v4062 = vld [vmem:[%s19 + $0x1e8] sm:$0xff]
  %v4063 = vld [vmem:[%s19 + $0x1f0] sm:$0xff]
  %v4064 = vld [vmem:[%s19 + $0x1f8] sm:$0xff]
  %v4065 = vld [vmem:[%s20] sm:$0xff]
  %v4067 = vlaneseq
  %v4068 = vshrl.u32 %v4067, 7
  %v4069 = vsub.s32 0, %v4068
  %v4070 = vrot.slane %v4065, %v4069
  %v4071 = vlaneseq
  %v4072 = vshrl.u32 %v4071, 7
  %v4073 = vsub.s32 1, %v4072
  %v4074 = vrot.slane %v4065, %v4073
  %v4075 = vlaneseq
  %v4076 = vshrl.u32 %v4075, 7
  %v4077 = vsub.s32 2, %v4076
  %v4078 = vrot.slane %v4065, %v4077
  %v4079 = vlaneseq
  %v4080 = vshrl.u32 %v4079, 7
  %v4081 = vsub.s32 3, %v4080
  %v4082 = vrot.slane %v4065, %v4081
  %v4083 = vlaneseq
  %v4084 = vshrl.u32 %v4083, 7
  %v4085 = vsub.s32 4, %v4084
  %v4086 = vrot.slane %v4065, %v4085
  %v4087 = vlaneseq
  %v4088 = vshrl.u32 %v4087, 7
  %v4089 = vsub.s32 5, %v4088
  %v4090 = vrot.slane %v4065, %v4089
  %v4091 = vlaneseq
  %v4092 = vshrl.u32 %v4091, 7
  %v4093 = vsub.s32 6, %v4092
  %v4094 = vrot.slane %v4065, %v4093
  %v4095 = vlaneseq
  %v4096 = vshrl.u32 %v4095, 7
  %v4097 = vsub.s32 7, %v4096
  %v4098 = vrot.slane %v4065, %v4097
  %v4108 = vsel %vm2027, %v4000, 0
  %4110 = vmatprep.subr.mxu0 %v4002
  %4111 = vmatpush1.msra.mxu0 %v4001
  %4112 = vmatprep.subr.mxu0 %v4010
  %4113 = vmatpush1.msra.mxu0 %v4009
  %4114 = vmatprep.subr.mxu0 %v4018
  %4115 = vmatpush1.msra.mxu0 %v4017
  %4116 = vmatprep.subr.mxu0 %v4026
  %4117 = vmatpush1.msra.mxu0 %v4025
  %4118 = vmatprep.subr.mxu0 %v4034
  %4119 = vmatpush1.msra.mxu0 %v4033
  %4120 = vmatprep.subr.mxu0 %v4042
  %4121 = vmatpush1.msra.mxu0 %v4041
  %4122 = vmatprep.subr.mxu0 %v4050
  %4123 = vmatpush1.msra.mxu0 %v4049
  %4124 = vmatprep.subr.mxu0 %v4058
  %4125 = vmatpush1.msra.mxu0 %v4057
  %4126 = vmatprep.subr.mxu0 0.0
  %4127 = vmatpush1.msra.mxu0 0.0
  %4128 = vmatprep.subr.mxu0 0.0
  %4129 = vmatpush1.msra.mxu0 0.0
  %4130 = vmatprep.subr.mxu0 0.0
  %4131 = vmatpush1.msra.mxu0 0.0
  %4132 = vmatprep.subr.mxu0 0.0
  %4133 = vmatpush1.msra.mxu0 0.0
  %4134 = vmatprep.subr.mxu0 0.0
  %4135 = vmatpush1.msra.mxu0 0.0
  %4136 = vmatprep.subr.mxu0 0.0
  %4137 = vmatpush1.msra.mxu0 0.0
  %4138 = vmatprep.subr.mxu0 0.0
  %4139 = vmatpush1.msra.mxu0 0.0
  %4140 = vmatprep.subr.mxu0 0.0
  %4141 = vmatpush1.msra.mxu0 0.0
  %4142 = vmatprep.subr.mxu0 0.0
  %4143 = vmatpush1.msra.mxu0 0.0
  %4144 = vmatprep.subr.mxu0 0.0
  %4145 = vmatpush1.msra.mxu0 0.0
  %4146 = vmatprep.subr.mxu0 0.0
  %4147 = vmatpush1.msra.mxu0 0.0
  %4148 = vmatprep.subr.mxu0 0.0
  %4149 = vmatpush1.msra.mxu0 0.0
  %4150 = vmatprep.subr.mxu0 0.0
  %4151 = vmatpush1.msra.mxu0 0.0
  %4152 = vmatprep.subr.mxu0 0.0
  %4153 = vmatpush1.msra.mxu0 0.0
  %4154 = vmatprep.subr.mxu0 0.0
  %4155 = vmatpush1.msra.mxu0 0.0
  %4156 = vmatprep.subr.mxu0 0.0
  %4157 = vmatpush1.msra.mxu0 0.0
  %4158 = vmatprep.subr.mxu0 0.0
  %4159 = vmatpush1.msra.mxu0 0.0
  %4160 = vmatprep.subr.mxu0 0.0
  %4161 = vmatpush1.msra.mxu0 0.0
  %4162 = vmatprep.subr.mxu0 0.0
  %4163 = vmatpush1.msra.mxu0 0.0
  %4164 = vmatprep.subr.mxu0 0.0
  %4165 = vmatpush1.msra.mxu0 0.0
  %4166 = vmatprep.subr.mxu0 0.0
  %4167 = vmatpush1.msra.mxu0 0.0
  %4168 = vmatprep.subr.mxu0 0.0
  %4169 = vmatpush1.msra.mxu0 0.0
  %4170 = vmatprep.subr.mxu0 0.0
  %4171 = vmatpush1.msra.mxu0 0.0
  %4172 = vmatprep.subr.mxu0 0.0
  %4173 = vmatpush1.msra.mxu0 0.0
  %4174 = vmatprep.mubr.f32.mxu0 0.0
  %4175 = vmatmul.mubr.f32.gmra.mrb[0].mxu0 %v4108
  %v4176 = vpop.f32.mrb[0].mxu0
  %v4177 = vadd.f32 %v4070, %v4176
  %v4178 = vpop.f32.mrb[0].mxu0
  %v4179 = vadd.f32 %v4074, %v4178
  %4180 = vdwg.mxu0
  %4181 = vmatprep.subr.mxu0 %v4004
  %4182 = vmatpush1.msra.mxu0 %v4003
  %4183 = vmatprep.subr.mxu0 %v4012
  %4184 = vmatpush1.msra.mxu0 %v4011
  %4185 = vmatprep.subr.mxu0 %v4020
  %4186 = vmatpush1.msra.mxu0 %v4019
  %4187 = vmatprep.subr.mxu0 %v4028
  %4188 = vmatpush1.msra.mxu0 %v4027
  %4189 = vmatprep.subr.mxu0 %v4036
  %4190 = vmatpush1.msra.mxu0 %v4035
  %4191 = vmatprep.subr.mxu0 %v4044
  %4192 = vmatpush1.msra.mxu0 %v4043
  %4193 = vmatprep.subr.mxu0 %v4052
  %4194 = vmatpush1.msra.mxu0 %v4051
  %4195 = vmatprep.subr.mxu0 %v4060
  %4196 = vmatpush1.msra.mxu0 %v4059
  %4197 = vmatprep.subr.mxu0 0.0
  %4198 = vmatpush1.msra.mxu0 0.0
  %4199 = vmatprep.subr.mxu0 0.0
  %4200 = vmatpush1.msra.mxu0 0.0
  %4201 = vmatprep.subr.mxu0 0.0
  %4202 = vmatpush1.msra.mxu0 0.0
  %4203 = vmatprep.subr.mxu0 0.0
  %4204 = vmatpush1.msra.mxu0 0.0
  %4205 = vmatprep.subr.mxu0 0.0
  %4206 = vmatpush1.msra.mxu0 0.0
  %4207 = vmatprep.subr.mxu0 0.0
  %4208 = vmatpush1.msra.mxu0 0.0
  %4209 = vmatprep.subr.mxu0 0.0
  %4210 = vmatpush1.msra.mxu0 0.0
  %4211 = vmatprep.subr.mxu0 0.0
  %4212 = vmatpush1.msra.mxu0 0.0
  %4213 = vmatprep.subr.mxu0 0.0
  %4214 = vmatpush1.msra.mxu0 0.0
  %4215 = vmatprep.subr.mxu0 0.0
  %4216 = vmatpush1.msra.mxu0 0.0
  %4217 = vmatprep.subr.mxu0 0.0
  %4218 = vmatpush1.msra.mxu0 0.0
  %4219 = vmatprep.subr.mxu0 0.0
  %4220 = vmatpush1.msra.mxu0 0.0
  %4221 = vmatprep.subr.mxu0 0.0
  %4222 = vmatpush1.msra.mxu0 0.0
  %4223 = vmatprep.subr.mxu0 0.0
  %4224 = vmatpush1.msra.mxu0 0.0
  %4225 = vmatprep.subr.mxu0 0.0
  %4226 = vmatpush1.msra.mxu0 0.0
  %4227 = vmatprep.subr.mxu0 0.0
  %4228 = vmatpush1.msra.mxu0 0.0
  %4229 = vmatprep.subr.mxu0 0.0
  %4230 = vmatpush1.msra.mxu0 0.0
  %4231 = vmatprep.subr.mxu0 0.0
  %4232 = vmatpush1.msra.mxu0 0.0
  %4233 = vmatprep.subr.mxu0 0.0
  %4234 = vmatpush1.msra.mxu0 0.0
  %4235 = vmatprep.subr.mxu0 0.0
  %4236 = vmatpush1.msra.mxu0 0.0
  %4237 = vmatprep.subr.mxu0 0.0
  %4238 = vmatpush1.msra.mxu0 0.0
  %4239 = vmatprep.subr.mxu0 0.0
  %4240 = vmatpush1.msra.mxu0 0.0
  %4241 = vmatprep.subr.mxu0 0.0
  %4242 = vmatpush1.msra.mxu0 0.0
  %4243 = vmatprep.subr.mxu0 0.0
  %4244 = vmatpush1.msra.mxu0 0.0
  %4245 = vmatprep.mubr.f32.mxu0 0.0
  %4246 = vmatmul.mubr.f32.gmra.mrb[0].mxu0 %v4108
  %v4247 = vpop.f32.mrb[0].mxu0
  %v4248 = vadd.f32 %v4078, %v4247
  %v4249 = vpop.f32.mrb[0].mxu0
  %v4250 = vadd.f32 %v4082, %v4249
  %4251 = vdwg.mxu0
  %4252 = vmatprep.subr.mxu0 %v4006
  %4253 = vmatpush1.msra.mxu0 %v4005
  %4254 = vmatprep.subr.mxu0 %v4014
  %4255 = vmatpush1.msra.mxu0 %v4013
  %4256 = vmatprep.subr.mxu0 %v4022
  %4257 = vmatpush1.msra.mxu0 %v4021
  %4258 = vmatprep.subr.mxu0 %v4030
  %4259 = vmatpush1.msra.mxu0 %v4029
  %4260 = vmatprep.subr.mxu0 %v4038
  %4261 = vmatpush1.msra.mxu0 %v4037
  %4262 = vmatprep.subr.mxu0 %v4046
  %4263 = vmatpush1.msra.mxu0 %v4045
  %4264 = vmatprep.subr.mxu0 %v4054
  %4265 = vmatpush1.msra.mxu0 %v4053
  %4266 = vmatprep.subr.mxu0 %v4062
  %4267 = vmatpush1.msra.mxu0 %v4061
  %4268 = vmatprep.subr.mxu0 0.0
  %4269 = vmatpush1.msra.mxu0 0.0
  %4270 = vmatprep.subr.mxu0 0.0
  %4271 = vmatpush1.msra.mxu0 0.0
  %4272 = vmatprep.subr.mxu0 0.0
  %4273 = vmatpush1.msra.mxu0 0.0
  %4274 = vmatprep.subr.mxu0 0.0
  %4275 = vmatpush1.msra.mxu0 0.0
  %4276 = vmatprep.subr.mxu0 0.0
  %4277 = vmatpush1.msra.mxu0 0.0
  %4278 = vmatprep.subr.mxu0 0.0
  %4279 = vmatpush1.msra.mxu0 0.0
  %4280 = vmatprep.subr.mxu0 0.0
  %4281 = vmatpush1.msra.mxu0 0.0
  %4282 = vmatprep.subr.mxu0 0.0
  %4283 = vmatpush1.msra.mxu0 0.0
  %4284 = vmatprep.subr.mxu0 0.0
  %4285 = vmatpush1.msra.mxu0 0.0
  %4286 = vmatprep.subr.mxu0 0.0
  %4287 = vmatpush1.msra.mxu0 0.0
  %4288 = vmatprep.subr.mxu0 0.0
  %4289 = vmatpush1.msra.mxu0 0.0
  %4290 = vmatprep.subr.mxu0 0.0
  %4291 = vmatpush1.msra.mxu0 0.0
  %4292 = vmatprep.subr.mxu0 0.0
  %4293 = vmatpush1.msra.mxu0 0.0
  %4294 = vmatprep.subr.mxu0 0.0
  %4295 = vmatpush1.msra.mxu0 0.0
  %4296 = vmatprep.subr.mxu0 0.0
  %4297 = vmatpush1.msra.mxu0 0.0
  %4298 = vmatprep.subr.mxu0 0.0
  %4299 = vmatpush1.msra.mxu0 0.0
  %4300 = vmatprep.subr.mxu0 0.0
  %4301 = vmatpush1.msra.mxu0 0.0
  %4302 = vmatprep.subr.mxu0 0.0
  %4303 = vmatpush1.msra.mxu0 0.0
  %4304 = vmatprep.subr.mxu0 0.0
  %4305 = vmatpush1.msra.mxu0 0.0
  %4306 = vmatprep.subr.mxu0 0.0
  %4307 = vmatpush1.msra.mxu0 0.0
  %4308 = vmatprep.subr.mxu0 0.0
  %4309 = vmatpush1.msra.mxu0 0.0
  %4310 = vmatprep.subr.mxu0 0.0
  %4311 = vmatpush1.msra.mxu0 0.0
  %4312 = vmatprep.subr.mxu0 0.0
  %4313 = vmatpush1.msra.mxu0 0.0
  %4314 = vmatprep.subr.mxu0 0.0
  %4315 = vmatpush1.msra.mxu0 0.0
  %4316 = vmatprep.mubr.f32.mxu0 0.0
  %4317 = vmatmul.mubr.f32.gmra.mrb[0].mxu0 %v4108
  %v4318 = vpop.f32.mrb[0].mxu0
  %v4319 = vadd.f32 %v4086, %v4318
  %v4320 = vpop.f32.mrb[0].mxu0
  %v4321 = vadd.f32 %v4090, %v4320
  %4322 = vdwg.mxu0
  %4323 = vmatprep.subr.mxu0 %v4008
  %4324 = vmatpush1.msra.mxu0 %v4007
  %4325 = vmatprep.subr.mxu0 %v4016
  %4326 = vmatpush1.msra.mxu0 %v4015
  %4327 = vmatprep.subr.mxu0 %v4024
  %4328 = vmatpush1.msra.mxu0 %v4023
  %4329 = vmatprep.subr.mxu0 %v4032
  %4330 = vmatpush1.msra.mxu0 %v4031
  %4331 = vmatprep.subr.mxu0 %v4040
  %4332 = vmatpush1.msra.mxu0 %v4039
  %4333 = vmatprep.subr.mxu0 %v4048
  %4334 = vmatpush1.msra.mxu0 %v4047
  %4335 = vmatprep.subr.mxu0 %v4056
  %4336 = vmatpush1.msra.mxu0 %v4055
  %4337 = vmatprep.subr.mxu0 %v4064
  %4338 = vmatpush1.msra.mxu0 %v4063
  %4339 = vmatprep.subr.mxu0 0.0
  %4340 = vmatpush1.msra.mxu0 0.0
  %4341 = vmatprep.subr.mxu0 0.0
  %4342 = vmatpush1.msra.mxu0 0.0
  %4343 = vmatprep.subr.mxu0 0.0
  %4344 = vmatpush1.msra.mxu0 0.0
  %4345 = vmatprep.subr.mxu0 0.0
  %4346 = vmatpush1.msra.mxu0 0.0
  %4347 = vmatprep.subr.mxu0 0.0
  %4348 = vmatpush1.msra.mxu0 0.0
  %4349 = vmatprep.subr.mxu0 0.0
  %4350 = vmatpush1.msra.mxu0 0.0
  %4351 = vmatprep.subr.mxu0 0.0
  %4352 = vmatpush1.msra.mxu0 0.0
  %4353 = vmatprep.subr.mxu0 0.0
  %4354 = vmatpush1.msra.mxu0 0.0
  %4355 = vmatprep.subr.mxu0 0.0
  %4356 = vmatpush1.msra.mxu0 0.0
  %4357 = vmatprep.subr.mxu0 0.0
  %4358 = vmatpush1.msra.mxu0 0.0
  %4359 = vmatprep.subr.mxu0 0.0
  %4360 = vmatpush1.msra.mxu0 0.0
  %4361 = vmatprep.subr.mxu0 0.0
  %4362 = vmatpush1.msra.mxu0 0.0
  %4363 = vmatprep.subr.mxu0 0.0
  %4364 = vmatpush1.msra.mxu0 0.0
  %4365 = vmatprep.subr.mxu0 0.0
  %4366 = vmatpush1.msra.mxu0 0.0
  %4367 = vmatprep.subr.mxu0 0.0
  %4368 = vmatpush1.msra.mxu0 0.0
  %4369 = vmatprep.subr.mxu0 0.0
  %4370 = vmatpush1.msra.mxu0 0.0
  %4371 = vmatprep.subr.mxu0 0.0
  %4372 = vmatpush1.msra.mxu0 0.0
  %4373 = vmatprep.subr.mxu0 0.0
  %4374 = vmatpush1.msra.mxu0 0.0
  %4375 = vmatprep.subr.mxu0 0.0
  %4376 = vmatpush1.msra.mxu0 0.0
  %4377 = vmatprep.subr.mxu0 0.0
  %4378 = vmatpush1.msra.mxu0 0.0
  %4379 = vmatprep.subr.mxu0 0.0
  %4380 = vmatpush1.msra.mxu0 0.0
  %4381 = vmatprep.subr.mxu0 0.0
  %4382 = vmatpush1.msra.mxu0 0.0
  %4383 = vmatprep.subr.mxu0 0.0
  %4384 = vmatpush1.msra.mxu0 0.0
  %4385 = vmatprep.subr.mxu0 0.0
  %4386 = vmatpush1.msra.mxu0 0.0
  %4387 = vmatprep.mubr.f32.mxu0 0.0
  %4388 = vmatmul.mubr.f32.gmra.mrb[0].mxu0 %v4108
  %v4389 = vpop.f32.mrb[0].mxu0
  %v4390 = vadd.f32 %v4094, %v4389
  %v4391 = vpop.f32.mrb[0].mxu0
  %v4392 = vadd.f32 %v4098, %v4391
  %4393 = vdwg.mxu0
  %v4394 = vmax.f32 %v4177, 0.0
  %v4395 = vmax.f32 %v4179, 0.0
  %v4396 = vmax.f32 %v4248, 0.0
  %v4397 = vmax.f32 %v4250, 0.0
  %v4398 = vmax.f32 %v4319, 0.0
  %v4399 = vmax.f32 %v4321, 0.0
  %v4400 = vmax.f32 %v4390, 0.0
  %v4401 = vmax.f32 %v4392, 0.0
  %v4402 = vld [vmem:[%s21] sm:$0xff]
  %v4403 = vld [vmem:[%s21 + $0x8] sm:$0xff]
  %v4404 = vld [vmem:[%s21 + $0x10] sm:$0xff]
  %v4405 = vld [vmem:[%s21 + $0x18] sm:$0xff]
  %v4406 = vld [vmem:[%s21 + $0x20] sm:$0xff]
  %v4407 = vld [vmem:[%s21 + $0x28] sm:$0xff]
  %v4408 = vld [vmem:[%s21 + $0x30] sm:$0xff]
  %v4409 = vld [vmem:[%s21 + $0x38] sm:$0xff]
  %v4410 = vld [vmem:[%s21 + $0x40] sm:$0xff]
  %v4411 = vld [vmem:[%s21 + $0x48] sm:$0xff]
  %v4412 = vld [vmem:[%s21 + $0x50] sm:$0xff]
  %v4413 = vld [vmem:[%s21 + $0x58] sm:$0xff]
  %v4414 = vld [vmem:[%s21 + $0x60] sm:$0xff]
  %v4415 = vld [vmem:[%s21 + $0x68] sm:$0xff]
  %v4416 = vld [vmem:[%s21 + $0x70] sm:$0xff]
  %v4417 = vld [vmem:[%s21 + $0x78] sm:$0xff]
  %v4418 = vld [vmem:[%s21 + $0x80] sm:$0xff]
  %v4419 = vld [vmem:[%s21 + $0x88] sm:$0xff]
  %v4420 = vld [vmem:[%s21 + $0x90] sm:$0xff]
  %v4421 = vld [vmem:[%s21 + $0x98] sm:$0xff]
  %v4422 = vld [vmem:[%s21 + $0xa0] sm:$0xff]
  %v4423 = vld [vmem:[%s21 + $0xa8] sm:$0xff]
  %v4424 = vld [vmem:[%s21 + $0xb0] sm:$0xff]
  %v4425 = vld [vmem:[%s21 + $0xb8] sm:$0xff]
  %v4426 = vld [vmem:[%s21 + $0xc0] sm:$0xff]
  %v4427 = vld [vmem:[%s21 + $0xc8] sm:$0xff]
  %v4428 = vld [vmem:[%s21 + $0xd0] sm:$0xff]
  %v4429 = vld [vmem:[%s21 + $0xd8] sm:$0xff]
  %v4430 = vld [vmem:[%s21 + $0xe0] sm:$0xff]
  %v4431 = vld [vmem:[%s21 + $0xe8] sm:$0xff]
  %v4432 = vld [vmem:[%s21 + $0xf0] sm:$0xff]
  %v4433 = vld [vmem:[%s21 + $0xf8] sm:$0xff]
  %v4434 = vld [vmem:[%s21 + $0x100] sm:$0xff]
  %v4435 = vld [vmem:[%s21 + $0x108] sm:$0xff]
  %v4436 = vld [vmem:[%s21 + $0x110] sm:$0xff]
  %v4437 = vld [vmem:[%s21 + $0x118] sm:$0xff]
  %v4438 = vld [vmem:[%s21 + $0x120] sm:$0xff]
  %v4439 = vld [vmem:[%s21 + $0x128] sm:$0xff]
  %v4440 = vld [vmem:[%s21 + $0x130] sm:$0xff]
  %v4441 = vld [vmem:[%s21 + $0x138] sm:$0xff]
  %v4442 = vld [vmem:[%s21 + $0x140] sm:$0xff]
  %v4443 = vld [vmem:[%s21 + $0x148] sm:$0xff]
  %v4444 = vld [vmem:[%s21 + $0x150] sm:$0xff]
  %v4445 = vld [vmem:[%s21 + $0x158] sm:$0xff]
  %v4446 = vld [vmem:[%s21 + $0x160] sm:$0xff]
  %v4447 = vld [vmem:[%s21 + $0x168] sm:$0xff]
  %v4448 = vld [vmem:[%s21 + $0x170] sm:$0xff]
  %v4449 = vld [vmem:[%s21 + $0x178] sm:$0xff]
  %v4450 = vld [vmem:[%s21 + $0x180] sm:$0xff]
  %v4451 = vld [vmem:[%s21 + $0x188] sm:$0xff]
  %v4452 = vld [vmem:[%s21 + $0x190] sm:$0xff]
  %v4453 = vld [vmem:[%s21 + $0x198] sm:$0xff]
  %v4454 = vld [vmem:[%s21 + $0x1a0] sm:$0xff]
  %v4455 = vld [vmem:[%s21 + $0x1a8] sm:$0xff]
  %v4456 = vld [vmem:[%s21 + $0x1b0] sm:$0xff]
  %v4457 = vld [vmem:[%s21 + $0x1b8] sm:$0xff]
  %v4458 = vld [vmem:[%s21 + $0x1c0] sm:$0xff]
  %v4459 = vld [vmem:[%s21 + $0x1c8] sm:$0xff]
  %v4460 = vld [vmem:[%s21 + $0x1d0] sm:$0xff]
  %v4461 = vld [vmem:[%s21 + $0x1d8] sm:$0xff]
  %v4462 = vld [vmem:[%s21 + $0x1e0] sm:$0xff]
  %v4463 = vld [vmem:[%s21 + $0x1e8] sm:$0xff]
  %v4464 = vld [vmem:[%s21 + $0x1f0] sm:$0xff]
  %v4465 = vld [vmem:[%s21 + $0x1f8] sm:$0xff]
  %v4466 = vld [vmem:[%s21 + $0x200] sm:$0xff]
  %v4467 = vld [vmem:[%s21 + $0x208] sm:$0xff]
  %v4468 = vld [vmem:[%s21 + $0x210] sm:$0xff]
  %v4469 = vld [vmem:[%s21 + $0x218] sm:$0xff]
  %v4470 = vld [vmem:[%s21 + $0x220] sm:$0xff]
  %v4471 = vld [vmem:[%s21 + $0x228] sm:$0xff]
  %v4472 = vld [vmem:[%s21 + $0x230] sm:$0xff]
  %v4473 = vld [vmem:[%s21 + $0x238] sm:$0xff]
  %v4474 = vld [vmem:[%s21 + $0x240] sm:$0xff]
  %v4475 = vld [vmem:[%s21 + $0x248] sm:$0xff]
  %v4476 = vld [vmem:[%s21 + $0x250] sm:$0xff]
  %v4477 = vld [vmem:[%s21 + $0x258] sm:$0xff]
  %v4478 = vld [vmem:[%s21 + $0x260] sm:$0xff]
  %v4479 = vld [vmem:[%s21 + $0x268] sm:$0xff]
  %v4480 = vld [vmem:[%s21 + $0x270] sm:$0xff]
  %v4481 = vld [vmem:[%s21 + $0x278] sm:$0xff]
  %v4482 = vld [vmem:[%s21 + $0x280] sm:$0xff]
  %v4483 = vld [vmem:[%s21 + $0x288] sm:$0xff]
  %v4484 = vld [vmem:[%s21 + $0x290] sm:$0xff]
  %v4485 = vld [vmem:[%s21 + $0x298] sm:$0xff]
  %v4486 = vld [vmem:[%s21 + $0x2a0] sm:$0xff]
  %v4487 = vld [vmem:[%s21 + $0x2a8] sm:$0xff]
  %v4488 = vld [vmem:[%s21 + $0x2b0] sm:$0xff]
  %v4489 = vld [vmem:[%s21 + $0x2b8] sm:$0xff]
  %v4490 = vld [vmem:[%s21 + $0x2c0] sm:$0xff]
  %v4491 = vld [vmem:[%s21 + $0x2c8] sm:$0xff]
  %v4492 = vld [vmem:[%s21 + $0x2d0] sm:$0xff]
  %v4493 = vld [vmem:[%s21 + $0x2d8] sm:$0xff]
  %v4494 = vld [vmem:[%s21 + $0x2e0] sm:$0xff]
  %v4495 = vld [vmem:[%s21 + $0x2e8] sm:$0xff]
  %v4496 = vld [vmem:[%s21 + $0x2f0] sm:$0xff]
  %v4497 = vld [vmem:[%s21 + $0x2f8] sm:$0xff]
  %v4498 = vld [vmem:[%s21 + $0x300] sm:$0xff]
  %v4499 = vld [vmem:[%s21 + $0x308] sm:$0xff]
  %v4500 = vld [vmem:[%s21 + $0x310] sm:$0xff]
  %v4501 = vld [vmem:[%s21 + $0x318] sm:$0xff]
  %v4502 = vld [vmem:[%s21 + $0x320] sm:$0xff]
  %v4503 = vld [vmem:[%s21 + $0x328] sm:$0xff]
  %v4504 = vld [vmem:[%s21 + $0x330] sm:$0xff]
  %v4505 = vld [vmem:[%s21 + $0x338] sm:$0xff]
  %v4506 = vld [vmem:[%s21 + $0x340] sm:$0xff]
  %v4507 = vld [vmem:[%s21 + $0x348] sm:$0xff]
  %v4508 = vld [vmem:[%s21 + $0x350] sm:$0xff]
  %v4509 = vld [vmem:[%s21 + $0x358] sm:$0xff]
  %v4510 = vld [vmem:[%s21 + $0x360] sm:$0xff]
  %v4511 = vld [vmem:[%s21 + $0x368] sm:$0xff]
  %v4512 = vld [vmem:[%s21 + $0x370] sm:$0xff]
  %v4513 = vld [vmem:[%s21 + $0x378] sm:$0xff]
  %v4514 = vld [vmem:[%s21 + $0x380] sm:$0xff]
  %v4515 = vld [vmem:[%s21 + $0x388] sm:$0xff]
  %v4516 = vld [vmem:[%s21 + $0x390] sm:$0xff]
  %v4517 = vld [vmem:[%s21 + $0x398] sm:$0xff]
  %v4518 = vld [vmem:[%s21 + $0x3a0] sm:$0xff]
  %v4519 = vld [vmem:[%s21 + $0x3a8] sm:$0xff]
  %v4520 = vld [vmem:[%s21 + $0x3b0] sm:$0xff]
  %v4521 = vld [vmem:[%s21 + $0x3b8] sm:$0xff]
  %v4522 = vld [vmem:[%s21 + $0x3c0] sm:$0xff]
  %v4523 = vld [vmem:[%s21 + $0x3c8] sm:$0xff]
  %v4524 = vld [vmem:[%s21 + $0x3d0] sm:$0xff]
  %v4525 = vld [vmem:[%s21 + $0x3d8] sm:$0xff]
  %v4526 = vld [vmem:[%s21 + $0x3e0] sm:$0xff]
  %v4527 = vld [vmem:[%s21 + $0x3e8] sm:$0xff]
  %v4528 = vld [vmem:[%s21 + $0x3f0] sm:$0xff]
  %v4529 = vld [vmem:[%s21 + $0x3f8] sm:$0xff]
  %v4530 = vld [vmem:[%s21 + $0x400] sm:$0xff]
  %v4531 = vld [vmem:[%s21 + $0x408] sm:$0xff]
  %v4532 = vld [vmem:[%s21 + $0x410] sm:$0xff]
  %v4533 = vld [vmem:[%s21 + $0x418] sm:$0xff]
  %v4534 = vld [vmem:[%s21 + $0x420] sm:$0xff]
  %v4535 = vld [vmem:[%s21 + $0x428] sm:$0xff]
  %v4536 = vld [vmem:[%s21 + $0x430] sm:$0xff]
  %v4537 = vld [vmem:[%s21 + $0x438] sm:$0xff]
  %v4538 = vld [vmem:[%s21 + $0x440] sm:$0xff]
  %v4539 = vld [vmem:[%s21 + $0x448] sm:$0xff]
  %v4540 = vld [vmem:[%s21 + $0x450] sm:$0xff]
  %v4541 = vld [vmem:[%s21 + $0x458] sm:$0xff]
  %v4542 = vld [vmem:[%s21 + $0x460] sm:$0xff]
  %v4543 = vld [vmem:[%s21 + $0x468] sm:$0xff]
  %v4544 = vld [vmem:[%s21 + $0x470] sm:$0xff]
  %v4545 = vld [vmem:[%s21 + $0x478] sm:$0xff]
  %v4546 = vld [vmem:[%s21 + $0x480] sm:$0xff]
  %v4547 = vld [vmem:[%s21 + $0x488] sm:$0xff]
  %v4548 = vld [vmem:[%s21 + $0x490] sm:$0xff]
  %v4549 = vld [vmem:[%s21 + $0x498] sm:$0xff]
  %v4550 = vld [vmem:[%s21 + $0x4a0] sm:$0xff]
  %v4551 = vld [vmem:[%s21 + $0x4a8] sm:$0xff]
  %v4552 = vld [vmem:[%s21 + $0x4b0] sm:$0xff]
  %v4553 = vld [vmem:[%s21 + $0x4b8] sm:$0xff]
  %v4554 = vld [vmem:[%s21 + $0x4c0] sm:$0xff]
  %v4555 = vld [vmem:[%s21 + $0x4c8] sm:$0xff]
  %v4556 = vld [vmem:[%s21 + $0x4d0] sm:$0xff]
  %v4557 = vld [vmem:[%s21 + $0x4d8] sm:$0xff]
  %v4558 = vld [vmem:[%s21 + $0x4e0] sm:$0xff]
  %v4559 = vld [vmem:[%s21 + $0x4e8] sm:$0xff]
  %v4560 = vld [vmem:[%s21 + $0x4f0] sm:$0xff]
  %v4561 = vld [vmem:[%s21 + $0x4f8] sm:$0xff]
  %v4562 = vld [vmem:[%s21 + $0x500] sm:$0xff]
  %v4563 = vld [vmem:[%s21 + $0x508] sm:$0xff]
  %v4564 = vld [vmem:[%s21 + $0x510] sm:$0xff]
  %v4565 = vld [vmem:[%s21 + $0x518] sm:$0xff]
  %v4566 = vld [vmem:[%s21 + $0x520] sm:$0xff]
  %v4567 = vld [vmem:[%s21 + $0x528] sm:$0xff]
  %v4568 = vld [vmem:[%s21 + $0x530] sm:$0xff]
  %v4569 = vld [vmem:[%s21 + $0x538] sm:$0xff]
  %v4570 = vld [vmem:[%s21 + $0x540] sm:$0xff]
  %v4571 = vld [vmem:[%s21 + $0x548] sm:$0xff]
  %v4572 = vld [vmem:[%s21 + $0x550] sm:$0xff]
  %v4573 = vld [vmem:[%s21 + $0x558] sm:$0xff]
  %v4574 = vld [vmem:[%s21 + $0x560] sm:$0xff]
  %v4575 = vld [vmem:[%s21 + $0x568] sm:$0xff]
  %v4576 = vld [vmem:[%s21 + $0x570] sm:$0xff]
  %v4577 = vld [vmem:[%s21 + $0x578] sm:$0xff]
  %v4578 = vld [vmem:[%s21 + $0x580] sm:$0xff]
  %v4579 = vld [vmem:[%s21 + $0x588] sm:$0xff]
  %v4580 = vld [vmem:[%s21 + $0x590] sm:$0xff]
  %v4581 = vld [vmem:[%s21 + $0x598] sm:$0xff]
  %v4582 = vld [vmem:[%s21 + $0x5a0] sm:$0xff]
  %v4583 = vld [vmem:[%s21 + $0x5a8] sm:$0xff]
  %v4584 = vld [vmem:[%s21 + $0x5b0] sm:$0xff]
  %v4585 = vld [vmem:[%s21 + $0x5b8] sm:$0xff]
  %v4586 = vld [vmem:[%s21 + $0x5c0] sm:$0xff]
  %v4587 = vld [vmem:[%s21 + $0x5c8] sm:$0xff]
  %v4588 = vld [vmem:[%s21 + $0x5d0] sm:$0xff]
  %v4589 = vld [vmem:[%s21 + $0x5d8] sm:$0xff]
  %v4590 = vld [vmem:[%s21 + $0x5e0] sm:$0xff]
  %v4591 = vld [vmem:[%s21 + $0x5e8] sm:$0xff]
  %v4592 = vld [vmem:[%s21 + $0x5f0] sm:$0xff]
  %v4593 = vld [vmem:[%s21 + $0x5f8] sm:$0xff]
  %v4594 = vld [vmem:[%s21 + $0x600] sm:$0xff]
  %v4595 = vld [vmem:[%s21 + $0x608] sm:$0xff]
  %v4596 = vld [vmem:[%s21 + $0x610] sm:$0xff]
  %v4597 = vld [vmem:[%s21 + $0x618] sm:$0xff]
  %v4598 = vld [vmem:[%s21 + $0x620] sm:$0xff]
  %v4599 = vld [vmem:[%s21 + $0x628] sm:$0xff]
  %v4600 = vld [vmem:[%s21 + $0x630] sm:$0xff]
  %v4601 = vld [vmem:[%s21 + $0x638] sm:$0xff]
  %v4602 = vld [vmem:[%s21 + $0x640] sm:$0xff]
  %v4603 = vld [vmem:[%s21 + $0x648] sm:$0xff]
  %v4604 = vld [vmem:[%s21 + $0x650] sm:$0xff]
  %v4605 = vld [vmem:[%s21 + $0x658] sm:$0xff]
  %v4606 = vld [vmem:[%s21 + $0x660] sm:$0xff]
  %v4607 = vld [vmem:[%s21 + $0x668] sm:$0xff]
  %v4608 = vld [vmem:[%s21 + $0x670] sm:$0xff]
  %v4609 = vld [vmem:[%s21 + $0x678] sm:$0xff]
  %v4610 = vld [vmem:[%s21 + $0x680] sm:$0xff]
  %v4611 = vld [vmem:[%s21 + $0x688] sm:$0xff]
  %v4612 = vld [vmem:[%s21 + $0x690] sm:$0xff]
  %v4613 = vld [vmem:[%s21 + $0x698] sm:$0xff]
  %v4614 = vld [vmem:[%s21 + $0x6a0] sm:$0xff]
  %v4615 = vld [vmem:[%s21 + $0x6a8] sm:$0xff]
  %v4616 = vld [vmem:[%s21 + $0x6b0] sm:$0xff]
  %v4617 = vld [vmem:[%s21 + $0x6b8] sm:$0xff]
  %v4618 = vld [vmem:[%s21 + $0x6c0] sm:$0xff]
  %v4619 = vld [vmem:[%s21 + $0x6c8] sm:$0xff]
  %v4620 = vld [vmem:[%s21 + $0x6d0] sm:$0xff]
  %v4621 = vld [vmem:[%s21 + $0x6d8] sm:$0xff]
  %v4622 = vld [vmem:[%s21 + $0x6e0] sm:$0xff]
  %v4623 = vld [vmem:[%s21 + $0x6e8] sm:$0xff]
  %v4624 = vld [vmem:[%s21 + $0x6f0] sm:$0xff]
  %v4625 = vld [vmem:[%s21 + $0x6f8] sm:$0xff]
  %v4626 = vld [vmem:[%s21 + $0x700] sm:$0xff]
  %v4627 = vld [vmem:[%s21 + $0x708] sm:$0xff]
  %v4628 = vld [vmem:[%s21 + $0x710] sm:$0xff]
  %v4629 = vld [vmem:[%s21 + $0x718] sm:$0xff]
  %v4630 = vld [vmem:[%s21 + $0x720] sm:$0xff]
  %v4631 = vld [vmem:[%s21 + $0x728] sm:$0xff]
  %v4632 = vld [vmem:[%s21 + $0x730] sm:$0xff]
  %v4633 = vld [vmem:[%s21 + $0x738] sm:$0xff]
  %v4634 = vld [vmem:[%s21 + $0x740] sm:$0xff]
  %v4635 = vld [vmem:[%s21 + $0x748] sm:$0xff]
  %v4636 = vld [vmem:[%s21 + $0x750] sm:$0xff]
  %v4637 = vld [vmem:[%s21 + $0x758] sm:$0xff]
  %v4638 = vld [vmem:[%s21 + $0x760] sm:$0xff]
  %v4639 = vld [vmem:[%s21 + $0x768] sm:$0xff]
  %v4640 = vld [vmem:[%s21 + $0x770] sm:$0xff]
  %v4641 = vld [vmem:[%s21 + $0x778] sm:$0xff]
  %v4642 = vld [vmem:[%s21 + $0x780] sm:$0xff]
  %v4643 = vld [vmem:[%s21 + $0x788] sm:$0xff]
  %v4644 = vld [vmem:[%s21 + $0x790] sm:$0xff]
  %v4645 = vld [vmem:[%s21 + $0x798] sm:$0xff]
  %v4646 = vld [vmem:[%s21 + $0x7a0] sm:$0xff]
  %v4647 = vld [vmem:[%s21 + $0x7a8] sm:$0xff]
  %v4648 = vld [vmem:[%s21 + $0x7b0] sm:$0xff]
  %v4649 = vld [vmem:[%s21 + $0x7b8] sm:$0xff]
  %v4650 = vld [vmem:[%s21 + $0x7c0] sm:$0xff]
  %v4651 = vld [vmem:[%s21 + $0x7c8] sm:$0xff]
  %v4652 = vld [vmem:[%s21 + $0x7d0] sm:$0xff]
  %v4653 = vld [vmem:[%s21 + $0x7d8] sm:$0xff]
  %v4654 = vld [vmem:[%s21 + $0x7e0] sm:$0xff]
  %v4655 = vld [vmem:[%s21 + $0x7e8] sm:$0xff]
  %v4656 = vld [vmem:[%s21 + $0x7f0] sm:$0xff]
  %v4657 = vld [vmem:[%s21 + $0x7f8] sm:$0xff]
  %v4658 = vld [vmem:[%s21 + $0x800] sm:$0xff]
  %v4659 = vld [vmem:[%s21 + $0x808] sm:$0xff]
  %v4660 = vld [vmem:[%s21 + $0x810] sm:$0xff]
  %v4661 = vld [vmem:[%s21 + $0x818] sm:$0xff]
  %v4662 = vld [vmem:[%s21 + $0x820] sm:$0xff]
  %v4663 = vld [vmem:[%s21 + $0x828] sm:$0xff]
  %v4664 = vld [vmem:[%s21 + $0x830] sm:$0xff]
  %v4665 = vld [vmem:[%s21 + $0x838] sm:$0xff]
  %v4666 = vld [vmem:[%s21 + $0x840] sm:$0xff]
  %v4667 = vld [vmem:[%s21 + $0x848] sm:$0xff]
  %v4668 = vld [vmem:[%s21 + $0x850] sm:$0xff]
  %v4669 = vld [vmem:[%s21 + $0x858] sm:$0xff]
  %v4670 = vld [vmem:[%s21 + $0x860] sm:$0xff]
  %v4671 = vld [vmem:[%s21 + $0x868] sm:$0xff]
  %v4672 = vld [vmem:[%s21 + $0x870] sm:$0xff]
  %v4673 = vld [vmem:[%s21 + $0x878] sm:$0xff]
  %v4674 = vld [vmem:[%s21 + $0x880] sm:$0xff]
  %v4675 = vld [vmem:[%s21 + $0x888] sm:$0xff]
  %v4676 = vld [vmem:[%s21 + $0x890] sm:$0xff]
  %v4677 = vld [vmem:[%s21 + $0x898] sm:$0xff]
  %v4678 = vld [vmem:[%s21 + $0x8a0] sm:$0xff]
  %v4679 = vld [vmem:[%s21 + $0x8a8] sm:$0xff]
  %v4680 = vld [vmem:[%s21 + $0x8b0] sm:$0xff]
  %v4681 = vld [vmem:[%s21 + $0x8b8] sm:$0xff]
  %v4682 = vld [vmem:[%s21 + $0x8c0] sm:$0xff]
  %v4683 = vld [vmem:[%s21 + $0x8c8] sm:$0xff]
  %v4684 = vld [vmem:[%s21 + $0x8d0] sm:$0xff]
  %v4685 = vld [vmem:[%s21 + $0x8d8] sm:$0xff]
  %v4686 = vld [vmem:[%s21 + $0x8e0] sm:$0xff]
  %v4687 = vld [vmem:[%s21 + $0x8e8] sm:$0xff]
  %v4688 = vld [vmem:[%s21 + $0x8f0] sm:$0xff]
  %v4689 = vld [vmem:[%s21 + $0x8f8] sm:$0xff]
  %v4690 = vld [vmem:[%s21 + $0x900] sm:$0xff]
  %v4691 = vld [vmem:[%s21 + $0x908] sm:$0xff]
  %v4692 = vld [vmem:[%s21 + $0x910] sm:$0xff]
  %v4693 = vld [vmem:[%s21 + $0x918] sm:$0xff]
  %v4694 = vld [vmem:[%s21 + $0x920] sm:$0xff]
  %v4695 = vld [vmem:[%s21 + $0x928] sm:$0xff]
  %v4696 = vld [vmem:[%s21 + $0x930] sm:$0xff]
  %v4697 = vld [vmem:[%s21 + $0x938] sm:$0xff]
  %v4698 = vld [vmem:[%s21 + $0x940] sm:$0xff]
  %v4699 = vld [vmem:[%s21 + $0x948] sm:$0xff]
  %v4700 = vld [vmem:[%s21 + $0x950] sm:$0xff]
  %v4701 = vld [vmem:[%s21 + $0x958] sm:$0xff]
  %v4702 = vld [vmem:[%s21 + $0x960] sm:$0xff]
  %v4703 = vld [vmem:[%s21 + $0x968] sm:$0xff]
  %v4704 = vld [vmem:[%s21 + $0x970] sm:$0xff]
  %v4705 = vld [vmem:[%s21 + $0x978] sm:$0xff]
  %v4706 = vld [vmem:[%s21 + $0x980] sm:$0xff]
  %v4707 = vld [vmem:[%s21 + $0x988] sm:$0xff]
  %v4708 = vld [vmem:[%s21 + $0x990] sm:$0xff]
  %v4709 = vld [vmem:[%s21 + $0x998] sm:$0xff]
  %v4710 = vld [vmem:[%s21 + $0x9a0] sm:$0xff]
  %v4711 = vld [vmem:[%s21 + $0x9a8] sm:$0xff]
  %v4712 = vld [vmem:[%s21 + $0x9b0] sm:$0xff]
  %v4713 = vld [vmem:[%s21 + $0x9b8] sm:$0xff]
  %v4714 = vld [vmem:[%s21 + $0x9c0] sm:$0xff]
  %v4715 = vld [vmem:[%s21 + $0x9c8] sm:$0xff]
  %v4716 = vld [vmem:[%s21 + $0x9d0] sm:$0xff]
  %v4717 = vld [vmem:[%s21 + $0x9d8] sm:$0xff]
  %v4718 = vld [vmem:[%s21 + $0x9e0] sm:$0xff]
  %v4719 = vld [vmem:[%s21 + $0x9e8] sm:$0xff]
  %v4720 = vld [vmem:[%s21 + $0x9f0] sm:$0xff]
  %v4721 = vld [vmem:[%s21 + $0x9f8] sm:$0xff]
  %v4722 = vld [vmem:[%s21 + $0xa00] sm:$0xff]
  %v4723 = vld [vmem:[%s21 + $0xa08] sm:$0xff]
  %v4724 = vld [vmem:[%s21 + $0xa10] sm:$0xff]
  %v4725 = vld [vmem:[%s21 + $0xa18] sm:$0xff]
  %v4726 = vld [vmem:[%s21 + $0xa20] sm:$0xff]
  %v4727 = vld [vmem:[%s21 + $0xa28] sm:$0xff]
  %v4728 = vld [vmem:[%s21 + $0xa30] sm:$0xff]
  %v4729 = vld [vmem:[%s21 + $0xa38] sm:$0xff]
  %v4730 = vld [vmem:[%s21 + $0xa40] sm:$0xff]
  %v4731 = vld [vmem:[%s21 + $0xa48] sm:$0xff]
  %v4732 = vld [vmem:[%s21 + $0xa50] sm:$0xff]
  %v4733 = vld [vmem:[%s21 + $0xa58] sm:$0xff]
  %v4734 = vld [vmem:[%s21 + $0xa60] sm:$0xff]
  %v4735 = vld [vmem:[%s21 + $0xa68] sm:$0xff]
  %v4736 = vld [vmem:[%s21 + $0xa70] sm:$0xff]
  %v4737 = vld [vmem:[%s21 + $0xa78] sm:$0xff]
  %v4738 = vld [vmem:[%s21 + $0xa80] sm:$0xff]
  %v4739 = vld [vmem:[%s21 + $0xa88] sm:$0xff]
  %v4740 = vld [vmem:[%s21 + $0xa90] sm:$0xff]
  %v4741 = vld [vmem:[%s21 + $0xa98] sm:$0xff]
  %v4742 = vld [vmem:[%s21 + $0xaa0] sm:$0xff]
  %v4743 = vld [vmem:[%s21 + $0xaa8] sm:$0xff]
  %v4744 = vld [vmem:[%s21 + $0xab0] sm:$0xff]
  %v4745 = vld [vmem:[%s21 + $0xab8] sm:$0xff]
  %v4746 = vld [vmem:[%s21 + $0xac0] sm:$0xff]
  %v4747 = vld [vmem:[%s21 + $0xac8] sm:$0xff]
  %v4748 = vld [vmem:[%s21 + $0xad0] sm:$0xff]
  %v4749 = vld [vmem:[%s21 + $0xad8] sm:$0xff]
  %v4750 = vld [vmem:[%s21 + $0xae0] sm:$0xff]
  %v4751 = vld [vmem:[%s21 + $0xae8] sm:$0xff]
  %v4752 = vld [vmem:[%s21 + $0xaf0] sm:$0xff]
  %v4753 = vld [vmem:[%s21 + $0xaf8] sm:$0xff]
  %v4754 = vld [vmem:[%s21 + $0xb00] sm:$0xff]
  %v4755 = vld [vmem:[%s21 + $0xb08] sm:$0xff]
  %v4756 = vld [vmem:[%s21 + $0xb10] sm:$0xff]
  %v4757 = vld [vmem:[%s21 + $0xb18] sm:$0xff]
  %v4758 = vld [vmem:[%s21 + $0xb20] sm:$0xff]
  %v4759 = vld [vmem:[%s21 + $0xb28] sm:$0xff]
  %v4760 = vld [vmem:[%s21 + $0xb30] sm:$0xff]
  %v4761 = vld [vmem:[%s21 + $0xb38] sm:$0xff]
  %v4762 = vld [vmem:[%s21 + $0xb40] sm:$0xff]
  %v4763 = vld [vmem:[%s21 + $0xb48] sm:$0xff]
  %v4764 = vld [vmem:[%s21 + $0xb50] sm:$0xff]
  %v4765 = vld [vmem:[%s21 + $0xb58] sm:$0xff]
  %v4766 = vld [vmem:[%s21 + $0xb60] sm:$0xff]
  %v4767 = vld [vmem:[%s21 + $0xb68] sm:$0xff]
  %v4768 = vld [vmem:[%s21 + $0xb70] sm:$0xff]
  %v4769 = vld [vmem:[%s21 + $0xb78] sm:$0xff]
  %v4770 = vld [vmem:[%s21 + $0xb80] sm:$0xff]
  %v4771 = vld [vmem:[%s21 + $0xb88] sm:$0xff]
  %v4772 = vld [vmem:[%s21 + $0xb90] sm:$0xff]
  %v4773 = vld [vmem:[%s21 + $0xb98] sm:$0xff]
  %v4774 = vld [vmem:[%s21 + $0xba0] sm:$0xff]
  %v4775 = vld [vmem:[%s21 + $0xba8] sm:$0xff]
  %v4776 = vld [vmem:[%s21 + $0xbb0] sm:$0xff]
  %v4777 = vld [vmem:[%s21 + $0xbb8] sm:$0xff]
  %v4778 = vld [vmem:[%s21 + $0xbc0] sm:$0xff]
  %v4779 = vld [vmem:[%s21 + $0xbc8] sm:$0xff]
  %v4780 = vld [vmem:[%s21 + $0xbd0] sm:$0xff]
  %v4781 = vld [vmem:[%s21 + $0xbd8] sm:$0xff]
  %v4782 = vld [vmem:[%s21 + $0xbe0] sm:$0xff]
  %v4783 = vld [vmem:[%s21 + $0xbe8] sm:$0xff]
  %v4784 = vld [vmem:[%s21 + $0xbf0] sm:$0xff]
  %v4785 = vld [vmem:[%s21 + $0xbf8] sm:$0xff]
  %v4786 = vld [vmem:[%s21 + $0xc00] sm:$0xff]
  %v4787 = vld [vmem:[%s21 + $0xc08] sm:$0xff]
  %v4788 = vld [vmem:[%s21 + $0xc10] sm:$0xff]
  %v4789 = vld [vmem:[%s21 + $0xc18] sm:$0xff]
  %v4790 = vld [vmem:[%s21 + $0xc20] sm:$0xff]
  %v4791 = vld [vmem:[%s21 + $0xc28] sm:$0xff]
  %v4792 = vld [vmem:[%s21 + $0xc30] sm:$0xff]
  %v4793 = vld [vmem:[%s21 + $0xc38] sm:$0xff]
  %v4794 = vld [vmem:[%s21 + $0xc40] sm:$0xff]
  %v4795 = vld [vmem:[%s21 + $0xc48] sm:$0xff]
  %v4796 = vld [vmem:[%s21 + $0xc50] sm:$0xff]
  %v4797 = vld [vmem:[%s21 + $0xc58] sm:$0xff]
  %v4798 = vld [vmem:[%s21 + $0xc60] sm:$0xff]
  %v4799 = vld [vmem:[%s21 + $0xc68] sm:$0xff]
  %v4800 = vld [vmem:[%s21 + $0xc70] sm:$0xff]
  %v4801 = vld [vmem:[%s21 + $0xc78] sm:$0xff]
  %v4802 = vld [vmem:[%s21 + $0xc80] sm:$0xff]
  %v4803 = vld [vmem:[%s21 + $0xc88] sm:$0xff]
  %v4804 = vld [vmem:[%s21 + $0xc90] sm:$0xff]
  %v4805 = vld [vmem:[%s21 + $0xc98] sm:$0xff]
  %v4806 = vld [vmem:[%s21 + $0xca0] sm:$0xff]
  %v4807 = vld [vmem:[%s21 + $0xca8] sm:$0xff]
  %v4808 = vld [vmem:[%s21 + $0xcb0] sm:$0xff]
  %v4809 = vld [vmem:[%s21 + $0xcb8] sm:$0xff]
  %v4810 = vld [vmem:[%s21 + $0xcc0] sm:$0xff]
  %v4811 = vld [vmem:[%s21 + $0xcc8] sm:$0xff]
  %v4812 = vld [vmem:[%s21 + $0xcd0] sm:$0xff]
  %v4813 = vld [vmem:[%s21 + $0xcd8] sm:$0xff]
  %v4814 = vld [vmem:[%s21 + $0xce0] sm:$0xff]
  %v4815 = vld [vmem:[%s21 + $0xce8] sm:$0xff]
  %v4816 = vld [vmem:[%s21 + $0xcf0] sm:$0xff]
  %v4817 = vld [vmem:[%s21 + $0xcf8] sm:$0xff]
  %v4818 = vld [vmem:[%s21 + $0xd00] sm:$0xff]
  %v4819 = vld [vmem:[%s21 + $0xd08] sm:$0xff]
  %v4820 = vld [vmem:[%s21 + $0xd10] sm:$0xff]
  %v4821 = vld [vmem:[%s21 + $0xd18] sm:$0xff]
  %v4822 = vld [vmem:[%s21 + $0xd20] sm:$0xff]
  %v4823 = vld [vmem:[%s21 + $0xd28] sm:$0xff]
  %v4824 = vld [vmem:[%s21 + $0xd30] sm:$0xff]
  %v4825 = vld [vmem:[%s21 + $0xd38] sm:$0xff]
  %v4826 = vld [vmem:[%s21 + $0xd40] sm:$0xff]
  %v4827 = vld [vmem:[%s21 + $0xd48] sm:$0xff]
  %v4828 = vld [vmem:[%s21 + $0xd50] sm:$0xff]
  %v4829 = vld [vmem:[%s21 + $0xd58] sm:$0xff]
  %v4830 = vld [vmem:[%s21 + $0xd60] sm:$0xff]
  %v4831 = vld [vmem:[%s21 + $0xd68] sm:$0xff]
  %v4832 = vld [vmem:[%s21 + $0xd70] sm:$0xff]
  %v4833 = vld [vmem:[%s21 + $0xd78] sm:$0xff]
  %v4834 = vld [vmem:[%s21 + $0xd80] sm:$0xff]
  %v4835 = vld [vmem:[%s21 + $0xd88] sm:$0xff]
  %v4836 = vld [vmem:[%s21 + $0xd90] sm:$0xff]
  %v4837 = vld [vmem:[%s21 + $0xd98] sm:$0xff]
  %v4838 = vld [vmem:[%s21 + $0xda0] sm:$0xff]
  %v4839 = vld [vmem:[%s21 + $0xda8] sm:$0xff]
  %v4840 = vld [vmem:[%s21 + $0xdb0] sm:$0xff]
  %v4841 = vld [vmem:[%s21 + $0xdb8] sm:$0xff]
  %v4842 = vld [vmem:[%s21 + $0xdc0] sm:$0xff]
  %v4843 = vld [vmem:[%s21 + $0xdc8] sm:$0xff]
  %v4844 = vld [vmem:[%s21 + $0xdd0] sm:$0xff]
  %v4845 = vld [vmem:[%s21 + $0xdd8] sm:$0xff]
  %v4846 = vld [vmem:[%s21 + $0xde0] sm:$0xff]
  %v4847 = vld [vmem:[%s21 + $0xde8] sm:$0xff]
  %v4848 = vld [vmem:[%s21 + $0xdf0] sm:$0xff]
  %v4849 = vld [vmem:[%s21 + $0xdf8] sm:$0xff]
  %v4850 = vld [vmem:[%s21 + $0xe00] sm:$0xff]
  %v4851 = vld [vmem:[%s21 + $0xe08] sm:$0xff]
  %v4852 = vld [vmem:[%s21 + $0xe10] sm:$0xff]
  %v4853 = vld [vmem:[%s21 + $0xe18] sm:$0xff]
  %v4854 = vld [vmem:[%s21 + $0xe20] sm:$0xff]
  %v4855 = vld [vmem:[%s21 + $0xe28] sm:$0xff]
  %v4856 = vld [vmem:[%s21 + $0xe30] sm:$0xff]
  %v4857 = vld [vmem:[%s21 + $0xe38] sm:$0xff]
  %v4858 = vld [vmem:[%s21 + $0xe40] sm:$0xff]
  %v4859 = vld [vmem:[%s21 + $0xe48] sm:$0xff]
  %v4860 = vld [vmem:[%s21 + $0xe50] sm:$0xff]
  %v4861 = vld [vmem:[%s21 + $0xe58] sm:$0xff]
  %v4862 = vld [vmem:[%s21 + $0xe60] sm:$0xff]
  %v4863 = vld [vmem:[%s21 + $0xe68] sm:$0xff]
  %v4864 = vld [vmem:[%s21 + $0xe70] sm:$0xff]
  %v4865 = vld [vmem:[%s21 + $0xe78] sm:$0xff]
  %v4866 = vld [vmem:[%s21 + $0xe80] sm:$0xff]
  %v4867 = vld [vmem:[%s21 + $0xe88] sm:$0xff]
  %v4868 = vld [vmem:[%s21 + $0xe90] sm:$0xff]
  %v4869 = vld [vmem:[%s21 + $0xe98] sm:$0xff]
  %v4870 = vld [vmem:[%s21 + $0xea0] sm:$0xff]
  %v4871 = vld [vmem:[%s21 + $0xea8] sm:$0xff]
  %v4872 = vld [vmem:[%s21 + $0xeb0] sm:$0xff]
  %v4873 = vld [vmem:[%s21 + $0xeb8] sm:$0xff]
  %v4874 = vld [vmem:[%s21 + $0xec0] sm:$0xff]
  %v4875 = vld [vmem:[%s21 + $0xec8] sm:$0xff]
  %v4876 = vld [vmem:[%s21 + $0xed0] sm:$0xff]
  %v4877 = vld [vmem:[%s21 + $0xed8] sm:$0xff]
  %v4878 = vld [vmem:[%s21 + $0xee0] sm:$0xff]
  %v4879 = vld [vmem:[%s21 + $0xee8] sm:$0xff]
  %v4880 = vld [vmem:[%s21 + $0xef0] sm:$0xff]
  %v4881 = vld [vmem:[%s21 + $0xef8] sm:$0xff]
  %v4882 = vld [vmem:[%s21 + $0xf00] sm:$0xff]
  %v4883 = vld [vmem:[%s21 + $0xf08] sm:$0xff]
  %v4884 = vld [vmem:[%s21 + $0xf10] sm:$0xff]
  %v4885 = vld [vmem:[%s21 + $0xf18] sm:$0xff]
  %v4886 = vld [vmem:[%s21 + $0xf20] sm:$0xff]
  %v4887 = vld [vmem:[%s21 + $0xf28] sm:$0xff]
  %v4888 = vld [vmem:[%s21 + $0xf30] sm:$0xff]
  %v4889 = vld [vmem:[%s21 + $0xf38] sm:$0xff]
  %v4890 = vld [vmem:[%s21 + $0xf40] sm:$0xff]
  %v4891 = vld [vmem:[%s21 + $0xf48] sm:$0xff]
  %v4892 = vld [vmem:[%s21 + $0xf50] sm:$0xff]
  %v4893 = vld [vmem:[%s21 + $0xf58] sm:$0xff]
  %v4894 = vld [vmem:[%s21 + $0xf60] sm:$0xff]
  %v4895 = vld [vmem:[%s21 + $0xf68] sm:$0xff]
  %v4896 = vld [vmem:[%s21 + $0xf70] sm:$0xff]
  %v4897 = vld [vmem:[%s21 + $0xf78] sm:$0xff]
  %v4898 = vld [vmem:[%s21 + $0xf80] sm:$0xff]
  %v4899 = vld [vmem:[%s21 + $0xf88] sm:$0xff]
  %v4900 = vld [vmem:[%s21 + $0xf90] sm:$0xff]
  %v4901 = vld [vmem:[%s21 + $0xf98] sm:$0xff]
  %v4902 = vld [vmem:[%s21 + $0xfa0] sm:$0xff]
  %v4903 = vld [vmem:[%s21 + $0xfa8] sm:$0xff]
  %v4904 = vld [vmem:[%s21 + $0xfb0] sm:$0xff]
  %v4905 = vld [vmem:[%s21 + $0xfb8] sm:$0xff]
  %v4906 = vld [vmem:[%s21 + $0xfc0] sm:$0xff]
  %v4907 = vld [vmem:[%s21 + $0xfc8] sm:$0xff]
  %v4908 = vld [vmem:[%s21 + $0xfd0] sm:$0xff]
  %v4909 = vld [vmem:[%s21 + $0xfd8] sm:$0xff]
  %v4910 = vld [vmem:[%s21 + $0xfe0] sm:$0xff]
  %v4911 = vld [vmem:[%s21 + $0xfe8] sm:$0xff]
  %v4912 = vld [vmem:[%s21 + $0xff0] sm:$0xff]
  %v4913 = vld [vmem:[%s21 + $0xff8] sm:$0xff]
  %v4914 = vld [vmem:[%s22] sm:$0xf]
  %v4916 = vlaneseq
  %v4917 = vshrl.u32 %v4916, 7
  %v4918 = vsub.s32 0, %v4917
  %v4919 = vrot.slane %v4914, %v4918
  %v4920 = vlaneseq
  %v4921 = vshrl.u32 %v4920, 7
  %v4922 = vsub.s32 1, %v4921
  %v4923 = vrot.slane %v4914, %v4922
  %v4924 = vlaneseq
  %v4925 = vshrl.u32 %v4924, 7
  %v4926 = vsub.s32 2, %v4925
  %v4927 = vrot.slane %v4914, %v4926
  %v4928 = vlaneseq
  %v4929 = vshrl.u32 %v4928, 7
  %v4930 = vsub.s32 3, %v4929
  %v4931 = vrot.slane %v4914, %v4930
  %4936 = vmatprep.subr.mxu0 %v4403
  %4937 = vmatpush1.msra.mxu0 %v4402
  %4938 = vmatprep.subr.mxu0 %v4407
  %4939 = vmatpush1.msra.mxu0 %v4406
  %4940 = vmatprep.subr.mxu0 %v4411
  %4941 = vmatpush1.msra.mxu0 %v4410
  %4942 = vmatprep.subr.mxu0 %v4415
  %4943 = vmatpush1.msra.mxu0 %v4414
  %4944 = vmatprep.subr.mxu0 %v4419
  %4945 = vmatpush1.msra.mxu0 %v4418
  %4946 = vmatprep.subr.mxu0 %v4423
  %4947 = vmatpush1.msra.mxu0 %v4422
  %4948 = vmatprep.subr.mxu0 %v4427
  %4949 = vmatpush1.msra.mxu0 %v4426
  %4950 = vmatprep.subr.mxu0 %v4431
  %4951 = vmatpush1.msra.mxu0 %v4430
  %4952 = vmatprep.subr.mxu0 %v4435
  %4953 = vmatpush1.msra.mxu0 %v4434
  %4954 = vmatprep.subr.mxu0 %v4439
  %4955 = vmatpush1.msra.mxu0 %v4438
  %4956 = vmatprep.subr.mxu0 %v4443
  %4957 = vmatpush1.msra.mxu0 %v4442
  %4958 = vmatprep.subr.mxu0 %v4447
  %4959 = vmatpush1.msra.mxu0 %v4446
  %4960 = vmatprep.subr.mxu0 %v4451
  %4961 = vmatpush1.msra.mxu0 %v4450
  %4962 = vmatprep.subr.mxu0 %v4455
  %4963 = vmatpush1.msra.mxu0 %v4454
  %4964 = vmatprep.subr.mxu0 %v4459
  %4965 = vmatpush1.msra.mxu0 %v4458
  %4966 = vmatprep.subr.mxu0 %v4463
  %4967 = vmatpush1.msra.mxu0 %v4462
  %4968 = vmatprep.subr.mxu0 %v4467
  %4969 = vmatpush1.msra.mxu0 %v4466
  %4970 = vmatprep.subr.mxu0 %v4471
  %4971 = vmatpush1.msra.mxu0 %v4470
  %4972 = vmatprep.subr.mxu0 %v4475
  %4973 = vmatpush1.msra.mxu0 %v4474
  %4974 = vmatprep.subr.mxu0 %v4479
  %4975 = vmatpush1.msra.mxu0 %v4478
  %4976 = vmatprep.subr.mxu0 %v4483
  %4977 = vmatpush1.msra.mxu0 %v4482
  %4978 = vmatprep.subr.mxu0 %v4487
  %4979 = vmatpush1.msra.mxu0 %v4486
  %4980 = vmatprep.subr.mxu0 %v4491
  %4981 = vmatpush1.msra.mxu0 %v4490
  %4982 = vmatprep.subr.mxu0 %v4495
  %4983 = vmatpush1.msra.mxu0 %v4494
  %4984 = vmatprep.subr.mxu0 %v4499
  %4985 = vmatpush1.msra.mxu0 %v4498
  %4986 = vmatprep.subr.mxu0 %v4503
  %4987 = vmatpush1.msra.mxu0 %v4502
  %4988 = vmatprep.subr.mxu0 %v4507
  %4989 = vmatpush1.msra.mxu0 %v4506
  %4990 = vmatprep.subr.mxu0 %v4511
  %4991 = vmatpush1.msra.mxu0 %v4510
  %4992 = vmatprep.subr.mxu0 %v4515
  %4993 = vmatpush1.msra.mxu0 %v4514
  %4994 = vmatprep.subr.mxu0 %v4519
  %4995 = vmatpush1.msra.mxu0 %v4518
  %4996 = vmatprep.subr.mxu0 %v4523
  %4997 = vmatpush1.msra.mxu0 %v4522
  %4998 = vmatprep.subr.mxu0 %v4527
  %4999 = vmatpush1.msra.mxu0 %v4526
  %5000 = vmatprep.mubr.f32.mxu0 %v4395
  %5001 = vmatmul.mubr.f32.gmra.mrb[0].mxu0 %v4394
  %v5002 = vpop.f32.mrb[0].mxu0
  %v5003 = vadd.f32 %v4919, %v5002
  %v5004 = vpop.f32.mrb[0].mxu0
  %v5005 = vadd.f32 %v4923, %v5004
  %5006 = vdwg.mxu0
  %5007 = vmatprep.subr.mxu0 %v4531
  %5008 = vmatpush1.msra.mxu0 %v4530
  %5009 = vmatprep.subr.mxu0 %v4535
  %5010 = vmatpush1.msra.mxu0 %v4534
  %5011 = vmatprep.subr.mxu0 %v4539
  %5012 = vmatpush1.msra.mxu0 %v4538
  %5013 = vmatprep.subr.mxu0 %v4543
  %5014 = vmatpush1.msra.mxu0 %v4542
  %5015 = vmatprep.subr.mxu0 %v4547
  %5016 = vmatpush1.msra.mxu0 %v4546
  %5017 = vmatprep.subr.mxu0 %v4551
  %5018 = vmatpush1.msra.mxu0 %v4550
  %5019 = vmatprep.subr.mxu0 %v4555
  %5020 = vmatpush1.msra.mxu0 %v4554
  %5021 = vmatprep.subr.mxu0 %v4559
  %5022 = vmatpush1.msra.mxu0 %v4558
  %5023 = vmatprep.subr.mxu0 %v4563
  %5024 = vmatpush1.msra.mxu0 %v4562
  %5025 = vmatprep.subr.mxu0 %v4567
  %5026 = vmatpush1.msra.mxu0 %v4566
  %5027 = vmatprep.subr.mxu0 %v4571
  %5028 = vmatpush1.msra.mxu0 %v4570
  %5029 = vmatprep.subr.mxu0 %v4575
  %5030 = vmatpush1.msra.mxu0 %v4574
  %5031 = vmatprep.subr.mxu0 %v4579
  %5032 = vmatpush1.msra.mxu0 %v4578
  %5033 = vmatprep.subr.mxu0 %v4583
  %5034 = vmatpush1.msra.mxu0 %v4582
  %5035 = vmatprep.subr.mxu0 %v4587
  %5036 = vmatpush1.msra.mxu0 %v4586
  %5037 = vmatprep.subr.mxu0 %v4591
  %5038 = vmatpush1.msra.mxu0 %v4590
  %5039 = vmatprep.subr.mxu0 %v4595
  %5040 = vmatpush1.msra.mxu0 %v4594
  %5041 = vmatprep.subr.mxu0 %v4599
  %5042 = vmatpush1.msra.mxu0 %v4598
  %5043 = vmatprep.subr.mxu0 %v4603
  %5044 = vmatpush1.msra.mxu0 %v4602
  %5045 = vmatprep.subr.mxu0 %v4607
  %5046 = vmatpush1.msra.mxu0 %v4606
  %5047 = vmatprep.subr.mxu0 %v4611
  %5048 = vmatpush1.msra.mxu0 %v4610
  %5049 = vmatprep.subr.mxu0 %v4615
  %5050 = vmatpush1.msra.mxu0 %v4614
  %5051 = vmatprep.subr.mxu0 %v4619
  %5052 = vmatpush1.msra.mxu0 %v4618
  %5053 = vmatprep.subr.mxu0 %v4623
  %5054 = vmatpush1.msra.mxu0 %v4622
  %5055 = vmatprep.subr.mxu0 %v4627
  %5056 = vmatpush1.msra.mxu0 %v4626
  %5057 = vmatprep.subr.mxu0 %v4631
  %5058 = vmatpush1.msra.mxu0 %v4630
  %5059 = vmatprep.subr.mxu0 %v4635
  %5060 = vmatpush1.msra.mxu0 %v4634
  %5061 = vmatprep.subr.mxu0 %v4639
  %5062 = vmatpush1.msra.mxu0 %v4638
  %5063 = vmatprep.subr.mxu0 %v4643
  %5064 = vmatpush1.msra.mxu0 %v4642
  %5065 = vmatprep.subr.mxu0 %v4647
  %5066 = vmatpush1.msra.mxu0 %v4646
  %5067 = vmatprep.subr.mxu0 %v4651
  %5068 = vmatpush1.msra.mxu0 %v4650
  %5069 = vmatprep.subr.mxu0 %v4655
  %5070 = vmatpush1.msra.mxu0 %v4654
  %5071 = vmatprep.mubr.f32.mxu0 %v4397
  %5072 = vmatmul.mubr.f32.gmra.mrb[0].mxu0 %v4396
  %v5073 = vpop.f32.mrb[0].mxu0
  %v5074 = vadd.f32 %v5003, %v5073
  %v5075 = vpop.f32.mrb[0].mxu0
  %v5076 = vadd.f32 %v5005, %v5075
  %5077 = vdwg.mxu0
  %5078 = vmatprep.subr.mxu0 %v4659
  %5079 = vmatpush1.msra.mxu0 %v4658
  %5080 = vmatprep.subr.mxu0 %v4663
  %5081 = vmatpush1.msra.mxu0 %v4662
  %5082 = vmatprep.subr.mxu0 %v4667
  %5083 = vmatpush1.msra.mxu0 %v4666
  %5084 = vmatprep.subr.mxu0 %v4671
  %5085 = vmatpush1.msra.mxu0 %v4670
  %5086 = vmatprep.subr.mxu0 %v4675
  %5087 = vmatpush1.msra.mxu0 %v4674
  %5088 = vmatprep.subr.mxu0 %v4679
  %5089 = vmatpush1.msra.mxu0 %v4678
  %5090 = vmatprep.subr.mxu0 %v4683
  %5091 = vmatpush1.msra.mxu0 %v4682
  %5092 = vmatprep.subr.mxu0 %v4687
  %5093 = vmatpush1.msra.mxu0 %v4686
  %5094 = vmatprep.subr.mxu0 %v4691
  %5095 = vmatpush1.msra.mxu0 %v4690
  %5096 = vmatprep.subr.mxu0 %v4695
  %5097 = vmatpush1.msra.mxu0 %v4694
  %5098 = vmatprep.subr.mxu0 %v4699
  %5099 = vmatpush1.msra.mxu0 %v4698
  %5100 = vmatprep.subr.mxu0 %v4703
  %5101 = vmatpush1.msra.mxu0 %v4702
  %5102 = vmatprep.subr.mxu0 %v4707
  %5103 = vmatpush1.msra.mxu0 %v4706
  %5104 = vmatprep.subr.mxu0 %v4711
  %5105 = vmatpush1.msra.mxu0 %v4710
  %5106 = vmatprep.subr.mxu0 %v4715
  %5107 = vmatpush1.msra.mxu0 %v4714
  %5108 = vmatprep.subr.mxu0 %v4719
  %5109 = vmatpush1.msra.mxu0 %v4718
  %5110 = vmatprep.subr.mxu0 %v4723
  %5111 = vmatpush1.msra.mxu0 %v4722
  %5112 = vmatprep.subr.mxu0 %v4727
  %5113 = vmatpush1.msra.mxu0 %v4726
  %5114 = vmatprep.subr.mxu0 %v4731
  %5115 = vmatpush1.msra.mxu0 %v4730
  %5116 = vmatprep.subr.mxu0 %v4735
  %5117 = vmatpush1.msra.mxu0 %v4734
  %5118 = vmatprep.subr.mxu0 %v4739
  %5119 = vmatpush1.msra.mxu0 %v4738
  %5120 = vmatprep.subr.mxu0 %v4743
  %5121 = vmatpush1.msra.mxu0 %v4742
  %5122 = vmatprep.subr.mxu0 %v4747
  %5123 = vmatpush1.msra.mxu0 %v4746
  %5124 = vmatprep.subr.mxu0 %v4751
  %5125 = vmatpush1.msra.mxu0 %v4750
  %5126 = vmatprep.subr.mxu0 %v4755
  %5127 = vmatpush1.msra.mxu0 %v4754
  %5128 = vmatprep.subr.mxu0 %v4759
  %5129 = vmatpush1.msra.mxu0 %v4758
  %5130 = vmatprep.subr.mxu0 %v4763
  %5131 = vmatpush1.msra.mxu0 %v4762
  %5132 = vmatprep.subr.mxu0 %v4767
  %5133 = vmatpush1.msra.mxu0 %v4766
  %5134 = vmatprep.subr.mxu0 %v4771
  %5135 = vmatpush1.msra.mxu0 %v4770
  %5136 = vmatprep.subr.mxu0 %v4775
  %5137 = vmatpush1.msra.mxu0 %v4774
  %5138 = vmatprep.subr.mxu0 %v4779
  %5139 = vmatpush1.msra.mxu0 %v4778
  %5140 = vmatprep.subr.mxu0 %v4783
  %5141 = vmatpush1.msra.mxu0 %v4782
  %5142 = vmatprep.mubr.f32.mxu0 %v4399
  %5143 = vmatmul.mubr.f32.gmra.mrb[0].mxu0 %v4398
  %v5144 = vpop.f32.mrb[0].mxu0
  %v5145 = vadd.f32 %v5074, %v5144
  %v5146 = vpop.f32.mrb[0].mxu0
  %v5147 = vadd.f32 %v5076, %v5146
  %5148 = vdwg.mxu0
  %5149 = vmatprep.subr.mxu0 %v4787
  %5150 = vmatpush1.msra.mxu0 %v4786
  %5151 = vmatprep.subr.mxu0 %v4791
  %5152 = vmatpush1.msra.mxu0 %v4790
  %5153 = vmatprep.subr.mxu0 %v4795
  %5154 = vmatpush1.msra.mxu0 %v4794
  %5155 = vmatprep.subr.mxu0 %v4799
  %5156 = vmatpush1.msra.mxu0 %v4798
  %5157 = vmatprep.subr.mxu0 %v4803
  %5158 = vmatpush1.msra.mxu0 %v4802
  %5159 = vmatprep.subr.mxu0 %v4807
  %5160 = vmatpush1.msra.mxu0 %v4806
  %5161 = vmatprep.subr.mxu0 %v4811
  %5162 = vmatpush1.msra.mxu0 %v4810
  %5163 = vmatprep.subr.mxu0 %v4815
  %5164 = vmatpush1.msra.mxu0 %v4814
  %5165 = vmatprep.subr.mxu0 %v4819
  %5166 = vmatpush1.msra.mxu0 %v4818
  %5167 = vmatprep.subr.mxu0 %v4823
  %5168 = vmatpush1.msra.mxu0 %v4822
  %5169 = vmatprep.subr.mxu0 %v4827
  %5170 = vmatpush1.msra.mxu0 %v4826
  %5171 = vmatprep.subr.mxu0 %v4831
  %5172 = vmatpush1.msra.mxu0 %v4830
  %5173 = vmatprep.subr.mxu0 %v4835
  %5174 = vmatpush1.msra.mxu0 %v4834
  %5175 = vmatprep.subr.mxu0 %v4839
  %5176 = vmatpush1.msra.mxu0 %v4838
  %5177 = vmatprep.subr.mxu0 %v4843
  %5178 = vmatpush1.msra.mxu0 %v4842
  %5179 = vmatprep.subr.mxu0 %v4847
  %5180 = vmatpush1.msra.mxu0 %v4846
  %5181 = vmatprep.subr.mxu0 %v4851
  %5182 = vmatpush1.msra.mxu0 %v4850
  %5183 = vmatprep.subr.mxu0 %v4855
  %5184 = vmatpush1.msra.mxu0 %v4854
  %5185 = vmatprep.subr.mxu0 %v4859
  %5186 = vmatpush1.msra.mxu0 %v4858
  %5187 = vmatprep.subr.mxu0 %v4863
  %5188 = vmatpush1.msra.mxu0 %v4862
  %5189 = vmatprep.subr.mxu0 %v4867
  %5190 = vmatpush1.msra.mxu0 %v4866
  %5191 = vmatprep.subr.mxu0 %v4871
  %5192 = vmatpush1.msra.mxu0 %v4870
  %5193 = vmatprep.subr.mxu0 %v4875
  %5194 = vmatpush1.msra.mxu0 %v4874
  %5195 = vmatprep.subr.mxu0 %v4879
  %5196 = vmatpush1.msra.mxu0 %v4878
  %5197 = vmatprep.subr.mxu0 %v4883
  %5198 = vmatpush1.msra.mxu0 %v4882
  %5199 = vmatprep.subr.mxu0 %v4887
  %5200 = vmatpush1.msra.mxu0 %v4886
  %5201 = vmatprep.subr.mxu0 %v4891
  %5202 = vmatpush1.msra.mxu0 %v4890
  %5203 = vmatprep.subr.mxu0 %v4895
  %5204 = vmatpush1.msra.mxu0 %v4894
  %5205 = vmatprep.subr.mxu0 %v4899
  %5206 = vmatpush1.msra.mxu0 %v4898
  %5207 = vmatprep.subr.mxu0 %v4903
  %5208 = vmatpush1.msra.mxu0 %v4902
  %5209 = vmatprep.subr.mxu0 %v4907
  %5210 = vmatpush1.msra.mxu0 %v4906
  %5211 = vmatprep.subr.mxu0 %v4911
  %5212 = vmatpush1.msra.mxu0 %v4910
  %5213 = vmatprep.mubr.f32.mxu0 %v4401
  %5214 = vmatmul.mubr.f32.gmra.mrb[0].mxu0 %v4400
  %v5215 = vpop.f32.mrb[0].mxu0
  %v5216 = vadd.f32 %v5145, %v5215
  %v5217 = vpop.f32.mrb[0].mxu0
  %v5218 = vadd.f32 %v5147, %v5217
  %5219 = vdwg.mxu0
  %5220 = vmatprep.subr.mxu0 %v4405
  %5221 = vmatpush1.msra.mxu0 %v4404
  %5222 = vmatprep.subr.mxu0 %v4409
  %5223 = vmatpush1.msra.mxu0 %v4408
  %5224 = vmatprep.subr.mxu0 %v4413
  %5225 = vmatpush1.msra.mxu0 %v4412
  %5226 = vmatprep.subr.mxu0 %v4417
  %5227 = vmatpush1.msra.mxu0 %v4416
  %5228 = vmatprep.subr.mxu0 %v4421
  %5229 = vmatpush1.msra.mxu0 %v4420
  %5230 = vmatprep.subr.mxu0 %v4425
  %5231 = vmatpush1.msra.mxu0 %v4424
  %5232 = vmatprep.subr.mxu0 %v4429
  %5233 = vmatpush1.msra.mxu0 %v4428
  %5234 = vmatprep.subr.mxu0 %v4433
  %5235 = vmatpush1.msra.mxu0 %v4432
  %5236 = vmatprep.subr.mxu0 %v4437
  %5237 = vmatpush1.msra.mxu0 %v4436
  %5238 = vmatprep.subr.mxu0 %v4441
  %5239 = vmatpush1.msra.mxu0 %v4440
  %5240 = vmatprep.subr.mxu0 %v4445
  %5241 = vmatpush1.msra.mxu0 %v4444
  %5242 = vmatprep.subr.mxu0 %v4449
  %5243 = vmatpush1.msra.mxu0 %v4448
  %5244 = vmatprep.subr.mxu0 %v4453
  %5245 = vmatpush1.msra.mxu0 %v4452
  %5246 = vmatprep.subr.mxu0 %v4457
  %5247 = vmatpush1.msra.mxu0 %v4456
  %5248 = vmatprep.subr.mxu0 %v4461
  %5249 = vmatpush1.msra.mxu0 %v4460
  %5250 = vmatprep.subr.mxu0 %v4465
  %5251 = vmatpush1.msra.mxu0 %v4464
  %5252 = vmatprep.subr.mxu0 %v4469
  %5253 = vmatpush1.msra.mxu0 %v4468
  %5254 = vmatprep.subr.mxu0 %v4473
  %5255 = vmatpush1.msra.mxu0 %v4472
  %5256 = vmatprep.subr.mxu0 %v4477
  %5257 = vmatpush1.msra.mxu0 %v4476
  %5258 = vmatprep.subr.mxu0 %v4481
  %5259 = vmatpush1.msra.mxu0 %v4480
  %5260 = vmatprep.subr.mxu0 %v4485
  %5261 = vmatpush1.msra.mxu0 %v4484
  %5262 = vmatprep.subr.mxu0 %v4489
  %5263 = vmatpush1.msra.mxu0 %v4488
  %5264 = vmatprep.subr.mxu0 %v4493
  %5265 = vmatpush1.msra.mxu0 %v4492
  %5266 = vmatprep.subr.mxu0 %v4497
  %5267 = vmatpush1.msra.mxu0 %v4496
  %5268 = vmatprep.subr.mxu0 %v4501
  %5269 = vmatpush1.msra.mxu0 %v4500
  %5270 = vmatprep.subr.mxu0 %v4505
  %5271 = vmatpush1.msra.mxu0 %v4504
  %5272 = vmatprep.subr.mxu0 %v4509
  %5273 = vmatpush1.msra.mxu0 %v4508
  %5274 = vmatprep.subr.mxu0 %v4513
  %5275 = vmatpush1.msra.mxu0 %v4512
  %5276 = vmatprep.subr.mxu0 %v4517
  %5277 = vmatpush1.msra.mxu0 %v4516
  %5278 = vmatprep.subr.mxu0 %v4521
  %5279 = vmatpush1.msra.mxu0 %v4520
  %5280 = vmatprep.subr.mxu0 %v4525
  %5281 = vmatpush1.msra.mxu0 %v4524
  %5282 = vmatprep.subr.mxu0 %v4529
  %5283 = vmatpush1.msra.mxu0 %v4528
  %5284 = vmatprep.mubr.f32.mxu0 %v4395
  %5285 = vmatmul.mubr.f32.gmra.mrb[0].mxu0 %v4394
  %v5286 = vpop.f32.mrb[0].mxu0
  %v5287 = vadd.f32 %v4927, %v5286
  %v5288 = vpop.f32.mrb[0].mxu0
  %v5289 = vadd.f32 %v4931, %v5288
  %5290 = vdwg.mxu0
  %5291 = vmatprep.subr.mxu0 %v4533
  %5292 = vmatpush1.msra.mxu0 %v4532
  %5293 = vmatprep.subr.mxu0 %v4537
  %5294 = vmatpush1.msra.mxu0 %v4536
  %5295 = vmatprep.subr.mxu0 %v4541
  %5296 = vmatpush1.msra.mxu0 %v4540
  %5297 = vmatprep.subr.mxu0 %v4545
  %5298 = vmatpush1.msra.mxu0 %v4544
  %5299 = vmatprep.subr.mxu0 %v4549
  %5300 = vmatpush1.msra.mxu0 %v4548
  %5301 = vmatprep.subr.mxu0 %v4553
  %5302 = vmatpush1.msra.mxu0 %v4552
  %5303 = vmatprep.subr.mxu0 %v4557
  %5304 = vmatpush1.msra.mxu0 %v4556
  %5305 = vmatprep.subr.mxu0 %v4561
  %5306 = vmatpush1.msra.mxu0 %v4560
  %5307 = vmatprep.subr.mxu0 %v4565
  %5308 = vmatpush1.msra.mxu0 %v4564
  %5309 = vmatprep.subr.mxu0 %v4569
  %5310 = vmatpush1.msra.mxu0 %v4568
  %5311 = vmatprep.subr.mxu0 %v4573
  %5312 = vmatpush1.msra.mxu0 %v4572
  %5313 = vmatprep.subr.mxu0 %v4577
  %5314 = vmatpush1.msra.mxu0 %v4576
  %5315 = vmatprep.subr.mxu0 %v4581
  %5316 = vmatpush1.msra.mxu0 %v4580
  %5317 = vmatprep.subr.mxu0 %v4585
  %5318 = vmatpush1.msra.mxu0 %v4584
  %5319 = vmatprep.subr.mxu0 %v4589
  %5320 = vmatpush1.msra.mxu0 %v4588
  %5321 = vmatprep.subr.mxu0 %v4593
  %5322 = vmatpush1.msra.mxu0 %v4592
  %5323 = vmatprep.subr.mxu0 %v4597
  %5324 = vmatpush1.msra.mxu0 %v4596
  %5325 = vmatprep.subr.mxu0 %v4601
  %5326 = vmatpush1.msra.mxu0 %v4600
  %5327 = vmatprep.subr.mxu0 %v4605
  %5328 = vmatpush1.msra.mxu0 %v4604
  %5329 = vmatprep.subr.mxu0 %v4609
  %5330 = vmatpush1.msra.mxu0 %v4608
  %5331 = vmatprep.subr.mxu0 %v4613
  %5332 = vmatpush1.msra.mxu0 %v4612
  %5333 = vmatprep.subr.mxu0 %v4617
  %5334 = vmatpush1.msra.mxu0 %v4616
  %5335 = vmatprep.subr.mxu0 %v4621
  %5336 = vmatpush1.msra.mxu0 %v4620
  %5337 = vmatprep.subr.mxu0 %v4625
  %5338 = vmatpush1.msra.mxu0 %v4624
  %5339 = vmatprep.subr.mxu0 %v4629
  %5340 = vmatpush1.msra.mxu0 %v4628
  %5341 = vmatprep.subr.mxu0 %v4633
  %5342 = vmatpush1.msra.mxu0 %v4632
  %5343 = vmatprep.subr.mxu0 %v4637
  %5344 = vmatpush1.msra.mxu0 %v4636
  %5345 = vmatprep.subr.mxu0 %v4641
  %5346 = vmatpush1.msra.mxu0 %v4640
  %5347 = vmatprep.subr.mxu0 %v4645
  %5348 = vmatpush1.msra.mxu0 %v4644
  %5349 = vmatprep.subr.mxu0 %v4649
  %5350 = vmatpush1.msra.mxu0 %v4648
  %5351 = vmatprep.subr.mxu0 %v4653
  %5352 = vmatpush1.msra.mxu0 %v4652
  %5353 = vmatprep.subr.mxu0 %v4657
  %5354 = vmatpush1.msra.mxu0 %v4656
  %5355 = vmatprep.mubr.f32.mxu0 %v4397
  %5356 = vmatmul.mubr.f32.gmra.mrb[0].mxu0 %v4396
  %v5357 = vpop.f32.mrb[0].mxu0
  %v5358 = vadd.f32 %v5287, %v5357
  %v5359 = vpop.f32.mrb[0].mxu0
  %v5360 = vadd.f32 %v5289, %v5359
  %5361 = vdwg.mxu0
  %5362 = vmatprep.subr.mxu0 %v4661
  %5363 = vmatpush1.msra.mxu0 %v4660
  %5364 = vmatprep.subr.mxu0 %v4665
  %5365 = vmatpush1.msra.mxu0 %v4664
  %5366 = vmatprep.subr.mxu0 %v4669
  %5367 = vmatpush1.msra.mxu0 %v4668
  %5368 = vmatprep.subr.mxu0 %v4673
  %5369 = vmatpush1.msra.mxu0 %v4672
  %5370 = vmatprep.subr.mxu0 %v4677
  %5371 = vmatpush1.msra.mxu0 %v4676
  %5372 = vmatprep.subr.mxu0 %v4681
  %5373 = vmatpush1.msra.mxu0 %v4680
  %5374 = vmatprep.subr.mxu0 %v4685
  %5375 = vmatpush1.msra.mxu0 %v4684
  %5376 = vmatprep.subr.mxu0 %v4689
  %5377 = vmatpush1.msra.mxu0 %v4688
  %5378 = vmatprep.subr.mxu0 %v4693
  %5379 = vmatpush1.msra.mxu0 %v4692
  %5380 = vmatprep.subr.mxu0 %v4697
  %5381 = vmatpush1.msra.mxu0 %v4696
  %5382 = vmatprep.subr.mxu0 %v4701
  %5383 = vmatpush1.msra.mxu0 %v4700
  %5384 = vmatprep.subr.mxu0 %v4705
  %5385 = vmatpush1.msra.mxu0 %v4704
  %5386 = vmatprep.subr.mxu0 %v4709
  %5387 = vmatpush1.msra.mxu0 %v4708
  %5388 = vmatprep.subr.mxu0 %v4713
  %5389 = vmatpush1.msra.mxu0 %v4712
  %5390 = vmatprep.subr.mxu0 %v4717
  %5391 = vmatpush1.msra.mxu0 %v4716
  %5392 = vmatprep.subr.mxu0 %v4721
  %5393 = vmatpush1.msra.mxu0 %v4720
  %5394 = vmatprep.subr.mxu0 %v4725
  %5395 = vmatpush1.msra.mxu0 %v4724
  %5396 = vmatprep.subr.mxu0 %v4729
  %5397 = vmatpush1.msra.mxu0 %v4728
  %5398 = vmatprep.subr.mxu0 %v4733
  %5399 = vmatpush1.msra.mxu0 %v4732
  %5400 = vmatprep.subr.mxu0 %v4737
  %5401 = vmatpush1.msra.mxu0 %v4736
  %5402 = vmatprep.subr.mxu0 %v4741
  %5403 = vmatpush1.msra.mxu0 %v4740
  %5404 = vmatprep.subr.mxu0 %v4745
  %5405 = vmatpush1.msra.mxu0 %v4744
  %5406 = vmatprep.subr.mxu0 %v4749
  %5407 = vmatpush1.msra.mxu0 %v4748
  %5408 = vmatprep.subr.mxu0 %v4753
  %5409 = vmatpush1.msra.mxu0 %v4752
  %5410 = vmatprep.subr.mxu0 %v4757
  %5411 = vmatpush1.msra.mxu0 %v4756
  %5412 = vmatprep.subr.mxu0 %v4761
  %5413 = vmatpush1.msra.mxu0 %v4760
  %5414 = vmatprep.subr.mxu0 %v4765
  %5415 = vmatpush1.msra.mxu0 %v4764
  %5416 = vmatprep.subr.mxu0 %v4769
  %5417 = vmatpush1.msra.mxu0 %v4768
  %5418 = vmatprep.subr.mxu0 %v4773
  %5419 = vmatpush1.msra.mxu0 %v4772
  %5420 = vmatprep.subr.mxu0 %v4777
  %5421 = vmatpush1.msra.mxu0 %v4776
  %5422 = vmatprep.subr.mxu0 %v4781
  %5423 = vmatpush1.msra.mxu0 %v4780
  %5424 = vmatprep.subr.mxu0 %v4785
  %5425 = vmatpush1.msra.mxu0 %v4784
  %5426 = vmatprep.mubr.f32.mxu0 %v4399
  %5427 = vmatmul.mubr.f32.gmra.mrb[0].mxu0 %v4398
  %v5428 = vpop.f32.mrb[0].mxu0
  %v5429 = vadd.f32 %v5358, %v5428
  %v5430 = vpop.f32.mrb[0].mxu0
  %v5431 = vadd.f32 %v5360, %v5430
  %5432 = vdwg.mxu0
  %5433 = vmatprep.subr.mxu0 %v4789
  %5434 = vmatpush1.msra.mxu0 %v4788
  %5435 = vmatprep.subr.mxu0 %v4793
  %5436 = vmatpush1.msra.mxu0 %v4792
  %5437 = vmatprep.subr.mxu0 %v4797
  %5438 = vmatpush1.msra.mxu0 %v4796
  %5439 = vmatprep.subr.mxu0 %v4801
  %5440 = vmatpush1.msra.mxu0 %v4800
  %5441 = vmatprep.subr.mxu0 %v4805
  %5442 = vmatpush1.msra.mxu0 %v4804
  %5443 = vmatprep.subr.mxu0 %v4809
  %5444 = vmatpush1.msra.mxu0 %v4808
  %5445 = vmatprep.subr.mxu0 %v4813
  %5446 = vmatpush1.msra.mxu0 %v4812
  %5447 = vmatprep.subr.mxu0 %v4817
  %5448 = vmatpush1.msra.mxu0 %v4816
  %5449 = vmatprep.subr.mxu0 %v4821
  %5450 = vmatpush1.msra.mxu0 %v4820
  %5451 = vmatprep.subr.mxu0 %v4825
  %5452 = vmatpush1.msra.mxu0 %v4824
  %5453 = vmatprep.subr.mxu0 %v4829
  %5454 = vmatpush1.msra.mxu0 %v4828
  %5455 = vmatprep.subr.mxu0 %v4833
  %5456 = vmatpush1.msra.mxu0 %v4832
  %5457 = vmatprep.subr.mxu0 %v4837
  %5458 = vmatpush1.msra.mxu0 %v4836
  %5459 = vmatprep.subr.mxu0 %v4841
  %5460 = vmatpush1.msra.mxu0 %v4840
  %5461 = vmatprep.subr.mxu0 %v4845
  %5462 = vmatpush1.msra.mxu0 %v4844
  %5463 = vmatprep.subr.mxu0 %v4849
  %5464 = vmatpush1.msra.mxu0 %v4848
  %5465 = vmatprep.subr.mxu0 %v4853
  %5466 = vmatpush1.msra.mxu0 %v4852
  %5467 = vmatprep.subr.mxu0 %v4857
  %5468 = vmatpush1.msra.mxu0 %v4856
  %5469 = vmatprep.subr.mxu0 %v4861
  %5470 = vmatpush1.msra.mxu0 %v4860
  %5471 = vmatprep.subr.mxu0 %v4865
  %5472 = vmatpush1.msra.mxu0 %v4864
  %5473 = vmatprep.subr.mxu0 %v4869
  %5474 = vmatpush1.msra.mxu0 %v4868
  %5475 = vmatprep.subr.mxu0 %v4873
  %5476 = vmatpush1.msra.mxu0 %v4872
  %5477 = vmatprep.subr.mxu0 %v4877
  %5478 = vmatpush1.msra.mxu0 %v4876
  %5479 = vmatprep.subr.mxu0 %v4881
  %5480 = vmatpush1.msra.mxu0 %v4880
  %5481 = vmatprep.subr.mxu0 %v4885
  %5482 = vmatpush1.msra.mxu0 %v4884
  %5483 = vmatprep.subr.mxu0 %v4889
  %5484 = vmatpush1.msra.mxu0 %v4888
  %5485 = vmatprep.subr.mxu0 %v4893
  %5486 = vmatpush1.msra.mxu0 %v4892
  %5487 = vmatprep.subr.mxu0 %v4897
  %5488 = vmatpush1.msra.mxu0 %v4896
  %5489 = vmatprep.subr.mxu0 %v4901
  %5490 = vmatpush1.msra.mxu0 %v4900
  %5491 = vmatprep.subr.mxu0 %v4905
  %5492 = vmatpush1.msra.mxu0 %v4904
  %5493 = vmatprep.subr.mxu0 %v4909
  %5494 = vmatpush1.msra.mxu0 %v4908
  %5495 = vmatprep.subr.mxu0 %v4913
  %5496 = vmatpush1.msra.mxu0 %v4912
  %5497 = vmatprep.mubr.f32.mxu0 %v4401
  %5498 = vmatmul.mubr.f32.gmra.mrb[0].mxu0 %v4400
  %v5499 = vpop.f32.mrb[0].mxu0
  %v5500 = vadd.f32 %v5429, %v5499
  %v5501 = vpop.f32.mrb[0].mxu0
  %v5502 = vadd.f32 %v5431, %v5501
  %5503 = vdwg.mxu0
  %v5504 = vmax.f32 %v5216, 0.0
  %v5505 = vmax.f32 %v5218, 0.0
  %v5506 = vmax.f32 %v5500, 0.0
  %v5507 = vmax.f32 %v5502, 0.0
  %v5508 = vld [vmem:[%s23] sm:$0xff]
  %v5509 = vld [vmem:[%s23 + $0x8] sm:$0xff]
  %v5510 = vld [vmem:[%s23 + $0x10] sm:$0xff]
  %v5511 = vld [vmem:[%s23 + $0x18] sm:$0xff]
  %v5512 = vld [vmem:[%s23 + $0x20] sm:$0xff]
  %v5513 = vld [vmem:[%s23 + $0x28] sm:$0xff]
  %v5514 = vld [vmem:[%s23 + $0x30] sm:$0xff]
  %v5515 = vld [vmem:[%s23 + $0x38] sm:$0xff]
  %v5516 = vld [vmem:[%s23 + $0x40] sm:$0xff]
  %v5517 = vld [vmem:[%s23 + $0x48] sm:$0xff]
  %v5518 = vld [vmem:[%s23 + $0x50] sm:$0xff]
  %v5519 = vld [vmem:[%s23 + $0x58] sm:$0xff]
  %v5520 = vld [vmem:[%s23 + $0x60] sm:$0xff]
  %v5521 = vld [vmem:[%s23 + $0x68] sm:$0xff]
  %v5522 = vld [vmem:[%s23 + $0x70] sm:$0xff]
  %v5523 = vld [vmem:[%s23 + $0x78] sm:$0xff]
  %v5524 = vld [vmem:[%s23 + $0x80] sm:$0xff]
  %v5525 = vld [vmem:[%s23 + $0x88] sm:$0xff]
  %v5526 = vld [vmem:[%s23 + $0x90] sm:$0xff]
  %v5527 = vld [vmem:[%s23 + $0x98] sm:$0xff]
  %v5528 = vld [vmem:[%s23 + $0xa0] sm:$0xff]
  %v5529 = vld [vmem:[%s23 + $0xa8] sm:$0xff]
  %v5530 = vld [vmem:[%s23 + $0xb0] sm:$0xff]
  %v5531 = vld [vmem:[%s23 + $0xb8] sm:$0xff]
  %v5532 = vld [vmem:[%s23 + $0xc0] sm:$0xff]
  %v5533 = vld [vmem:[%s23 + $0xc8] sm:$0xff]
  %v5534 = vld [vmem:[%s23 + $0xd0] sm:$0xff]
  %v5535 = vld [vmem:[%s23 + $0xd8] sm:$0xff]
  %v5536 = vld [vmem:[%s23 + $0xe0] sm:$0xff]
  %v5537 = vld [vmem:[%s23 + $0xe8] sm:$0xff]
  %v5538 = vld [vmem:[%s23 + $0xf0] sm:$0xff]
  %v5539 = vld [vmem:[%s23 + $0xf8] sm:$0xff]
  %v5540 = vld [vmem:[%s23 + $0x100] sm:$0xff]
  %v5541 = vld [vmem:[%s23 + $0x108] sm:$0xff]
  %v5542 = vld [vmem:[%s23 + $0x110] sm:$0xff]
  %v5543 = vld [vmem:[%s23 + $0x118] sm:$0xff]
  %v5544 = vld [vmem:[%s23 + $0x120] sm:$0xff]
  %v5545 = vld [vmem:[%s23 + $0x128] sm:$0xff]
  %v5546 = vld [vmem:[%s23 + $0x130] sm:$0xff]
  %v5547 = vld [vmem:[%s23 + $0x138] sm:$0xff]
  %v5548 = vld [vmem:[%s23 + $0x140] sm:$0xff]
  %v5549 = vld [vmem:[%s23 + $0x148] sm:$0xff]
  %v5550 = vld [vmem:[%s23 + $0x150] sm:$0xff]
  %v5551 = vld [vmem:[%s23 + $0x158] sm:$0xff]
  %v5552 = vld [vmem:[%s23 + $0x160] sm:$0xff]
  %v5553 = vld [vmem:[%s23 + $0x168] sm:$0xff]
  %v5554 = vld [vmem:[%s23 + $0x170] sm:$0xff]
  %v5555 = vld [vmem:[%s23 + $0x178] sm:$0xff]
  %v5556 = vld [vmem:[%s23 + $0x180] sm:$0xff]
  %v5557 = vld [vmem:[%s23 + $0x188] sm:$0xff]
  %v5558 = vld [vmem:[%s23 + $0x190] sm:$0xff]
  %v5559 = vld [vmem:[%s23 + $0x198] sm:$0xff]
  %v5560 = vld [vmem:[%s23 + $0x1a0] sm:$0xff]
  %v5561 = vld [vmem:[%s23 + $0x1a8] sm:$0xff]
  %v5562 = vld [vmem:[%s23 + $0x1b0] sm:$0xff]
  %v5563 = vld [vmem:[%s23 + $0x1b8] sm:$0xff]
  %v5564 = vld [vmem:[%s23 + $0x1c0] sm:$0xff]
  %v5565 = vld [vmem:[%s23 + $0x1c8] sm:$0xff]
  %v5566 = vld [vmem:[%s23 + $0x1d0] sm:$0xff]
  %v5567 = vld [vmem:[%s23 + $0x1d8] sm:$0xff]
  %v5568 = vld [vmem:[%s23 + $0x1e0] sm:$0xff]
  %v5569 = vld [vmem:[%s23 + $0x1e8] sm:$0xff]
  %v5570 = vld [vmem:[%s23 + $0x1f0] sm:$0xff]
  %v5571 = vld [vmem:[%s23 + $0x1f8] sm:$0xff]
  %v5572 = vld [vmem:[%s23 + $0x200] sm:$0xff]
  %v5573 = vld [vmem:[%s23 + $0x208] sm:$0xff]
  %v5574 = vld [vmem:[%s23 + $0x210] sm:$0xff]
  %v5575 = vld [vmem:[%s23 + $0x218] sm:$0xff]
  %v5576 = vld [vmem:[%s23 + $0x220] sm:$0xff]
  %v5577 = vld [vmem:[%s23 + $0x228] sm:$0xff]
  %v5578 = vld [vmem:[%s23 + $0x230] sm:$0xff]
  %v5579 = vld [vmem:[%s23 + $0x238] sm:$0xff]
  %v5580 = vld [vmem:[%s23 + $0x240] sm:$0xff]
  %v5581 = vld [vmem:[%s23 + $0x248] sm:$0xff]
  %v5582 = vld [vmem:[%s23 + $0x250] sm:$0xff]
  %v5583 = vld [vmem:[%s23 + $0x258] sm:$0xff]
  %v5584 = vld [vmem:[%s23 + $0x260] sm:$0xff]
  %v5585 = vld [vmem:[%s23 + $0x268] sm:$0xff]
  %v5586 = vld [vmem:[%s23 + $0x270] sm:$0xff]
  %v5587 = vld [vmem:[%s23 + $0x278] sm:$0xff]
  %v5588 = vld [vmem:[%s23 + $0x280] sm:$0xff]
  %v5589 = vld [vmem:[%s23 + $0x288] sm:$0xff]
  %v5590 = vld [vmem:[%s23 + $0x290] sm:$0xff]
  %v5591 = vld [vmem:[%s23 + $0x298] sm:$0xff]
  %v5592 = vld [vmem:[%s23 + $0x2a0] sm:$0xff]
  %v5593 = vld [vmem:[%s23 + $0x2a8] sm:$0xff]
  %v5594 = vld [vmem:[%s23 + $0x2b0] sm:$0xff]
  %v5595 = vld [vmem:[%s23 + $0x2b8] sm:$0xff]
  %v5596 = vld [vmem:[%s23 + $0x2c0] sm:$0xff]
  %v5597 = vld [vmem:[%s23 + $0x2c8] sm:$0xff]
  %v5598 = vld [vmem:[%s23 + $0x2d0] sm:$0xff]
  %v5599 = vld [vmem:[%s23 + $0x2d8] sm:$0xff]
  %v5600 = vld [vmem:[%s23 + $0x2e0] sm:$0xff]
  %v5601 = vld [vmem:[%s23 + $0x2e8] sm:$0xff]
  %v5602 = vld [vmem:[%s23 + $0x2f0] sm:$0xff]
  %v5603 = vld [vmem:[%s23 + $0x2f8] sm:$0xff]
  %v5604 = vld [vmem:[%s23 + $0x300] sm:$0xff]
  %v5605 = vld [vmem:[%s23 + $0x308] sm:$0xff]
  %v5606 = vld [vmem:[%s23 + $0x310] sm:$0xff]
  %v5607 = vld [vmem:[%s23 + $0x318] sm:$0xff]
  %v5608 = vld [vmem:[%s23 + $0x320] sm:$0xff]
  %v5609 = vld [vmem:[%s23 + $0x328] sm:$0xff]
  %v5610 = vld [vmem:[%s23 + $0x330] sm:$0xff]
  %v5611 = vld [vmem:[%s23 + $0x338] sm:$0xff]
  %v5612 = vld [vmem:[%s23 + $0x340] sm:$0xff]
  %v5613 = vld [vmem:[%s23 + $0x348] sm:$0xff]
  %v5614 = vld [vmem:[%s23 + $0x350] sm:$0xff]
  %v5615 = vld [vmem:[%s23 + $0x358] sm:$0xff]
  %v5616 = vld [vmem:[%s23 + $0x360] sm:$0xff]
  %v5617 = vld [vmem:[%s23 + $0x368] sm:$0xff]
  %v5618 = vld [vmem:[%s23 + $0x370] sm:$0xff]
  %v5619 = vld [vmem:[%s23 + $0x378] sm:$0xff]
  %v5620 = vld [vmem:[%s23 + $0x380] sm:$0xff]
  %v5621 = vld [vmem:[%s23 + $0x388] sm:$0xff]
  %v5622 = vld [vmem:[%s23 + $0x390] sm:$0xff]
  %v5623 = vld [vmem:[%s23 + $0x398] sm:$0xff]
  %v5624 = vld [vmem:[%s23 + $0x3a0] sm:$0xff]
  %v5625 = vld [vmem:[%s23 + $0x3a8] sm:$0xff]
  %v5626 = vld [vmem:[%s23 + $0x3b0] sm:$0xff]
  %v5627 = vld [vmem:[%s23 + $0x3b8] sm:$0xff]
  %v5628 = vld [vmem:[%s23 + $0x3c0] sm:$0xff]
  %v5629 = vld [vmem:[%s23 + $0x3c8] sm:$0xff]
  %v5630 = vld [vmem:[%s23 + $0x3d0] sm:$0xff]
  %v5631 = vld [vmem:[%s23 + $0x3d8] sm:$0xff]
  %v5632 = vld [vmem:[%s23 + $0x3e0] sm:$0xff]
  %v5633 = vld [vmem:[%s23 + $0x3e8] sm:$0xff]
  %v5634 = vld [vmem:[%s23 + $0x3f0] sm:$0xff]
  %v5635 = vld [vmem:[%s23 + $0x3f8] sm:$0xff]
  %v5636 = vld [vmem:[%s24] sm:$0x3]
  %v5638 = vlaneseq
  %v5639 = vshrl.u32 %v5638, 7
  %v5640 = vsub.s32 0, %v5639
  %v5641 = vrot.slane %v5636, %v5640
  %v5642 = vlaneseq
  %v5643 = vshrl.u32 %v5642, 7
  %v5644 = vsub.s32 1, %v5643
  %v5645 = vrot.slane %v5636, %v5644
  %5648 = vmatprep.subr.mxu0 %v5509
  %5649 = vmatpush1.msra.mxu0 %v5508
  %5650 = vmatprep.subr.mxu0 %v5511
  %5651 = vmatpush1.msra.mxu0 %v5510
  %5652 = vmatprep.subr.mxu0 %v5513
  %5653 = vmatpush1.msra.mxu0 %v5512
  %5654 = vmatprep.subr.mxu0 %v5515
  %5655 = vmatpush1.msra.mxu0 %v5514
  %5656 = vmatprep.subr.mxu0 %v5517
  %5657 = vmatpush1.msra.mxu0 %v5516
  %5658 = vmatprep.subr.mxu0 %v5519
  %5659 = vmatpush1.msra.mxu0 %v5518
  %5660 = vmatprep.subr.mxu0 %v5521
  %5661 = vmatpush1.msra.mxu0 %v5520
  %5662 = vmatprep.subr.mxu0 %v5523
  %5663 = vmatpush1.msra.mxu0 %v5522
  %5664 = vmatprep.subr.mxu0 %v5525
  %5665 = vmatpush1.msra.mxu0 %v5524
  %5666 = vmatprep.subr.mxu0 %v5527
  %5667 = vmatpush1.msra.mxu0 %v5526
  %5668 = vmatprep.subr.mxu0 %v5529
  %5669 = vmatpush1.msra.mxu0 %v5528
  %5670 = vmatprep.subr.mxu0 %v5531
  %5671 = vmatpush1.msra.mxu0 %v5530
  %5672 = vmatprep.subr.mxu0 %v5533
  %5673 = vmatpush1.msra.mxu0 %v5532
  %5674 = vmatprep.subr.mxu0 %v5535
  %5675 = vmatpush1.msra.mxu0 %v5534
  %5676 = vmatprep.subr.mxu0 %v5537
  %5677 = vmatpush1.msra.mxu0 %v5536
  %5678 = vmatprep.subr.mxu0 %v5539
  %5679 = vmatpush1.msra.mxu0 %v5538
  %5680 = vmatprep.subr.mxu0 %v5541
  %5681 = vmatpush1.msra.mxu0 %v5540
  %5682 = vmatprep.subr.mxu0 %v5543
  %5683 = vmatpush1.msra.mxu0 %v5542
  %5684 = vmatprep.subr.mxu0 %v5545
  %5685 = vmatpush1.msra.mxu0 %v5544
  %5686 = vmatprep.subr.mxu0 %v5547
  %5687 = vmatpush1.msra.mxu0 %v5546
  %5688 = vmatprep.subr.mxu0 %v5549
  %5689 = vmatpush1.msra.mxu0 %v5548
  %5690 = vmatprep.subr.mxu0 %v5551
  %5691 = vmatpush1.msra.mxu0 %v5550
  %5692 = vmatprep.subr.mxu0 %v5553
  %5693 = vmatpush1.msra.mxu0 %v5552
  %5694 = vmatprep.subr.mxu0 %v5555
  %5695 = vmatpush1.msra.mxu0 %v5554
  %5696 = vmatprep.subr.mxu0 %v5557
  %5697 = vmatpush1.msra.mxu0 %v5556
  %5698 = vmatprep.subr.mxu0 %v5559
  %5699 = vmatpush1.msra.mxu0 %v5558
  %5700 = vmatprep.subr.mxu0 %v5561
  %5701 = vmatpush1.msra.mxu0 %v5560
  %5702 = vmatprep.subr.mxu0 %v5563
  %5703 = vmatpush1.msra.mxu0 %v5562
  %5704 = vmatprep.subr.mxu0 %v5565
  %5705 = vmatpush1.msra.mxu0 %v5564
  %5706 = vmatprep.subr.mxu0 %v5567
  %5707 = vmatpush1.msra.mxu0 %v5566
  %5708 = vmatprep.subr.mxu0 %v5569
  %5709 = vmatpush1.msra.mxu0 %v5568
  %5710 = vmatprep.subr.mxu0 %v5571
  %5711 = vmatpush1.msra.mxu0 %v5570
  %5712 = vmatprep.mubr.f32.mxu0 %v5505
  %5713 = vmatmul.mubr.f32.gmra.mrb[0].mxu0 %v5504
  %v5714 = vpop.f32.mrb[0].mxu0
  %v5715 = vadd.f32 %v5641, %v5714
  %v5716 = vpop.f32.mrb[0].mxu0
  %v5717 = vadd.f32 %v5645, %v5716
  %5718 = vdwg.mxu0
  %5719 = vmatprep.subr.mxu0 %v5573
  %5720 = vmatpush1.msra.mxu0 %v5572
  %5721 = vmatprep.subr.mxu0 %v5575
  %5722 = vmatpush1.msra.mxu0 %v5574
  %5723 = vmatprep.subr.mxu0 %v5577
  %5724 = vmatpush1.msra.mxu0 %v5576
  %5725 = vmatprep.subr.mxu0 %v5579
  %5726 = vmatpush1.msra.mxu0 %v5578
  %5727 = vmatprep.subr.mxu0 %v5581
  %5728 = vmatpush1.msra.mxu0 %v5580
  %5729 = vmatprep.subr.mxu0 %v5583
  %5730 = vmatpush1.msra.mxu0 %v5582
  %5731 = vmatprep.subr.mxu0 %v5585
  %5732 = vmatpush1.msra.mxu0 %v5584
  %5733 = vmatprep.subr.mxu0 %v5587
  %5734 = vmatpush1.msra.mxu0 %v5586
  %5735 = vmatprep.subr.mxu0 %v5589
  %5736 = vmatpush1.msra.mxu0 %v5588
  %5737 = vmatprep.subr.mxu0 %v5591
  %5738 = vmatpush1.msra.mxu0 %v5590
  %5739 = vmatprep.subr.mxu0 %v5593
  %5740 = vmatpush1.msra.mxu0 %v5592
  %5741 = vmatprep.subr.mxu0 %v5595
  %5742 = vmatpush1.msra.mxu0 %v5594
  %5743 = vmatprep.subr.mxu0 %v5597
  %5744 = vmatpush1.msra.mxu0 %v5596
  %5745 = vmatprep.subr.mxu0 %v5599
  %5746 = vmatpush1.msra.mxu0 %v5598
  %5747 = vmatprep.subr.mxu0 %v5601
  %5748 = vmatpush1.msra.mxu0 %v5600
  %5749 = vmatprep.subr.mxu0 %v5603
  %5750 = vmatpush1.msra.mxu0 %v5602
  %5751 = vmatprep.subr.mxu0 %v5605
  %5752 = vmatpush1.msra.mxu0 %v5604
  %5753 = vmatprep.subr.mxu0 %v5607
  %5754 = vmatpush1.msra.mxu0 %v5606
  %5755 = vmatprep.subr.mxu0 %v5609
  %5756 = vmatpush1.msra.mxu0 %v5608
  %5757 = vmatprep.subr.mxu0 %v5611
  %5758 = vmatpush1.msra.mxu0 %v5610
  %5759 = vmatprep.subr.mxu0 %v5613
  %5760 = vmatpush1.msra.mxu0 %v5612
  %5761 = vmatprep.subr.mxu0 %v5615
  %5762 = vmatpush1.msra.mxu0 %v5614
  %5763 = vmatprep.subr.mxu0 %v5617
  %5764 = vmatpush1.msra.mxu0 %v5616
  %5765 = vmatprep.subr.mxu0 %v5619
  %5766 = vmatpush1.msra.mxu0 %v5618
  %5767 = vmatprep.subr.mxu0 %v5621
  %5768 = vmatpush1.msra.mxu0 %v5620
  %5769 = vmatprep.subr.mxu0 %v5623
  %5770 = vmatpush1.msra.mxu0 %v5622
  %5771 = vmatprep.subr.mxu0 %v5625
  %5772 = vmatpush1.msra.mxu0 %v5624
  %5773 = vmatprep.subr.mxu0 %v5627
  %5774 = vmatpush1.msra.mxu0 %v5626
  %5775 = vmatprep.subr.mxu0 %v5629
  %5776 = vmatpush1.msra.mxu0 %v5628
  %5777 = vmatprep.subr.mxu0 %v5631
  %5778 = vmatpush1.msra.mxu0 %v5630
  %5779 = vmatprep.subr.mxu0 %v5633
  %5780 = vmatpush1.msra.mxu0 %v5632
  %5781 = vmatprep.subr.mxu0 %v5635
  %5782 = vmatpush1.msra.mxu0 %v5634
  %5783 = vmatprep.mubr.f32.mxu0 %v5507
  %5784 = vmatmul.mubr.f32.gmra.mrb[0].mxu0 %v5506
  %v5785 = vpop.f32.mrb[0].mxu0
  %v5786 = vadd.f32 %v5715, %v5785
  %v5787 = vpop.f32.mrb[0].mxu0
  %v5788 = vadd.f32 %v5717, %v5787
  %5789 = vdwg.mxu0
  %v5792 = vrot.slane %v5786, 2
  %v5793 = vrot.slane %v5788, 2
  %v5796 = vmul.f32 %v5786, %v5792
  %v5797 = vmul.f32 %v5788, %v5793
  %vm5798 = vcmask 1041408
  %v5799 = vsel %vm5798, %v5796, 0.0
  %v5800 = vsel %vm5798, %v5797, 0.0
  %v5801 = vadd.f32 %v5799, %v5800
  %5802 = vadd.xlane.f32.xlu0 %v5801
  %v5803 = vpop.xlane.xlu0 %5802
  %v5804 = vmul.f32 %v5786, %v5786
  %v5805 = vmul.f32 %v5788, %v5788
  %v5806 = vsel %vm5798, %v5804, 0.0
  %v5807 = vsel %vm5798, %v5805, 0.0
  %v5808 = vadd.f32 %v5806, %v5807
  %5809 = vadd.xlane.f32.xlu0 %v5808
  %v5810 = vpop.xlane.xlu0 %5809
  %v5811 = vrsqrt.pop %v5810
  %v5812 = vmul.f32 %v5810, %v5811
  %vm5813 = vcmp.eq.f32.partialorder %v5810, inf
  %v5814 = vsel %vm5813, %v5810, %v5812
  %vm5815 = vcmp.eq.f32.partialorder %v5810, 0.0
  %v5816 = vand.u32 %v5810, 2147483648
  %v5817 = vsel %vm5815, %v5816, %v5814
  %vm5818 = vcmask 1043458
  %v5819 = vsel %vm5818, %v5804, 0.0
  %v5820 = vsel %vm5818, %v5805, 0.0
  %v5821 = vadd.f32 %v5819, %v5820
  %5822 = vadd.xlane.f32.xlu0 %v5821
  %v5823 = vpop.xlane.xlu0 %5822
  %v5824 = vrsqrt.pop %v5823
  %v5825 = vmul.f32 %v5823, %v5824
  %vm5826 = vcmp.eq.f32.partialorder %v5823, inf
  %v5827 = vsel %vm5826, %v5823, %v5825
  %vm5828 = vcmp.eq.f32.partialorder %v5823, 0.0
  %v5829 = vand.u32 %v5823, 2147483648
  %v5830 = vsel %vm5828, %v5829, %v5827
  %v5832 = vrot.slane %v5830, 2
  %v5834 = vmul.f32 %v5817, %v5832
  %v5835 = vmax.f32 %v5834, 1e-06
  %v5836 = vrcp.pop %v5835
  %v5837 = vmul.f32 %v5803, %v5836
  %vm5838 = vcmask 1024
  %5839 = vst.msk [vmem:[%s25] sm:$0x3] %vm5838, %v5837
  // Predicated region
  $region102: #{forward.1} parent=0 // pred_check
    _
  $region103: #{forward.1} parent=0 // pred_check_branch
    %5841 = sbr.rel (0) target = $region105
  $region104: #{forward.1} parent=0 // pred_region
    _
  $region105: #{forward.1} parent=0 // pred_fallthru
    _
  // Predicated region
  $region106: #{forward.1} parent=0 // pred_check
    _
  $region107: #{forward.1} parent=0 // pred_check_branch
    %5843 = sbr.rel (0) target = $region109
  $region108: #{forward.1} parent=0 // pred_region
    _
  $region109: #{forward.1} parent=0 // pred_fallthru
    _

</llo_original>
